<compile_context>
chip_gen: v7x
topology: tpu7x:2x2x1
jax: 0.10.0
libtpu: 0.0.40
codegen_flags: <defaults>
</compile_context>

<pallas_src>
import jax
import jax.numpy as jnp
import numpy as np
from jax.experimental import pallas as pl
from jax.experimental.pallas import tpu as pltpu

KSIZE = 4
STRIDE = 2
PAD = 1            # (kernel_size - 1) // 2
BN_EPS = 1e-5
LRELU_SLOPE = 0.2


# ------------------------------ fused Pallas kernel ------------------------------

def _fused_disc_kernel(x_ref, r1_ref, g1_ref, b1_ref,
                       r2_ref, g2_ref, b2_ref, fold2_ref, tile2_ref, gm2_ref, bt2_ref,
                       r3_ref, g3_ref, b3_ref, gm3_ref, bt3_ref,
                       wl_ref, bl_ref, out_ref):
    f32 = jnp.float32
    bf16 = jnp.bfloat16

    def conv_folded(sel, g_ref, bias, x_bf):
        # sum_kh (RowSel_kh @ X) @ G_kh + bias  -- both gathers + channel mix on the MXU,
        # bf16 operands, f32 accumulation.
        acc = None
        for kh in range(KSIZE):
            t = jnp.dot(sel(kh), x_bf, preferred_element_type=f32)                  # H gather
            z = jnp.dot(t.astype(bf16), g_ref[kh], preferred_element_type=f32)      # W taps + Cin->Cout
            acc = z if acc is None else acc + z
        return acc + bias

    # ---- Conv2d(2, ndf): the reference model has no pool / norm / activation here ----
    x_bf = x_ref[...].astype(bf16)
    a1 = conv_folded(lambda kh: r1_ref[kh], g1_ref, b1_ref[...], x_bf)     # (N*16, 16*32) f32

    # ---- Block 1: Conv(32,64) -> MaxPool2d(2,2) -> BatchNorm2d(64) -> LeakyReLU(0.2) ----
    y2 = conv_folded(lambda kh: r2_ref[kh], g2_ref, b2_ref[...], a1.astype(bf16))
    rh, ch = y2.shape[0] // 2, y2.shape[1] // 2
    m2 = jnp.maximum(y2[:rh, :], y2[rh:, :])      # pool over H: even-oh half vs odd-oh half
    p2 = jnp.maximum(m2[:, :ch], m2[:, ch:])      # pool over W: even-ow half vs odd-ow half
    # BatchNorm2d, training-mode batch stats over (N, H, W).  Channels are tiled along the
    # lane dim, so per-channel sums fold the W blocks with tiny 0/1 matmuls (fold2/tile2).
    c2 = gm2_ref.shape[1]
    cnt2 = p2.shape[0] * (p2.shape[1] // c2)
    mean2 = jnp.dot(jnp.sum(p2, axis=0, keepdims=True), fold2_ref[...],
                    preferred_element_type=f32) * (1.0 / cnt2)             # (1, 64)
    cen2 = p2 - jnp.dot(mean2, tile2_ref[...], preferred_element_type=f32)
    var2 = jnp.dot(jnp.sum(cen2 * cen2, axis=0, keepdims=True), fold2_ref[...],
                   preferred_element_type=f32) * (1.0 / cnt2)
    scale2 = gm2_ref[...] * jax.lax.rsqrt(var2 + BN_EPS)
    shift2 = bt2_ref[...] - mean2 * scale2
    z2 = (p2 * jnp.dot(scale2, tile2_ref[...], preferred_element_type=f32)
          + jnp.dot(shift2, tile2_ref[...], preferred_element_type=f32))
    b2v = jnp.where(z2 >= 0.0, z2, LRELU_SLOPE * z2)                       # (N*4, 4*64)

    # ---- Block 2: Conv(64,128) -> MaxPool2d(2,2) -> BatchNorm2d(128) -> LeakyReLU(0.2) ----
    x3 = b2v.astype(bf16)
    yp = []
    for p in range(2):   # row-parity handled by two selection stacks (keeps all slices aligned)
        yp.append(conv_folded(lambda kh, _p=p: r3_ref[_p, kh], g3_ref, b3_ref[...], x3))
    m3 = jnp.maximum(yp[0], yp[1])                # pool over H
    ch3 = m3.shape[1] // 2
    p3 = jnp.maximum(m3[:, :ch3], m3[:, ch3:])    # pool over W -> (N, 128)
    mean3 = jnp.mean(p3, axis=0, keepdims=True)
    cen3 = p3 - mean3
    var3 = jnp.mean(cen3 * cen3, axis=0, keepdims=True)
    z3 = cen3 * (gm3_ref[...] * jax.lax.rsqrt(var3 + BN_EPS)) + bt3_ref[...]
    b3v = jnp.where(z3 >= 0.0, z3, LRELU_SLOPE * z3)                       # (N, 128)

    # ---- Flatten + Linear epilogue (final spatial is 1x1 -> flatten == channel vector) ----
    out_ref[...] = jnp.dot(b3v, wl_ref[...], preferred_element_type=f32) + bl_ref[...]


# ------------------------------- wrapper (one launch) -------------------------------

def _full_spec(a):
    nd = a.ndim
    return pl.BlockSpec(a.shape, lambda i, _nd=nd: (0,) * _nd)


@jax.jit
def vanilla_discriminator(x_nchw, params):
    n, cin, h, w = x_nchw.shape
    # NCHW -> channels-last, folded to the 2D (N*H, W*C) layout the kernel consumes.
    xf = jnp.transpose(x_nchw, (0, 2, 3, 1)).astype(jnp.float32).reshape(n * h, w * cin)
    args = (xf,
            params["r1"], params["g1"], params["b1"],
            params["r2"], params["g2"], params["b2"],
            params["fold2"], params["tile2"], params["gm2"], params["bt2"],
            params["r3"], params["g3"], params["b3"], params["gm3"], params["bt3"],
            params["wl"], params["bl"])
    return pl.pallas_call(
        _fused_disc_kernel,
        out_shape=jax.ShapeDtypeStruct((n, 1), jnp.float32),
        grid=(1,),   # whole net in one grid step: all intermediates stay in VMEM/vregs
        in_specs=[_full_spec(a) for a in args],
        out_specs=pl.BlockSpec((n, 1), lambda i: (0, 0)),
        compiler_params=pltpu.CompilerParams(
            dimension_semantics=("arbitrary",),
            vmem_limit_bytes=32 * 1024 * 1024,   # ~3 MiB of (bf16) operands; safe on v5e/v6e/v7x
        ),
    )(*args)


# ---------------------- host-side weight restructuring (one-time) ----------------------

def _rowsel_np(n_imgs, h_in, kh, parity_rows):
    """0/1 matrix selecting input row (2*oh + kh - 1) for every conv output row.
    Out-of-range rows simply have no entry -> zero padding.  Output rows are canonical
    (b, oh) order, or parity-grouped ([all even oh][all odd oh]) to make MaxPool(2,2)
    an elementwise max of halves."""
    h_out = h_in // 2
    m = np.zeros((n_imgs * h_out, n_imgs * h_in), np.float32)
    for b in range(n_imgs):
        for oh in range(h_out):
            hh = STRIDE * oh + kh - PAD
            if not (0 <= hh < h_in):
                continue
            if parity_rows:
                r = (oh % 2) * (n_imgs * (h_out // 2)) + b * (h_out // 2) + oh // 2
            else:
                r = b * h_out + oh
            m[r, b * h_in + hh] = 1.0
    return m


def _conv_gemm_np(w_khkwcico, w_in, parity_cols):
    """Banded block-Toeplitz GEMM operand (one per kh): maps folded input lanes
    (w*Cin + ci) to folded output lanes (ow*Cout + co), absorbing kw taps, stride 2 and
    zero padding.  With parity_cols the output columns are grouped [even ow][odd ow]."""
    _, _, cin, cout = w_khkwcico.shape
    w_out = w_in // 2
    g = np.zeros((KSIZE, w_in * cin, w_out * cout), np.float32)
    for kh in range(KSIZE):
        for ow in range(w_out):
            if parity_cols:
                col = (ow % 2) * (w_out // 2) * cout + (ow // 2) * cout
            else:
                col = ow * cout
            for kw in range(KSIZE):
                wi = STRIDE * ow + kw - PAD
                if 0 <= wi < w_in:
                    g[kh, wi * cin:(wi + 1) * cin, col:col + cout] = w_khkwcico[kh, kw]
    return g


def init_params(key, batch=2, input_size=32, ndf=32, n_layers=2):
    """Random weights in PyTorch-equivalent shapes, restructured once (host-side) into the
    GEMM-friendly operands the fused kernel consumes.  Real PyTorch conv weights would be
    permuted (Cout,Cin,kh,kw) -> (kh,kw,Cin,Cout) and passed through the same expansion;
    the Linear weight (1, 128) would be transposed to (128, 1)."""
    assert input_size == 32 and n_layers == 2, "kernel is specialized to the default config"
    c0, c1 = 2, ndf
    c2 = min(c1 * 2, 512)          # 64
    c3 = min(c2 * 2, 512)          # 128
    ks = jax.random.split(key, 8)

    def rnd(k, shape, scale=0.05):
        return np.asarray(scale * jax.random.normal(k, shape, jnp.float32))

    w1, b1 = rnd(ks[0], (KSIZE, KSIZE, c0, c1)), rnd(ks[1], (c1,), 0.01)
    w2, b2 = rnd(ks[2], (KSIZE, KSIZE, c1, c2)), rnd(ks[3], (c2,), 0.01)
    w3, b3 = rnd(ks[4], (KSIZE, KSIZE, c2, c3)), rnd(ks[5], (c3,), 0.01)
    feat = (input_size // 32) ** 2 * c3
    wl, bl = rnd(ks[6], (feat, 1)), rnd(ks[7], (1, 1), 0.01)

    s0, s1, s2 = input_size, input_size // 2, input_size // 8   # conv input sizes: 32, 16, 4
    w1o, w2o, w3o = s0 // 2, s1 // 2, s2 // 2                   # conv output widths: 16, 8, 2

    # Row-selection stacks (per kh).  Conv3's stack is split by output-row parity so the
    # kernel never needs a sub-8-row slice.
    r1 = np.stack([_rowsel_np(batch, s0, kh, False) for kh in range(KSIZE)])
    r2 = np.stack([_rowsel_np(batch, s1, kh, True) for kh in range(KSIZE)])
    r3_full = np.stack([_rowsel_np(batch, s2, kh, True) for kh in range(KSIZE)])
    half3 = batch * (s2 // 2 // 2)
    r3 = np.stack([r3_full[:, :half3, :], r3_full[:, half3:, :]], axis=0)   # (2, 4, N, N*4)

    # Fold/tile matrices for block-1 BatchNorm (channels tiled along lanes in 4 blocks).
    blocks2 = w2o // 2
    fold2 = np.zeros((blocks2 * c2, c2), np.float32)
    for j in range(blocks2):
        fold2[j * c2:(j + 1) * c2, :] = np.eye(c2, dtype=np.float32)
    tile2 = np.ascontiguousarray(fold2.T)

    bf, f32 = jnp.bfloat16, jnp.float32
    return {
        "r1": jnp.asarray(r1, bf),
        "g1": jnp.asarray(_conv_gemm_np(w1, s0, False), bf),
        "b1": jnp.asarray(np.tile(b1, w1o)[None, :], f32),
        "r2": jnp.asarray(r2, bf),
        "g2": jnp.asarray(_conv_gemm_np(w2, s1, True), bf),
        "b2": jnp.asarray(np.tile(b2, w2o)[None, :], f32),
        "fold2": jnp.asarray(fold2, f32),
        "tile2": jnp.asarray(tile2, f32),
        "gm2": jnp.ones((1, c2), f32),    # BatchNorm gamma / beta (PyTorch init)
        "bt2": jnp.zeros((1, c2), f32),
        "r3": jnp.asarray(r3, bf),
        "g3": jnp.asarray(_conv_gemm_np(w3, s2, True), bf),
        "b3": jnp.asarray(np.tile(b3, w3o)[None, :], f32),
        "gm3": jnp.ones((1, c3), f32),
        "bt3": jnp.zeros((1, c3), f32),
        "wl": jnp.asarray(wl, f32),
        "bl": jnp.asarray(bl, f32),
    }


# --------------------------------------- main ---------------------------------------

if __name__ == "__main__":
    key = jax.random.PRNGKey(0)
    kx, kp = jax.random.split(key)
    batch, input_size = 2, 32                      # smallest size the module supports (S // 32 >= 1)
    # PyTorch-convention NCHW input with 2 channels (what the first conv expects).
    x = jax.random.normal(kx, (batch, 2, input_size, input_size), jnp.float32)
    params = init_params(kp, batch=batch, input_size=input_size)

    out = jax.block_until_ready(vanilla_discriminator(x, params))
    assert out.shape == (batch, 1) and out.dtype == jnp.float32
    assert bool(jnp.all(jnp.isfinite(out)))
    print("KERNEL_OK")
</pallas_src>

<mosaic_0001>
module attributes {stable_mosaic.version = 11 : i64} {
  func.func @_fused_disc_kernel(%arg0: i32, %arg1: memref<64x64xf32, #tpu.memory_space<vmem>>, %arg2: memref<4x32x64xbf16, #tpu.memory_space<vmem>>, %arg3: memref<4x64x512xbf16, #tpu.memory_space<vmem>>, %arg4: memref<1x512xf32, #tpu.memory_space<vmem>>, %arg5: memref<4x16x32xbf16, #tpu.memory_space<vmem>>, %arg6: memref<4x512x512xbf16, #tpu.memory_space<vmem>>, %arg7: memref<1x512xf32, #tpu.memory_space<vmem>>, %arg8: memref<256x64xf32, #tpu.memory_space<vmem>>, %arg9: memref<64x256xf32, #tpu.memory_space<vmem>>, %arg10: memref<1x64xf32, #tpu.memory_space<vmem>>, %arg11: memref<1x64xf32, #tpu.memory_space<vmem>>, %arg12: memref<2x4x2x8xbf16, #tpu.memory_space<vmem>>, %arg13: memref<4x256x256xbf16, #tpu.memory_space<vmem>>, %arg14: memref<1x256xf32, #tpu.memory_space<vmem>>, %arg15: memref<1x128xf32, #tpu.memory_space<vmem>>, %arg16: memref<1x128xf32, #tpu.memory_space<vmem>>, %arg17: memref<128x1xf32, #tpu.memory_space<vmem>>, %arg18: memref<1x1xf32, #tpu.memory_space<vmem>>, %arg19: memref<2x1xf32, #tpu.memory_space<vmem>>) attributes {dimension_semantics = [#tpu.dimension_semantics<arbitrary>], iteration_bounds = array<i64: 1>, scalar_prefetch = 0 : i64, scratch_operands = 0 : i64, tpu.core_type = #tpu.core_type<tc>, window_params = [{pipeline_mode = #tpu.pipeline_mode<synchronous>, transform_indices = @transform_0, window_bounds = array<i64: 64, 64>}, {pipeline_mode = #tpu.pipeline_mode<synchronous>, transform_indices = @transform_1, window_bounds = array<i64: 4, 32, 64>}, {pipeline_mode = #tpu.pipeline_mode<synchronous>, transform_indices = @transform_2, window_bounds = array<i64: 4, 64, 512>}, {pipeline_mode = #tpu.pipeline_mode<synchronous>, transform_indices = @transform_3, window_bounds = array<i64: 1, 512>}, {pipeline_mode = #tpu.pipeline_mode<synchronous>, transform_indices = @transform_4, window_bounds = array<i64: 4, 16, 32>}, {pipeline_mode = #tpu.pipeline_mode<synchronous>, transform_indices = @transform_5, window_bounds = array<i64: 4, 512, 512>}, {pipeline_mode = #tpu.pipeline_mode<synchronous>, transform_indices = @transform_6, window_bounds = array<i64: 1, 512>}, {pipeline_mode = #tpu.pipeline_mode<synchronous>, transform_indices = @transform_7, window_bounds = array<i64: 256, 64>}, {pipeline_mode = #tpu.pipeline_mode<synchronous>, transform_indices = @transform_8, window_bounds = array<i64: 64, 256>}, {pipeline_mode = #tpu.pipeline_mode<synchronous>, transform_indices = @transform_9, window_bounds = array<i64: 1, 64>}, {pipeline_mode = #tpu.pipeline_mode<synchronous>, transform_indices = @transform_10, window_bounds = array<i64: 1, 64>}, {pipeline_mode = #tpu.pipeline_mode<synchronous>, transform_indices = @transform_11, window_bounds = array<i64: 2, 4, 2, 8>}, {pipeline_mode = #tpu.pipeline_mode<synchronous>, transform_indices = @transform_12, window_bounds = array<i64: 4, 256, 256>}, {pipeline_mode = #tpu.pipeline_mode<synchronous>, transform_indices = @transform_13, window_bounds = array<i64: 1, 256>}, {pipeline_mode = #tpu.pipeline_mode<synchronous>, transform_indices = @transform_14, window_bounds = array<i64: 1, 128>}, {pipeline_mode = #tpu.pipeline_mode<synchronous>, transform_indices = @transform_15, window_bounds = array<i64: 1, 128>}, {pipeline_mode = #tpu.pipeline_mode<synchronous>, transform_indices = @transform_16, window_bounds = array<i64: 128, 1>}, {pipeline_mode = #tpu.pipeline_mode<synchronous>, transform_indices = @transform_17, window_bounds = array<i64: 1, 1>}, {pipeline_mode = #tpu.pipeline_mode<synchronous>, transform_indices = @transform_18, window_bounds = array<i64: 2, 1>}]} {
    %c0 = arith.constant 0 : index
    %c0_0 = arith.constant 0 : index
    %0 = vector.load %arg1[%c0, %c0_0] : memref<64x64xf32, #tpu.memory_space<vmem>>, vector<64x64xf32>
    %1 = arith.truncf %0 : vector<64x64xf32> to vector<64x64xbf16>
    %c0_1 = arith.constant 0 : index
    %c0_2 = arith.constant 0 : index
    %2 = vector.load %arg4[%c0_1, %c0_2] : memref<1x512xf32, #tpu.memory_space<vmem>>, vector<1x512xf32>
    %c0_3 = arith.constant 0 : index
    %c0_4 = arith.constant 0 : index
    %c0_5 = arith.constant 0 : index
    %3 = vector.load %arg2[%c0_3, %c0_4, %c0_5] : memref<4x32x64xbf16, #tpu.memory_space<vmem>>, vector<1x32x64xbf16>
    %4 = vector.shape_cast %3 : vector<1x32x64xbf16> to vector<32x64xbf16>
    %cst = arith.constant dense<0.000000e+00> : vector<32x64xf32>
    %5 = tpu.matmul %4, %1, %cst {dimension_numbers = #tpu.dot_dimension_numbers<[1], [0], [0], [1], [0, 0, 1, 1], [], []>} : vector<32x64xbf16>, vector<64x64xbf16>, vector<32x64xf32> -> vector<32x64xf32>
    %6 = arith.truncf %5 : vector<32x64xf32> to vector<32x64xbf16>
    %c0_6 = arith.constant 0 : index
    %c0_7 = arith.constant 0 : index
    %c0_8 = arith.constant 0 : index
    %7 = vector.load %arg3[%c0_6, %c0_7, %c0_8] : memref<4x64x512xbf16, #tpu.memory_space<vmem>>, vector<1x64x512xbf16>
    %8 = vector.shape_cast %7 : vector<1x64x512xbf16> to vector<64x512xbf16>
    %cst_9 = arith.constant dense<0.000000e+00> : vector<32x512xf32>
    %9 = tpu.matmul %6, %8, %cst_9 {dimension_numbers = #tpu.dot_dimension_numbers<[1], [0], [0], [1], [0, 0, 1, 1], [], []>} : vector<32x64xbf16>, vector<64x512xbf16>, vector<32x512xf32> -> vector<32x512xf32>
    %c1 = arith.constant 1 : index
    %c0_10 = arith.constant 0 : index
    %c0_11 = arith.constant 0 : index
    %10 = vector.load %arg2[%c1, %c0_10, %c0_11] : memref<4x32x64xbf16, #tpu.memory_space<vmem>>, vector<1x32x64xbf16>
    %11 = vector.shape_cast %10 : vector<1x32x64xbf16> to vector<32x64xbf16>
    %cst_12 = arith.constant dense<0.000000e+00> : vector<32x64xf32>
    %12 = tpu.matmul %11, %1, %cst_12 {dimension_numbers = #tpu.dot_dimension_numbers<[1], [0], [0], [1], [0, 0, 1, 1], [], []>} : vector<32x64xbf16>, vector<64x64xbf16>, vector<32x64xf32> -> vector<32x64xf32>
    %13 = arith.truncf %12 : vector<32x64xf32> to vector<32x64xbf16>
    %c1_13 = arith.constant 1 : index
    %c0_14 = arith.constant 0 : index
    %c0_15 = arith.constant 0 : index
    %14 = vector.load %arg3[%c1_13, %c0_14, %c0_15] : memref<4x64x512xbf16, #tpu.memory_space<vmem>>, vector<1x64x512xbf16>
    %15 = vector.shape_cast %14 : vector<1x64x512xbf16> to vector<64x512xbf16>
    %cst_16 = arith.constant dense<0.000000e+00> : vector<32x512xf32>
    %16 = tpu.matmul %13, %15, %cst_16 {dimension_numbers = #tpu.dot_dimension_numbers<[1], [0], [0], [1], [0, 0, 1, 1], [], []>} : vector<32x64xbf16>, vector<64x512xbf16>, vector<32x512xf32> -> vector<32x512xf32>
    %17 = arith.addf %9, %16 : vector<32x512xf32>
    %c2 = arith.constant 2 : index
    %c0_17 = arith.constant 0 : index
    %c0_18 = arith.constant 0 : index
    %18 = vector.load %arg2[%c2, %c0_17, %c0_18] : memref<4x32x64xbf16, #tpu.memory_space<vmem>>, vector<1x32x64xbf16>
    %19 = vector.shape_cast %18 : vector<1x32x64xbf16> to vector<32x64xbf16>
    %cst_19 = arith.constant dense<0.000000e+00> : vector<32x64xf32>
    %20 = tpu.matmul %19, %1, %cst_19 {dimension_numbers = #tpu.dot_dimension_numbers<[1], [0], [0], [1], [0, 0, 1, 1], [], []>} : vector<32x64xbf16>, vector<64x64xbf16>, vector<32x64xf32> -> vector<32x64xf32>
    %21 = arith.truncf %20 : vector<32x64xf32> to vector<32x64xbf16>
    %c2_20 = arith.constant 2 : index
    %c0_21 = arith.constant 0 : index
    %c0_22 = arith.constant 0 : index
    %22 = vector.load %arg3[%c2_20, %c0_21, %c0_22] : memref<4x64x512xbf16, #tpu.memory_space<vmem>>, vector<1x64x512xbf16>
    %23 = vector.shape_cast %22 : vector<1x64x512xbf16> to vector<64x512xbf16>
    %cst_23 = arith.constant dense<0.000000e+00> : vector<32x512xf32>
    %24 = tpu.matmul %21, %23, %cst_23 {dimension_numbers = #tpu.dot_dimension_numbers<[1], [0], [0], [1], [0, 0, 1, 1], [], []>} : vector<32x64xbf16>, vector<64x512xbf16>, vector<32x512xf32> -> vector<32x512xf32>
    %25 = arith.addf %17, %24 : vector<32x512xf32>
    %c3 = arith.constant 3 : index
    %c0_24 = arith.constant 0 : index
    %c0_25 = arith.constant 0 : index
    %26 = vector.load %arg2[%c3, %c0_24, %c0_25] : memref<4x32x64xbf16, #tpu.memory_space<vmem>>, vector<1x32x64xbf16>
    %27 = vector.shape_cast %26 : vector<1x32x64xbf16> to vector<32x64xbf16>
    %cst_26 = arith.constant dense<0.000000e+00> : vector<32x64xf32>
    %28 = tpu.matmul %27, %1, %cst_26 {dimension_numbers = #tpu.dot_dimension_numbers<[1], [0], [0], [1], [0, 0, 1, 1], [], []>} : vector<32x64xbf16>, vector<64x64xbf16>, vector<32x64xf32> -> vector<32x64xf32>
    %29 = arith.truncf %28 : vector<32x64xf32> to vector<32x64xbf16>
    %c3_27 = arith.constant 3 : index
    %c0_28 = arith.constant 0 : index
    %c0_29 = arith.constant 0 : index
    %30 = vector.load %arg3[%c3_27, %c0_28, %c0_29] : memref<4x64x512xbf16, #tpu.memory_space<vmem>>, vector<1x64x512xbf16>
    %31 = vector.shape_cast %30 : vector<1x64x512xbf16> to vector<64x512xbf16>
    %cst_30 = arith.constant dense<0.000000e+00> : vector<32x512xf32>
    %32 = tpu.matmul %29, %31, %cst_30 {dimension_numbers = #tpu.dot_dimension_numbers<[1], [0], [0], [1], [0, 0, 1, 1], [], []>} : vector<32x64xbf16>, vector<64x512xbf16>, vector<32x512xf32> -> vector<32x512xf32>
    %33 = arith.addf %25, %32 : vector<32x512xf32>
    %34 = vector.broadcast %2 : vector<1x512xf32> to vector<32x512xf32>
    %35 = arith.addf %33, %34 : vector<32x512xf32>
    %c0_31 = arith.constant 0 : index
    %c0_32 = arith.constant 0 : index
    %36 = vector.load %arg7[%c0_31, %c0_32] : memref<1x512xf32, #tpu.memory_space<vmem>>, vector<1x512xf32>
    %37 = arith.truncf %35 : vector<32x512xf32> to vector<32x512xbf16>
    %c0_33 = arith.constant 0 : index
    %c0_34 = arith.constant 0 : index
    %c0_35 = arith.constant 0 : index
    %38 = vector.load %arg5[%c0_33, %c0_34, %c0_35] : memref<4x16x32xbf16, #tpu.memory_space<vmem>>, vector<1x16x32xbf16>
    %39 = vector.shape_cast %38 : vector<1x16x32xbf16> to vector<16x32xbf16>
    %cst_36 = arith.constant dense<0.000000e+00> : vector<16x512xf32>
    %40 = tpu.matmul %39, %37, %cst_36 {dimension_numbers = #tpu.dot_dimension_numbers<[1], [0], [0], [1], [0, 0, 1, 1], [], []>} : vector<16x32xbf16>, vector<32x512xbf16>, vector<16x512xf32> -> vector<16x512xf32>
    %41 = arith.truncf %40 : vector<16x512xf32> to vector<16x512xbf16>
    %c0_37 = arith.constant 0 : index
    %c0_38 = arith.constant 0 : index
    %c0_39 = arith.constant 0 : index
    %42 = vector.load %arg6[%c0_37, %c0_38, %c0_39] : memref<4x512x512xbf16, #tpu.memory_space<vmem>>, vector<1x512x512xbf16>
    %43 = vector.shape_cast %42 : vector<1x512x512xbf16> to vector<512x512xbf16>
    %cst_40 = arith.constant dense<0.000000e+00> : vector<16x512xf32>
    %44 = tpu.matmul %41, %43, %cst_40 {dimension_numbers = #tpu.dot_dimension_numbers<[1], [0], [0], [1], [0, 0, 1, 1], [], []>} : vector<16x512xbf16>, vector<512x512xbf16>, vector<16x512xf32> -> vector<16x512xf32>
    %c1_41 = arith.constant 1 : index
    %c0_42 = arith.constant 0 : index
    %c0_43 = arith.constant 0 : index
    %45 = vector.load %arg5[%c1_41, %c0_42, %c0_43] : memref<4x16x32xbf16, #tpu.memory_space<vmem>>, vector<1x16x32xbf16>
    %46 = vector.shape_cast %45 : vector<1x16x32xbf16> to vector<16x32xbf16>
    %cst_44 = arith.constant dense<0.000000e+00> : vector<16x512xf32>
    %47 = tpu.matmul %46, %37, %cst_44 {dimension_numbers = #tpu.dot_dimension_numbers<[1], [0], [0], [1], [0, 0, 1, 1], [], []>} : vector<16x32xbf16>, vector<32x512xbf16>, vector<16x512xf32> -> vector<16x512xf32>
    %48 = arith.truncf %47 : vector<16x512xf32> to vector<16x512xbf16>
    %c1_45 = arith.constant 1 : index
    %c0_46 = arith.constant 0 : index
    %c0_47 = arith.constant 0 : index
    %49 = vector.load %arg6[%c1_45, %c0_46, %c0_47] : memref<4x512x512xbf16, #tpu.memory_space<vmem>>, vector<1x512x512xbf16>
    %50 = vector.shape_cast %49 : vector<1x512x512xbf16> to vector<512x512xbf16>
    %cst_48 = arith.constant dense<0.000000e+00> : vector<16x512xf32>
    %51 = tpu.matmul %48, %50, %cst_48 {dimension_numbers = #tpu.dot_dimension_numbers<[1], [0], [0], [1], [0, 0, 1, 1], [], []>} : vector<16x512xbf16>, vector<512x512xbf16>, vector<16x512xf32> -> vector<16x512xf32>
    %52 = arith.addf %44, %51 : vector<16x512xf32>
    %c2_49 = arith.constant 2 : index
    %c0_50 = arith.constant 0 : index
    %c0_51 = arith.constant 0 : index
    %53 = vector.load %arg5[%c2_49, %c0_50, %c0_51] : memref<4x16x32xbf16, #tpu.memory_space<vmem>>, vector<1x16x32xbf16>
    %54 = vector.shape_cast %53 : vector<1x16x32xbf16> to vector<16x32xbf16>
    %cst_52 = arith.constant dense<0.000000e+00> : vector<16x512xf32>
    %55 = tpu.matmul %54, %37, %cst_52 {dimension_numbers = #tpu.dot_dimension_numbers<[1], [0], [0], [1], [0, 0, 1, 1], [], []>} : vector<16x32xbf16>, vector<32x512xbf16>, vector<16x512xf32> -> vector<16x512xf32>
    %56 = arith.truncf %55 : vector<16x512xf32> to vector<16x512xbf16>
    %c2_53 = arith.constant 2 : index
    %c0_54 = arith.constant 0 : index
    %c0_55 = arith.constant 0 : index
    %57 = vector.load %arg6[%c2_53, %c0_54, %c0_55] : memref<4x512x512xbf16, #tpu.memory_space<vmem>>, vector<1x512x512xbf16>
    %58 = vector.shape_cast %57 : vector<1x512x512xbf16> to vector<512x512xbf16>
    %cst_56 = arith.constant dense<0.000000e+00> : vector<16x512xf32>
    %59 = tpu.matmul %56, %58, %cst_56 {dimension_numbers = #tpu.dot_dimension_numbers<[1], [0], [0], [1], [0, 0, 1, 1], [], []>} : vector<16x512xbf16>, vector<512x512xbf16>, vector<16x512xf32> -> vector<16x512xf32>
    %60 = arith.addf %52, %59 : vector<16x512xf32>
    %c3_57 = arith.constant 3 : index
    %c0_58 = arith.constant 0 : index
    %c0_59 = arith.constant 0 : index
    %61 = vector.load %arg5[%c3_57, %c0_58, %c0_59] : memref<4x16x32xbf16, #tpu.memory_space<vmem>>, vector<1x16x32xbf16>
    %62 = vector.shape_cast %61 : vector<1x16x32xbf16> to vector<16x32xbf16>
    %cst_60 = arith.constant dense<0.000000e+00> : vector<16x512xf32>
    %63 = tpu.matmul %62, %37, %cst_60 {dimension_numbers = #tpu.dot_dimension_numbers<[1], [0], [0], [1], [0, 0, 1, 1], [], []>} : vector<16x32xbf16>, vector<32x512xbf16>, vector<16x512xf32> -> vector<16x512xf32>
    %64 = arith.truncf %63 : vector<16x512xf32> to vector<16x512xbf16>
    %c3_61 = arith.constant 3 : index
    %c0_62 = arith.constant 0 : index
    %c0_63 = arith.constant 0 : index
    %65 = vector.load %arg6[%c3_61, %c0_62, %c0_63] : memref<4x512x512xbf16, #tpu.memory_space<vmem>>, vector<1x512x512xbf16>
    %66 = vector.shape_cast %65 : vector<1x512x512xbf16> to vector<512x512xbf16>
    %cst_64 = arith.constant dense<0.000000e+00> : vector<16x512xf32>
    %67 = tpu.matmul %64, %66, %cst_64 {dimension_numbers = #tpu.dot_dimension_numbers<[1], [0], [0], [1], [0, 0, 1, 1], [], []>} : vector<16x512xbf16>, vector<512x512xbf16>, vector<16x512xf32> -> vector<16x512xf32>
    %68 = arith.addf %60, %67 : vector<16x512xf32>
    %69 = vector.broadcast %36 : vector<1x512xf32> to vector<16x512xf32>
    %70 = arith.addf %68, %69 : vector<16x512xf32>
    %71 = vector.extract_strided_slice %70 {offsets = [0, 0], sizes = [8, 512], strides = [1, 1]} : vector<16x512xf32> to vector<8x512xf32>
    %72 = vector.extract_strided_slice %70 {offsets = [8, 0], sizes = [8, 512], strides = [1, 1]} : vector<16x512xf32> to vector<8x512xf32>
    %73 = arith.maximumf %71, %72 : vector<8x512xf32>
    %74 = vector.extract_strided_slice %73 {offsets = [0, 0], sizes = [8, 256], strides = [1, 1]} : vector<8x512xf32> to vector<8x256xf32>
    %75 = vector.extract_strided_slice %73 {offsets = [0, 256], sizes = [8, 256], strides = [1, 1]} : vector<8x512xf32> to vector<8x256xf32>
    %76 = arith.maximumf %74, %75 : vector<8x256xf32>
    %cst_65 = arith.constant dense<0.000000e+00> : vector<256xf32>
    %77 = vector.multi_reduction <add>, %76, %cst_65 [0] : vector<8x256xf32> to vector<256xf32>
    %78 = vector.shape_cast %77 : vector<256xf32> to vector<1x256xf32>
    %c0_66 = arith.constant 0 : index
    %c0_67 = arith.constant 0 : index
    %79 = vector.load %arg8[%c0_66, %c0_67] : memref<256x64xf32, #tpu.memory_space<vmem>>, vector<256x64xf32>
    %cst_68 = arith.constant dense<0.000000e+00> : vector<1x64xf32>
    %80 = tpu.matmul %78, %79, %cst_68 {dimension_numbers = #tpu.dot_dimension_numbers<[1], [0], [0], [1], [0, 0, 1, 1], [], []>} : vector<1x256xf32>, vector<256x64xf32>, vector<1x64xf32> -> vector<1x64xf32>
    %cst_69 = arith.constant 3.125000e-02 : f32
    %81 = vector.broadcast %cst_69 : f32 to vector<1x64xf32>
    %82 = arith.mulf %80, %81 : vector<1x64xf32>
    %c0_70 = arith.constant 0 : index
    %c0_71 = arith.constant 0 : index
    %83 = vector.load %arg9[%c0_70, %c0_71] : memref<64x256xf32, #tpu.memory_space<vmem>>, vector<64x256xf32>
    %cst_72 = arith.constant dense<0.000000e+00> : vector<1x256xf32>
    %84 = tpu.matmul %82, %83, %cst_72 {dimension_numbers = #tpu.dot_dimension_numbers<[1], [0], [0], [1], [0, 0, 1, 1], [], []>} : vector<1x64xf32>, vector<64x256xf32>, vector<1x256xf32> -> vector<1x256xf32>
    %85 = vector.broadcast %84 : vector<1x256xf32> to vector<8x256xf32>
    %86 = arith.subf %76, %85 : vector<8x256xf32>
    %87 = arith.mulf %86, %86 : vector<8x256xf32>
    %cst_73 = arith.constant dense<0.000000e+00> : vector<256xf32>
    %88 = vector.multi_reduction <add>, %87, %cst_73 [0] : vector<8x256xf32> to vector<256xf32>
    %89 = vector.shape_cast %88 : vector<256xf32> to vector<1x256xf32>
    %c0_74 = arith.constant 0 : index
    %c0_75 = arith.constant 0 : index
    %90 = vector.load %arg8[%c0_74, %c0_75] : memref<256x64xf32, #tpu.memory_space<vmem>>, vector<256x64xf32>
    %cst_76 = arith.constant dense<0.000000e+00> : vector<1x64xf32>
    %91 = tpu.matmul %89, %90, %cst_76 {dimension_numbers = #tpu.dot_dimension_numbers<[1], [0], [0], [1], [0, 0, 1, 1], [], []>} : vector<1x256xf32>, vector<256x64xf32>, vector<1x64xf32> -> vector<1x64xf32>
    %cst_77 = arith.constant 3.125000e-02 : f32
    %92 = vector.broadcast %cst_77 : f32 to vector<1x64xf32>
    %93 = arith.mulf %91, %92 : vector<1x64xf32>
    %c0_78 = arith.constant 0 : index
    %c0_79 = arith.constant 0 : index
    %94 = vector.load %arg10[%c0_78, %c0_79] : memref<1x64xf32, #tpu.memory_space<vmem>>, vector<1x64xf32>
    %cst_80 = arith.constant 9.99999974E-6 : f32
    %95 = vector.broadcast %cst_80 : f32 to vector<1x64xf32>
    %96 = arith.addf %93, %95 : vector<1x64xf32>
    %97 = math.rsqrt %96 : vector<1x64xf32>
    %98 = arith.mulf %94, %97 : vector<1x64xf32>
    %c0_81 = arith.constant 0 : index
    %c0_82 = arith.constant 0 : index
    %99 = vector.load %arg11[%c0_81, %c0_82] : memref<1x64xf32, #tpu.memory_space<vmem>>, vector<1x64xf32>
    %100 = arith.mulf %82, %98 : vector<1x64xf32>
    %101 = arith.subf %99, %100 : vector<1x64xf32>
    %c0_83 = arith.constant 0 : index
    %c0_84 = arith.constant 0 : index
    %102 = vector.load %arg9[%c0_83, %c0_84] : memref<64x256xf32, #tpu.memory_space<vmem>>, vector<64x256xf32>
    %cst_85 = arith.constant dense<0.000000e+00> : vector<1x256xf32>
    %103 = tpu.matmul %98, %102, %cst_85 {dimension_numbers = #tpu.dot_dimension_numbers<[1], [0], [0], [1], [0, 0, 1, 1], [], []>} : vector<1x64xf32>, vector<64x256xf32>, vector<1x256xf32> -> vector<1x256xf32>
    %104 = vector.broadcast %103 : vector<1x256xf32> to vector<8x256xf32>
    %105 = arith.mulf %76, %104 : vector<8x256xf32>
    %c0_86 = arith.constant 0 : index
    %c0_87 = arith.constant 0 : index
    %106 = vector.load %arg9[%c0_86, %c0_87] : memref<64x256xf32, #tpu.memory_space<vmem>>, vector<64x256xf32>
    %cst_88 = arith.constant dense<0.000000e+00> : vector<1x256xf32>
    %107 = tpu.matmul %101, %106, %cst_88 {dimension_numbers = #tpu.dot_dimension_numbers<[1], [0], [0], [1], [0, 0, 1, 1], [], []>} : vector<1x64xf32>, vector<64x256xf32>, vector<1x256xf32> -> vector<1x256xf32>
    %108 = vector.broadcast %107 : vector<1x256xf32> to vector<8x256xf32>
    %109 = arith.addf %105, %108 : vector<8x256xf32>
    %cst_89 = arith.constant 0.000000e+00 : f32
    %110 = vector.broadcast %cst_89 : f32 to vector<8x256xf32>
    %111 = arith.cmpf oge, %109, %110 : vector<8x256xf32>
    %cst_90 = arith.constant 2.000000e-01 : f32
    %112 = vector.broadcast %cst_90 : f32 to vector<8x256xf32>
    %113 = arith.mulf %112, %109 : vector<8x256xf32>
    %114 = arith.select %111, %109, %113 : vector<8x256xi1>, vector<8x256xf32>
    %115 = arith.truncf %114 : vector<8x256xf32> to vector<8x256xbf16>
    %c0_91 = arith.constant 0 : index
    %c0_92 = arith.constant 0 : index
    %116 = vector.load %arg14[%c0_91, %c0_92] : memref<1x256xf32, #tpu.memory_space<vmem>>, vector<1x256xf32>
    %c0_93 = arith.constant 0 : index
    %c0_94 = arith.constant 0 : index
    %c0_95 = arith.constant 0 : index
    %c0_96 = arith.constant 0 : index
    %117 = vector.load %arg12[%c0_93, %c0_94, %c0_95, %c0_96] : memref<2x4x2x8xbf16, #tpu.memory_space<vmem>>, vector<1x1x2x8xbf16>
    %118 = vector.shape_cast %117 : vector<1x1x2x8xbf16> to vector<2x8xbf16>
    %cst_97 = arith.constant dense<0.000000e+00> : vector<2x256xf32>
    %119 = tpu.matmul %118, %115, %cst_97 {dimension_numbers = #tpu.dot_dimension_numbers<[1], [0], [0], [1], [0, 0, 1, 1], [], []>} : vector<2x8xbf16>, vector<8x256xbf16>, vector<2x256xf32> -> vector<2x256xf32>
    %120 = arith.truncf %119 : vector<2x256xf32> to vector<2x256xbf16>
    %c0_98 = arith.constant 0 : index
    %c0_99 = arith.constant 0 : index
    %c0_100 = arith.constant 0 : index
    %121 = vector.load %arg13[%c0_98, %c0_99, %c0_100] : memref<4x256x256xbf16, #tpu.memory_space<vmem>>, vector<1x256x256xbf16>
    %122 = vector.shape_cast %121 : vector<1x256x256xbf16> to vector<256x256xbf16>
    %cst_101 = arith.constant dense<0.000000e+00> : vector<2x256xf32>
    %123 = tpu.matmul %120, %122, %cst_101 {dimension_numbers = #tpu.dot_dimension_numbers<[1], [0], [0], [1], [0, 0, 1, 1], [], []>} : vector<2x256xbf16>, vector<256x256xbf16>, vector<2x256xf32> -> vector<2x256xf32>
    %c0_102 = arith.constant 0 : index
    %c1_103 = arith.constant 1 : index
    %c0_104 = arith.constant 0 : index
    %c0_105 = arith.constant 0 : index
    %124 = vector.load %arg12[%c0_102, %c1_103, %c0_104, %c0_105] : memref<2x4x2x8xbf16, #tpu.memory_space<vmem>>, vector<1x1x2x8xbf16>
    %125 = vector.shape_cast %124 : vector<1x1x2x8xbf16> to vector<2x8xbf16>
    %cst_106 = arith.constant dense<0.000000e+00> : vector<2x256xf32>
    %126 = tpu.matmul %125, %115, %cst_106 {dimension_numbers = #tpu.dot_dimension_numbers<[1], [0], [0], [1], [0, 0, 1, 1], [], []>} : vector<2x8xbf16>, vector<8x256xbf16>, vector<2x256xf32> -> vector<2x256xf32>
    %127 = arith.truncf %126 : vector<2x256xf32> to vector<2x256xbf16>
    %c1_107 = arith.constant 1 : index
    %c0_108 = arith.constant 0 : index
    %c0_109 = arith.constant 0 : index
    %128 = vector.load %arg13[%c1_107, %c0_108, %c0_109] : memref<4x256x256xbf16, #tpu.memory_space<vmem>>, vector<1x256x256xbf16>
    %129 = vector.shape_cast %128 : vector<1x256x256xbf16> to vector<256x256xbf16>
    %cst_110 = arith.constant dense<0.000000e+00> : vector<2x256xf32>
    %130 = tpu.matmul %127, %129, %cst_110 {dimension_numbers = #tpu.dot_dimension_numbers<[1], [0], [0], [1], [0, 0, 1, 1], [], []>} : vector<2x256xbf16>, vector<256x256xbf16>, vector<2x256xf32> -> vector<2x256xf32>
    %131 = arith.addf %123, %130 : vector<2x256xf32>
    %c0_111 = arith.constant 0 : index
    %c2_112 = arith.constant 2 : index
    %c0_113 = arith.constant 0 : index
    %c0_114 = arith.constant 0 : index
    %132 = vector.load %arg12[%c0_111, %c2_112, %c0_113, %c0_114] : memref<2x4x2x8xbf16, #tpu.memory_space<vmem>>, vector<1x1x2x8xbf16>
    %133 = vector.shape_cast %132 : vector<1x1x2x8xbf16> to vector<2x8xbf16>
    %cst_115 = arith.constant dense<0.000000e+00> : vector<2x256xf32>
    %134 = tpu.matmul %133, %115, %cst_115 {dimension_numbers = #tpu.dot_dimension_numbers<[1], [0], [0], [1], [0, 0, 1, 1], [], []>} : vector<2x8xbf16>, vector<8x256xbf16>, vector<2x256xf32> -> vector<2x256xf32>
    %135 = arith.truncf %134 : vector<2x256xf32> to vector<2x256xbf16>
    %c2_116 = arith.constant 2 : index
    %c0_117 = arith.constant 0 : index
    %c0_118 = arith.constant 0 : index
    %136 = vector.load %arg13[%c2_116, %c0_117, %c0_118] : memref<4x256x256xbf16, #tpu.memory_space<vmem>>, vector<1x256x256xbf16>
    %137 = vector.shape_cast %136 : vector<1x256x256xbf16> to vector<256x256xbf16>
    %cst_119 = arith.constant dense<0.000000e+00> : vector<2x256xf32>
    %138 = tpu.matmul %135, %137, %cst_119 {dimension_numbers = #tpu.dot_dimension_numbers<[1], [0], [0], [1], [0, 0, 1, 1], [], []>} : vector<2x256xbf16>, vector<256x256xbf16>, vector<2x256xf32> -> vector<2x256xf32>
    %139 = arith.addf %131, %138 : vector<2x256xf32>
    %c0_120 = arith.constant 0 : index
    %c3_121 = arith.constant 3 : index
    %c0_122 = arith.constant 0 : index
    %c0_123 = arith.constant 0 : index
    %140 = vector.load %arg12[%c0_120, %c3_121, %c0_122, %c0_123] : memref<2x4x2x8xbf16, #tpu.memory_space<vmem>>, vector<1x1x2x8xbf16>
    %141 = vector.shape_cast %140 : vector<1x1x2x8xbf16> to vector<2x8xbf16>
    %cst_124 = arith.constant dense<0.000000e+00> : vector<2x256xf32>
    %142 = tpu.matmul %141, %115, %cst_124 {dimension_numbers = #tpu.dot_dimension_numbers<[1], [0], [0], [1], [0, 0, 1, 1], [], []>} : vector<2x8xbf16>, vector<8x256xbf16>, vector<2x256xf32> -> vector<2x256xf32>
    %143 = arith.truncf %142 : vector<2x256xf32> to vector<2x256xbf16>
    %c3_125 = arith.constant 3 : index
    %c0_126 = arith.constant 0 : index
    %c0_127 = arith.constant 0 : index
    %144 = vector.load %arg13[%c3_125, %c0_126, %c0_127] : memref<4x256x256xbf16, #tpu.memory_space<vmem>>, vector<1x256x256xbf16>
    %145 = vector.shape_cast %144 : vector<1x256x256xbf16> to vector<256x256xbf16>
    %cst_128 = arith.constant dense<0.000000e+00> : vector<2x256xf32>
    %146 = tpu.matmul %143, %145, %cst_128 {dimension_numbers = #tpu.dot_dimension_numbers<[1], [0], [0], [1], [0, 0, 1, 1], [], []>} : vector<2x256xbf16>, vector<256x256xbf16>, vector<2x256xf32> -> vector<2x256xf32>
    %147 = arith.addf %139, %146 : vector<2x256xf32>
    %148 = vector.broadcast %116 : vector<1x256xf32> to vector<2x256xf32>
    %149 = arith.addf %147, %148 : vector<2x256xf32>
    %c0_129 = arith.constant 0 : index
    %c0_130 = arith.constant 0 : index
    %150 = vector.load %arg14[%c0_129, %c0_130] : memref<1x256xf32, #tpu.memory_space<vmem>>, vector<1x256xf32>
    %c1_131 = arith.constant 1 : index
    %c0_132 = arith.constant 0 : index
    %c0_133 = arith.constant 0 : index
    %c0_134 = arith.constant 0 : index
    %151 = vector.load %arg12[%c1_131, %c0_132, %c0_133, %c0_134] : memref<2x4x2x8xbf16, #tpu.memory_space<vmem>>, vector<1x1x2x8xbf16>
    %152 = vector.shape_cast %151 : vector<1x1x2x8xbf16> to vector<2x8xbf16>
    %cst_135 = arith.constant dense<0.000000e+00> : vector<2x256xf32>
    %153 = tpu.matmul %152, %115, %cst_135 {dimension_numbers = #tpu.dot_dimension_numbers<[1], [0], [0], [1], [0, 0, 1, 1], [], []>} : vector<2x8xbf16>, vector<8x256xbf16>, vector<2x256xf32> -> vector<2x256xf32>
    %154 = arith.truncf %153 : vector<2x256xf32> to vector<2x256xbf16>
    %c0_136 = arith.constant 0 : index
    %c0_137 = arith.constant 0 : index
    %c0_138 = arith.constant 0 : index
    %155 = vector.load %arg13[%c0_136, %c0_137, %c0_138] : memref<4x256x256xbf16, #tpu.memory_space<vmem>>, vector<1x256x256xbf16>
    %156 = vector.shape_cast %155 : vector<1x256x256xbf16> to vector<256x256xbf16>
    %cst_139 = arith.constant dense<0.000000e+00> : vector<2x256xf32>
    %157 = tpu.matmul %154, %156, %cst_139 {dimension_numbers = #tpu.dot_dimension_numbers<[1], [0], [0], [1], [0, 0, 1, 1], [], []>} : vector<2x256xbf16>, vector<256x256xbf16>, vector<2x256xf32> -> vector<2x256xf32>
    %c1_140 = arith.constant 1 : index
    %c1_141 = arith.constant 1 : index
    %c0_142 = arith.constant 0 : index
    %c0_143 = arith.constant 0 : index
    %158 = vector.load %arg12[%c1_140, %c1_141, %c0_142, %c0_143] : memref<2x4x2x8xbf16, #tpu.memory_space<vmem>>, vector<1x1x2x8xbf16>
    %159 = vector.shape_cast %158 : vector<1x1x2x8xbf16> to vector<2x8xbf16>
    %cst_144 = arith.constant dense<0.000000e+00> : vector<2x256xf32>
    %160 = tpu.matmul %159, %115, %cst_144 {dimension_numbers = #tpu.dot_dimension_numbers<[1], [0], [0], [1], [0, 0, 1, 1], [], []>} : vector<2x8xbf16>, vector<8x256xbf16>, vector<2x256xf32> -> vector<2x256xf32>
    %161 = arith.truncf %160 : vector<2x256xf32> to vector<2x256xbf16>
    %c1_145 = arith.constant 1 : index
    %c0_146 = arith.constant 0 : index
    %c0_147 = arith.constant 0 : index
    %162 = vector.load %arg13[%c1_145, %c0_146, %c0_147] : memref<4x256x256xbf16, #tpu.memory_space<vmem>>, vector<1x256x256xbf16>
    %163 = vector.shape_cast %162 : vector<1x256x256xbf16> to vector<256x256xbf16>
    %cst_148 = arith.constant dense<0.000000e+00> : vector<2x256xf32>
    %164 = tpu.matmul %161, %163, %cst_148 {dimension_numbers = #tpu.dot_dimension_numbers<[1], [0], [0], [1], [0, 0, 1, 1], [], []>} : vector<2x256xbf16>, vector<256x256xbf16>, vector<2x256xf32> -> vector<2x256xf32>
    %165 = arith.addf %157, %164 : vector<2x256xf32>
    %c1_149 = arith.constant 1 : index
    %c2_150 = arith.constant 2 : index
    %c0_151 = arith.constant 0 : index
    %c0_152 = arith.constant 0 : index
    %166 = vector.load %arg12[%c1_149, %c2_150, %c0_151, %c0_152] : memref<2x4x2x8xbf16, #tpu.memory_space<vmem>>, vector<1x1x2x8xbf16>
    %167 = vector.shape_cast %166 : vector<1x1x2x8xbf16> to vector<2x8xbf16>
    %cst_153 = arith.constant dense<0.000000e+00> : vector<2x256xf32>
    %168 = tpu.matmul %167, %115, %cst_153 {dimension_numbers = #tpu.dot_dimension_numbers<[1], [0], [0], [1], [0, 0, 1, 1], [], []>} : vector<2x8xbf16>, vector<8x256xbf16>, vector<2x256xf32> -> vector<2x256xf32>
    %169 = arith.truncf %168 : vector<2x256xf32> to vector<2x256xbf16>
    %c2_154 = arith.constant 2 : index
    %c0_155 = arith.constant 0 : index
    %c0_156 = arith.constant 0 : index
    %170 = vector.load %arg13[%c2_154, %c0_155, %c0_156] : memref<4x256x256xbf16, #tpu.memory_space<vmem>>, vector<1x256x256xbf16>
    %171 = vector.shape_cast %170 : vector<1x256x256xbf16> to vector<256x256xbf16>
    %cst_157 = arith.constant dense<0.000000e+00> : vector<2x256xf32>
    %172 = tpu.matmul %169, %171, %cst_157 {dimension_numbers = #tpu.dot_dimension_numbers<[1], [0], [0], [1], [0, 0, 1, 1], [], []>} : vector<2x256xbf16>, vector<256x256xbf16>, vector<2x256xf32> -> vector<2x256xf32>
    %173 = arith.addf %165, %172 : vector<2x256xf32>
    %c1_158 = arith.constant 1 : index
    %c3_159 = arith.constant 3 : index
    %c0_160 = arith.constant 0 : index
    %c0_161 = arith.constant 0 : index
    %174 = vector.load %arg12[%c1_158, %c3_159, %c0_160, %c0_161] : memref<2x4x2x8xbf16, #tpu.memory_space<vmem>>, vector<1x1x2x8xbf16>
    %175 = vector.shape_cast %174 : vector<1x1x2x8xbf16> to vector<2x8xbf16>
    %cst_162 = arith.constant dense<0.000000e+00> : vector<2x256xf32>
    %176 = tpu.matmul %175, %115, %cst_162 {dimension_numbers = #tpu.dot_dimension_numbers<[1], [0], [0], [1], [0, 0, 1, 1], [], []>} : vector<2x8xbf16>, vector<8x256xbf16>, vector<2x256xf32> -> vector<2x256xf32>
    %177 = arith.truncf %176 : vector<2x256xf32> to vector<2x256xbf16>
    %c3_163 = arith.constant 3 : index
    %c0_164 = arith.constant 0 : index
    %c0_165 = arith.constant 0 : index
    %178 = vector.load %arg13[%c3_163, %c0_164, %c0_165] : memref<4x256x256xbf16, #tpu.memory_space<vmem>>, vector<1x256x256xbf16>
    %179 = vector.shape_cast %178 : vector<1x256x256xbf16> to vector<256x256xbf16>
    %cst_166 = arith.constant dense<0.000000e+00> : vector<2x256xf32>
    %180 = tpu.matmul %177, %179, %cst_166 {dimension_numbers = #tpu.dot_dimension_numbers<[1], [0], [0], [1], [0, 0, 1, 1], [], []>} : vector<2x256xbf16>, vector<256x256xbf16>, vector<2x256xf32> -> vector<2x256xf32>
    %181 = arith.addf %173, %180 : vector<2x256xf32>
    %182 = vector.broadcast %150 : vector<1x256xf32> to vector<2x256xf32>
    %183 = arith.addf %181, %182 : vector<2x256xf32>
    %184 = arith.maximumf %149, %183 : vector<2x256xf32>
    %185 = vector.extract_strided_slice %184 {offsets = [0, 0], sizes = [2, 128], strides = [1, 1]} : vector<2x256xf32> to vector<2x128xf32>
    %186 = vector.extract_strided_slice %184 {offsets = [0, 128], sizes = [2, 128], strides = [1, 1]} : vector<2x256xf32> to vector<2x128xf32>
    %187 = arith.maximumf %185, %186 : vector<2x128xf32>
    %cst_167 = arith.constant dense<0.000000e+00> : vector<128xf32>
    %188 = vector.multi_reduction <add>, %187, %cst_167 [0] : vector<2x128xf32> to vector<128xf32>
    %189 = vector.shape_cast %188 : vector<128xf32> to vector<1x128xf32>
    %cst_168 = arith.constant 2.000000e+00 : f32
    %190 = vector.broadcast %cst_168 : f32 to vector<1x128xf32>
    %191 = arith.divf %189, %190 : vector<1x128xf32>
    %192 = vector.broadcast %191 : vector<1x128xf32> to vector<2x128xf32>
    %193 = arith.subf %187, %192 : vector<2x128xf32>
    %194 = arith.mulf %193, %193 : vector<2x128xf32>
    %cst_169 = arith.constant dense<0.000000e+00> : vector<128xf32>
    %195 = vector.multi_reduction <add>, %194, %cst_169 [0] : vector<2x128xf32> to vector<128xf32>
    %196 = vector.shape_cast %195 : vector<128xf32> to vector<1x128xf32>
    %cst_170 = arith.constant 2.000000e+00 : f32
    %197 = vector.broadcast %cst_170 : f32 to vector<1x128xf32>
    %198 = arith.divf %196, %197 : vector<1x128xf32>
    %c0_171 = arith.constant 0 : index
    %c0_172 = arith.constant 0 : index
    %199 = vector.load %arg15[%c0_171, %c0_172] : memref<1x128xf32, #tpu.memory_space<vmem>>, vector<1x128xf32>
    %cst_173 = arith.constant 9.99999974E-6 : f32
    %200 = vector.broadcast %cst_173 : f32 to vector<1x128xf32>
    %201 = arith.addf %198, %200 : vector<1x128xf32>
    %202 = math.rsqrt %201 : vector<1x128xf32>
    %203 = arith.mulf %199, %202 : vector<1x128xf32>
    %204 = vector.broadcast %203 : vector<1x128xf32> to vector<2x128xf32>
    %205 = arith.mulf %193, %204 : vector<2x128xf32>
    %c0_174 = arith.constant 0 : index
    %c0_175 = arith.constant 0 : index
    %206 = vector.load %arg16[%c0_174, %c0_175] : memref<1x128xf32, #tpu.memory_space<vmem>>, vector<1x128xf32>
    %207 = vector.broadcast %206 : vector<1x128xf32> to vector<2x128xf32>
    %208 = arith.addf %205, %207 : vector<2x128xf32>
    %cst_176 = arith.constant 0.000000e+00 : f32
    %209 = vector.broadcast %cst_176 : f32 to vector<2x128xf32>
    %210 = arith.cmpf oge, %208, %209 : vector<2x128xf32>
    %cst_177 = arith.constant 2.000000e-01 : f32
    %211 = vector.broadcast %cst_177 : f32 to vector<2x128xf32>
    %212 = arith.mulf %211, %208 : vector<2x128xf32>
    %213 = arith.select %210, %208, %212 : vector<2x128xi1>, vector<2x128xf32>
    %c0_178 = arith.constant 0 : index
    %c0_179 = arith.constant 0 : index
    %214 = vector.load %arg17[%c0_178, %c0_179] : memref<128x1xf32, #tpu.memory_space<vmem>>, vector<128x1xf32>
    %cst_180 = arith.constant dense<0.000000e+00> : vector<2x1xf32>
    %215 = tpu.matmul %213, %214, %cst_180 {dimension_numbers = #tpu.dot_dimension_numbers<[1], [0], [0], [1], [0, 0, 1, 1], [], []>} : vector<2x128xf32>, vector<128x1xf32>, vector<2x1xf32> -> vector<2x1xf32>
    %c0_181 = arith.constant 0 : index
    %c0_182 = arith.constant 0 : index
    %216 = vector.load %arg18[%c0_181, %c0_182] : memref<1x1xf32, #tpu.memory_space<vmem>>, vector<1x1xf32>
    %217 = vector.broadcast %216 : vector<1x1xf32> to vector<2x1xf32>
    %218 = arith.addf %215, %217 : vector<2x1xf32>
    %c0_183 = arith.constant 0 : index
    %c0_184 = arith.constant 0 : index
    %219 = vector.load %arg19[%c0_183, %c0_184] : memref<2x1xf32, #tpu.memory_space<vmem>>, vector<2x1xf32>
    tpu.vector_store %arg19[%c0_183, %c0_184], %218 {strides = array<i32>} : memref<2x1xf32, #tpu.memory_space<vmem>>, vector<2x1xf32>,
    return
  }
  func.func @transform_0(%arg0: i32) -> (i32, i32) {
    %c0_i32 = arith.constant 0 : i32
    %c0_i32_0 = arith.constant 0 : i32
    %c0_i32_1 = arith.constant 0 : i32
    return %c0_i32, %c0_i32_0 : i32, i32
  }
  func.func @transform_1(%arg0: i32) -> (i32, i32, i32) {
    %c0_i32 = arith.constant 0 : i32
    %c0_i32_0 = arith.constant 0 : i32
    %c0_i32_1 = arith.constant 0 : i32
    %c0_i32_2 = arith.constant 0 : i32
    return %c0_i32, %c0_i32_0, %c0_i32_1 : i32, i32, i32
  }
  func.func @transform_2(%arg0: i32) -> (i32, i32, i32) {
    %c0_i32 = arith.constant 0 : i32
    %c0_i32_0 = arith.constant 0 : i32
    %c0_i32_1 = arith.constant 0 : i32
    %c0_i32_2 = arith.constant 0 : i32
    return %c0_i32, %c0_i32_0, %c0_i32_1 : i32, i32, i32
  }
  func.func @transform_3(%arg0: i32) -> (i32, i32) {
    %c0_i32 = arith.constant 0 : i32
    %c0_i32_0 = arith.constant 0 : i32
    %c0_i32_1 = arith.constant 0 : i32
    return %c0_i32, %c0_i32_0 : i32, i32
  }
  func.func @transform_4(%arg0: i32) -> (i32, i32, i32) {
    %c0_i32 = arith.constant 0 : i32
    %c0_i32_0 = arith.constant 0 : i32
    %c0_i32_1 = arith.constant 0 : i32
    %c0_i32_2 = arith.constant 0 : i32
    return %c0_i32, %c0_i32_0, %c0_i32_1 : i32, i32, i32
  }
  func.func @transform_5(%arg0: i32) -> (i32, i32, i32) {
    %c0_i32 = arith.constant 0 : i32
    %c0_i32_0 = arith.constant 0 : i32
    %c0_i32_1 = arith.constant 0 : i32
    %c0_i32_2 = arith.constant 0 : i32
    return %c0_i32, %c0_i32_0, %c0_i32_1 : i32, i32, i32
  }
  func.func @transform_6(%arg0: i32) -> (i32, i32) {
    %c0_i32 = arith.constant 0 : i32
    %c0_i32_0 = arith.constant 0 : i32
    %c0_i32_1 = arith.constant 0 : i32
    return %c0_i32, %c0_i32_0 : i32, i32
  }
  func.func @transform_7(%arg0: i32) -> (i32, i32) {
    %c0_i32 = arith.constant 0 : i32
    %c0_i32_0 = arith.constant 0 : i32
    %c0_i32_1 = arith.constant 0 : i32
    return %c0_i32, %c0_i32_0 : i32, i32
  }
  func.func @transform_8(%arg0: i32) -> (i32, i32) {
    %c0_i32 = arith.constant 0 : i32
    %c0_i32_0 = arith.constant 0 : i32
    %c0_i32_1 = arith.constant 0 : i32
    return %c0_i32, %c0_i32_0 : i32, i32
  }
  func.func @transform_9(%arg0: i32) -> (i32, i32) {
    %c0_i32 = arith.constant 0 : i32
    %c0_i32_0 = arith.constant 0 : i32
    %c0_i32_1 = arith.constant 0 : i32
    return %c0_i32, %c0_i32_0 : i32, i32
  }
  func.func @transform_10(%arg0: i32) -> (i32, i32) {
    %c0_i32 = arith.constant 0 : i32
    %c0_i32_0 = arith.constant 0 : i32
    %c0_i32_1 = arith.constant 0 : i32
    return %c0_i32, %c0_i32_0 : i32, i32
  }
  func.func @transform_11(%arg0: i32) -> (i32, i32, i32, i32) {
    %c0_i32 = arith.constant 0 : i32
    %c0_i32_0 = arith.constant 0 : i32
    %c0_i32_1 = arith.constant 0 : i32
    %c0_i32_2 = arith.constant 0 : i32
    %c0_i32_3 = arith.constant 0 : i32
    return %c0_i32, %c0_i32_0, %c0_i32_1, %c0_i32_2 : i32, i32, i32, i32
  }
  func.func @transform_12(%arg0: i32) -> (i32, i32, i32) {
    %c0_i32 = arith.constant 0 : i32
    %c0_i32_0 = arith.constant 0 : i32
    %c0_i32_1 = arith.constant 0 : i32
    %c0_i32_2 = arith.constant 0 : i32
    return %c0_i32, %c0_i32_0, %c0_i32_1 : i32, i32, i32
  }
  func.func @transform_13(%arg0: i32) -> (i32, i32) {
    %c0_i32 = arith.constant 0 : i32
    %c0_i32_0 = arith.constant 0 : i32
    %c0_i32_1 = arith.constant 0 : i32
    return %c0_i32, %c0_i32_0 : i32, i32
  }
  func.func @transform_14(%arg0: i32) -> (i32, i32) {
    %c0_i32 = arith.constant 0 : i32
    %c0_i32_0 = arith.constant 0 : i32
    %c0_i32_1 = arith.constant 0 : i32
    return %c0_i32, %c0_i32_0 : i32, i32
  }
  func.func @transform_15(%arg0: i32) -> (i32, i32) {
    %c0_i32 = arith.constant 0 : i32
    %c0_i32_0 = arith.constant 0 : i32
    %c0_i32_1 = arith.constant 0 : i32
    return %c0_i32, %c0_i32_0 : i32, i32
  }
  func.func @transform_16(%arg0: i32) -> (i32, i32) {
    %c0_i32 = arith.constant 0 : i32
    %c0_i32_0 = arith.constant 0 : i32
    %c0_i32_1 = arith.constant 0 : i32
    return %c0_i32, %c0_i32_0 : i32, i32
  }
  func.func @transform_17(%arg0: i32) -> (i32, i32) {
    %c0_i32 = arith.constant 0 : i32
    %c0_i32_0 = arith.constant 0 : i32
    %c0_i32_1 = arith.constant 0 : i32
    return %c0_i32, %c0_i32_0 : i32, i32
  }
  func.func @transform_18(%arg0: i32) -> (i32, i32) {
    %c0_i32 = arith.constant 0 : i32
    %c0_i32_0 = arith.constant 0 : i32
    %c0_i32_1 = arith.constant 0 : i32
    return %c0_i32, %c0_i32_0 : i32, i32
  }
}

</mosaic_0001>

<llo_original>
// kernel: vanilla_discriminator.1
$region0: #{vanilla_discriminator.1}
  #allocation0 [shape = 'u32[]', space=smem, size = 0x4, offset = 0x4, fixed_abs, tag = 'smem constant byte address 0x4 - core index']
  #allocation1 [shape = 'u32[144,128]{1,0:T(1,128)}', space=vmem, size = 0x12000, scoped, tag = 'internal scratch']
  #allocation2 [shape = 'f32[1,1]{1,0:T(1,128)S(1)}', space=vmem, size = 0x200, scoped, tag = 'scoped memory for vanilla_discriminator.1']
  %s0 = inlined_call_operand.vmem [shape: f32[64,64], index: 0, kind: input, shape index: {}]
  %s1 = inlined_call_operand.hbm [shape: bf16[4,32,64], index: 1, kind: input, shape index: {}]
  %s2 = inlined_call_operand.hbm [shape: bf16[4,64,512], index: 2, kind: input, shape index: {}]
  %s3 = inlined_call_operand.hbm [shape: f32[1,512], index: 3, kind: input, shape index: {}]
  %s4 = inlined_call_operand.hbm [shape: bf16[4,16,32], index: 4, kind: input, shape index: {}]
  %s5 = inlined_call_operand.hbm [shape: bf16[4,512,512], index: 5, kind: input, shape index: {}]
  %s6 = inlined_call_operand.hbm [shape: f32[1,512], index: 6, kind: input, shape index: {}]
  %s7 = inlined_call_operand.vmem [shape: f32[256,64], index: 7, kind: input, shape index: {}]
  %s8 = inlined_call_operand.hbm [shape: f32[64,256], index: 8, kind: input, shape index: {}]
  %s9 = inlined_call_operand.hbm [shape: f32[1,64], index: 9, kind: input, shape index: {}]
  %s10 = inlined_call_operand.hbm [shape: f32[1,64], index: 10, kind: input, shape index: {}]
  %s11 = inlined_call_operand.hbm [shape: bf16[2,4,2,8], index: 11, kind: input, shape index: {}]
  %s12 = inlined_call_operand.hbm [shape: bf16[4,256,256], index: 12, kind: input, shape index: {}]
  %s13 = inlined_call_operand.hbm [shape: f32[1,256], index: 13, kind: input, shape index: {}]
  %s14 = inlined_call_operand.hbm [shape: f32[1,128], index: 14, kind: input, shape index: {}]
  %s15 = inlined_call_operand.hbm [shape: f32[1,128], index: 15, kind: input, shape index: {}]
  %s16 = inlined_call_operand.vmem [shape: f32[128,1], index: 16, kind: input, shape index: {}]
  %s17 = inlined_call_operand.<no memory space> [shape: f32[1,1], index: 17, kind: input, shape index: {}]
  %s18 = inlined_call_operand.vmem [shape: f32[2,1], index: 18, kind: output, shape index: {}]
  %s19 = sld [smem:[#allocation0]]
  $region138: #{vanilla_discriminator.1} parent=0
    _
  %s21 = ssub.s32 1, %s19
  %s22 = scalar_select 0, %s21, %s19
  %v23 = vstv %s17
  %24 = vst [vmem:[#allocation2] sm:$0x1] %v23
  $region1: #{vanilla_discriminator.1} parent=0
    #allocation3 [shape = 'u8[32768]{0}', space=vmem, size = 0x8000, scoped, tag = 'input window, operand 1, single buffered']
    #allocation4 [shape = 's32[1]{0}', space=sflag, size = 0x4, scoped, tag = 'scoped memory for vanilla_discriminator.1']
    #allocation5 [shape = 'u8[262144]{0}', space=vmem, size = 0x40000, scoped, tag = 'input window, operand 2, single buffered']
    #allocation6 [shape = 's32[1]{0}', space=sflag, size = 0x4, scoped, tag = 'scoped memory for vanilla_discriminator.1']
    #allocation7 [shape = 'u8[2048]{0}', space=vmem, size = 0x800, scoped, tag = 'input window, operand 3, single buffered']
    #allocation8 [shape = 'u8[16384]{0}', space=vmem, size = 0x4000, scoped, tag = 'input window, operand 4, single buffered']
    #allocation9 [shape = 's32[1]{0}', space=sflag, size = 0x4, scoped, tag = 'scoped memory for vanilla_discriminator.1']
    #allocation10 [shape = 'u8[2097152]{0}', space=vmem, size = 0x200000, scoped, tag = 'input window, operand 5, single buffered']
    #allocation11 [shape = 'u8[2048]{0}', space=vmem, size = 0x800, scoped, tag = 'input window, operand 6, single buffered']
    #allocation12 [shape = 's32[1]{0}', space=sflag, size = 0x4, scoped, tag = 'scoped memory for vanilla_discriminator.1']
    #allocation13 [shape = 'u8[65536]{0}', space=vmem, size = 0x10000, scoped, tag = 'input window, operand 8, single buffered']
    #allocation14 [shape = 'u8[512]{0}', space=vmem, size = 0x400, scoped, tag = 'input window, operand 9, single buffered']
    #allocation15 [shape = 's32[1]{0}', space=sflag, size = 0x4, scoped, tag = 'scoped memory for vanilla_discriminator.1']
    #allocation16 [shape = 'u8[512]{0}', space=vmem, size = 0x400, scoped, tag = 'input window, operand 10, single buffered']
    #allocation17 [shape = 'u8[4096]{0}', space=vmem, size = 0x1000, scoped, tag = 'input window, operand 11, single buffered']
    #allocation18 [shape = 's32[1]{0}', space=sflag, size = 0x4, scoped, tag = 'scoped memory for vanilla_discriminator.1']
    #allocation19 [shape = 'u8[524288]{0}', space=vmem, size = 0x80000, scoped, tag = 'input window, operand 12, single buffered']
    #allocation20 [shape = 'u8[1024]{0}', space=vmem, size = 0x400, scoped, tag = 'input window, operand 13, single buffered']
    #allocation21 [shape = 's32[1]{0}', space=sflag, size = 0x4, scoped, tag = 'scoped memory for vanilla_discriminator.1']
    #allocation22 [shape = 'u8[512]{0}', space=vmem, size = 0x400, scoped, tag = 'input window, operand 14, single buffered']
    #allocation23 [shape = 'u8[512]{0}', space=vmem, size = 0x400, scoped, tag = 'input window, operand 15, single buffered']
    #allocation24 [shape = 's32[1]{0}', space=sflag, size = 0x4, scoped, tag = 'scoped memory for vanilla_discriminator.1']
    %25 = vsyncpa [#allocation4], 0
    %26 = vsyncpa [#allocation6], 0
    %27 = vsyncpa [#allocation9], 0
    %28 = vsyncpa [#allocation12], 0
    %29 = vsyncpa [#allocation15], 0
    %30 = vsyncpa [#allocation18], 0
    %31 = vsyncpa [#allocation21], 0
    %32 = vsyncpa [#allocation24], 0
    // Predicated region
    $region2: #{vanilla_discriminator.1} parent=1 // pred_check
      _
    $region3: #{vanilla_discriminator.1} parent=1 // pred_check_branch
      %34 = sbr.rel (0) target = $region5
    $region4: #{vanilla_discriminator.1} parent=1 // pred_region
      _
    $region5: #{vanilla_discriminator.1} parent=1 // pred_fallthru
      _
    // Predicated region
    $region6: #{vanilla_discriminator.1} parent=1 // pred_check
      _
    $region7: #{vanilla_discriminator.1} parent=1 // pred_check_branch
      %36 = sbr.rel (0) target = $region9
    $region8: #{vanilla_discriminator.1} parent=1 // pred_region
      %s38 = ssub.s32 1024, 1024
      %39 = vsyncadd [#allocation4], %s38
      %s40 = sshll.u32 [#allocation3], 4
      %s41 = int_to_ptr.vmem [resolvable:$true] %s40
      %46 = dma.hbm_to_vmem [thread:$0]  %s1, 1024, %s41, [#allocation4], 64, 64, 4
    $region9: #{vanilla_discriminator.1} parent=1 // pred_fallthru
      _
    // Predicated region
    $region10: #{vanilla_discriminator.1} parent=1 // pred_check
      _
    $region11: #{vanilla_discriminator.1} parent=1 // pred_check_branch
      %48 = sbr.rel (0) target = $region13
    $region12: #{vanilla_discriminator.1} parent=1 // pred_region
      %s50 = ssub.s32 8192, 8192
      %51 = vsyncadd [#allocation6], %s50
      %s52 = sshll.u32 [#allocation5], 4
      %s53 = int_to_ptr.vmem [resolvable:$true] %s52
      %58 = dma.hbm_to_vmem [thread:$0]  %s2, 8192, %s53, [#allocation6], 256, 256, 16
    $region13: #{vanilla_discriminator.1} parent=1 // pred_fallthru
      _
    // Predicated region
    $region14: #{vanilla_discriminator.1} parent=1 // pred_check
      _
    $region15: #{vanilla_discriminator.1} parent=1 // pred_check_branch
      %60 = sbr.rel (0) target = $region17
    $region16: #{vanilla_discriminator.1} parent=1 // pred_region
      %s62 = ssub.s32 64, 64
      %63 = vsyncadd [#allocation6], %s62
      %s65 = sshll.u32 [#allocation7], 4
      %s66 = int_to_ptr.vmem [resolvable:$true] %s65
      %68 = dma.hbm_to_vmem [thread:$0]  %s3, 64, %s66, [#allocation6]
    $region17: #{vanilla_discriminator.1} parent=1 // pred_fallthru
      _
    // Predicated region
    $region18: #{vanilla_discriminator.1} parent=1 // pred_check
      _
    $region19: #{vanilla_discriminator.1} parent=1 // pred_check_branch
      %70 = sbr.rel (0) target = $region21
    $region20: #{vanilla_discriminator.1} parent=1 // pred_region
      %s72 = ssub.s32 512, 512
      %73 = vsyncadd [#allocation9], %s72
      %s74 = sshll.u32 [#allocation8], 4
      %s75 = int_to_ptr.vmem [resolvable:$true] %s74
      %80 = dma.hbm_to_vmem [thread:$0]  %s4, 512, %s75, [#allocation9], 64, 64, 4
    $region21: #{vanilla_discriminator.1} parent=1 // pred_fallthru
      _
    // Predicated region
    $region22: #{vanilla_discriminator.1} parent=1 // pred_check
      _
    $region23: #{vanilla_discriminator.1} parent=1 // pred_check_branch
      %82 = sbr.rel (0) target = $region25
    $region24: #{vanilla_discriminator.1} parent=1 // pred_region
      %s84 = ssub.s32 65536, 65536
      %85 = vsyncadd [#allocation9], %s84
      %s86 = sshll.u32 [#allocation10], 4
      %s87 = int_to_ptr.vmem [resolvable:$true] %s86
      %92 = dma.hbm_to_vmem [thread:$0]  %s5, 65536, %s87, [#allocation9], 256, 256, 16
    $region25: #{vanilla_discriminator.1} parent=1 // pred_fallthru
      _
    // Predicated region
    $region26: #{vanilla_discriminator.1} parent=1 // pred_check
      _
    $region27: #{vanilla_discriminator.1} parent=1 // pred_check_branch
      %94 = sbr.rel (0) target = $region29
    $region28: #{vanilla_discriminator.1} parent=1 // pred_region
      %s96 = ssub.s32 64, 64
      %97 = vsyncadd [#allocation12], %s96
      %s99 = sshll.u32 [#allocation11], 4
      %s100 = int_to_ptr.vmem [resolvable:$true] %s99
      %102 = dma.hbm_to_vmem [thread:$0]  %s6, 64, %s100, [#allocation12]
    $region29: #{vanilla_discriminator.1} parent=1 // pred_fallthru
      _
    // Predicated region
    $region30: #{vanilla_discriminator.1} parent=1 // pred_check
      _
    $region31: #{vanilla_discriminator.1} parent=1 // pred_check_branch
      %104 = sbr.rel (0) target = $region33
    $region32: #{vanilla_discriminator.1} parent=1 // pred_region
      _
    $region33: #{vanilla_discriminator.1} parent=1 // pred_fallthru
      _
    // Predicated region
    $region34: #{vanilla_discriminator.1} parent=1 // pred_check
      _
    $region35: #{vanilla_discriminator.1} parent=1 // pred_check_branch
      %106 = sbr.rel (0) target = $region37
    $region36: #{vanilla_discriminator.1} parent=1 // pred_region
      %s108 = ssub.s32 2048, 2048
      %109 = vsyncadd [#allocation12], %s108
      %s110 = sshll.u32 [#allocation13], 4
      %s111 = int_to_ptr.vmem [resolvable:$true] %s110
      %116 = dma.hbm_to_vmem [thread:$0]  %s8, 2048, %s111, [#allocation12], 256, 256, 16
    $region37: #{vanilla_discriminator.1} parent=1 // pred_fallthru
      _
    // Predicated region
    $region38: #{vanilla_discriminator.1} parent=1 // pred_check
      _
    $region39: #{vanilla_discriminator.1} parent=1 // pred_check_branch
      %118 = sbr.rel (0) target = $region41
    $region40: #{vanilla_discriminator.1} parent=1 // pred_region
      %s120 = ssub.s32 16, 16
      %121 = vsyncadd [#allocation15], %s120
      %s123 = sshll.u32 [#allocation14], 4
      %s124 = int_to_ptr.vmem [resolvable:$true] %s123
      %126 = dma.hbm_to_vmem [thread:$0]  %s9, 16, %s124, [#allocation15]
    $region41: #{vanilla_discriminator.1} parent=1 // pred_fallthru
      _
    // Predicated region
    $region42: #{vanilla_discriminator.1} parent=1 // pred_check
      _
    $region43: #{vanilla_discriminator.1} parent=1 // pred_check_branch
      %128 = sbr.rel (0) target = $region45
    $region44: #{vanilla_discriminator.1} parent=1 // pred_region
      %s130 = ssub.s32 16, 16
      %131 = vsyncadd [#allocation15], %s130
      %s133 = sshll.u32 [#allocation16], 4
      %s134 = int_to_ptr.vmem [resolvable:$true] %s133
      %136 = dma.hbm_to_vmem [thread:$0]  %s10, 16, %s134, [#allocation15]
    $region45: #{vanilla_discriminator.1} parent=1 // pred_fallthru
      _
    // Predicated region
    $region46: #{vanilla_discriminator.1} parent=1 // pred_check
      _
    $region47: #{vanilla_discriminator.1} parent=1 // pred_check_branch
      %138 = sbr.rel (0) target = $region49
    $region48: #{vanilla_discriminator.1} parent=1 // pred_region
      %s140 = ssub.s32 128, 128
      %141 = vsyncadd [#allocation18], %s140
      %s142 = sshll.u32 [#allocation17], 4
      %s143 = int_to_ptr.vmem [resolvable:$true] %s142
      %148 = dma.hbm_to_vmem [thread:$0]  %s11, 128, %s143, [#allocation18], 16, 16, 1
    $region49: #{vanilla_discriminator.1} parent=1 // pred_fallthru
      _
    // Predicated region
    $region50: #{vanilla_discriminator.1} parent=1 // pred_check
      _
    $region51: #{vanilla_discriminator.1} parent=1 // pred_check_branch
      %150 = sbr.rel (0) target = $region53
    $region52: #{vanilla_discriminator.1} parent=1 // pred_region
      %s152 = ssub.s32 16384, 16384
      %153 = vsyncadd [#allocation18], %s152
      %s154 = sshll.u32 [#allocation19], 4
      %s155 = int_to_ptr.vmem [resolvable:$true] %s154
      %160 = dma.hbm_to_vmem [thread:$0]  %s12, 16384, %s155, [#allocation18], 128, 128, 8
    $region53: #{vanilla_discriminator.1} parent=1 // pred_fallthru
      _
    // Predicated region
    $region54: #{vanilla_discriminator.1} parent=1 // pred_check
      _
    $region55: #{vanilla_discriminator.1} parent=1 // pred_check_branch
      %162 = sbr.rel (0) target = $region57
    $region56: #{vanilla_discriminator.1} parent=1 // pred_region
      %s164 = ssub.s32 32, 32
      %165 = vsyncadd [#allocation21], %s164
      %s167 = sshll.u32 [#allocation20], 4
      %s168 = int_to_ptr.vmem [resolvable:$true] %s167
      %170 = dma.hbm_to_vmem [thread:$0]  %s13, 32, %s168, [#allocation21]
    $region57: #{vanilla_discriminator.1} parent=1 // pred_fallthru
      _
    // Predicated region
    $region58: #{vanilla_discriminator.1} parent=1 // pred_check
      _
    $region59: #{vanilla_discriminator.1} parent=1 // pred_check_branch
      %172 = sbr.rel (0) target = $region61
    $region60: #{vanilla_discriminator.1} parent=1 // pred_region
      %s174 = ssub.s32 16, 16
      %175 = vsyncadd [#allocation21], %s174
      %s177 = sshll.u32 [#allocation22], 4
      %s178 = int_to_ptr.vmem [resolvable:$true] %s177
      %180 = dma.hbm_to_vmem [thread:$0]  %s14, 16, %s178, [#allocation21]
    $region61: #{vanilla_discriminator.1} parent=1 // pred_fallthru
      _
    // Predicated region
    $region62: #{vanilla_discriminator.1} parent=1 // pred_check
      _
    $region63: #{vanilla_discriminator.1} parent=1 // pred_check_branch
      %182 = sbr.rel (0) target = $region65
    $region64: #{vanilla_discriminator.1} parent=1 // pred_region
      %s184 = ssub.s32 16, 16
      %185 = vsyncadd [#allocation24], %s184
      %s187 = sshll.u32 [#allocation23], 4
      %s188 = int_to_ptr.vmem [resolvable:$true] %s187
      %190 = dma.hbm_to_vmem [thread:$0]  %s15, 16, %s188, [#allocation24]
    $region65: #{vanilla_discriminator.1} parent=1 // pred_fallthru
      _
    // Predicated region
    $region66: #{vanilla_discriminator.1} parent=1 // pred_check
      _
    $region67: #{vanilla_discriminator.1} parent=1 // pred_check_branch
      %192 = sbr.rel (0) target = $region69
    $region68: #{vanilla_discriminator.1} parent=1 // pred_region
      _
    $region69: #{vanilla_discriminator.1} parent=1 // pred_fallthru
      _
    // Predicated region
    $region70: #{vanilla_discriminator.1} parent=1 // pred_check
      _
    $region71: #{vanilla_discriminator.1} parent=1 // pred_check_branch
      %194 = sbr.rel (0) target = $region73
    $region72: #{vanilla_discriminator.1} parent=1 // pred_region
      _
    $region73: #{vanilla_discriminator.1} parent=1 // pred_fallthru
      _
    // Predicated region
    $region74: #{vanilla_discriminator.1} parent=1 // pred_check
      _
    $region75: #{vanilla_discriminator.1} parent=1 // pred_check_branch
      %196 = sbr.rel (0) target = $region77
    $region76: #{vanilla_discriminator.1} parent=1 // pred_region
      %197 = dma.done [#allocation4], 1024
    $region77: #{vanilla_discriminator.1} parent=1 // pred_fallthru
      _
    // Predicated region
    $region78: #{vanilla_discriminator.1} parent=1 // pred_check
      _
    $region79: #{vanilla_discriminator.1} parent=1 // pred_check_branch
      %199 = sbr.rel (0) target = $region81
    $region80: #{vanilla_discriminator.1} parent=1 // pred_region
      %200 = dma.done [#allocation6], 8192
    $region81: #{vanilla_discriminator.1} parent=1 // pred_fallthru
      _
    // Predicated region
    $region82: #{vanilla_discriminator.1} parent=1 // pred_check
      _
    $region83: #{vanilla_discriminator.1} parent=1 // pred_check_branch
      %202 = sbr.rel (0) target = $region85
    $region84: #{vanilla_discriminator.1} parent=1 // pred_region
      %203 = dma.done [#allocation6], 64
    $region85: #{vanilla_discriminator.1} parent=1 // pred_fallthru
      _
    // Predicated region
    $region86: #{vanilla_discriminator.1} parent=1 // pred_check
      _
    $region87: #{vanilla_discriminator.1} parent=1 // pred_check_branch
      %205 = sbr.rel (0) target = $region89
    $region88: #{vanilla_discriminator.1} parent=1 // pred_region
      %206 = dma.done [#allocation9], 512
    $region89: #{vanilla_discriminator.1} parent=1 // pred_fallthru
      _
    // Predicated region
    $region90: #{vanilla_discriminator.1} parent=1 // pred_check
      _
    $region91: #{vanilla_discriminator.1} parent=1 // pred_check_branch
      %208 = sbr.rel (0) target = $region93
    $region92: #{vanilla_discriminator.1} parent=1 // pred_region
      %209 = dma.done [#allocation9], 65536
    $region93: #{vanilla_discriminator.1} parent=1 // pred_fallthru
      _
    // Predicated region
    $region94: #{vanilla_discriminator.1} parent=1 // pred_check
      _
    $region95: #{vanilla_discriminator.1} parent=1 // pred_check_branch
      %211 = sbr.rel (0) target = $region97
    $region96: #{vanilla_discriminator.1} parent=1 // pred_region
      %212 = dma.done [#allocation12], 64
    $region97: #{vanilla_discriminator.1} parent=1 // pred_fallthru
      _
    // Predicated region
    $region98: #{vanilla_discriminator.1} parent=1 // pred_check
      _
    $region99: #{vanilla_discriminator.1} parent=1 // pred_check_branch
      %214 = sbr.rel (0) target = $region101
    $region100: #{vanilla_discriminator.1} parent=1 // pred_region
      %215 = dma.done [#allocation12], 2048
    $region101: #{vanilla_discriminator.1} parent=1 // pred_fallthru
      _
    // Predicated region
    $region102: #{vanilla_discriminator.1} parent=1 // pred_check
      _
    $region103: #{vanilla_discriminator.1} parent=1 // pred_check_branch
      %217 = sbr.rel (0) target = $region105
    $region104: #{vanilla_discriminator.1} parent=1 // pred_region
      %218 = dma.done [#allocation15], 16
    $region105: #{vanilla_discriminator.1} parent=1 // pred_fallthru
      _
    // Predicated region
    $region106: #{vanilla_discriminator.1} parent=1 // pred_check
      _
    $region107: #{vanilla_discriminator.1} parent=1 // pred_check_branch
      %220 = sbr.rel (0) target = $region109
    $region108: #{vanilla_discriminator.1} parent=1 // pred_region
      %221 = dma.done [#allocation15], 16
    $region109: #{vanilla_discriminator.1} parent=1 // pred_fallthru
      _
    // Predicated region
    $region110: #{vanilla_discriminator.1} parent=1 // pred_check
      _
    $region111: #{vanilla_discriminator.1} parent=1 // pred_check_branch
      %223 = sbr.rel (0) target = $region113
    $region112: #{vanilla_discriminator.1} parent=1 // pred_region
      %224 = dma.done [#allocation18], 128
    $region113: #{vanilla_discriminator.1} parent=1 // pred_fallthru
      _
    // Predicated region
    $region114: #{vanilla_discriminator.1} parent=1 // pred_check
      _
    $region115: #{vanilla_discriminator.1} parent=1 // pred_check_branch
      %226 = sbr.rel (0) target = $region117
    $region116: #{vanilla_discriminator.1} parent=1 // pred_region
      %227 = dma.done [#allocation18], 16384
    $region117: #{vanilla_discriminator.1} parent=1 // pred_fallthru
      _
    // Predicated region
    $region118: #{vanilla_discriminator.1} parent=1 // pred_check
      _
    $region119: #{vanilla_discriminator.1} parent=1 // pred_check_branch
      %229 = sbr.rel (0) target = $region121
    $region120: #{vanilla_discriminator.1} parent=1 // pred_region
      %230 = dma.done [#allocation21], 32
    $region121: #{vanilla_discriminator.1} parent=1 // pred_fallthru
      _
    // Predicated region
    $region122: #{vanilla_discriminator.1} parent=1 // pred_check
      _
    $region123: #{vanilla_discriminator.1} parent=1 // pred_check_branch
      %232 = sbr.rel (0) target = $region125
    $region124: #{vanilla_discriminator.1} parent=1 // pred_region
      %233 = dma.done [#allocation21], 16
    $region125: #{vanilla_discriminator.1} parent=1 // pred_fallthru
      _
    // Predicated region
    $region126: #{vanilla_discriminator.1} parent=1 // pred_check
      _
    $region127: #{vanilla_discriminator.1} parent=1 // pred_check_branch
      %235 = sbr.rel (0) target = $region129
    $region128: #{vanilla_discriminator.1} parent=1 // pred_region
      %236 = dma.done [#allocation24], 16
    $region129: #{vanilla_discriminator.1} parent=1 // pred_fallthru
      _
    %v238 = vld [vmem:[%s0] sm:$0xff]
    %v239 = vld [vmem:[%s0 + $0x8] sm:$0xff]
    %v240 = vld [vmem:[%s0 + $0x10] sm:$0xff]
    %v241 = vld [vmem:[%s0 + $0x18] sm:$0xff]
    %v242 = vld [vmem:[%s0 + $0x20] sm:$0xff]
    %v243 = vld [vmem:[%s0 + $0x28] sm:$0xff]
    %v244 = vld [vmem:[%s0 + $0x30] sm:$0xff]
    %v245 = vld [vmem:[%s0 + $0x38] sm:$0xff]
    %v246 = vpack.c.bf16 %v239, %v238
    %v247 = vpack.c.bf16 %v241, %v240
    %v248 = vpack.c.bf16 %v243, %v242
    %v249 = vpack.c.bf16 %v245, %v244
    %v250 = vld [vmem:[#allocation7] sm:$0xf]
    %v251 = vld [vmem:[#allocation3] sm:$0xf]
    %v252 = vld [vmem:[#allocation3 + $0x4] sm:$0xf]
    %v253 = vld [vmem:[#allocation3 + $0x8] sm:$0xf]
    %v254 = vld [vmem:[#allocation3 + $0xc] sm:$0xf]
    %v259 = vunpack.c.l.b16 %v251
    %v260 = vunpack.c.l.b16 %v252
    %v261 = vunpack.c.l.b16 %v253
    %v262 = vunpack.c.l.b16 %v254
    %v263 = vpack.c.b16 %v260, %v259
    %v264 = vpack.c.b16 %v262, %v261
    %vm265 = vcmask 523264
    %v267 = vsel %vm265, %v263, 0
    %v270 = vsel %vm265, %v264, 0
    %272 = vmatprep.subr.bf16.mxu0 0
    %273 = vmatpush1.bf16.msra.mxu0 %v246
    %274 = vmatprep.subr.bf16.mxu0 0
    %275 = vmatpush1.bf16.msra.mxu0 %v247
    %276 = vmatprep.subr.bf16.mxu0 0
    %277 = vmatpush1.bf16.msra.mxu0 %v248
    %278 = vmatprep.subr.bf16.mxu0 0
    %279 = vmatpush1.bf16.msra.mxu0 %v249
    %280 = vmatprep.subr.bf16.mxu0 0
    %281 = vmatpush1.bf16.msra.mxu0 0
    %282 = vmatprep.subr.bf16.mxu0 0
    %283 = vmatpush1.bf16.msra.mxu0 0
    %284 = vmatprep.subr.bf16.mxu0 0
    %285 = vmatpush1.bf16.msra.mxu0 0
    %286 = vmatprep.subr.bf16.mxu0 0
    %287 = vmatpush1.bf16.msra.mxu0 0
    %288 = vmatprep.subr.bf16.mxu0 0
    %289 = vmatpush1.bf16.msra.mxu0 0
    %290 = vmatprep.subr.bf16.mxu0 0
    %291 = vmatpush1.bf16.msra.mxu0 0
    %292 = vmatprep.subr.bf16.mxu0 0
    %293 = vmatpush1.bf16.msra.mxu0 0
    %294 = vmatprep.subr.bf16.mxu0 0
    %295 = vmatpush1.bf16.msra.mxu0 0
    %296 = vmatprep.subr.bf16.mxu0 0
    %297 = vmatpush1.bf16.msra.mxu0 0
    %298 = vmatprep.subr.bf16.mxu0 0
    %299 = vmatpush1.bf16.msra.mxu0 0
    %300 = vmatprep.subr.bf16.mxu0 0
    %301 = vmatpush1.bf16.msra.mxu0 0
    %302 = vmatprep.subr.bf16.mxu0 0
    %303 = vmatpush1.bf16.msra.mxu0 0
    %304 = vmatprep.mubr.bf16.mxu0 0
    %305 = vmatmul.mubr.bf16.gmra.mrb[0].mxu0 %v267
    %v306 = vpop.f32.mrb[0].mxu0
    %v307 = vadd.f32 0.0, %v306
    %v308 = vpop.f32.mrb[0].mxu0
    %v309 = vpop.f32.mrb[0].mxu0
    %v310 = vadd.f32 0.0, %v309
    %v311 = vpop.f32.mrb[0].mxu0
    %312 = vmatprep.mubr.bf16.mxu0 0
    %313 = vmatmul.mubr.bf16.gmra.mrb[0].mxu0 %v270
    %v314 = vpop.f32.mrb[0].mxu0
    %v315 = vadd.f32 0.0, %v314
    %v316 = vpop.f32.mrb[0].mxu0
    %v317 = vpop.f32.mrb[0].mxu0
    %v318 = vadd.f32 0.0, %v317
    %v319 = vpop.f32.mrb[0].mxu0
    %320 = vdwg.mxu0
    %v321 = vpack.c.bf16 %v310, %v307
    %v322 = vpack.c.bf16 %v318, %v315
    %v323 = vld [vmem:[#allocation5] sm:$0xff]
    %v324 = vld [vmem:[#allocation5 + $0x8] sm:$0xff]
    %v325 = vld [vmem:[#allocation5 + $0x10] sm:$0xff]
    %v326 = vld [vmem:[#allocation5 + $0x18] sm:$0xff]
    %v327 = vld [vmem:[#allocation5 + $0x20] sm:$0xff]
    %v328 = vld [vmem:[#allocation5 + $0x28] sm:$0xff]
    %v329 = vld [vmem:[#allocation5 + $0x30] sm:$0xff]
    %v330 = vld [vmem:[#allocation5 + $0x38] sm:$0xff]
    %v331 = vld [vmem:[#allocation5 + $0x40] sm:$0xff]
    %v332 = vld [vmem:[#allocation5 + $0x48] sm:$0xff]
    %v333 = vld [vmem:[#allocation5 + $0x50] sm:$0xff]
    %v334 = vld [vmem:[#allocation5 + $0x58] sm:$0xff]
    %v335 = vld [vmem:[#allocation5 + $0x60] sm:$0xff]
    %v336 = vld [vmem:[#allocation5 + $0x68] sm:$0xff]
    %v337 = vld [vmem:[#allocation5 + $0x70] sm:$0xff]
    %v338 = vld [vmem:[#allocation5 + $0x78] sm:$0xff]
    %s339 = scalar_lea.vmem [#allocation3], 16
    %v340 = vld [vmem:[%s339] sm:$0xf]
    %v341 = vld [vmem:[%s339 + $0x4] sm:$0xf]
    %v342 = vld [vmem:[%s339 + $0x8] sm:$0xf]
    %v343 = vld [vmem:[%s339 + $0xc] sm:$0xf]
    %v348 = vunpack.c.l.b16 %v340
    %v349 = vunpack.c.l.b16 %v341
    %v350 = vunpack.c.l.b16 %v342
    %v351 = vunpack.c.l.b16 %v343
    %v352 = vpack.c.b16 %v349, %v348
    %v353 = vpack.c.b16 %v351, %v350
    %v355 = vsel %vm265, %v352, 0
    %v358 = vsel %vm265, %v353, 0
    %360 = vmatprep.subr.bf16.mxu0 0
    %361 = vmatpush1.bf16.msra.mxu0 %v246
    %362 = vmatprep.subr.bf16.mxu0 0
    %363 = vmatpush1.bf16.msra.mxu0 %v247
    %364 = vmatprep.subr.bf16.mxu0 0
    %365 = vmatpush1.bf16.msra.mxu0 %v248
    %366 = vmatprep.subr.bf16.mxu0 0
    %367 = vmatpush1.bf16.msra.mxu0 %v249
    %368 = vmatprep.subr.bf16.mxu0 0
    %369 = vmatpush1.bf16.msra.mxu0 0
    %370 = vmatprep.subr.bf16.mxu0 0
    %371 = vmatpush1.bf16.msra.mxu0 0
    %372 = vmatprep.subr.bf16.mxu0 0
    %373 = vmatpush1.bf16.msra.mxu0 0
    %374 = vmatprep.subr.bf16.mxu0 0
    %375 = vmatpush1.bf16.msra.mxu0 0
    %376 = vmatprep.subr.bf16.mxu0 0
    %377 = vmatpush1.bf16.msra.mxu0 0
    %378 = vmatprep.subr.bf16.mxu0 0
    %379 = vmatpush1.bf16.msra.mxu0 0
    %380 = vmatprep.subr.bf16.mxu0 0
    %381 = vmatpush1.bf16.msra.mxu0 0
    %382 = vmatprep.subr.bf16.mxu0 0
    %383 = vmatpush1.bf16.msra.mxu0 0
    %384 = vmatprep.subr.bf16.mxu0 0
    %385 = vmatpush1.bf16.msra.mxu0 0
    %386 = vmatprep.subr.bf16.mxu0 0
    %387 = vmatpush1.bf16.msra.mxu0 0
    %388 = vmatprep.subr.bf16.mxu0 0
    %389 = vmatpush1.bf16.msra.mxu0 0
    %390 = vmatprep.subr.bf16.mxu0 0
    %391 = vmatpush1.bf16.msra.mxu0 0
    %392 = vmatprep.mubr.bf16.mxu0 0
    %393 = vmatmul.mubr.bf16.gmra.mrb[0].mxu0 %v355
    %v394 = vpop.f32.mrb[0].mxu0
    %v395 = vadd.f32 0.0, %v394
    %v396 = vpop.f32.mrb[0].mxu0
    %v397 = vpop.f32.mrb[0].mxu0
    %v398 = vadd.f32 0.0, %v397
    %v399 = vpop.f32.mrb[0].mxu0
    %400 = vmatprep.mubr.bf16.mxu0 0
    %401 = vmatmul.mubr.bf16.gmra.mrb[0].mxu0 %v358
    %v402 = vpop.f32.mrb[0].mxu0
    %v403 = vadd.f32 0.0, %v402
    %v404 = vpop.f32.mrb[0].mxu0
    %v405 = vpop.f32.mrb[0].mxu0
    %v406 = vadd.f32 0.0, %v405
    %v407 = vpop.f32.mrb[0].mxu0
    %408 = vdwg.mxu0
    %v409 = vpack.c.bf16 %v398, %v395
    %v410 = vpack.c.bf16 %v406, %v403
    %s411 = scalar_lea.vmem [#allocation5], 128
    %v412 = vld [vmem:[%s411] sm:$0xff]
    %v413 = vld [vmem:[%s411 + $0x8] sm:$0xff]
    %v414 = vld [vmem:[%s411 + $0x10] sm:$0xff]
    %v415 = vld [vmem:[%s411 + $0x18] sm:$0xff]
    %v416 = vld [vmem:[%s411 + $0x20] sm:$0xff]
    %v417 = vld [vmem:[%s411 + $0x28] sm:$0xff]
    %v418 = vld [vmem:[%s411 + $0x30] sm:$0xff]
    %v419 = vld [vmem:[%s411 + $0x38] sm:$0xff]
    %v420 = vld [vmem:[%s411 + $0x40] sm:$0xff]
    %v421 = vld [vmem:[%s411 + $0x48] sm:$0xff]
    %v422 = vld [vmem:[%s411 + $0x50] sm:$0xff]
    %v423 = vld [vmem:[%s411 + $0x58] sm:$0xff]
    %v424 = vld [vmem:[%s411 + $0x60] sm:$0xff]
    %v425 = vld [vmem:[%s411 + $0x68] sm:$0xff]
    %v426 = vld [vmem:[%s411 + $0x70] sm:$0xff]
    %v427 = vld [vmem:[%s411 + $0x78] sm:$0xff]
    %v444 = vunpack.c.l.b16 %v412
    %v445 = vunpack.c.h.b16 %v412
    %v446 = vunpack.c.l.b16 %v413
    %v447 = vunpack.c.h.b16 %v413
    %v448 = vunpack.c.l.b16 %v414
    %v449 = vunpack.c.h.b16 %v414
    %v450 = vunpack.c.l.b16 %v415
    %v451 = vunpack.c.h.b16 %v415
    %v452 = vunpack.c.l.b16 %v416
    %v453 = vunpack.c.h.b16 %v416
    %v454 = vunpack.c.l.b16 %v417
    %v455 = vunpack.c.h.b16 %v417
    %v456 = vunpack.c.l.b16 %v418
    %v457 = vunpack.c.h.b16 %v418
    %v458 = vunpack.c.l.b16 %v419
    %v459 = vunpack.c.h.b16 %v419
    %v460 = vunpack.c.l.b16 %v420
    %v461 = vunpack.c.h.b16 %v420
    %v462 = vunpack.c.l.b16 %v421
    %v463 = vunpack.c.h.b16 %v421
    %v464 = vunpack.c.l.b16 %v422
    %v465 = vunpack.c.h.b16 %v422
    %v466 = vunpack.c.l.b16 %v423
    %v467 = vunpack.c.h.b16 %v423
    %v468 = vunpack.c.l.b16 %v424
    %v469 = vunpack.c.h.b16 %v424
    %v470 = vunpack.c.l.b16 %v425
    %v471 = vunpack.c.h.b16 %v425
    %v472 = vunpack.c.l.b16 %v426
    %v473 = vunpack.c.h.b16 %v426
    %v474 = vunpack.c.l.b16 %v427
    %v475 = vunpack.c.h.b16 %v427
    %v476 = vpack.c.b16 %v448, %v444
    %v477 = vpack.c.b16 %v449, %v445
    %v478 = vpack.c.b16 %v450, %v446
    %v479 = vpack.c.b16 %v451, %v447
    %v480 = vpack.c.b16 %v456, %v452
    %v481 = vpack.c.b16 %v457, %v453
    %v482 = vpack.c.b16 %v458, %v454
    %v483 = vpack.c.b16 %v459, %v455
    %v484 = vpack.c.b16 %v464, %v460
    %v485 = vpack.c.b16 %v465, %v461
    %v486 = vpack.c.b16 %v466, %v462
    %v487 = vpack.c.b16 %v467, %v463
    %v488 = vpack.c.b16 %v472, %v468
    %v489 = vpack.c.b16 %v473, %v469
    %v490 = vpack.c.b16 %v474, %v470
    %v491 = vpack.c.b16 %v475, %v471
    %v509 = vsel %vm265, %v409, 0
    %v512 = vsel %vm265, %v410, 0
    %514 = vmatprep.subr.bf16.mxu0 %v477
    %515 = vmatpush1.bf16.msra.mxu0 %v476
    %516 = vmatprep.subr.bf16.mxu0 %v481
    %517 = vmatpush1.bf16.msra.mxu0 %v480
    %518 = vmatprep.subr.bf16.mxu0 %v485
    %519 = vmatpush1.bf16.msra.mxu0 %v484
    %520 = vmatprep.subr.bf16.mxu0 %v489
    %521 = vmatpush1.bf16.msra.mxu0 %v488
    %522 = vmatprep.subr.bf16.mxu0 0
    %523 = vmatpush1.bf16.msra.mxu0 0
    %524 = vmatprep.subr.bf16.mxu0 0
    %525 = vmatpush1.bf16.msra.mxu0 0
    %526 = vmatprep.subr.bf16.mxu0 0
    %527 = vmatpush1.bf16.msra.mxu0 0
    %528 = vmatprep.subr.bf16.mxu0 0
    %529 = vmatpush1.bf16.msra.mxu0 0
    %530 = vmatprep.subr.bf16.mxu0 0
    %531 = vmatpush1.bf16.msra.mxu0 0
    %532 = vmatprep.subr.bf16.mxu0 0
    %533 = vmatpush1.bf16.msra.mxu0 0
    %534 = vmatprep.subr.bf16.mxu0 0
    %535 = vmatpush1.bf16.msra.mxu0 0
    %536 = vmatprep.subr.bf16.mxu0 0
    %537 = vmatpush1.bf16.msra.mxu0 0
    %538 = vmatprep.subr.bf16.mxu0 0
    %539 = vmatpush1.bf16.msra.mxu0 0
    %540 = vmatprep.subr.bf16.mxu0 0
    %541 = vmatpush1.bf16.msra.mxu0 0
    %542 = vmatprep.subr.bf16.mxu0 0
    %543 = vmatpush1.bf16.msra.mxu0 0
    %544 = vmatprep.subr.bf16.mxu0 0
    %545 = vmatpush1.bf16.msra.mxu0 0
    %546 = vmatprep.mubr.bf16.mxu0 0
    %547 = vmatmul.mubr.bf16.gmra.mrb[0].mxu0 %v509
    %v548 = vpop.f32.mrb[0].mxu0
    %v549 = vadd.f32 0.0, %v548
    %v550 = vpop.f32.mrb[0].mxu0
    %v551 = vadd.f32 0.0, %v550
    %v552 = vpop.f32.mrb[0].mxu0
    %v553 = vadd.f32 0.0, %v552
    %v554 = vpop.f32.mrb[0].mxu0
    %v555 = vadd.f32 0.0, %v554
    %556 = vmatprep.mubr.bf16.mxu0 0
    %557 = vmatmul.mubr.bf16.gmra.mrb[0].mxu0 %v512
    %v558 = vpop.f32.mrb[0].mxu0
    %v559 = vadd.f32 0.0, %v558
    %v560 = vpop.f32.mrb[0].mxu0
    %v561 = vadd.f32 0.0, %v560
    %v562 = vpop.f32.mrb[0].mxu0
    %v563 = vadd.f32 0.0, %v562
    %v564 = vpop.f32.mrb[0].mxu0
    %v565 = vadd.f32 0.0, %v564
    %566 = vdwg.mxu0
    %567 = vmatprep.subr.bf16.mxu0 %v479
    %568 = vmatpush1.bf16.msra.mxu0 %v478
    %569 = vmatprep.subr.bf16.mxu0 %v483
    %570 = vmatpush1.bf16.msra.mxu0 %v482
    %571 = vmatprep.subr.bf16.mxu0 %v487
    %572 = vmatpush1.bf16.msra.mxu0 %v486
    %573 = vmatprep.subr.bf16.mxu0 %v491
    %574 = vmatpush1.bf16.msra.mxu0 %v490
    %575 = vmatprep.subr.bf16.mxu0 0
    %576 = vmatpush1.bf16.msra.mxu0 0
    %577 = vmatprep.subr.bf16.mxu0 0
    %578 = vmatpush1.bf16.msra.mxu0 0
    %579 = vmatprep.subr.bf16.mxu0 0
    %580 = vmatpush1.bf16.msra.mxu0 0
    %581 = vmatprep.subr.bf16.mxu0 0
    %582 = vmatpush1.bf16.msra.mxu0 0
    %583 = vmatprep.subr.bf16.mxu0 0
    %584 = vmatpush1.bf16.msra.mxu0 0
    %585 = vmatprep.subr.bf16.mxu0 0
    %586 = vmatpush1.bf16.msra.mxu0 0
    %587 = vmatprep.subr.bf16.mxu0 0
    %588 = vmatpush1.bf16.msra.mxu0 0
    %589 = vmatprep.subr.bf16.mxu0 0
    %590 = vmatpush1.bf16.msra.mxu0 0
    %591 = vmatprep.subr.bf16.mxu0 0
    %592 = vmatpush1.bf16.msra.mxu0 0
    %593 = vmatprep.subr.bf16.mxu0 0
    %594 = vmatpush1.bf16.msra.mxu0 0
    %595 = vmatprep.subr.bf16.mxu0 0
    %596 = vmatpush1.bf16.msra.mxu0 0
    %597 = vmatprep.subr.bf16.mxu0 0
    %598 = vmatpush1.bf16.msra.mxu0 0
    %599 = vmatprep.mubr.bf16.mxu0 0
    %600 = vmatmul.mubr.bf16.gmra.mrb[0].mxu0 %v509
    %v601 = vpop.f32.mrb[0].mxu0
    %v602 = vadd.f32 0.0, %v601
    %v603 = vpop.f32.mrb[0].mxu0
    %v604 = vadd.f32 0.0, %v603
    %v605 = vpop.f32.mrb[0].mxu0
    %v606 = vadd.f32 0.0, %v605
    %v607 = vpop.f32.mrb[0].mxu0
    %v608 = vadd.f32 0.0, %v607
    %609 = vmatprep.mubr.bf16.mxu0 0
    %610 = vmatmul.mubr.bf16.gmra.mrb[0].mxu0 %v512
    %v611 = vpop.f32.mrb[0].mxu0
    %v612 = vadd.f32 0.0, %v611
    %v613 = vpop.f32.mrb[0].mxu0
    %v614 = vadd.f32 0.0, %v613
    %v615 = vpop.f32.mrb[0].mxu0
    %v616 = vadd.f32 0.0, %v615
    %v617 = vpop.f32.mrb[0].mxu0
    %v618 = vadd.f32 0.0, %v617
    %619 = vdwg.mxu0
    %v636 = vunpack.c.l.b16 %v323
    %v637 = vunpack.c.h.b16 %v323
    %v638 = vunpack.c.l.b16 %v324
    %v639 = vunpack.c.h.b16 %v324
    %v640 = vunpack.c.l.b16 %v325
    %v641 = vunpack.c.h.b16 %v325
    %v642 = vunpack.c.l.b16 %v326
    %v643 = vunpack.c.h.b16 %v326
    %v644 = vunpack.c.l.b16 %v327
    %v645 = vunpack.c.h.b16 %v327
    %v646 = vunpack.c.l.b16 %v328
    %v647 = vunpack.c.h.b16 %v328
    %v648 = vunpack.c.l.b16 %v329
    %v649 = vunpack.c.h.b16 %v329
    %v650 = vunpack.c.l.b16 %v330
    %v651 = vunpack.c.h.b16 %v330
    %v652 = vunpack.c.l.b16 %v331
    %v653 = vunpack.c.h.b16 %v331
    %v654 = vunpack.c.l.b16 %v332
    %v655 = vunpack.c.h.b16 %v332
    %v656 = vunpack.c.l.b16 %v333
    %v657 = vunpack.c.h.b16 %v333
    %v658 = vunpack.c.l.b16 %v334
    %v659 = vunpack.c.h.b16 %v334
    %v660 = vunpack.c.l.b16 %v335
    %v661 = vunpack.c.h.b16 %v335
    %v662 = vunpack.c.l.b16 %v336
    %v663 = vunpack.c.h.b16 %v336
    %v664 = vunpack.c.l.b16 %v337
    %v665 = vunpack.c.h.b16 %v337
    %v666 = vunpack.c.l.b16 %v338
    %v667 = vunpack.c.h.b16 %v338
    %v668 = vpack.c.b16 %v640, %v636
    %v669 = vpack.c.b16 %v641, %v637
    %v670 = vpack.c.b16 %v642, %v638
    %v671 = vpack.c.b16 %v643, %v639
    %v672 = vpack.c.b16 %v648, %v644
    %v673 = vpack.c.b16 %v649, %v645
    %v674 = vpack.c.b16 %v650, %v646
    %v675 = vpack.c.b16 %v651, %v647
    %v676 = vpack.c.b16 %v656, %v652
    %v677 = vpack.c.b16 %v657, %v653
    %v678 = vpack.c.b16 %v658, %v654
    %v679 = vpack.c.b16 %v659, %v655
    %v680 = vpack.c.b16 %v664, %v660
    %v681 = vpack.c.b16 %v665, %v661
    %v682 = vpack.c.b16 %v666, %v662
    %v683 = vpack.c.b16 %v667, %v663
    %v701 = vsel %vm265, %v321, 0
    %v704 = vsel %vm265, %v322, 0
    %706 = vmatprep.subr.bf16.mxu0 %v669
    %707 = vmatpush1.bf16.msra.mxu0 %v668
    %708 = vmatprep.subr.bf16.mxu0 %v673
    %709 = vmatpush1.bf16.msra.mxu0 %v672
    %710 = vmatprep.subr.bf16.mxu0 %v677
    %711 = vmatpush1.bf16.msra.mxu0 %v676
    %712 = vmatprep.subr.bf16.mxu0 %v681
    %713 = vmatpush1.bf16.msra.mxu0 %v680
    %714 = vmatprep.subr.bf16.mxu0 0
    %715 = vmatpush1.bf16.msra.mxu0 0
    %716 = vmatprep.subr.bf16.mxu0 0
    %717 = vmatpush1.bf16.msra.mxu0 0
    %718 = vmatprep.subr.bf16.mxu0 0
    %719 = vmatpush1.bf16.msra.mxu0 0
    %720 = vmatprep.subr.bf16.mxu0 0
    %721 = vmatpush1.bf16.msra.mxu0 0
    %722 = vmatprep.subr.bf16.mxu0 0
    %723 = vmatpush1.bf16.msra.mxu0 0
    %724 = vmatprep.subr.bf16.mxu0 0
    %725 = vmatpush1.bf16.msra.mxu0 0
    %726 = vmatprep.subr.bf16.mxu0 0
    %727 = vmatpush1.bf16.msra.mxu0 0
    %728 = vmatprep.subr.bf16.mxu0 0
    %729 = vmatpush1.bf16.msra.mxu0 0
    %730 = vmatprep.subr.bf16.mxu0 0
    %731 = vmatpush1.bf16.msra.mxu0 0
    %732 = vmatprep.subr.bf16.mxu0 0
    %733 = vmatpush1.bf16.msra.mxu0 0
    %734 = vmatprep.subr.bf16.mxu0 0
    %735 = vmatpush1.bf16.msra.mxu0 0
    %736 = vmatprep.subr.bf16.mxu0 0
    %737 = vmatpush1.bf16.msra.mxu0 0
    %738 = vmatprep.mubr.bf16.mxu0 0
    %739 = vmatmul.mubr.bf16.gmra.mrb[0].mxu0 %v701
    %v740 = vpop.f32.mrb[0].mxu0
    %v741 = vadd.f32 %v549, %v740
    %v742 = vpop.f32.mrb[0].mxu0
    %v743 = vadd.f32 %v551, %v742
    %v744 = vpop.f32.mrb[0].mxu0
    %v745 = vadd.f32 %v553, %v744
    %v746 = vpop.f32.mrb[0].mxu0
    %v747 = vadd.f32 %v555, %v746
    %748 = vmatprep.mubr.bf16.mxu0 0
    %749 = vmatmul.mubr.bf16.gmra.mrb[0].mxu0 %v704
    %v750 = vpop.f32.mrb[0].mxu0
    %v751 = vadd.f32 %v559, %v750
    %v752 = vpop.f32.mrb[0].mxu0
    %v753 = vadd.f32 %v561, %v752
    %v754 = vpop.f32.mrb[0].mxu0
    %v755 = vadd.f32 %v563, %v754
    %v756 = vpop.f32.mrb[0].mxu0
    %v757 = vadd.f32 %v565, %v756
    %758 = vdwg.mxu0
    %759 = vmatprep.subr.bf16.mxu0 %v671
    %760 = vmatpush1.bf16.msra.mxu0 %v670
    %761 = vmatprep.subr.bf16.mxu0 %v675
    %762 = vmatpush1.bf16.msra.mxu0 %v674
    %763 = vmatprep.subr.bf16.mxu0 %v679
    %764 = vmatpush1.bf16.msra.mxu0 %v678
    %765 = vmatprep.subr.bf16.mxu0 %v683
    %766 = vmatpush1.bf16.msra.mxu0 %v682
    %767 = vmatprep.subr.bf16.mxu0 0
    %768 = vmatpush1.bf16.msra.mxu0 0
    %769 = vmatprep.subr.bf16.mxu0 0
    %770 = vmatpush1.bf16.msra.mxu0 0
    %771 = vmatprep.subr.bf16.mxu0 0
    %772 = vmatpush1.bf16.msra.mxu0 0
    %773 = vmatprep.subr.bf16.mxu0 0
    %774 = vmatpush1.bf16.msra.mxu0 0
    %775 = vmatprep.subr.bf16.mxu0 0
    %776 = vmatpush1.bf16.msra.mxu0 0
    %777 = vmatprep.subr.bf16.mxu0 0
    %778 = vmatpush1.bf16.msra.mxu0 0
    %779 = vmatprep.subr.bf16.mxu0 0
    %780 = vmatpush1.bf16.msra.mxu0 0
    %781 = vmatprep.subr.bf16.mxu0 0
    %782 = vmatpush1.bf16.msra.mxu0 0
    %783 = vmatprep.subr.bf16.mxu0 0
    %784 = vmatpush1.bf16.msra.mxu0 0
    %785 = vmatprep.subr.bf16.mxu0 0
    %786 = vmatpush1.bf16.msra.mxu0 0
    %787 = vmatprep.subr.bf16.mxu0 0
    %788 = vmatpush1.bf16.msra.mxu0 0
    %789 = vmatprep.subr.bf16.mxu0 0
    %790 = vmatpush1.bf16.msra.mxu0 0
    %791 = vmatprep.mubr.bf16.mxu0 0
    %792 = vmatmul.mubr.bf16.gmra.mrb[0].mxu0 %v701
    %v793 = vpop.f32.mrb[0].mxu0
    %v794 = vadd.f32 %v602, %v793
    %v795 = vpop.f32.mrb[0].mxu0
    %v796 = vadd.f32 %v604, %v795
    %v797 = vpop.f32.mrb[0].mxu0
    %v798 = vadd.f32 %v606, %v797
    %v799 = vpop.f32.mrb[0].mxu0
    %v800 = vadd.f32 %v608, %v799
    %801 = vmatprep.mubr.bf16.mxu0 0
    %802 = vmatmul.mubr.bf16.gmra.mrb[0].mxu0 %v704
    %v803 = vpop.f32.mrb[0].mxu0
    %v804 = vadd.f32 %v612, %v803
    %v805 = vpop.f32.mrb[0].mxu0
    %v806 = vadd.f32 %v614, %v805
    %v807 = vpop.f32.mrb[0].mxu0
    %v808 = vadd.f32 %v616, %v807
    %v809 = vpop.f32.mrb[0].mxu0
    %v810 = vadd.f32 %v618, %v809
    %811 = vdwg.mxu0
    %s812 = scalar_lea.vmem [#allocation3], 32
    %v813 = vld [vmem:[%s812] sm:$0xf]
    %v814 = vld [vmem:[%s812 + $0x4] sm:$0xf]
    %v815 = vld [vmem:[%s812 + $0x8] sm:$0xf]
    %v816 = vld [vmem:[%s812 + $0xc] sm:$0xf]
    %v821 = vunpack.c.l.b16 %v813
    %v822 = vunpack.c.l.b16 %v814
    %v823 = vunpack.c.l.b16 %v815
    %v824 = vunpack.c.l.b16 %v816
    %v825 = vpack.c.b16 %v822, %v821
    %v826 = vpack.c.b16 %v824, %v823
    %v828 = vsel %vm265, %v825, 0
    %v831 = vsel %vm265, %v826, 0
    %833 = vmatprep.subr.bf16.mxu0 0
    %834 = vmatpush1.bf16.msra.mxu0 %v246
    %835 = vmatprep.subr.bf16.mxu0 0
    %836 = vmatpush1.bf16.msra.mxu0 %v247
    %837 = vmatprep.subr.bf16.mxu0 0
    %838 = vmatpush1.bf16.msra.mxu0 %v248
    %839 = vmatprep.subr.bf16.mxu0 0
    %840 = vmatpush1.bf16.msra.mxu0 %v249
    %841 = vmatprep.subr.bf16.mxu0 0
    %842 = vmatpush1.bf16.msra.mxu0 0
    %843 = vmatprep.subr.bf16.mxu0 0
    %844 = vmatpush1.bf16.msra.mxu0 0
    %845 = vmatprep.subr.bf16.mxu0 0
    %846 = vmatpush1.bf16.msra.mxu0 0
    %847 = vmatprep.subr.bf16.mxu0 0
    %848 = vmatpush1.bf16.msra.mxu0 0
    %849 = vmatprep.subr.bf16.mxu0 0
    %850 = vmatpush1.bf16.msra.mxu0 0
    %851 = vmatprep.subr.bf16.mxu0 0
    %852 = vmatpush1.bf16.msra.mxu0 0
    %853 = vmatprep.subr.bf16.mxu0 0
    %854 = vmatpush1.bf16.msra.mxu0 0
    %855 = vmatprep.subr.bf16.mxu0 0
    %856 = vmatpush1.bf16.msra.mxu0 0
    %857 = vmatprep.subr.bf16.mxu0 0
    %858 = vmatpush1.bf16.msra.mxu0 0
    %859 = vmatprep.subr.bf16.mxu0 0
    %860 = vmatpush1.bf16.msra.mxu0 0
    %861 = vmatprep.subr.bf16.mxu0 0
    %862 = vmatpush1.bf16.msra.mxu0 0
    %863 = vmatprep.subr.bf16.mxu0 0
    %864 = vmatpush1.bf16.msra.mxu0 0
    %865 = vmatprep.mubr.bf16.mxu0 0
    %866 = vmatmul.mubr.bf16.gmra.mrb[0].mxu0 %v828
    %v867 = vpop.f32.mrb[0].mxu0
    %v868 = vadd.f32 0.0, %v867
    %v869 = vpop.f32.mrb[0].mxu0
    %v870 = vpop.f32.mrb[0].mxu0
    %v871 = vadd.f32 0.0, %v870
    %v872 = vpop.f32.mrb[0].mxu0
    %873 = vmatprep.mubr.bf16.mxu0 0
    %874 = vmatmul.mubr.bf16.gmra.mrb[0].mxu0 %v831
    %v875 = vpop.f32.mrb[0].mxu0
    %v876 = vadd.f32 0.0, %v875
    %v877 = vpop.f32.mrb[0].mxu0
    %v878 = vpop.f32.mrb[0].mxu0
    %v879 = vadd.f32 0.0, %v878
    %v880 = vpop.f32.mrb[0].mxu0
    %881 = vdwg.mxu0
    %v882 = vpack.c.bf16 %v871, %v868
    %v883 = vpack.c.bf16 %v879, %v876
    %s884 = scalar_lea.vmem [#allocation5], 256
    %v885 = vld [vmem:[%s884] sm:$0xff]
    %v886 = vld [vmem:[%s884 + $0x8] sm:$0xff]
    %v887 = vld [vmem:[%s884 + $0x10] sm:$0xff]
    %v888 = vld [vmem:[%s884 + $0x18] sm:$0xff]
    %v889 = vld [vmem:[%s884 + $0x20] sm:$0xff]
    %v890 = vld [vmem:[%s884 + $0x28] sm:$0xff]
    %v891 = vld [vmem:[%s884 + $0x30] sm:$0xff]
    %v892 = vld [vmem:[%s884 + $0x38] sm:$0xff]
    %v893 = vld [vmem:[%s884 + $0x40] sm:$0xff]
    %v894 = vld [vmem:[%s884 + $0x48] sm:$0xff]
    %v895 = vld [vmem:[%s884 + $0x50] sm:$0xff]
    %v896 = vld [vmem:[%s884 + $0x58] sm:$0xff]
    %v897 = vld [vmem:[%s884 + $0x60] sm:$0xff]
    %v898 = vld [vmem:[%s884 + $0x68] sm:$0xff]
    %v899 = vld [vmem:[%s884 + $0x70] sm:$0xff]
    %v900 = vld [vmem:[%s884 + $0x78] sm:$0xff]
    %v917 = vunpack.c.l.b16 %v885
    %v918 = vunpack.c.h.b16 %v885
    %v919 = vunpack.c.l.b16 %v886
    %v920 = vunpack.c.h.b16 %v886
    %v921 = vunpack.c.l.b16 %v887
    %v922 = vunpack.c.h.b16 %v887
    %v923 = vunpack.c.l.b16 %v888
    %v924 = vunpack.c.h.b16 %v888
    %v925 = vunpack.c.l.b16 %v889
    %v926 = vunpack.c.h.b16 %v889
    %v927 = vunpack.c.l.b16 %v890
    %v928 = vunpack.c.h.b16 %v890
    %v929 = vunpack.c.l.b16 %v891
    %v930 = vunpack.c.h.b16 %v891
    %v931 = vunpack.c.l.b16 %v892
    %v932 = vunpack.c.h.b16 %v892
    %v933 = vunpack.c.l.b16 %v893
    %v934 = vunpack.c.h.b16 %v893
    %v935 = vunpack.c.l.b16 %v894
    %v936 = vunpack.c.h.b16 %v894
    %v937 = vunpack.c.l.b16 %v895
    %v938 = vunpack.c.h.b16 %v895
    %v939 = vunpack.c.l.b16 %v896
    %v940 = vunpack.c.h.b16 %v896
    %v941 = vunpack.c.l.b16 %v897
    %v942 = vunpack.c.h.b16 %v897
    %v943 = vunpack.c.l.b16 %v898
    %v944 = vunpack.c.h.b16 %v898
    %v945 = vunpack.c.l.b16 %v899
    %v946 = vunpack.c.h.b16 %v899
    %v947 = vunpack.c.l.b16 %v900
    %v948 = vunpack.c.h.b16 %v900
    %v949 = vpack.c.b16 %v921, %v917
    %v950 = vpack.c.b16 %v922, %v918
    %v951 = vpack.c.b16 %v923, %v919
    %v952 = vpack.c.b16 %v924, %v920
    %v953 = vpack.c.b16 %v929, %v925
    %v954 = vpack.c.b16 %v930, %v926
    %v955 = vpack.c.b16 %v931, %v927
    %v956 = vpack.c.b16 %v932, %v928
    %v957 = vpack.c.b16 %v937, %v933
    %v958 = vpack.c.b16 %v938, %v934
    %v959 = vpack.c.b16 %v939, %v935
    %v960 = vpack.c.b16 %v940, %v936
    %v961 = vpack.c.b16 %v945, %v941
    %v962 = vpack.c.b16 %v946, %v942
    %v963 = vpack.c.b16 %v947, %v943
    %v964 = vpack.c.b16 %v948, %v944
    %v982 = vsel %vm265, %v882, 0
    %v985 = vsel %vm265, %v883, 0
    %987 = vmatprep.subr.bf16.mxu0 %v950
    %988 = vmatpush1.bf16.msra.mxu0 %v949
    %989 = vmatprep.subr.bf16.mxu0 %v954
    %990 = vmatpush1.bf16.msra.mxu0 %v953
    %991 = vmatprep.subr.bf16.mxu0 %v958
    %992 = vmatpush1.bf16.msra.mxu0 %v957
    %993 = vmatprep.subr.bf16.mxu0 %v962
    %994 = vmatpush1.bf16.msra.mxu0 %v961
    %995 = vmatprep.subr.bf16.mxu0 0
    %996 = vmatpush1.bf16.msra.mxu0 0
    %997 = vmatprep.subr.bf16.mxu0 0
    %998 = vmatpush1.bf16.msra.mxu0 0
    %999 = vmatprep.subr.bf16.mxu0 0
    %1000 = vmatpush1.bf16.msra.mxu0 0
    %1001 = vmatprep.subr.bf16.mxu0 0
    %1002 = vmatpush1.bf16.msra.mxu0 0
    %1003 = vmatprep.subr.bf16.mxu0 0
    %1004 = vmatpush1.bf16.msra.mxu0 0
    %1005 = vmatprep.subr.bf16.mxu0 0
    %1006 = vmatpush1.bf16.msra.mxu0 0
    %1007 = vmatprep.subr.bf16.mxu0 0
    %1008 = vmatpush1.bf16.msra.mxu0 0
    %1009 = vmatprep.subr.bf16.mxu0 0
    %1010 = vmatpush1.bf16.msra.mxu0 0
    %1011 = vmatprep.subr.bf16.mxu0 0
    %1012 = vmatpush1.bf16.msra.mxu0 0
    %1013 = vmatprep.subr.bf16.mxu0 0
    %1014 = vmatpush1.bf16.msra.mxu0 0
    %1015 = vmatprep.subr.bf16.mxu0 0
    %1016 = vmatpush1.bf16.msra.mxu0 0
    %1017 = vmatprep.subr.bf16.mxu0 0
    %1018 = vmatpush1.bf16.msra.mxu0 0
    %1019 = vmatprep.mubr.bf16.mxu0 0
    %1020 = vmatmul.mubr.bf16.gmra.mrb[0].mxu0 %v982
    %v1021 = vpop.f32.mrb[0].mxu0
    %v1022 = vadd.f32 0.0, %v1021
    %v1023 = vpop.f32.mrb[0].mxu0
    %v1024 = vadd.f32 0.0, %v1023
    %v1025 = vpop.f32.mrb[0].mxu0
    %v1026 = vadd.f32 0.0, %v1025
    %v1027 = vpop.f32.mrb[0].mxu0
    %v1028 = vadd.f32 0.0, %v1027
    %1029 = vmatprep.mubr.bf16.mxu0 0
    %1030 = vmatmul.mubr.bf16.gmra.mrb[0].mxu0 %v985
    %v1031 = vpop.f32.mrb[0].mxu0
    %v1032 = vadd.f32 0.0, %v1031
    %v1033 = vpop.f32.mrb[0].mxu0
    %v1034 = vadd.f32 0.0, %v1033
    %v1035 = vpop.f32.mrb[0].mxu0
    %v1036 = vadd.f32 0.0, %v1035
    %v1037 = vpop.f32.mrb[0].mxu0
    %v1038 = vadd.f32 0.0, %v1037
    %1039 = vdwg.mxu0
    %1040 = vmatprep.subr.bf16.mxu0 %v952
    %1041 = vmatpush1.bf16.msra.mxu0 %v951
    %1042 = vmatprep.subr.bf16.mxu0 %v956
    %1043 = vmatpush1.bf16.msra.mxu0 %v955
    %1044 = vmatprep.subr.bf16.mxu0 %v960
    %1045 = vmatpush1.bf16.msra.mxu0 %v959
    %1046 = vmatprep.subr.bf16.mxu0 %v964
    %1047 = vmatpush1.bf16.msra.mxu0 %v963
    %1048 = vmatprep.subr.bf16.mxu0 0
    %1049 = vmatpush1.bf16.msra.mxu0 0
    %1050 = vmatprep.subr.bf16.mxu0 0
    %1051 = vmatpush1.bf16.msra.mxu0 0
    %1052 = vmatprep.subr.bf16.mxu0 0
    %1053 = vmatpush1.bf16.msra.mxu0 0
    %1054 = vmatprep.subr.bf16.mxu0 0
    %1055 = vmatpush1.bf16.msra.mxu0 0
    %1056 = vmatprep.subr.bf16.mxu0 0
    %1057 = vmatpush1.bf16.msra.mxu0 0
    %1058 = vmatprep.subr.bf16.mxu0 0
    %1059 = vmatpush1.bf16.msra.mxu0 0
    %1060 = vmatprep.subr.bf16.mxu0 0
    %1061 = vmatpush1.bf16.msra.mxu0 0
    %1062 = vmatprep.subr.bf16.mxu0 0
    %1063 = vmatpush1.bf16.msra.mxu0 0
    %1064 = vmatprep.subr.bf16.mxu0 0
    %1065 = vmatpush1.bf16.msra.mxu0 0
    %1066 = vmatprep.subr.bf16.mxu0 0
    %1067 = vmatpush1.bf16.msra.mxu0 0
    %1068 = vmatprep.subr.bf16.mxu0 0
    %1069 = vmatpush1.bf16.msra.mxu0 0
    %1070 = vmatprep.subr.bf16.mxu0 0
    %1071 = vmatpush1.bf16.msra.mxu0 0
    %1072 = vmatprep.mubr.bf16.mxu0 0
    %1073 = vmatmul.mubr.bf16.gmra.mrb[0].mxu0 %v982
    %v1074 = vpop.f32.mrb[0].mxu0
    %v1075 = vadd.f32 0.0, %v1074
    %v1076 = vpop.f32.mrb[0].mxu0
    %v1077 = vadd.f32 0.0, %v1076
    %v1078 = vpop.f32.mrb[0].mxu0
    %v1079 = vadd.f32 0.0, %v1078
    %v1080 = vpop.f32.mrb[0].mxu0
    %v1081 = vadd.f32 0.0, %v1080
    %1082 = vmatprep.mubr.bf16.mxu0 0
    %1083 = vmatmul.mubr.bf16.gmra.mrb[0].mxu0 %v985
    %v1084 = vpop.f32.mrb[0].mxu0
    %v1085 = vadd.f32 0.0, %v1084
    %v1086 = vpop.f32.mrb[0].mxu0
    %v1087 = vadd.f32 0.0, %v1086
    %v1088 = vpop.f32.mrb[0].mxu0
    %v1089 = vadd.f32 0.0, %v1088
    %v1090 = vpop.f32.mrb[0].mxu0
    %v1091 = vadd.f32 0.0, %v1090
    %1092 = vdwg.mxu0
    %v1093 = vadd.f32 %v741, %v1022
    %v1094 = vadd.f32 %v743, %v1024
    %v1095 = vadd.f32 %v794, %v1075
    %v1096 = vadd.f32 %v796, %v1077
    %v1097 = vadd.f32 %v745, %v1026
    %v1098 = vadd.f32 %v747, %v1028
    %v1099 = vadd.f32 %v798, %v1079
    %v1100 = vadd.f32 %v800, %v1081
    %v1101 = vadd.f32 %v751, %v1032
    %v1102 = vadd.f32 %v753, %v1034
    %v1103 = vadd.f32 %v804, %v1085
    %v1104 = vadd.f32 %v806, %v1087
    %v1105 = vadd.f32 %v755, %v1036
    %v1106 = vadd.f32 %v757, %v1038
    %v1107 = vadd.f32 %v808, %v1089
    %v1108 = vadd.f32 %v810, %v1091
    %s1109 = scalar_lea.vmem [#allocation3], 48
    %v1110 = vld [vmem:[%s1109] sm:$0xf]
    %v1111 = vld [vmem:[%s1109 + $0x4] sm:$0xf]
    %v1112 = vld [vmem:[%s1109 + $0x8] sm:$0xf]
    %v1113 = vld [vmem:[%s1109 + $0xc] sm:$0xf]
    %v1118 = vunpack.c.l.b16 %v1110
    %v1119 = vunpack.c.l.b16 %v1111
    %v1120 = vunpack.c.l.b16 %v1112
    %v1121 = vunpack.c.l.b16 %v1113
    %v1122 = vpack.c.b16 %v1119, %v1118
    %v1123 = vpack.c.b16 %v1121, %v1120
    %v1125 = vsel %vm265, %v1122, 0
    %v1128 = vsel %vm265, %v1123, 0
    %1130 = vmatprep.subr.bf16.mxu0 0
    %1131 = vmatpush1.bf16.msra.mxu0 %v246
    %1132 = vmatprep.subr.bf16.mxu0 0
    %1133 = vmatpush1.bf16.msra.mxu0 %v247
    %1134 = vmatprep.subr.bf16.mxu0 0
    %1135 = vmatpush1.bf16.msra.mxu0 %v248
    %1136 = vmatprep.subr.bf16.mxu0 0
    %1137 = vmatpush1.bf16.msra.mxu0 %v249
    %1138 = vmatprep.subr.bf16.mxu0 0
    %1139 = vmatpush1.bf16.msra.mxu0 0
    %1140 = vmatprep.subr.bf16.mxu0 0
    %1141 = vmatpush1.bf16.msra.mxu0 0
    %1142 = vmatprep.subr.bf16.mxu0 0
    %1143 = vmatpush1.bf16.msra.mxu0 0
    %1144 = vmatprep.subr.bf16.mxu0 0
    %1145 = vmatpush1.bf16.msra.mxu0 0
    %1146 = vmatprep.subr.bf16.mxu0 0
    %1147 = vmatpush1.bf16.msra.mxu0 0
    %1148 = vmatprep.subr.bf16.mxu0 0
    %1149 = vmatpush1.bf16.msra.mxu0 0
    %1150 = vmatprep.subr.bf16.mxu0 0
    %1151 = vmatpush1.bf16.msra.mxu0 0
    %1152 = vmatprep.subr.bf16.mxu0 0
    %1153 = vmatpush1.bf16.msra.mxu0 0
    %1154 = vmatprep.subr.bf16.mxu0 0
    %1155 = vmatpush1.bf16.msra.mxu0 0
    %1156 = vmatprep.subr.bf16.mxu0 0
    %1157 = vmatpush1.bf16.msra.mxu0 0
    %1158 = vmatprep.subr.bf16.mxu0 0
    %1159 = vmatpush1.bf16.msra.mxu0 0
    %1160 = vmatprep.subr.bf16.mxu0 0
    %1161 = vmatpush1.bf16.msra.mxu0 0
    %1162 = vmatprep.mubr.bf16.mxu0 0
    %1163 = vmatmul.mubr.bf16.gmra.mrb[0].mxu0 %v1125
    %v1164 = vpop.f32.mrb[0].mxu0
    %v1165 = vadd.f32 0.0, %v1164
    %v1166 = vpop.f32.mrb[0].mxu0
    %v1167 = vpop.f32.mrb[0].mxu0
    %v1168 = vadd.f32 0.0, %v1167
    %v1169 = vpop.f32.mrb[0].mxu0
    %1170 = vmatprep.mubr.bf16.mxu0 0
    %1171 = vmatmul.mubr.bf16.gmra.mrb[0].mxu0 %v1128
    %v1172 = vpop.f32.mrb[0].mxu0
    %v1173 = vadd.f32 0.0, %v1172
    %v1174 = vpop.f32.mrb[0].mxu0
    %v1175 = vpop.f32.mrb[0].mxu0
    %v1176 = vadd.f32 0.0, %v1175
    %v1177 = vpop.f32.mrb[0].mxu0
    %1178 = vdwg.mxu0
    %v1179 = vpack.c.bf16 %v1168, %v1165
    %v1180 = vpack.c.bf16 %v1176, %v1173
    %s1181 = scalar_lea.vmem [#allocation5], 384
    %v1182 = vld [vmem:[%s1181] sm:$0xff]
    %v1183 = vld [vmem:[%s1181 + $0x8] sm:$0xff]
    %v1184 = vld [vmem:[%s1181 + $0x10] sm:$0xff]
    %v1185 = vld [vmem:[%s1181 + $0x18] sm:$0xff]
    %v1186 = vld [vmem:[%s1181 + $0x20] sm:$0xff]
    %v1187 = vld [vmem:[%s1181 + $0x28] sm:$0xff]
    %v1188 = vld [vmem:[%s1181 + $0x30] sm:$0xff]
    %v1189 = vld [vmem:[%s1181 + $0x38] sm:$0xff]
    %v1190 = vld [vmem:[%s1181 + $0x40] sm:$0xff]
    %v1191 = vld [vmem:[%s1181 + $0x48] sm:$0xff]
    %v1192 = vld [vmem:[%s1181 + $0x50] sm:$0xff]
    %v1193 = vld [vmem:[%s1181 + $0x58] sm:$0xff]
    %v1194 = vld [vmem:[%s1181 + $0x60] sm:$0xff]
    %v1195 = vld [vmem:[%s1181 + $0x68] sm:$0xff]
    %v1196 = vld [vmem:[%s1181 + $0x70] sm:$0xff]
    %v1197 = vld [vmem:[%s1181 + $0x78] sm:$0xff]
    %v1214 = vunpack.c.l.b16 %v1182
    %v1215 = vunpack.c.h.b16 %v1182
    %v1216 = vunpack.c.l.b16 %v1183
    %v1217 = vunpack.c.h.b16 %v1183
    %v1218 = vunpack.c.l.b16 %v1184
    %v1219 = vunpack.c.h.b16 %v1184
    %v1220 = vunpack.c.l.b16 %v1185
    %v1221 = vunpack.c.h.b16 %v1185
    %v1222 = vunpack.c.l.b16 %v1186
    %v1223 = vunpack.c.h.b16 %v1186
    %v1224 = vunpack.c.l.b16 %v1187
    %v1225 = vunpack.c.h.b16 %v1187
    %v1226 = vunpack.c.l.b16 %v1188
    %v1227 = vunpack.c.h.b16 %v1188
    %v1228 = vunpack.c.l.b16 %v1189
    %v1229 = vunpack.c.h.b16 %v1189
    %v1230 = vunpack.c.l.b16 %v1190
    %v1231 = vunpack.c.h.b16 %v1190
    %v1232 = vunpack.c.l.b16 %v1191
    %v1233 = vunpack.c.h.b16 %v1191
    %v1234 = vunpack.c.l.b16 %v1192
    %v1235 = vunpack.c.h.b16 %v1192
    %v1236 = vunpack.c.l.b16 %v1193
    %v1237 = vunpack.c.h.b16 %v1193
    %v1238 = vunpack.c.l.b16 %v1194
    %v1239 = vunpack.c.h.b16 %v1194
    %v1240 = vunpack.c.l.b16 %v1195
    %v1241 = vunpack.c.h.b16 %v1195
    %v1242 = vunpack.c.l.b16 %v1196
    %v1243 = vunpack.c.h.b16 %v1196
    %v1244 = vunpack.c.l.b16 %v1197
    %v1245 = vunpack.c.h.b16 %v1197
    %v1246 = vpack.c.b16 %v1218, %v1214
    %v1247 = vpack.c.b16 %v1219, %v1215
    %v1248 = vpack.c.b16 %v1220, %v1216
    %v1249 = vpack.c.b16 %v1221, %v1217
    %v1250 = vpack.c.b16 %v1226, %v1222
    %v1251 = vpack.c.b16 %v1227, %v1223
    %v1252 = vpack.c.b16 %v1228, %v1224
    %v1253 = vpack.c.b16 %v1229, %v1225
    %v1254 = vpack.c.b16 %v1234, %v1230
    %v1255 = vpack.c.b16 %v1235, %v1231
    %v1256 = vpack.c.b16 %v1236, %v1232
    %v1257 = vpack.c.b16 %v1237, %v1233
    %v1258 = vpack.c.b16 %v1242, %v1238
    %v1259 = vpack.c.b16 %v1243, %v1239
    %v1260 = vpack.c.b16 %v1244, %v1240
    %v1261 = vpack.c.b16 %v1245, %v1241
    %v1279 = vsel %vm265, %v1179, 0
    %v1282 = vsel %vm265, %v1180, 0
    %1284 = vmatprep.subr.bf16.mxu0 %v1247
    %1285 = vmatpush1.bf16.msra.mxu0 %v1246
    %1286 = vmatprep.subr.bf16.mxu0 %v1251
    %1287 = vmatpush1.bf16.msra.mxu0 %v1250
    %1288 = vmatprep.subr.bf16.mxu0 %v1255
    %1289 = vmatpush1.bf16.msra.mxu0 %v1254
    %1290 = vmatprep.subr.bf16.mxu0 %v1259
    %1291 = vmatpush1.bf16.msra.mxu0 %v1258
    %1292 = vmatprep.subr.bf16.mxu0 0
    %1293 = vmatpush1.bf16.msra.mxu0 0
    %1294 = vmatprep.subr.bf16.mxu0 0
    %1295 = vmatpush1.bf16.msra.mxu0 0
    %1296 = vmatprep.subr.bf16.mxu0 0
    %1297 = vmatpush1.bf16.msra.mxu0 0
    %1298 = vmatprep.subr.bf16.mxu0 0
    %1299 = vmatpush1.bf16.msra.mxu0 0
    %1300 = vmatprep.subr.bf16.mxu0 0
    %1301 = vmatpush1.bf16.msra.mxu0 0
    %1302 = vmatprep.subr.bf16.mxu0 0
    %1303 = vmatpush1.bf16.msra.mxu0 0
    %1304 = vmatprep.subr.bf16.mxu0 0
    %1305 = vmatpush1.bf16.msra.mxu0 0
    %1306 = vmatprep.subr.bf16.mxu0 0
    %1307 = vmatpush1.bf16.msra.mxu0 0
    %1308 = vmatprep.subr.bf16.mxu0 0
    %1309 = vmatpush1.bf16.msra.mxu0 0
    %1310 = vmatprep.subr.bf16.mxu0 0
    %1311 = vmatpush1.bf16.msra.mxu0 0
    %1312 = vmatprep.subr.bf16.mxu0 0
    %1313 = vmatpush1.bf16.msra.mxu0 0
    %1314 = vmatprep.subr.bf16.mxu0 0
    %1315 = vmatpush1.bf16.msra.mxu0 0
    %1316 = vmatprep.mubr.bf16.mxu0 0
    %1317 = vmatmul.mubr.bf16.gmra.mrb[0].mxu0 %v1279
    %v1318 = vpop.f32.mrb[0].mxu0
    %v1319 = vadd.f32 0.0, %v1318
    %v1320 = vpop.f32.mrb[0].mxu0
    %v1321 = vadd.f32 0.0, %v1320
    %v1322 = vpop.f32.mrb[0].mxu0
    %v1323 = vadd.f32 0.0, %v1322
    %v1324 = vpop.f32.mrb[0].mxu0
    %v1325 = vadd.f32 0.0, %v1324
    %1326 = vmatprep.mubr.bf16.mxu0 0
    %1327 = vmatmul.mubr.bf16.gmra.mrb[0].mxu0 %v1282
    %v1328 = vpop.f32.mrb[0].mxu0
    %v1329 = vadd.f32 0.0, %v1328
    %v1330 = vpop.f32.mrb[0].mxu0
    %v1331 = vadd.f32 0.0, %v1330
    %v1332 = vpop.f32.mrb[0].mxu0
    %v1333 = vadd.f32 0.0, %v1332
    %v1334 = vpop.f32.mrb[0].mxu0
    %v1335 = vadd.f32 0.0, %v1334
    %1336 = vdwg.mxu0
    %1337 = vmatprep.subr.bf16.mxu0 %v1249
    %1338 = vmatpush1.bf16.msra.mxu0 %v1248
    %1339 = vmatprep.subr.bf16.mxu0 %v1253
    %1340 = vmatpush1.bf16.msra.mxu0 %v1252
    %1341 = vmatprep.subr.bf16.mxu0 %v1257
    %1342 = vmatpush1.bf16.msra.mxu0 %v1256
    %1343 = vmatprep.subr.bf16.mxu0 %v1261
    %1344 = vmatpush1.bf16.msra.mxu0 %v1260
    %1345 = vmatprep.subr.bf16.mxu0 0
    %1346 = vmatpush1.bf16.msra.mxu0 0
    %1347 = vmatprep.subr.bf16.mxu0 0
    %1348 = vmatpush1.bf16.msra.mxu0 0
    %1349 = vmatprep.subr.bf16.mxu0 0
    %1350 = vmatpush1.bf16.msra.mxu0 0
    %1351 = vmatprep.subr.bf16.mxu0 0
    %1352 = vmatpush1.bf16.msra.mxu0 0
    %1353 = vmatprep.subr.bf16.mxu0 0
    %1354 = vmatpush1.bf16.msra.mxu0 0
    %1355 = vmatprep.subr.bf16.mxu0 0
    %1356 = vmatpush1.bf16.msra.mxu0 0
    %1357 = vmatprep.subr.bf16.mxu0 0
    %1358 = vmatpush1.bf16.msra.mxu0 0
    %1359 = vmatprep.subr.bf16.mxu0 0
    %1360 = vmatpush1.bf16.msra.mxu0 0
    %1361 = vmatprep.subr.bf16.mxu0 0
    %1362 = vmatpush1.bf16.msra.mxu0 0
    %1363 = vmatprep.subr.bf16.mxu0 0
    %1364 = vmatpush1.bf16.msra.mxu0 0
    %1365 = vmatprep.subr.bf16.mxu0 0
    %1366 = vmatpush1.bf16.msra.mxu0 0
    %1367 = vmatprep.subr.bf16.mxu0 0
    %1368 = vmatpush1.bf16.msra.mxu0 0
    %1369 = vmatprep.mubr.bf16.mxu0 0
    %1370 = vmatmul.mubr.bf16.gmra.mrb[0].mxu0 %v1279
    %v1371 = vpop.f32.mrb[0].mxu0
    %v1372 = vadd.f32 0.0, %v1371
    %v1373 = vpop.f32.mrb[0].mxu0
    %v1374 = vadd.f32 0.0, %v1373
    %v1375 = vpop.f32.mrb[0].mxu0
    %v1376 = vadd.f32 0.0, %v1375
    %v1377 = vpop.f32.mrb[0].mxu0
    %v1378 = vadd.f32 0.0, %v1377
    %1379 = vmatprep.mubr.bf16.mxu0 0
    %1380 = vmatmul.mubr.bf16.gmra.mrb[0].mxu0 %v1282
    %v1381 = vpop.f32.mrb[0].mxu0
    %v1382 = vadd.f32 0.0, %v1381
    %v1383 = vpop.f32.mrb[0].mxu0
    %v1384 = vadd.f32 0.0, %v1383
    %v1385 = vpop.f32.mrb[0].mxu0
    %v1386 = vadd.f32 0.0, %v1385
    %v1387 = vpop.f32.mrb[0].mxu0
    %v1388 = vadd.f32 0.0, %v1387
    %1389 = vdwg.mxu0
    %v1390 = vadd.f32 %v1093, %v1319
    %v1391 = vadd.f32 %v1094, %v1321
    %v1392 = vadd.f32 %v1095, %v1372
    %v1393 = vadd.f32 %v1096, %v1374
    %v1394 = vadd.f32 %v1097, %v1323
    %v1395 = vadd.f32 %v1098, %v1325
    %v1396 = vadd.f32 %v1099, %v1376
    %v1397 = vadd.f32 %v1100, %v1378
    %v1398 = vadd.f32 %v1101, %v1329
    %v1399 = vadd.f32 %v1102, %v1331
    %v1400 = vadd.f32 %v1103, %v1382
    %v1401 = vadd.f32 %v1104, %v1384
    %v1402 = vadd.f32 %v1105, %v1333
    %v1403 = vadd.f32 %v1106, %v1335
    %v1404 = vadd.f32 %v1107, %v1386
    %v1405 = vadd.f32 %v1108, %v1388
    %v1407 = vlaneseq
    %v1408 = vshrl.u32 %v1407, 7
    %v1409 = vsub.s32 0, %v1408
    %v1410 = vrot.slane %v250, %v1409
    %v1411 = vlaneseq
    %v1412 = vshrl.u32 %v1411, 7
    %v1413 = vsub.s32 1, %v1412
    %v1414 = vrot.slane %v250, %v1413
    %v1415 = vlaneseq
    %v1416 = vshrl.u32 %v1415, 7
    %v1417 = vsub.s32 2, %v1416
    %v1418 = vrot.slane %v250, %v1417
    %v1419 = vlaneseq
    %v1420 = vshrl.u32 %v1419, 7
    %v1421 = vsub.s32 3, %v1420
    %v1422 = vrot.slane %v250, %v1421
    %v1427 = vadd.f32 %v1390, %v1410
    %v1428 = vadd.f32 %v1391, %v1414
    %v1429 = vadd.f32 %v1392, %v1418
    %v1430 = vadd.f32 %v1393, %v1422
    %v1431 = vadd.f32 %v1394, %v1410
    %v1432 = vadd.f32 %v1395, %v1414
    %v1433 = vadd.f32 %v1396, %v1418
    %v1434 = vadd.f32 %v1397, %v1422
    %v1435 = vadd.f32 %v1398, %v1410
    %v1436 = vadd.f32 %v1399, %v1414
    %v1437 = vadd.f32 %v1400, %v1418
    %v1438 = vadd.f32 %v1401, %v1422
    %v1439 = vadd.f32 %v1402, %v1410
    %v1440 = vadd.f32 %v1403, %v1414
    %v1441 = vadd.f32 %v1404, %v1418
    %v1442 = vadd.f32 %v1405, %v1422
    %v1443 = vld [vmem:[#allocation11] sm:$0xf]
    %v1444 = vpack.c.bf16 %v1431, %v1427
    %v1445 = vpack.c.bf16 %v1432, %v1428
    %v1446 = vpack.c.bf16 %v1433, %v1429
    %v1447 = vpack.c.bf16 %v1434, %v1430
    %v1448 = vpack.c.bf16 %v1439, %v1435
    %v1449 = vpack.c.bf16 %v1440, %v1436
    %v1450 = vpack.c.bf16 %v1441, %v1437
    %v1451 = vpack.c.bf16 %v1442, %v1438
    %v1452 = vld [vmem:[#allocation8] sm:$0xf]
    %v1453 = vld [vmem:[#allocation8 + $0x4] sm:$0xf]
    %v1456 = vunpack.c.l.b16 %v1452
    %v1457 = vunpack.c.l.b16 %v1453
    %v1458 = vpack.c.b16 %v1457, %v1456
    %vm1459 = vcmask 261120
    %v1461 = vsel %vm1459, %v1458, 0
    %1463 = vmatprep.subr.bf16.mxu0 %v1445
    %1464 = vmatpush1.bf16.msra.mxu0 %v1444
    %1465 = vmatprep.subr.bf16.mxu0 %v1449
    %1466 = vmatpush1.bf16.msra.mxu0 %v1448
    %1467 = vmatprep.subr.bf16.mxu0 0
    %1468 = vmatpush1.bf16.msra.mxu0 0
    %1469 = vmatprep.subr.bf16.mxu0 0
    %1470 = vmatpush1.bf16.msra.mxu0 0
    %1471 = vmatprep.subr.bf16.mxu0 0
    %1472 = vmatpush1.bf16.msra.mxu0 0
    %1473 = vmatprep.subr.bf16.mxu0 0
    %1474 = vmatpush1.bf16.msra.mxu0 0
    %1475 = vmatprep.subr.bf16.mxu0 0
    %1476 = vmatpush1.bf16.msra.mxu0 0
    %1477 = vmatprep.subr.bf16.mxu0 0
    %1478 = vmatpush1.bf16.msra.mxu0 0
    %1479 = vmatprep.subr.bf16.mxu0 0
    %1480 = vmatpush1.bf16.msra.mxu0 0
    %1481 = vmatprep.subr.bf16.mxu0 0
    %1482 = vmatpush1.bf16.msra.mxu0 0
    %1483 = vmatprep.subr.bf16.mxu0 0
    %1484 = vmatpush1.bf16.msra.mxu0 0
    %1485 = vmatprep.subr.bf16.mxu0 0
    %1486 = vmatpush1.bf16.msra.mxu0 0
    %1487 = vmatprep.subr.bf16.mxu0 0
    %1488 = vmatpush1.bf16.msra.mxu0 0
    %1489 = vmatprep.subr.bf16.mxu0 0
    %1490 = vmatpush1.bf16.msra.mxu0 0
    %1491 = vmatprep.subr.bf16.mxu0 0
    %1492 = vmatpush1.bf16.msra.mxu0 0
    %1493 = vmatprep.subr.bf16.mxu0 0
    %1494 = vmatpush1.bf16.msra.mxu0 0
    %1495 = vmatprep.mubr.bf16.mxu0 0
    %1496 = vmatmul.mubr.bf16.gmra.mrb[0].mxu0 %v1461
    %v1497 = vpop.f32.mrb[0].mxu0
    %v1498 = vadd.f32 0.0, %v1497
    %v1499 = vpop.f32.mrb[0].mxu0
    %v1500 = vadd.f32 0.0, %v1499
    %v1501 = vpop.f32.mrb[0].mxu0
    %v1502 = vadd.f32 0.0, %v1501
    %v1503 = vpop.f32.mrb[0].mxu0
    %v1504 = vadd.f32 0.0, %v1503
    %1505 = vdwg.mxu0
    %1506 = vmatprep.subr.bf16.mxu0 %v1447
    %1507 = vmatpush1.bf16.msra.mxu0 %v1446
    %1508 = vmatprep.subr.bf16.mxu0 %v1451
    %1509 = vmatpush1.bf16.msra.mxu0 %v1450
    %1510 = vmatprep.subr.bf16.mxu0 0
    %1511 = vmatpush1.bf16.msra.mxu0 0
    %1512 = vmatprep.subr.bf16.mxu0 0
    %1513 = vmatpush1.bf16.msra.mxu0 0
    %1514 = vmatprep.subr.bf16.mxu0 0
    %1515 = vmatpush1.bf16.msra.mxu0 0
    %1516 = vmatprep.subr.bf16.mxu0 0
    %1517 = vmatpush1.bf16.msra.mxu0 0
    %1518 = vmatprep.subr.bf16.mxu0 0
    %1519 = vmatpush1.bf16.msra.mxu0 0
    %1520 = vmatprep.subr.bf16.mxu0 0
    %1521 = vmatpush1.bf16.msra.mxu0 0
    %1522 = vmatprep.subr.bf16.mxu0 0
    %1523 = vmatpush1.bf16.msra.mxu0 0
    %1524 = vmatprep.subr.bf16.mxu0 0
    %1525 = vmatpush1.bf16.msra.mxu0 0
    %1526 = vmatprep.subr.bf16.mxu0 0
    %1527 = vmatpush1.bf16.msra.mxu0 0
    %1528 = vmatprep.subr.bf16.mxu0 0
    %1529 = vmatpush1.bf16.msra.mxu0 0
    %1530 = vmatprep.subr.bf16.mxu0 0
    %1531 = vmatpush1.bf16.msra.mxu0 0
    %1532 = vmatprep.subr.bf16.mxu0 0
    %1533 = vmatpush1.bf16.msra.mxu0 0
    %1534 = vmatprep.subr.bf16.mxu0 0
    %1535 = vmatpush1.bf16.msra.mxu0 0
    %1536 = vmatprep.subr.bf16.mxu0 0
    %1537 = vmatpush1.bf16.msra.mxu0 0
    %1538 = vmatprep.mubr.bf16.mxu0 0
    %1539 = vmatmul.mubr.bf16.gmra.mrb[0].mxu0 %v1461
    %v1540 = vpop.f32.mrb[0].mxu0
    %v1541 = vadd.f32 0.0, %v1540
    %v1542 = vpop.f32.mrb[0].mxu0
    %v1543 = vadd.f32 0.0, %v1542
    %v1544 = vpop.f32.mrb[0].mxu0
    %v1545 = vadd.f32 0.0, %v1544
    %v1546 = vpop.f32.mrb[0].mxu0
    %v1547 = vadd.f32 0.0, %v1546
    %1548 = vdwg.mxu0
    %v1549 = vpack.c.bf16 %v1502, %v1498
    %v1550 = vpack.c.bf16 %v1504, %v1500
    %v1551 = vpack.c.bf16 %v1545, %v1541
    %v1552 = vpack.c.bf16 %v1547, %v1543
    %v1553 = vld [vmem:[#allocation10] sm:$0xff]
    %v1554 = vld [vmem:[#allocation10 + $0x8] sm:$0xff]
    %v1555 = vld [vmem:[#allocation10 + $0x10] sm:$0xff]
    %v1556 = vld [vmem:[#allocation10 + $0x18] sm:$0xff]
    %v1557 = vld [vmem:[#allocation10 + $0x20] sm:$0xff]
    %v1558 = vld [vmem:[#allocation10 + $0x28] sm:$0xff]
    %v1559 = vld [vmem:[#allocation10 + $0x30] sm:$0xff]
    %v1560 = vld [vmem:[#allocation10 + $0x38] sm:$0xff]
    %v1561 = vld [vmem:[#allocation10 + $0x40] sm:$0xff]
    %v1562 = vld [vmem:[#allocation10 + $0x48] sm:$0xff]
    %v1563 = vld [vmem:[#allocation10 + $0x50] sm:$0xff]
    %v1564 = vld [vmem:[#allocation10 + $0x58] sm:$0xff]
    %v1565 = vld [vmem:[#allocation10 + $0x60] sm:$0xff]
    %v1566 = vld [vmem:[#allocation10 + $0x68] sm:$0xff]
    %v1567 = vld [vmem:[#allocation10 + $0x70] sm:$0xff]
    %v1568 = vld [vmem:[#allocation10 + $0x78] sm:$0xff]
    %v1569 = vld [vmem:[#allocation10 + $0x80] sm:$0xff]
    %v1570 = vld [vmem:[#allocation10 + $0x88] sm:$0xff]
    %v1571 = vld [vmem:[#allocation10 + $0x90] sm:$0xff]
    %v1572 = vld [vmem:[#allocation10 + $0x98] sm:$0xff]
    %v1573 = vld [vmem:[#allocation10 + $0xa0] sm:$0xff]
    %v1574 = vld [vmem:[#allocation10 + $0xa8] sm:$0xff]
    %v1575 = vld [vmem:[#allocation10 + $0xb0] sm:$0xff]
    %v1576 = vld [vmem:[#allocation10 + $0xb8] sm:$0xff]
    %v1577 = vld [vmem:[#allocation10 + $0xc0] sm:$0xff]
    %v1578 = vld [vmem:[#allocation10 + $0xc8] sm:$0xff]
    %v1579 = vld [vmem:[#allocation10 + $0xd0] sm:$0xff]
    %v1580 = vld [vmem:[#allocation10 + $0xd8] sm:$0xff]
    %v1581 = vld [vmem:[#allocation10 + $0xe0] sm:$0xff]
    %v1582 = vld [vmem:[#allocation10 + $0xe8] sm:$0xff]
    %v1583 = vld [vmem:[#allocation10 + $0xf0] sm:$0xff]
    %v1584 = vld [vmem:[#allocation10 + $0xf8] sm:$0xff]
    %v1585 = vld [vmem:[#allocation10 + $0x100] sm:$0xff]
    %v1586 = vld [vmem:[#allocation10 + $0x108] sm:$0xff]
    %v1587 = vld [vmem:[#allocation10 + $0x110] sm:$0xff]
    %v1588 = vld [vmem:[#allocation10 + $0x118] sm:$0xff]
    %v1589 = vld [vmem:[#allocation10 + $0x120] sm:$0xff]
    %v1590 = vld [vmem:[#allocation10 + $0x128] sm:$0xff]
    %v1591 = vld [vmem:[#allocation10 + $0x130] sm:$0xff]
    %v1592 = vld [vmem:[#allocation10 + $0x138] sm:$0xff]
    %v1593 = vld [vmem:[#allocation10 + $0x140] sm:$0xff]
    %v1594 = vld [vmem:[#allocation10 + $0x148] sm:$0xff]
    %v1595 = vld [vmem:[#allocation10 + $0x150] sm:$0xff]
    %v1596 = vld [vmem:[#allocation10 + $0x158] sm:$0xff]
    %v1597 = vld [vmem:[#allocation10 + $0x160] sm:$0xff]
    %v1598 = vld [vmem:[#allocation10 + $0x168] sm:$0xff]
    %v1599 = vld [vmem:[#allocation10 + $0x170] sm:$0xff]
    %v1600 = vld [vmem:[#allocation10 + $0x178] sm:$0xff]
    %v1601 = vld [vmem:[#allocation10 + $0x180] sm:$0xff]
    %v1602 = vld [vmem:[#allocation10 + $0x188] sm:$0xff]
    %v1603 = vld [vmem:[#allocation10 + $0x190] sm:$0xff]
    %v1604 = vld [vmem:[#allocation10 + $0x198] sm:$0xff]
    %v1605 = vld [vmem:[#allocation10 + $0x1a0] sm:$0xff]
    %v1606 = vld [vmem:[#allocation10 + $0x1a8] sm:$0xff]
    %v1607 = vld [vmem:[#allocation10 + $0x1b0] sm:$0xff]
    %v1608 = vld [vmem:[#allocation10 + $0x1b8] sm:$0xff]
    %v1609 = vld [vmem:[#allocation10 + $0x1c0] sm:$0xff]
    %v1610 = vld [vmem:[#allocation10 + $0x1c8] sm:$0xff]
    %v1611 = vld [vmem:[#allocation10 + $0x1d0] sm:$0xff]
    %v1612 = vld [vmem:[#allocation10 + $0x1d8] sm:$0xff]
    %v1613 = vld [vmem:[#allocation10 + $0x1e0] sm:$0xff]
    %v1614 = vld [vmem:[#allocation10 + $0x1e8] sm:$0xff]
    %v1615 = vld [vmem:[#allocation10 + $0x1f0] sm:$0xff]
    %v1616 = vld [vmem:[#allocation10 + $0x1f8] sm:$0xff]
    %v1617 = vld [vmem:[#allocation10 + $0x200] sm:$0xff]
    %v1618 = vld [vmem:[#allocation10 + $0x208] sm:$0xff]
    %v1619 = vld [vmem:[#allocation10 + $0x210] sm:$0xff]
    %v1620 = vld [vmem:[#allocation10 + $0x218] sm:$0xff]
    %v1621 = vld [vmem:[#allocation10 + $0x220] sm:$0xff]
    %v1622 = vld [vmem:[#allocation10 + $0x228] sm:$0xff]
    %v1623 = vld [vmem:[#allocation10 + $0x230] sm:$0xff]
    %v1624 = vld [vmem:[#allocation10 + $0x238] sm:$0xff]
    %v1625 = vld [vmem:[#allocation10 + $0x240] sm:$0xff]
    %v1626 = vld [vmem:[#allocation10 + $0x248] sm:$0xff]
    %v1627 = vld [vmem:[#allocation10 + $0x250] sm:$0xff]
    %v1628 = vld [vmem:[#allocation10 + $0x258] sm:$0xff]
    %v1629 = vld [vmem:[#allocation10 + $0x260] sm:$0xff]
    %v1630 = vld [vmem:[#allocation10 + $0x268] sm:$0xff]
    %v1631 = vld [vmem:[#allocation10 + $0x270] sm:$0xff]
    %v1632 = vld [vmem:[#allocation10 + $0x278] sm:$0xff]
    %v1633 = vld [vmem:[#allocation10 + $0x280] sm:$0xff]
    %v1634 = vld [vmem:[#allocation10 + $0x288] sm:$0xff]
    %v1635 = vld [vmem:[#allocation10 + $0x290] sm:$0xff]
    %v1636 = vld [vmem:[#allocation10 + $0x298] sm:$0xff]
    %v1637 = vld [vmem:[#allocation10 + $0x2a0] sm:$0xff]
    %v1638 = vld [vmem:[#allocation10 + $0x2a8] sm:$0xff]
    %v1639 = vld [vmem:[#allocation10 + $0x2b0] sm:$0xff]
    %v1640 = vld [vmem:[#allocation10 + $0x2b8] sm:$0xff]
    %v1641 = vld [vmem:[#allocation10 + $0x2c0] sm:$0xff]
    %v1642 = vld [vmem:[#allocation10 + $0x2c8] sm:$0xff]
    %v1643 = vld [vmem:[#allocation10 + $0x2d0] sm:$0xff]
    %v1644 = vld [vmem:[#allocation10 + $0x2d8] sm:$0xff]
    %v1645 = vld [vmem:[#allocation10 + $0x2e0] sm:$0xff]
    %v1646 = vld [vmem:[#allocation10 + $0x2e8] sm:$0xff]
    %v1647 = vld [vmem:[#allocation10 + $0x2f0] sm:$0xff]
    %v1648 = vld [vmem:[#allocation10 + $0x2f8] sm:$0xff]
    %v1649 = vld [vmem:[#allocation10 + $0x300] sm:$0xff]
    %v1650 = vld [vmem:[#allocation10 + $0x308] sm:$0xff]
    %v1651 = vld [vmem:[#allocation10 + $0x310] sm:$0xff]
    %v1652 = vld [vmem:[#allocation10 + $0x318] sm:$0xff]
    %v1653 = vld [vmem:[#allocation10 + $0x320] sm:$0xff]
    %v1654 = vld [vmem:[#allocation10 + $0x328] sm:$0xff]
    %v1655 = vld [vmem:[#allocation10 + $0x330] sm:$0xff]
    %v1656 = vld [vmem:[#allocation10 + $0x338] sm:$0xff]
    %v1657 = vld [vmem:[#allocation10 + $0x340] sm:$0xff]
    %v1658 = vld [vmem:[#allocation10 + $0x348] sm:$0xff]
    %v1659 = vld [vmem:[#allocation10 + $0x350] sm:$0xff]
    %v1660 = vld [vmem:[#allocation10 + $0x358] sm:$0xff]
    %v1661 = vld [vmem:[#allocation10 + $0x360] sm:$0xff]
    %v1662 = vld [vmem:[#allocation10 + $0x368] sm:$0xff]
    %v1663 = vld [vmem:[#allocation10 + $0x370] sm:$0xff]
    %v1664 = vld [vmem:[#allocation10 + $0x378] sm:$0xff]
    %v1665 = vld [vmem:[#allocation10 + $0x380] sm:$0xff]
    %v1666 = vld [vmem:[#allocation10 + $0x388] sm:$0xff]
    %v1667 = vld [vmem:[#allocation10 + $0x390] sm:$0xff]
    %v1668 = vld [vmem:[#allocation10 + $0x398] sm:$0xff]
    %v1669 = vld [vmem:[#allocation10 + $0x3a0] sm:$0xff]
    %v1670 = vld [vmem:[#allocation10 + $0x3a8] sm:$0xff]
    %v1671 = vld [vmem:[#allocation10 + $0x3b0] sm:$0xff]
    %v1672 = vld [vmem:[#allocation10 + $0x3b8] sm:$0xff]
    %v1673 = vld [vmem:[#allocation10 + $0x3c0] sm:$0xff]
    %v1674 = vld [vmem:[#allocation10 + $0x3c8] sm:$0xff]
    %v1675 = vld [vmem:[#allocation10 + $0x3d0] sm:$0xff]
    %v1676 = vld [vmem:[#allocation10 + $0x3d8] sm:$0xff]
    %v1677 = vld [vmem:[#allocation10 + $0x3e0] sm:$0xff]
    %v1678 = vld [vmem:[#allocation10 + $0x3e8] sm:$0xff]
    %v1679 = vld [vmem:[#allocation10 + $0x3f0] sm:$0xff]
    %v1680 = vld [vmem:[#allocation10 + $0x3f8] sm:$0xff]
    %s1681 = scalar_lea.vmem [#allocation8], 8
    %v1682 = vld [vmem:[%s1681] sm:$0xf]
    %v1683 = vld [vmem:[%s1681 + $0x4] sm:$0xf]
    %v1686 = vunpack.c.l.b16 %v1682
    %v1687 = vunpack.c.l.b16 %v1683
    %v1688 = vpack.c.b16 %v1687, %v1686
    %v1690 = vsel %vm1459, %v1688, 0
    %1692 = vmatprep.subr.bf16.mxu0 %v1445
    %1693 = vmatpush1.bf16.msra.mxu0 %v1444
    %1694 = vmatprep.subr.bf16.mxu0 %v1449
    %1695 = vmatpush1.bf16.msra.mxu0 %v1448
    %1696 = vmatprep.subr.bf16.mxu0 0
    %1697 = vmatpush1.bf16.msra.mxu0 0
    %1698 = vmatprep.subr.bf16.mxu0 0
    %1699 = vmatpush1.bf16.msra.mxu0 0
    %1700 = vmatprep.subr.bf16.mxu0 0
    %1701 = vmatpush1.bf16.msra.mxu0 0
    %1702 = vmatprep.subr.bf16.mxu0 0
    %1703 = vmatpush1.bf16.msra.mxu0 0
    %1704 = vmatprep.subr.bf16.mxu0 0
    %1705 = vmatpush1.bf16.msra.mxu0 0
    %1706 = vmatprep.subr.bf16.mxu0 0
    %1707 = vmatpush1.bf16.msra.mxu0 0
    %1708 = vmatprep.subr.bf16.mxu0 0
    %1709 = vmatpush1.bf16.msra.mxu0 0
    %1710 = vmatprep.subr.bf16.mxu0 0
    %1711 = vmatpush1.bf16.msra.mxu0 0
    %1712 = vmatprep.subr.bf16.mxu0 0
    %1713 = vmatpush1.bf16.msra.mxu0 0
    %1714 = vmatprep.subr.bf16.mxu0 0
    %1715 = vmatpush1.bf16.msra.mxu0 0
    %1716 = vmatprep.subr.bf16.mxu0 0
    %1717 = vmatpush1.bf16.msra.mxu0 0
    %1718 = vmatprep.subr.bf16.mxu0 0
    %1719 = vmatpush1.bf16.msra.mxu0 0
    %1720 = vmatprep.subr.bf16.mxu0 0
    %1721 = vmatpush1.bf16.msra.mxu0 0
    %1722 = vmatprep.subr.bf16.mxu0 0
    %1723 = vmatpush1.bf16.msra.mxu0 0
    %1724 = vmatprep.mubr.bf16.mxu0 0
    %1725 = vmatmul.mubr.bf16.gmra.mrb[0].mxu0 %v1690
    %v1726 = vpop.f32.mrb[0].mxu0
    %v1727 = vadd.f32 0.0, %v1726
    %v1728 = vpop.f32.mrb[0].mxu0
    %v1729 = vadd.f32 0.0, %v1728
    %v1730 = vpop.f32.mrb[0].mxu0
    %v1731 = vadd.f32 0.0, %v1730
    %v1732 = vpop.f32.mrb[0].mxu0
    %v1733 = vadd.f32 0.0, %v1732
    %1734 = vdwg.mxu0
    %1735 = vmatprep.subr.bf16.mxu0 %v1447
    %1736 = vmatpush1.bf16.msra.mxu0 %v1446
    %1737 = vmatprep.subr.bf16.mxu0 %v1451
    %1738 = vmatpush1.bf16.msra.mxu0 %v1450
    %1739 = vmatprep.subr.bf16.mxu0 0
    %1740 = vmatpush1.bf16.msra.mxu0 0
    %1741 = vmatprep.subr.bf16.mxu0 0
    %1742 = vmatpush1.bf16.msra.mxu0 0
    %1743 = vmatprep.subr.bf16.mxu0 0
    %1744 = vmatpush1.bf16.msra.mxu0 0
    %1745 = vmatprep.subr.bf16.mxu0 0
    %1746 = vmatpush1.bf16.msra.mxu0 0
    %1747 = vmatprep.subr.bf16.mxu0 0
    %1748 = vmatpush1.bf16.msra.mxu0 0
    %1749 = vmatprep.subr.bf16.mxu0 0
    %1750 = vmatpush1.bf16.msra.mxu0 0
    %1751 = vmatprep.subr.bf16.mxu0 0
    %1752 = vmatpush1.bf16.msra.mxu0 0
    %1753 = vmatprep.subr.bf16.mxu0 0
    %1754 = vmatpush1.bf16.msra.mxu0 0
    %1755 = vmatprep.subr.bf16.mxu0 0
    %1756 = vmatpush1.bf16.msra.mxu0 0
    %1757 = vmatprep.subr.bf16.mxu0 0
    %1758 = vmatpush1.bf16.msra.mxu0 0
    %1759 = vmatprep.subr.bf16.mxu0 0
    %1760 = vmatpush1.bf16.msra.mxu0 0
    %1761 = vmatprep.subr.bf16.mxu0 0
    %1762 = vmatpush1.bf16.msra.mxu0 0
    %1763 = vmatprep.subr.bf16.mxu0 0
    %1764 = vmatpush1.bf16.msra.mxu0 0
    %1765 = vmatprep.subr.bf16.mxu0 0
    %1766 = vmatpush1.bf16.msra.mxu0 0
    %1767 = vmatprep.mubr.bf16.mxu0 0
    %1768 = vmatmul.mubr.bf16.gmra.mrb[0].mxu0 %v1690
    %v1769 = vpop.f32.mrb[0].mxu0
    %v1770 = vadd.f32 0.0, %v1769
    %v1771 = vpop.f32.mrb[0].mxu0
    %v1772 = vadd.f32 0.0, %v1771
    %v1773 = vpop.f32.mrb[0].mxu0
    %v1774 = vadd.f32 0.0, %v1773
    %v1775 = vpop.f32.mrb[0].mxu0
    %v1776 = vadd.f32 0.0, %v1775
    %1777 = vdwg.mxu0
    %v1778 = vpack.c.bf16 %v1731, %v1727
    %v1779 = vpack.c.bf16 %v1733, %v1729
    %v1780 = vpack.c.bf16 %v1774, %v1770
    %v1781 = vpack.c.bf16 %v1776, %v1772
    %s1782 = scalar_lea.vmem [#allocation10], 1024
    %v1783 = vld [vmem:[%s1782] sm:$0xff]
    %v1784 = vld [vmem:[%s1782 + $0x8] sm:$0xff]
    %v1785 = vld [vmem:[%s1782 + $0x10] sm:$0xff]
    %v1786 = vld [vmem:[%s1782 + $0x18] sm:$0xff]
    %v1787 = vld [vmem:[%s1782 + $0x20] sm:$0xff]
    %v1788 = vld [vmem:[%s1782 + $0x28] sm:$0xff]
    %v1789 = vld [vmem:[%s1782 + $0x30] sm:$0xff]
    %v1790 = vld [vmem:[%s1782 + $0x38] sm:$0xff]
    %v1791 = vld [vmem:[%s1782 + $0x40] sm:$0xff]
    %v1792 = vld [vmem:[%s1782 + $0x48] sm:$0xff]
    %v1793 = vld [vmem:[%s1782 + $0x50] sm:$0xff]
    %v1794 = vld [vmem:[%s1782 + $0x58] sm:$0xff]
    %v1795 = vld [vmem:[%s1782 + $0x60] sm:$0xff]
    %v1796 = vld [vmem:[%s1782 + $0x68] sm:$0xff]
    %v1797 = vld [vmem:[%s1782 + $0x70] sm:$0xff]
    %v1798 = vld [vmem:[%s1782 + $0x78] sm:$0xff]
    %v1799 = vld [vmem:[%s1782 + $0x80] sm:$0xff]
    %v1800 = vld [vmem:[%s1782 + $0x88] sm:$0xff]
    %v1801 = vld [vmem:[%s1782 + $0x90] sm:$0xff]
    %v1802 = vld [vmem:[%s1782 + $0x98] sm:$0xff]
    %v1803 = vld [vmem:[%s1782 + $0xa0] sm:$0xff]
    %v1804 = vld [vmem:[%s1782 + $0xa8] sm:$0xff]
    %v1805 = vld [vmem:[%s1782 + $0xb0] sm:$0xff]
    %v1806 = vld [vmem:[%s1782 + $0xb8] sm:$0xff]
    %v1807 = vld [vmem:[%s1782 + $0xc0] sm:$0xff]
    %v1808 = vld [vmem:[%s1782 + $0xc8] sm:$0xff]
    %v1809 = vld [vmem:[%s1782 + $0xd0] sm:$0xff]
    %v1810 = vld [vmem:[%s1782 + $0xd8] sm:$0xff]
    %v1811 = vld [vmem:[%s1782 + $0xe0] sm:$0xff]
    %v1812 = vld [vmem:[%s1782 + $0xe8] sm:$0xff]
    %v1813 = vld [vmem:[%s1782 + $0xf0] sm:$0xff]
    %v1814 = vld [vmem:[%s1782 + $0xf8] sm:$0xff]
    %v1815 = vld [vmem:[%s1782 + $0x100] sm:$0xff]
    %v1816 = vld [vmem:[%s1782 + $0x108] sm:$0xff]
    %v1817 = vld [vmem:[%s1782 + $0x110] sm:$0xff]
    %v1818 = vld [vmem:[%s1782 + $0x118] sm:$0xff]
    %v1819 = vld [vmem:[%s1782 + $0x120] sm:$0xff]
    %v1820 = vld [vmem:[%s1782 + $0x128] sm:$0xff]
    %v1821 = vld [vmem:[%s1782 + $0x130] sm:$0xff]
    %v1822 = vld [vmem:[%s1782 + $0x138] sm:$0xff]
    %v1823 = vld [vmem:[%s1782 + $0x140] sm:$0xff]
    %v1824 = vld [vmem:[%s1782 + $0x148] sm:$0xff]
    %v1825 = vld [vmem:[%s1782 + $0x150] sm:$0xff]
    %v1826 = vld [vmem:[%s1782 + $0x158] sm:$0xff]
    %v1827 = vld [vmem:[%s1782 + $0x160] sm:$0xff]
    %v1828 = vld [vmem:[%s1782 + $0x168] sm:$0xff]
    %v1829 = vld [vmem:[%s1782 + $0x170] sm:$0xff]
    %v1830 = vld [vmem:[%s1782 + $0x178] sm:$0xff]
    %v1831 = vld [vmem:[%s1782 + $0x180] sm:$0xff]
    %v1832 = vld [vmem:[%s1782 + $0x188] sm:$0xff]
    %v1833 = vld [vmem:[%s1782 + $0x190] sm:$0xff]
    %v1834 = vld [vmem:[%s1782 + $0x198] sm:$0xff]
    %v1835 = vld [vmem:[%s1782 + $0x1a0] sm:$0xff]
    %v1836 = vld [vmem:[%s1782 + $0x1a8] sm:$0xff]
    %v1837 = vld [vmem:[%s1782 + $0x1b0] sm:$0xff]
    %v1838 = vld [vmem:[%s1782 + $0x1b8] sm:$0xff]
    %v1839 = vld [vmem:[%s1782 + $0x1c0] sm:$0xff]
    %v1840 = vld [vmem:[%s1782 + $0x1c8] sm:$0xff]
    %v1841 = vld [vmem:[%s1782 + $0x1d0] sm:$0xff]
    %v1842 = vld [vmem:[%s1782 + $0x1d8] sm:$0xff]
    %v1843 = vld [vmem:[%s1782 + $0x1e0] sm:$0xff]
    %v1844 = vld [vmem:[%s1782 + $0x1e8] sm:$0xff]
    %v1845 = vld [vmem:[%s1782 + $0x1f0] sm:$0xff]
    %v1846 = vld [vmem:[%s1782 + $0x1f8] sm:$0xff]
    %v1847 = vld [vmem:[%s1782 + $0x200] sm:$0xff]
    %v1848 = vld [vmem:[%s1782 + $0x208] sm:$0xff]
    %v1849 = vld [vmem:[%s1782 + $0x210] sm:$0xff]
    %v1850 = vld [vmem:[%s1782 + $0x218] sm:$0xff]
    %v1851 = vld [vmem:[%s1782 + $0x220] sm:$0xff]
    %v1852 = vld [vmem:[%s1782 + $0x228] sm:$0xff]
    %v1853 = vld [vmem:[%s1782 + $0x230] sm:$0xff]
    %v1854 = vld [vmem:[%s1782 + $0x238] sm:$0xff]
    %v1855 = vld [vmem:[%s1782 + $0x240] sm:$0xff]
    %v1856 = vld [vmem:[%s1782 + $0x248] sm:$0xff]
    %v1857 = vld [vmem:[%s1782 + $0x250] sm:$0xff]
    %v1858 = vld [vmem:[%s1782 + $0x258] sm:$0xff]
    %v1859 = vld [vmem:[%s1782 + $0x260] sm:$0xff]
    %v1860 = vld [vmem:[%s1782 + $0x268] sm:$0xff]
    %v1861 = vld [vmem:[%s1782 + $0x270] sm:$0xff]
    %v1862 = vld [vmem:[%s1782 + $0x278] sm:$0xff]
    %v1863 = vld [vmem:[%s1782 + $0x280] sm:$0xff]
    %v1864 = vld [vmem:[%s1782 + $0x288] sm:$0xff]
    %v1865 = vld [vmem:[%s1782 + $0x290] sm:$0xff]
    %v1866 = vld [vmem:[%s1782 + $0x298] sm:$0xff]
    %v1867 = vld [vmem:[%s1782 + $0x2a0] sm:$0xff]
    %v1868 = vld [vmem:[%s1782 + $0x2a8] sm:$0xff]
    %v1869 = vld [vmem:[%s1782 + $0x2b0] sm:$0xff]
    %v1870 = vld [vmem:[%s1782 + $0x2b8] sm:$0xff]
    %v1871 = vld [vmem:[%s1782 + $0x2c0] sm:$0xff]
    %v1872 = vld [vmem:[%s1782 + $0x2c8] sm:$0xff]
    %v1873 = vld [vmem:[%s1782 + $0x2d0] sm:$0xff]
    %v1874 = vld [vmem:[%s1782 + $0x2d8] sm:$0xff]
    %v1875 = vld [vmem:[%s1782 + $0x2e0] sm:$0xff]
    %v1876 = vld [vmem:[%s1782 + $0x2e8] sm:$0xff]
    %v1877 = vld [vmem:[%s1782 + $0x2f0] sm:$0xff]
    %v1878 = vld [vmem:[%s1782 + $0x2f8] sm:$0xff]
    %v1879 = vld [vmem:[%s1782 + $0x300] sm:$0xff]
    %v1880 = vld [vmem:[%s1782 + $0x308] sm:$0xff]
    %v1881 = vld [vmem:[%s1782 + $0x310] sm:$0xff]
    %v1882 = vld [vmem:[%s1782 + $0x318] sm:$0xff]
    %v1883 = vld [vmem:[%s1782 + $0x320] sm:$0xff]
    %v1884 = vld [vmem:[%s1782 + $0x328] sm:$0xff]
    %v1885 = vld [vmem:[%s1782 + $0x330] sm:$0xff]
    %v1886 = vld [vmem:[%s1782 + $0x338] sm:$0xff]
    %v1887 = vld [vmem:[%s1782 + $0x340] sm:$0xff]
    %v1888 = vld [vmem:[%s1782 + $0x348] sm:$0xff]
    %v1889 = vld [vmem:[%s1782 + $0x350] sm:$0xff]
    %v1890 = vld [vmem:[%s1782 + $0x358] sm:$0xff]
    %v1891 = vld [vmem:[%s1782 + $0x360] sm:$0xff]
    %v1892 = vld [vmem:[%s1782 + $0x368] sm:$0xff]
    %v1893 = vld [vmem:[%s1782 + $0x370] sm:$0xff]
    %v1894 = vld [vmem:[%s1782 + $0x378] sm:$0xff]
    %v1895 = vld [vmem:[%s1782 + $0x380] sm:$0xff]
    %v1896 = vld [vmem:[%s1782 + $0x388] sm:$0xff]
    %v1897 = vld [vmem:[%s1782 + $0x390] sm:$0xff]
    %v1898 = vld [vmem:[%s1782 + $0x398] sm:$0xff]
    %v1899 = vld [vmem:[%s1782 + $0x3a0] sm:$0xff]
    %v1900 = vld [vmem:[%s1782 + $0x3a8] sm:$0xff]
    %v1901 = vld [vmem:[%s1782 + $0x3b0] sm:$0xff]
    %v1902 = vld [vmem:[%s1782 + $0x3b8] sm:$0xff]
    %v1903 = vld [vmem:[%s1782 + $0x3c0] sm:$0xff]
    %v1904 = vld [vmem:[%s1782 + $0x3c8] sm:$0xff]
    %v1905 = vld [vmem:[%s1782 + $0x3d0] sm:$0xff]
    %v1906 = vld [vmem:[%s1782 + $0x3d8] sm:$0xff]
    %v1907 = vld [vmem:[%s1782 + $0x3e0] sm:$0xff]
    %v1908 = vld [vmem:[%s1782 + $0x3e8] sm:$0xff]
    %v1909 = vld [vmem:[%s1782 + $0x3f0] sm:$0xff]
    %v1910 = vld [vmem:[%s1782 + $0x3f8] sm:$0xff]
    %v2039 = vunpack.c.l.b16 %v1783
    %v2040 = vunpack.c.h.b16 %v1783
    %v2041 = vunpack.c.l.b16 %v1784
    %v2042 = vunpack.c.h.b16 %v1784
    %v2043 = vunpack.c.l.b16 %v1785
    %v2044 = vunpack.c.h.b16 %v1785
    %v2045 = vunpack.c.l.b16 %v1786
    %v2046 = vunpack.c.h.b16 %v1786
    %v2047 = vunpack.c.l.b16 %v1787
    %v2048 = vunpack.c.h.b16 %v1787
    %v2049 = vunpack.c.l.b16 %v1788
    %v2050 = vunpack.c.h.b16 %v1788
    %v2051 = vunpack.c.l.b16 %v1789
    %v2052 = vunpack.c.h.b16 %v1789
    %v2053 = vunpack.c.l.b16 %v1790
    %v2054 = vunpack.c.h.b16 %v1790
    %v2055 = vunpack.c.l.b16 %v1791
    %v2056 = vunpack.c.h.b16 %v1791
    %v2057 = vunpack.c.l.b16 %v1792
    %v2058 = vunpack.c.h.b16 %v1792
    %v2059 = vunpack.c.l.b16 %v1793
    %v2060 = vunpack.c.h.b16 %v1793
    %v2061 = vunpack.c.l.b16 %v1794
    %v2062 = vunpack.c.h.b16 %v1794
    %v2063 = vunpack.c.l.b16 %v1795
    %v2064 = vunpack.c.h.b16 %v1795
    %v2065 = vunpack.c.l.b16 %v1796
    %v2066 = vunpack.c.h.b16 %v1796
    %v2067 = vunpack.c.l.b16 %v1797
    %v2068 = vunpack.c.h.b16 %v1797
    %v2069 = vunpack.c.l.b16 %v1798
    %v2070 = vunpack.c.h.b16 %v1798
    %v2071 = vunpack.c.l.b16 %v1799
    %v2072 = vunpack.c.h.b16 %v1799
    %v2073 = vunpack.c.l.b16 %v1800
    %v2074 = vunpack.c.h.b16 %v1800
    %v2075 = vunpack.c.l.b16 %v1801
    %v2076 = vunpack.c.h.b16 %v1801
    %v2077 = vunpack.c.l.b16 %v1802
    %v2078 = vunpack.c.h.b16 %v1802
    %v2079 = vunpack.c.l.b16 %v1803
    %v2080 = vunpack.c.h.b16 %v1803
    %v2081 = vunpack.c.l.b16 %v1804
    %v2082 = vunpack.c.h.b16 %v1804
    %v2083 = vunpack.c.l.b16 %v1805
    %v2084 = vunpack.c.h.b16 %v1805
    %v2085 = vunpack.c.l.b16 %v1806
    %v2086 = vunpack.c.h.b16 %v1806
    %v2087 = vunpack.c.l.b16 %v1807
    %v2088 = vunpack.c.h.b16 %v1807
    %v2089 = vunpack.c.l.b16 %v1808
    %v2090 = vunpack.c.h.b16 %v1808
    %v2091 = vunpack.c.l.b16 %v1809
    %v2092 = vunpack.c.h.b16 %v1809
    %v2093 = vunpack.c.l.b16 %v1810
    %v2094 = vunpack.c.h.b16 %v1810
    %v2095 = vunpack.c.l.b16 %v1811
    %v2096 = vunpack.c.h.b16 %v1811
    %v2097 = vunpack.c.l.b16 %v1812
    %v2098 = vunpack.c.h.b16 %v1812
    %v2099 = vunpack.c.l.b16 %v1813
    %v2100 = vunpack.c.h.b16 %v1813
    %v2101 = vunpack.c.l.b16 %v1814
    %v2102 = vunpack.c.h.b16 %v1814
    %v2103 = vunpack.c.l.b16 %v1815
    %v2104 = vunpack.c.h.b16 %v1815
    %v2105 = vunpack.c.l.b16 %v1816
    %v2106 = vunpack.c.h.b16 %v1816
    %v2107 = vunpack.c.l.b16 %v1817
    %v2108 = vunpack.c.h.b16 %v1817
    %v2109 = vunpack.c.l.b16 %v1818
    %v2110 = vunpack.c.h.b16 %v1818
    %v2111 = vunpack.c.l.b16 %v1819
    %v2112 = vunpack.c.h.b16 %v1819
    %v2113 = vunpack.c.l.b16 %v1820
    %v2114 = vunpack.c.h.b16 %v1820
    %v2115 = vunpack.c.l.b16 %v1821
    %v2116 = vunpack.c.h.b16 %v1821
    %v2117 = vunpack.c.l.b16 %v1822
    %v2118 = vunpack.c.h.b16 %v1822
    %v2119 = vunpack.c.l.b16 %v1823
    %v2120 = vunpack.c.h.b16 %v1823
    %v2121 = vunpack.c.l.b16 %v1824
    %v2122 = vunpack.c.h.b16 %v1824
    %v2123 = vunpack.c.l.b16 %v1825
    %v2124 = vunpack.c.h.b16 %v1825
    %v2125 = vunpack.c.l.b16 %v1826
    %v2126 = vunpack.c.h.b16 %v1826
    %v2127 = vunpack.c.l.b16 %v1827
    %v2128 = vunpack.c.h.b16 %v1827
    %v2129 = vunpack.c.l.b16 %v1828
    %v2130 = vunpack.c.h.b16 %v1828
    %v2131 = vunpack.c.l.b16 %v1829
    %v2132 = vunpack.c.h.b16 %v1829
    %v2133 = vunpack.c.l.b16 %v1830
    %v2134 = vunpack.c.h.b16 %v1830
    %v2135 = vunpack.c.l.b16 %v1831
    %v2136 = vunpack.c.h.b16 %v1831
    %v2137 = vunpack.c.l.b16 %v1832
    %v2138 = vunpack.c.h.b16 %v1832
    %v2139 = vunpack.c.l.b16 %v1833
    %v2140 = vunpack.c.h.b16 %v1833
    %v2141 = vunpack.c.l.b16 %v1834
    %v2142 = vunpack.c.h.b16 %v1834
    %v2143 = vunpack.c.l.b16 %v1835
    %v2144 = vunpack.c.h.b16 %v1835
    %v2145 = vunpack.c.l.b16 %v1836
    %v2146 = vunpack.c.h.b16 %v1836
    %v2147 = vunpack.c.l.b16 %v1837
    %v2148 = vunpack.c.h.b16 %v1837
    %v2149 = vunpack.c.l.b16 %v1838
    %v2150 = vunpack.c.h.b16 %v1838
    %v2151 = vunpack.c.l.b16 %v1839
    %v2152 = vunpack.c.h.b16 %v1839
    %v2153 = vunpack.c.l.b16 %v1840
    %v2154 = vunpack.c.h.b16 %v1840
    %v2155 = vunpack.c.l.b16 %v1841
    %v2156 = vunpack.c.h.b16 %v1841
    %v2157 = vunpack.c.l.b16 %v1842
    %v2158 = vunpack.c.h.b16 %v1842
    %v2159 = vunpack.c.l.b16 %v1843
    %v2160 = vunpack.c.h.b16 %v1843
    %v2161 = vunpack.c.l.b16 %v1844
    %v2162 = vunpack.c.h.b16 %v1844
    %v2163 = vunpack.c.l.b16 %v1845
    %v2164 = vunpack.c.h.b16 %v1845
    %v2165 = vunpack.c.l.b16 %v1846
    %v2166 = vunpack.c.h.b16 %v1846
    %v2167 = vunpack.c.l.b16 %v1847
    %v2168 = vunpack.c.h.b16 %v1847
    %v2169 = vunpack.c.l.b16 %v1848
    %v2170 = vunpack.c.h.b16 %v1848
    %v2171 = vunpack.c.l.b16 %v1849
    %v2172 = vunpack.c.h.b16 %v1849
    %v2173 = vunpack.c.l.b16 %v1850
    %v2174 = vunpack.c.h.b16 %v1850
    %v2175 = vunpack.c.l.b16 %v1851
    %v2176 = vunpack.c.h.b16 %v1851
    %v2177 = vunpack.c.l.b16 %v1852
    %v2178 = vunpack.c.h.b16 %v1852
    %v2179 = vunpack.c.l.b16 %v1853
    %v2180 = vunpack.c.h.b16 %v1853
    %v2181 = vunpack.c.l.b16 %v1854
    %v2182 = vunpack.c.h.b16 %v1854
    %v2183 = vunpack.c.l.b16 %v1855
    %v2184 = vunpack.c.h.b16 %v1855
    %v2185 = vunpack.c.l.b16 %v1856
    %v2186 = vunpack.c.h.b16 %v1856
    %v2187 = vunpack.c.l.b16 %v1857
    %v2188 = vunpack.c.h.b16 %v1857
    %v2189 = vunpack.c.l.b16 %v1858
    %v2190 = vunpack.c.h.b16 %v1858
    %v2191 = vunpack.c.l.b16 %v1859
    %v2192 = vunpack.c.h.b16 %v1859
    %v2193 = vunpack.c.l.b16 %v1860
    %v2194 = vunpack.c.h.b16 %v1860
    %v2195 = vunpack.c.l.b16 %v1861
    %v2196 = vunpack.c.h.b16 %v1861
    %v2197 = vunpack.c.l.b16 %v1862
    %v2198 = vunpack.c.h.b16 %v1862
    %v2199 = vunpack.c.l.b16 %v1863
    %v2200 = vunpack.c.h.b16 %v1863
    %v2201 = vunpack.c.l.b16 %v1864
    %v2202 = vunpack.c.h.b16 %v1864
    %v2203 = vunpack.c.l.b16 %v1865
    %v2204 = vunpack.c.h.b16 %v1865
    %v2205 = vunpack.c.l.b16 %v1866
    %v2206 = vunpack.c.h.b16 %v1866
    %v2207 = vunpack.c.l.b16 %v1867
    %v2208 = vunpack.c.h.b16 %v1867
    %v2209 = vunpack.c.l.b16 %v1868
    %v2210 = vunpack.c.h.b16 %v1868
    %v2211 = vunpack.c.l.b16 %v1869
    %v2212 = vunpack.c.h.b16 %v1869
    %v2213 = vunpack.c.l.b16 %v1870
    %v2214 = vunpack.c.h.b16 %v1870
    %v2215 = vunpack.c.l.b16 %v1871
    %v2216 = vunpack.c.h.b16 %v1871
    %v2217 = vunpack.c.l.b16 %v1872
    %v2218 = vunpack.c.h.b16 %v1872
    %v2219 = vunpack.c.l.b16 %v1873
    %v2220 = vunpack.c.h.b16 %v1873
    %v2221 = vunpack.c.l.b16 %v1874
    %v2222 = vunpack.c.h.b16 %v1874
    %v2223 = vunpack.c.l.b16 %v1875
    %v2224 = vunpack.c.h.b16 %v1875
    %v2225 = vunpack.c.l.b16 %v1876
    %v2226 = vunpack.c.h.b16 %v1876
    %v2227 = vunpack.c.l.b16 %v1877
    %v2228 = vunpack.c.h.b16 %v1877
    %v2229 = vunpack.c.l.b16 %v1878
    %v2230 = vunpack.c.h.b16 %v1878
    %v2231 = vunpack.c.l.b16 %v1879
    %v2232 = vunpack.c.h.b16 %v1879
    %v2233 = vunpack.c.l.b16 %v1880
    %v2234 = vunpack.c.h.b16 %v1880
    %v2235 = vunpack.c.l.b16 %v1881
    %v2236 = vunpack.c.h.b16 %v1881
    %v2237 = vunpack.c.l.b16 %v1882
    %v2238 = vunpack.c.h.b16 %v1882
    %v2239 = vunpack.c.l.b16 %v1883
    %v2240 = vunpack.c.h.b16 %v1883
    %v2241 = vunpack.c.l.b16 %v1884
    %v2242 = vunpack.c.h.b16 %v1884
    %v2243 = vunpack.c.l.b16 %v1885
    %v2244 = vunpack.c.h.b16 %v1885
    %v2245 = vunpack.c.l.b16 %v1886
    %v2246 = vunpack.c.h.b16 %v1886
    %v2247 = vunpack.c.l.b16 %v1887
    %v2248 = vunpack.c.h.b16 %v1887
    %v2249 = vunpack.c.l.b16 %v1888
    %v2250 = vunpack.c.h.b16 %v1888
    %v2251 = vunpack.c.l.b16 %v1889
    %v2252 = vunpack.c.h.b16 %v1889
    %v2253 = vunpack.c.l.b16 %v1890
    %v2254 = vunpack.c.h.b16 %v1890
    %v2255 = vunpack.c.l.b16 %v1891
    %v2256 = vunpack.c.h.b16 %v1891
    %v2257 = vunpack.c.l.b16 %v1892
    %v2258 = vunpack.c.h.b16 %v1892
    %v2259 = vunpack.c.l.b16 %v1893
    %v2260 = vunpack.c.h.b16 %v1893
    %v2261 = vunpack.c.l.b16 %v1894
    %v2262 = vunpack.c.h.b16 %v1894
    %v2263 = vunpack.c.l.b16 %v1895
    %v2264 = vunpack.c.h.b16 %v1895
    %v2265 = vunpack.c.l.b16 %v1896
    %v2266 = vunpack.c.h.b16 %v1896
    %v2267 = vunpack.c.l.b16 %v1897
    %v2268 = vunpack.c.h.b16 %v1897
    %v2269 = vunpack.c.l.b16 %v1898
    %v2270 = vunpack.c.h.b16 %v1898
    %v2271 = vunpack.c.l.b16 %v1899
    %v2272 = vunpack.c.h.b16 %v1899
    %v2273 = vunpack.c.l.b16 %v1900
    %v2274 = vunpack.c.h.b16 %v1900
    %v2275 = vunpack.c.l.b16 %v1901
    %v2276 = vunpack.c.h.b16 %v1901
    %v2277 = vunpack.c.l.b16 %v1902
    %v2278 = vunpack.c.h.b16 %v1902
    %v2279 = vunpack.c.l.b16 %v1903
    %v2280 = vunpack.c.h.b16 %v1903
    %v2281 = vunpack.c.l.b16 %v1904
    %v2282 = vunpack.c.h.b16 %v1904
    %v2283 = vunpack.c.l.b16 %v1905
    %v2284 = vunpack.c.h.b16 %v1905
    %v2285 = vunpack.c.l.b16 %v1906
    %v2286 = vunpack.c.h.b16 %v1906
    %v2287 = vunpack.c.l.b16 %v1907
    %v2288 = vunpack.c.h.b16 %v1907
    %v2289 = vunpack.c.l.b16 %v1908
    %v2290 = vunpack.c.h.b16 %v1908
    %v2291 = vunpack.c.l.b16 %v1909
    %v2292 = vunpack.c.h.b16 %v1909
    %v2293 = vunpack.c.l.b16 %v1910
    %v2294 = vunpack.c.h.b16 %v1910
    %v2295 = vpack.c.b16 %v2043, %v2039
    %v2296 = vpack.c.b16 %v2044, %v2040
    %v2297 = vpack.c.b16 %v2045, %v2041
    %v2298 = vpack.c.b16 %v2046, %v2042
    %v2299 = vpack.c.b16 %v2051, %v2047
    %v2300 = vpack.c.b16 %v2052, %v2048
    %v2301 = vpack.c.b16 %v2053, %v2049
    %v2302 = vpack.c.b16 %v2054, %v2050
    %v2303 = vpack.c.b16 %v2059, %v2055
    %v2304 = vpack.c.b16 %v2060, %v2056
    %v2305 = vpack.c.b16 %v2061, %v2057
    %v2306 = vpack.c.b16 %v2062, %v2058
    %v2307 = vpack.c.b16 %v2067, %v2063
    %v2308 = vpack.c.b16 %v2068, %v2064
    %v2309 = vpack.c.b16 %v2069, %v2065
    %v2310 = vpack.c.b16 %v2070, %v2066
    %v2311 = vpack.c.b16 %v2075, %v2071
    %v2312 = vpack.c.b16 %v2076, %v2072
    %v2313 = vpack.c.b16 %v2077, %v2073
    %v2314 = vpack.c.b16 %v2078, %v2074
    %v2315 = vpack.c.b16 %v2083, %v2079
    %v2316 = vpack.c.b16 %v2084, %v2080
    %v2317 = vpack.c.b16 %v2085, %v2081
    %v2318 = vpack.c.b16 %v2086, %v2082
    %v2319 = vpack.c.b16 %v2091, %v2087
    %v2320 = vpack.c.b16 %v2092, %v2088
    %v2321 = vpack.c.b16 %v2093, %v2089
    %v2322 = vpack.c.b16 %v2094, %v2090
    %v2323 = vpack.c.b16 %v2099, %v2095
    %v2324 = vpack.c.b16 %v2100, %v2096
    %v2325 = vpack.c.b16 %v2101, %v2097
    %v2326 = vpack.c.b16 %v2102, %v2098
    %v2327 = vpack.c.b16 %v2107, %v2103
    %v2328 = vpack.c.b16 %v2108, %v2104
    %v2329 = vpack.c.b16 %v2109, %v2105
    %v2330 = vpack.c.b16 %v2110, %v2106
    %v2331 = vpack.c.b16 %v2115, %v2111
    %v2332 = vpack.c.b16 %v2116, %v2112
    %v2333 = vpack.c.b16 %v2117, %v2113
    %v2334 = vpack.c.b16 %v2118, %v2114
    %v2335 = vpack.c.b16 %v2123, %v2119
    %v2336 = vpack.c.b16 %v2124, %v2120
    %v2337 = vpack.c.b16 %v2125, %v2121
    %v2338 = vpack.c.b16 %v2126, %v2122
    %v2339 = vpack.c.b16 %v2131, %v2127
    %v2340 = vpack.c.b16 %v2132, %v2128
    %v2341 = vpack.c.b16 %v2133, %v2129
    %v2342 = vpack.c.b16 %v2134, %v2130
    %v2343 = vpack.c.b16 %v2139, %v2135
    %v2344 = vpack.c.b16 %v2140, %v2136
    %v2345 = vpack.c.b16 %v2141, %v2137
    %v2346 = vpack.c.b16 %v2142, %v2138
    %v2347 = vpack.c.b16 %v2147, %v2143
    %v2348 = vpack.c.b16 %v2148, %v2144
    %v2349 = vpack.c.b16 %v2149, %v2145
    %v2350 = vpack.c.b16 %v2150, %v2146
    %v2351 = vpack.c.b16 %v2155, %v2151
    %v2352 = vpack.c.b16 %v2156, %v2152
    %v2353 = vpack.c.b16 %v2157, %v2153
    %v2354 = vpack.c.b16 %v2158, %v2154
    %v2355 = vpack.c.b16 %v2163, %v2159
    %v2356 = vpack.c.b16 %v2164, %v2160
    %v2357 = vpack.c.b16 %v2165, %v2161
    %v2358 = vpack.c.b16 %v2166, %v2162
    %v2359 = vpack.c.b16 %v2171, %v2167
    %v2360 = vpack.c.b16 %v2172, %v2168
    %v2361 = vpack.c.b16 %v2173, %v2169
    %v2362 = vpack.c.b16 %v2174, %v2170
    %v2363 = vpack.c.b16 %v2179, %v2175
    %v2364 = vpack.c.b16 %v2180, %v2176
    %v2365 = vpack.c.b16 %v2181, %v2177
    %v2366 = vpack.c.b16 %v2182, %v2178
    %v2367 = vpack.c.b16 %v2187, %v2183
    %v2368 = vpack.c.b16 %v2188, %v2184
    %v2369 = vpack.c.b16 %v2189, %v2185
    %v2370 = vpack.c.b16 %v2190, %v2186
    %v2371 = vpack.c.b16 %v2195, %v2191
    %v2372 = vpack.c.b16 %v2196, %v2192
    %v2373 = vpack.c.b16 %v2197, %v2193
    %v2374 = vpack.c.b16 %v2198, %v2194
    %v2375 = vpack.c.b16 %v2203, %v2199
    %v2376 = vpack.c.b16 %v2204, %v2200
    %v2377 = vpack.c.b16 %v2205, %v2201
    %v2378 = vpack.c.b16 %v2206, %v2202
    %v2379 = vpack.c.b16 %v2211, %v2207
    %v2380 = vpack.c.b16 %v2212, %v2208
    %v2381 = vpack.c.b16 %v2213, %v2209
    %v2382 = vpack.c.b16 %v2214, %v2210
    %v2383 = vpack.c.b16 %v2219, %v2215
    %v2384 = vpack.c.b16 %v2220, %v2216
    %v2385 = vpack.c.b16 %v2221, %v2217
    %v2386 = vpack.c.b16 %v2222, %v2218
    %v2387 = vpack.c.b16 %v2227, %v2223
    %v2388 = vpack.c.b16 %v2228, %v2224
    %v2389 = vpack.c.b16 %v2229, %v2225
    %v2390 = vpack.c.b16 %v2230, %v2226
    %v2391 = vpack.c.b16 %v2235, %v2231
    %v2392 = vpack.c.b16 %v2236, %v2232
    %v2393 = vpack.c.b16 %v2237, %v2233
    %v2394 = vpack.c.b16 %v2238, %v2234
    %v2395 = vpack.c.b16 %v2243, %v2239
    %v2396 = vpack.c.b16 %v2244, %v2240
    %v2397 = vpack.c.b16 %v2245, %v2241
    %v2398 = vpack.c.b16 %v2246, %v2242
    %v2399 = vpack.c.b16 %v2251, %v2247
    %v2400 = vpack.c.b16 %v2252, %v2248
    %v2401 = vpack.c.b16 %v2253, %v2249
    %v2402 = vpack.c.b16 %v2254, %v2250
    %v2403 = vpack.c.b16 %v2259, %v2255
    %v2404 = vpack.c.b16 %v2260, %v2256
    %v2405 = vpack.c.b16 %v2261, %v2257
    %v2406 = vpack.c.b16 %v2262, %v2258
    %v2407 = vpack.c.b16 %v2267, %v2263
    %v2408 = vpack.c.b16 %v2268, %v2264
    %v2409 = vpack.c.b16 %v2269, %v2265
    %v2410 = vpack.c.b16 %v2270, %v2266
    %v2411 = vpack.c.b16 %v2275, %v2271
    %v2412 = vpack.c.b16 %v2276, %v2272
    %v2413 = vpack.c.b16 %v2277, %v2273
    %v2414 = vpack.c.b16 %v2278, %v2274
    %v2415 = vpack.c.b16 %v2283, %v2279
    %v2416 = vpack.c.b16 %v2284, %v2280
    %v2417 = vpack.c.b16 %v2285, %v2281
    %v2418 = vpack.c.b16 %v2286, %v2282
    %v2419 = vpack.c.b16 %v2291, %v2287
    %v2420 = vpack.c.b16 %v2292, %v2288
    %v2421 = vpack.c.b16 %v2293, %v2289
    %v2422 = vpack.c.b16 %v2294, %v2290
    %2551 = vmatprep.subr.bf16.mxu0 %v2296
    %2552 = vmatpush1.bf16.msra.mxu0 %v2295
    %2553 = vmatprep.subr.bf16.mxu0 %v2300
    %2554 = vmatpush1.bf16.msra.mxu0 %v2299
    %2555 = vmatprep.subr.bf16.mxu0 %v2304
    %2556 = vmatpush1.bf16.msra.mxu0 %v2303
    %2557 = vmatprep.subr.bf16.mxu0 %v2308
    %2558 = vmatpush1.bf16.msra.mxu0 %v2307
    %2559 = vmatprep.subr.bf16.mxu0 %v2312
    %2560 = vmatpush1.bf16.msra.mxu0 %v2311
    %2561 = vmatprep.subr.bf16.mxu0 %v2316
    %2562 = vmatpush1.bf16.msra.mxu0 %v2315
    %2563 = vmatprep.subr.bf16.mxu0 %v2320
    %2564 = vmatpush1.bf16.msra.mxu0 %v2319
    %2565 = vmatprep.subr.bf16.mxu0 %v2324
    %2566 = vmatpush1.bf16.msra.mxu0 %v2323
    %2567 = vmatprep.subr.bf16.mxu0 %v2328
    %2568 = vmatpush1.bf16.msra.mxu0 %v2327
    %2569 = vmatprep.subr.bf16.mxu0 %v2332
    %2570 = vmatpush1.bf16.msra.mxu0 %v2331
    %2571 = vmatprep.subr.bf16.mxu0 %v2336
    %2572 = vmatpush1.bf16.msra.mxu0 %v2335
    %2573 = vmatprep.subr.bf16.mxu0 %v2340
    %2574 = vmatpush1.bf16.msra.mxu0 %v2339
    %2575 = vmatprep.subr.bf16.mxu0 %v2344
    %2576 = vmatpush1.bf16.msra.mxu0 %v2343
    %2577 = vmatprep.subr.bf16.mxu0 %v2348
    %2578 = vmatpush1.bf16.msra.mxu0 %v2347
    %2579 = vmatprep.subr.bf16.mxu0 %v2352
    %2580 = vmatpush1.bf16.msra.mxu0 %v2351
    %2581 = vmatprep.subr.bf16.mxu0 %v2356
    %2582 = vmatpush1.bf16.msra.mxu0 %v2355
    %2583 = vmatprep.mubr.bf16.mxu0 %v1779
    %2584 = vmatmul.mubr.bf16.gmra.mrb[0].mxu0 %v1778
    %v2585 = vpop.f32.mrb[0].mxu0
    %v2586 = vadd.f32 0.0, %v2585
    %v2587 = vpop.f32.mrb[0].mxu0
    %v2588 = vadd.f32 0.0, %v2587
    %v2589 = vpop.f32.mrb[0].mxu0
    %v2590 = vadd.f32 0.0, %v2589
    %v2591 = vpop.f32.mrb[0].mxu0
    %v2592 = vadd.f32 0.0, %v2591
    %2593 = vdwg.mxu0
    %2594 = vmatprep.subr.bf16.mxu0 %v2360
    %2595 = vmatpush1.bf16.msra.mxu0 %v2359
    %2596 = vmatprep.subr.bf16.mxu0 %v2364
    %2597 = vmatpush1.bf16.msra.mxu0 %v2363
    %2598 = vmatprep.subr.bf16.mxu0 %v2368
    %2599 = vmatpush1.bf16.msra.mxu0 %v2367
    %2600 = vmatprep.subr.bf16.mxu0 %v2372
    %2601 = vmatpush1.bf16.msra.mxu0 %v2371
    %2602 = vmatprep.subr.bf16.mxu0 %v2376
    %2603 = vmatpush1.bf16.msra.mxu0 %v2375
    %2604 = vmatprep.subr.bf16.mxu0 %v2380
    %2605 = vmatpush1.bf16.msra.mxu0 %v2379
    %2606 = vmatprep.subr.bf16.mxu0 %v2384
    %2607 = vmatpush1.bf16.msra.mxu0 %v2383
    %2608 = vmatprep.subr.bf16.mxu0 %v2388
    %2609 = vmatpush1.bf16.msra.mxu0 %v2387
    %2610 = vmatprep.subr.bf16.mxu0 %v2392
    %2611 = vmatpush1.bf16.msra.mxu0 %v2391
    %2612 = vmatprep.subr.bf16.mxu0 %v2396
    %2613 = vmatpush1.bf16.msra.mxu0 %v2395
    %2614 = vmatprep.subr.bf16.mxu0 %v2400
    %2615 = vmatpush1.bf16.msra.mxu0 %v2399
    %2616 = vmatprep.subr.bf16.mxu0 %v2404
    %2617 = vmatpush1.bf16.msra.mxu0 %v2403
    %2618 = vmatprep.subr.bf16.mxu0 %v2408
    %2619 = vmatpush1.bf16.msra.mxu0 %v2407
    %2620 = vmatprep.subr.bf16.mxu0 %v2412
    %2621 = vmatpush1.bf16.msra.mxu0 %v2411
    %2622 = vmatprep.subr.bf16.mxu0 %v2416
    %2623 = vmatpush1.bf16.msra.mxu0 %v2415
    %2624 = vmatprep.subr.bf16.mxu0 %v2420
    %2625 = vmatpush1.bf16.msra.mxu0 %v2419
    %2626 = vmatprep.mubr.bf16.mxu0 %v1781
    %2627 = vmatmul.mubr.bf16.gmra.mrb[0].mxu0 %v1780
    %v2628 = vpop.f32.mrb[0].mxu0
    %v2629 = vadd.f32 %v2586, %v2628
    %v2630 = vpop.f32.mrb[0].mxu0
    %v2631 = vadd.f32 %v2588, %v2630
    %v2632 = vpop.f32.mrb[0].mxu0
    %v2633 = vadd.f32 %v2590, %v2632
    %v2634 = vpop.f32.mrb[0].mxu0
    %v2635 = vadd.f32 %v2592, %v2634
    %2636 = vdwg.mxu0
    %2637 = vmatprep.subr.bf16.mxu0 %v2298
    %2638 = vmatpush1.bf16.msra.mxu0 %v2297
    %2639 = vmatprep.subr.bf16.mxu0 %v2302
    %2640 = vmatpush1.bf16.msra.mxu0 %v2301
    %2641 = vmatprep.subr.bf16.mxu0 %v2306
    %2642 = vmatpush1.bf16.msra.mxu0 %v2305
    %2643 = vmatprep.subr.bf16.mxu0 %v2310
    %2644 = vmatpush1.bf16.msra.mxu0 %v2309
    %2645 = vmatprep.subr.bf16.mxu0 %v2314
    %2646 = vmatpush1.bf16.msra.mxu0 %v2313
    %2647 = vmatprep.subr.bf16.mxu0 %v2318
    %2648 = vmatpush1.bf16.msra.mxu0 %v2317
    %2649 = vmatprep.subr.bf16.mxu0 %v2322
    %2650 = vmatpush1.bf16.msra.mxu0 %v2321
    %2651 = vmatprep.subr.bf16.mxu0 %v2326
    %2652 = vmatpush1.bf16.msra.mxu0 %v2325
    %2653 = vmatprep.subr.bf16.mxu0 %v2330
    %2654 = vmatpush1.bf16.msra.mxu0 %v2329
    %2655 = vmatprep.subr.bf16.mxu0 %v2334
    %2656 = vmatpush1.bf16.msra.mxu0 %v2333
    %2657 = vmatprep.subr.bf16.mxu0 %v2338
    %2658 = vmatpush1.bf16.msra.mxu0 %v2337
    %2659 = vmatprep.subr.bf16.mxu0 %v2342
    %2660 = vmatpush1.bf16.msra.mxu0 %v2341
    %2661 = vmatprep.subr.bf16.mxu0 %v2346
    %2662 = vmatpush1.bf16.msra.mxu0 %v2345
    %2663 = vmatprep.subr.bf16.mxu0 %v2350
    %2664 = vmatpush1.bf16.msra.mxu0 %v2349
    %2665 = vmatprep.subr.bf16.mxu0 %v2354
    %2666 = vmatpush1.bf16.msra.mxu0 %v2353
    %2667 = vmatprep.subr.bf16.mxu0 %v2358
    %2668 = vmatpush1.bf16.msra.mxu0 %v2357
    %2669 = vmatprep.mubr.bf16.mxu0 %v1779
    %2670 = vmatmul.mubr.bf16.gmra.mrb[0].mxu0 %v1778
    %v2671 = vpop.f32.mrb[0].mxu0
    %v2672 = vadd.f32 0.0, %v2671
    %v2673 = vpop.f32.mrb[0].mxu0
    %v2674 = vadd.f32 0.0, %v2673
    %v2675 = vpop.f32.mrb[0].mxu0
    %v2676 = vadd.f32 0.0, %v2675
    %v2677 = vpop.f32.mrb[0].mxu0
    %v2678 = vadd.f32 0.0, %v2677
    %2679 = vdwg.mxu0
    %2680 = vmatprep.subr.bf16.mxu0 %v2362
    %2681 = vmatpush1.bf16.msra.mxu0 %v2361
    %2682 = vmatprep.subr.bf16.mxu0 %v2366
    %2683 = vmatpush1.bf16.msra.mxu0 %v2365
    %2684 = vmatprep.subr.bf16.mxu0 %v2370
    %2685 = vmatpush1.bf16.msra.mxu0 %v2369
    %2686 = vmatprep.subr.bf16.mxu0 %v2374
    %2687 = vmatpush1.bf16.msra.mxu0 %v2373
    %2688 = vmatprep.subr.bf16.mxu0 %v2378
    %2689 = vmatpush1.bf16.msra.mxu0 %v2377
    %2690 = vmatprep.subr.bf16.mxu0 %v2382
    %2691 = vmatpush1.bf16.msra.mxu0 %v2381
    %2692 = vmatprep.subr.bf16.mxu0 %v2386
    %2693 = vmatpush1.bf16.msra.mxu0 %v2385
    %2694 = vmatprep.subr.bf16.mxu0 %v2390
    %2695 = vmatpush1.bf16.msra.mxu0 %v2389
    %2696 = vmatprep.subr.bf16.mxu0 %v2394
    %2697 = vmatpush1.bf16.msra.mxu0 %v2393
    %2698 = vmatprep.subr.bf16.mxu0 %v2398
    %2699 = vmatpush1.bf16.msra.mxu0 %v2397
    %2700 = vmatprep.subr.bf16.mxu0 %v2402
    %2701 = vmatpush1.bf16.msra.mxu0 %v2401
    %2702 = vmatprep.subr.bf16.mxu0 %v2406
    %2703 = vmatpush1.bf16.msra.mxu0 %v2405
    %2704 = vmatprep.subr.bf16.mxu0 %v2410
    %2705 = vmatpush1.bf16.msra.mxu0 %v2409
    %2706 = vmatprep.subr.bf16.mxu0 %v2414
    %2707 = vmatpush1.bf16.msra.mxu0 %v2413
    %2708 = vmatprep.subr.bf16.mxu0 %v2418
    %2709 = vmatpush1.bf16.msra.mxu0 %v2417
    %2710 = vmatprep.subr.bf16.mxu0 %v2422
    %2711 = vmatpush1.bf16.msra.mxu0 %v2421
    %2712 = vmatprep.mubr.bf16.mxu0 %v1781
    %2713 = vmatmul.mubr.bf16.gmra.mrb[0].mxu0 %v1780
    %v2714 = vpop.f32.mrb[0].mxu0
    %v2715 = vadd.f32 %v2672, %v2714
    %v2716 = vpop.f32.mrb[0].mxu0
    %v2717 = vadd.f32 %v2674, %v2716
    %v2718 = vpop.f32.mrb[0].mxu0
    %v2719 = vadd.f32 %v2676, %v2718
    %v2720 = vpop.f32.mrb[0].mxu0
    %v2721 = vadd.f32 %v2678, %v2720
    %2722 = vdwg.mxu0
    %v2851 = vunpack.c.l.b16 %v1553
    %v2852 = vunpack.c.h.b16 %v1553
    %v2853 = vunpack.c.l.b16 %v1554
    %v2854 = vunpack.c.h.b16 %v1554
    %v2855 = vunpack.c.l.b16 %v1555
    %v2856 = vunpack.c.h.b16 %v1555
    %v2857 = vunpack.c.l.b16 %v1556
    %v2858 = vunpack.c.h.b16 %v1556
    %v2859 = vunpack.c.l.b16 %v1557
    %v2860 = vunpack.c.h.b16 %v1557
    %v2861 = vunpack.c.l.b16 %v1558
    %v2862 = vunpack.c.h.b16 %v1558
    %v2863 = vunpack.c.l.b16 %v1559
    %v2864 = vunpack.c.h.b16 %v1559
    %v2865 = vunpack.c.l.b16 %v1560
    %v2866 = vunpack.c.h.b16 %v1560
    %v2867 = vunpack.c.l.b16 %v1561
    %v2868 = vunpack.c.h.b16 %v1561
    %v2869 = vunpack.c.l.b16 %v1562
    %v2870 = vunpack.c.h.b16 %v1562
    %v2871 = vunpack.c.l.b16 %v1563
    %v2872 = vunpack.c.h.b16 %v1563
    %v2873 = vunpack.c.l.b16 %v1564
    %v2874 = vunpack.c.h.b16 %v1564
    %v2875 = vunpack.c.l.b16 %v1565
    %v2876 = vunpack.c.h.b16 %v1565
    %v2877 = vunpack.c.l.b16 %v1566
    %v2878 = vunpack.c.h.b16 %v1566
    %v2879 = vunpack.c.l.b16 %v1567
    %v2880 = vunpack.c.h.b16 %v1567
    %v2881 = vunpack.c.l.b16 %v1568
    %v2882 = vunpack.c.h.b16 %v1568
    %v2883 = vunpack.c.l.b16 %v1569
    %v2884 = vunpack.c.h.b16 %v1569
    %v2885 = vunpack.c.l.b16 %v1570
    %v2886 = vunpack.c.h.b16 %v1570
    %v2887 = vunpack.c.l.b16 %v1571
    %v2888 = vunpack.c.h.b16 %v1571
    %v2889 = vunpack.c.l.b16 %v1572
    %v2890 = vunpack.c.h.b16 %v1572
    %v2891 = vunpack.c.l.b16 %v1573
    %v2892 = vunpack.c.h.b16 %v1573
    %v2893 = vunpack.c.l.b16 %v1574
    %v2894 = vunpack.c.h.b16 %v1574
    %v2895 = vunpack.c.l.b16 %v1575
    %v2896 = vunpack.c.h.b16 %v1575
    %v2897 = vunpack.c.l.b16 %v1576
    %v2898 = vunpack.c.h.b16 %v1576
    %v2899 = vunpack.c.l.b16 %v1577
    %v2900 = vunpack.c.h.b16 %v1577
    %v2901 = vunpack.c.l.b16 %v1578
    %v2902 = vunpack.c.h.b16 %v1578
    %v2903 = vunpack.c.l.b16 %v1579
    %v2904 = vunpack.c.h.b16 %v1579
    %v2905 = vunpack.c.l.b16 %v1580
    %v2906 = vunpack.c.h.b16 %v1580
    %v2907 = vunpack.c.l.b16 %v1581
    %v2908 = vunpack.c.h.b16 %v1581
    %v2909 = vunpack.c.l.b16 %v1582
    %v2910 = vunpack.c.h.b16 %v1582
    %v2911 = vunpack.c.l.b16 %v1583
    %v2912 = vunpack.c.h.b16 %v1583
    %v2913 = vunpack.c.l.b16 %v1584
    %v2914 = vunpack.c.h.b16 %v1584
    %v2915 = vunpack.c.l.b16 %v1585
    %v2916 = vunpack.c.h.b16 %v1585
    %v2917 = vunpack.c.l.b16 %v1586
    %v2918 = vunpack.c.h.b16 %v1586
    %v2919 = vunpack.c.l.b16 %v1587
    %v2920 = vunpack.c.h.b16 %v1587
    %v2921 = vunpack.c.l.b16 %v1588
    %v2922 = vunpack.c.h.b16 %v1588
    %v2923 = vunpack.c.l.b16 %v1589
    %v2924 = vunpack.c.h.b16 %v1589
    %v2925 = vunpack.c.l.b16 %v1590
    %v2926 = vunpack.c.h.b16 %v1590
    %v2927 = vunpack.c.l.b16 %v1591
    %v2928 = vunpack.c.h.b16 %v1591
    %v2929 = vunpack.c.l.b16 %v1592
    %v2930 = vunpack.c.h.b16 %v1592
    %v2931 = vunpack.c.l.b16 %v1593
    %v2932 = vunpack.c.h.b16 %v1593
    %v2933 = vunpack.c.l.b16 %v1594
    %v2934 = vunpack.c.h.b16 %v1594
    %v2935 = vunpack.c.l.b16 %v1595
    %v2936 = vunpack.c.h.b16 %v1595
    %v2937 = vunpack.c.l.b16 %v1596
    %v2938 = vunpack.c.h.b16 %v1596
    %v2939 = vunpack.c.l.b16 %v1597
    %v2940 = vunpack.c.h.b16 %v1597
    %v2941 = vunpack.c.l.b16 %v1598
    %v2942 = vunpack.c.h.b16 %v1598
    %v2943 = vunpack.c.l.b16 %v1599
    %v2944 = vunpack.c.h.b16 %v1599
    %v2945 = vunpack.c.l.b16 %v1600
    %v2946 = vunpack.c.h.b16 %v1600
    %v2947 = vunpack.c.l.b16 %v1601
    %v2948 = vunpack.c.h.b16 %v1601
    %v2949 = vunpack.c.l.b16 %v1602
    %v2950 = vunpack.c.h.b16 %v1602
    %v2951 = vunpack.c.l.b16 %v1603
    %v2952 = vunpack.c.h.b16 %v1603
    %v2953 = vunpack.c.l.b16 %v1604
    %v2954 = vunpack.c.h.b16 %v1604
    %v2955 = vunpack.c.l.b16 %v1605
    %v2956 = vunpack.c.h.b16 %v1605
    %v2957 = vunpack.c.l.b16 %v1606
    %v2958 = vunpack.c.h.b16 %v1606
    %v2959 = vunpack.c.l.b16 %v1607
    %v2960 = vunpack.c.h.b16 %v1607
    %v2961 = vunpack.c.l.b16 %v1608
    %v2962 = vunpack.c.h.b16 %v1608
    %v2963 = vunpack.c.l.b16 %v1609
    %v2964 = vunpack.c.h.b16 %v1609
    %v2965 = vunpack.c.l.b16 %v1610
    %v2966 = vunpack.c.h.b16 %v1610
    %v2967 = vunpack.c.l.b16 %v1611
    %v2968 = vunpack.c.h.b16 %v1611
    %v2969 = vunpack.c.l.b16 %v1612
    %v2970 = vunpack.c.h.b16 %v1612
    %v2971 = vunpack.c.l.b16 %v1613
    %v2972 = vunpack.c.h.b16 %v1613
    %v2973 = vunpack.c.l.b16 %v1614
    %v2974 = vunpack.c.h.b16 %v1614
    %v2975 = vunpack.c.l.b16 %v1615
    %v2976 = vunpack.c.h.b16 %v1615
    %v2977 = vunpack.c.l.b16 %v1616
    %v2978 = vunpack.c.h.b16 %v1616
    %v2979 = vunpack.c.l.b16 %v1617
    %v2980 = vunpack.c.h.b16 %v1617
    %v2981 = vunpack.c.l.b16 %v1618
    %v2982 = vunpack.c.h.b16 %v1618
    %v2983 = vunpack.c.l.b16 %v1619
    %v2984 = vunpack.c.h.b16 %v1619
    %v2985 = vunpack.c.l.b16 %v1620
    %v2986 = vunpack.c.h.b16 %v1620
    %v2987 = vunpack.c.l.b16 %v1621
    %v2988 = vunpack.c.h.b16 %v1621
    %v2989 = vunpack.c.l.b16 %v1622
    %v2990 = vunpack.c.h.b16 %v1622
    %v2991 = vunpack.c.l.b16 %v1623
    %v2992 = vunpack.c.h.b16 %v1623
    %v2993 = vunpack.c.l.b16 %v1624
    %v2994 = vunpack.c.h.b16 %v1624
    %v2995 = vunpack.c.l.b16 %v1625
    %v2996 = vunpack.c.h.b16 %v1625
    %v2997 = vunpack.c.l.b16 %v1626
    %v2998 = vunpack.c.h.b16 %v1626
    %v2999 = vunpack.c.l.b16 %v1627
    %v3000 = vunpack.c.h.b16 %v1627
    %v3001 = vunpack.c.l.b16 %v1628
    %v3002 = vunpack.c.h.b16 %v1628
    %v3003 = vunpack.c.l.b16 %v1629
    %v3004 = vunpack.c.h.b16 %v1629
    %v3005 = vunpack.c.l.b16 %v1630
    %v3006 = vunpack.c.h.b16 %v1630
    %v3007 = vunpack.c.l.b16 %v1631
    %v3008 = vunpack.c.h.b16 %v1631
    %v3009 = vunpack.c.l.b16 %v1632
    %v3010 = vunpack.c.h.b16 %v1632
    %v3011 = vunpack.c.l.b16 %v1633
    %v3012 = vunpack.c.h.b16 %v1633
    %v3013 = vunpack.c.l.b16 %v1634
    %v3014 = vunpack.c.h.b16 %v1634
    %v3015 = vunpack.c.l.b16 %v1635
    %v3016 = vunpack.c.h.b16 %v1635
    %v3017 = vunpack.c.l.b16 %v1636
    %v3018 = vunpack.c.h.b16 %v1636
    %v3019 = vunpack.c.l.b16 %v1637
    %v3020 = vunpack.c.h.b16 %v1637
    %v3021 = vunpack.c.l.b16 %v1638
    %v3022 = vunpack.c.h.b16 %v1638
    %v3023 = vunpack.c.l.b16 %v1639
    %v3024 = vunpack.c.h.b16 %v1639
    %v3025 = vunpack.c.l.b16 %v1640
    %v3026 = vunpack.c.h.b16 %v1640
    %v3027 = vunpack.c.l.b16 %v1641
    %v3028 = vunpack.c.h.b16 %v1641
    %v3029 = vunpack.c.l.b16 %v1642
    %v3030 = vunpack.c.h.b16 %v1642
    %v3031 = vunpack.c.l.b16 %v1643
    %v3032 = vunpack.c.h.b16 %v1643
    %v3033 = vunpack.c.l.b16 %v1644
    %v3034 = vunpack.c.h.b16 %v1644
    %v3035 = vunpack.c.l.b16 %v1645
    %v3036 = vunpack.c.h.b16 %v1645
    %v3037 = vunpack.c.l.b16 %v1646
    %v3038 = vunpack.c.h.b16 %v1646
    %v3039 = vunpack.c.l.b16 %v1647
    %v3040 = vunpack.c.h.b16 %v1647
    %v3041 = vunpack.c.l.b16 %v1648
    %v3042 = vunpack.c.h.b16 %v1648
    %v3043 = vunpack.c.l.b16 %v1649
    %v3044 = vunpack.c.h.b16 %v1649
    %v3045 = vunpack.c.l.b16 %v1650
    %v3046 = vunpack.c.h.b16 %v1650
    %v3047 = vunpack.c.l.b16 %v1651
    %v3048 = vunpack.c.h.b16 %v1651
    %v3049 = vunpack.c.l.b16 %v1652
    %v3050 = vunpack.c.h.b16 %v1652
    %v3051 = vunpack.c.l.b16 %v1653
    %v3052 = vunpack.c.h.b16 %v1653
    %v3053 = vunpack.c.l.b16 %v1654
    %v3054 = vunpack.c.h.b16 %v1654
    %v3055 = vunpack.c.l.b16 %v1655
    %v3056 = vunpack.c.h.b16 %v1655
    %v3057 = vunpack.c.l.b16 %v1656
    %v3058 = vunpack.c.h.b16 %v1656
    %v3059 = vunpack.c.l.b16 %v1657
    %v3060 = vunpack.c.h.b16 %v1657
    %v3061 = vunpack.c.l.b16 %v1658
    %v3062 = vunpack.c.h.b16 %v1658
    %v3063 = vunpack.c.l.b16 %v1659
    %v3064 = vunpack.c.h.b16 %v1659
    %v3065 = vunpack.c.l.b16 %v1660
    %v3066 = vunpack.c.h.b16 %v1660
    %v3067 = vunpack.c.l.b16 %v1661
    %v3068 = vunpack.c.h.b16 %v1661
    %v3069 = vunpack.c.l.b16 %v1662
    %v3070 = vunpack.c.h.b16 %v1662
    %v3071 = vunpack.c.l.b16 %v1663
    %v3072 = vunpack.c.h.b16 %v1663
    %v3073 = vunpack.c.l.b16 %v1664
    %v3074 = vunpack.c.h.b16 %v1664
    %v3075 = vunpack.c.l.b16 %v1665
    %v3076 = vunpack.c.h.b16 %v1665
    %v3077 = vunpack.c.l.b16 %v1666
    %v3078 = vunpack.c.h.b16 %v1666
    %v3079 = vunpack.c.l.b16 %v1667
    %v3080 = vunpack.c.h.b16 %v1667
    %v3081 = vunpack.c.l.b16 %v1668
    %v3082 = vunpack.c.h.b16 %v1668
    %v3083 = vunpack.c.l.b16 %v1669
    %v3084 = vunpack.c.h.b16 %v1669
    %v3085 = vunpack.c.l.b16 %v1670
    %v3086 = vunpack.c.h.b16 %v1670
    %v3087 = vunpack.c.l.b16 %v1671
    %v3088 = vunpack.c.h.b16 %v1671
    %v3089 = vunpack.c.l.b16 %v1672
    %v3090 = vunpack.c.h.b16 %v1672
    %v3091 = vunpack.c.l.b16 %v1673
    %v3092 = vunpack.c.h.b16 %v1673
    %v3093 = vunpack.c.l.b16 %v1674
    %v3094 = vunpack.c.h.b16 %v1674
    %v3095 = vunpack.c.l.b16 %v1675
    %v3096 = vunpack.c.h.b16 %v1675
    %v3097 = vunpack.c.l.b16 %v1676
    %v3098 = vunpack.c.h.b16 %v1676
    %v3099 = vunpack.c.l.b16 %v1677
    %v3100 = vunpack.c.h.b16 %v1677
    %v3101 = vunpack.c.l.b16 %v1678
    %v3102 = vunpack.c.h.b16 %v1678
    %v3103 = vunpack.c.l.b16 %v1679
    %v3104 = vunpack.c.h.b16 %v1679
    %v3105 = vunpack.c.l.b16 %v1680
    %v3106 = vunpack.c.h.b16 %v1680
    %v3107 = vpack.c.b16 %v2855, %v2851
    %v3108 = vpack.c.b16 %v2856, %v2852
    %v3109 = vpack.c.b16 %v2857, %v2853
    %v3110 = vpack.c.b16 %v2858, %v2854
    %v3111 = vpack.c.b16 %v2863, %v2859
    %v3112 = vpack.c.b16 %v2864, %v2860
    %v3113 = vpack.c.b16 %v2865, %v2861
    %v3114 = vpack.c.b16 %v2866, %v2862
    %v3115 = vpack.c.b16 %v2871, %v2867
    %v3116 = vpack.c.b16 %v2872, %v2868
    %v3117 = vpack.c.b16 %v2873, %v2869
    %v3118 = vpack.c.b16 %v2874, %v2870
    %v3119 = vpack.c.b16 %v2879, %v2875
    %v3120 = vpack.c.b16 %v2880, %v2876
    %v3121 = vpack.c.b16 %v2881, %v2877
    %v3122 = vpack.c.b16 %v2882, %v2878
    %v3123 = vpack.c.b16 %v2887, %v2883
    %v3124 = vpack.c.b16 %v2888, %v2884
    %v3125 = vpack.c.b16 %v2889, %v2885
    %v3126 = vpack.c.b16 %v2890, %v2886
    %v3127 = vpack.c.b16 %v2895, %v2891
    %v3128 = vpack.c.b16 %v2896, %v2892
    %v3129 = vpack.c.b16 %v2897, %v2893
    %v3130 = vpack.c.b16 %v2898, %v2894
    %v3131 = vpack.c.b16 %v2903, %v2899
    %v3132 = vpack.c.b16 %v2904, %v2900
    %v3133 = vpack.c.b16 %v2905, %v2901
    %v3134 = vpack.c.b16 %v2906, %v2902
    %v3135 = vpack.c.b16 %v2911, %v2907
    %v3136 = vpack.c.b16 %v2912, %v2908
    %v3137 = vpack.c.b16 %v2913, %v2909
    %v3138 = vpack.c.b16 %v2914, %v2910
    %v3139 = vpack.c.b16 %v2919, %v2915
    %v3140 = vpack.c.b16 %v2920, %v2916
    %v3141 = vpack.c.b16 %v2921, %v2917
    %v3142 = vpack.c.b16 %v2922, %v2918
    %v3143 = vpack.c.b16 %v2927, %v2923
    %v3144 = vpack.c.b16 %v2928, %v2924
    %v3145 = vpack.c.b16 %v2929, %v2925
    %v3146 = vpack.c.b16 %v2930, %v2926
    %v3147 = vpack.c.b16 %v2935, %v2931
    %v3148 = vpack.c.b16 %v2936, %v2932
    %v3149 = vpack.c.b16 %v2937, %v2933
    %v3150 = vpack.c.b16 %v2938, %v2934
    %v3151 = vpack.c.b16 %v2943, %v2939
    %v3152 = vpack.c.b16 %v2944, %v2940
    %v3153 = vpack.c.b16 %v2945, %v2941
    %v3154 = vpack.c.b16 %v2946, %v2942
    %v3155 = vpack.c.b16 %v2951, %v2947
    %v3156 = vpack.c.b16 %v2952, %v2948
    %v3157 = vpack.c.b16 %v2953, %v2949
    %v3158 = vpack.c.b16 %v2954, %v2950
    %v3159 = vpack.c.b16 %v2959, %v2955
    %v3160 = vpack.c.b16 %v2960, %v2956
    %v3161 = vpack.c.b16 %v2961, %v2957
    %v3162 = vpack.c.b16 %v2962, %v2958
    %v3163 = vpack.c.b16 %v2967, %v2963
    %v3164 = vpack.c.b16 %v2968, %v2964
    %v3165 = vpack.c.b16 %v2969, %v2965
    %v3166 = vpack.c.b16 %v2970, %v2966
    %v3167 = vpack.c.b16 %v2975, %v2971
    %v3168 = vpack.c.b16 %v2976, %v2972
    %v3169 = vpack.c.b16 %v2977, %v2973
    %v3170 = vpack.c.b16 %v2978, %v2974
    %v3171 = vpack.c.b16 %v2983, %v2979
    %v3172 = vpack.c.b16 %v2984, %v2980
    %v3173 = vpack.c.b16 %v2985, %v2981
    %v3174 = vpack.c.b16 %v2986, %v2982
    %v3175 = vpack.c.b16 %v2991, %v2987
    %v3176 = vpack.c.b16 %v2992, %v2988
    %v3177 = vpack.c.b16 %v2993, %v2989
    %v3178 = vpack.c.b16 %v2994, %v2990
    %v3179 = vpack.c.b16 %v2999, %v2995
    %v3180 = vpack.c.b16 %v3000, %v2996
    %v3181 = vpack.c.b16 %v3001, %v2997
    %v3182 = vpack.c.b16 %v3002, %v2998
    %v3183 = vpack.c.b16 %v3007, %v3003
    %v3184 = vpack.c.b16 %v3008, %v3004
    %v3185 = vpack.c.b16 %v3009, %v3005
    %v3186 = vpack.c.b16 %v3010, %v3006
    %v3187 = vpack.c.b16 %v3015, %v3011
    %v3188 = vpack.c.b16 %v3016, %v3012
    %v3189 = vpack.c.b16 %v3017, %v3013
    %v3190 = vpack.c.b16 %v3018, %v3014
    %v3191 = vpack.c.b16 %v3023, %v3019
    %v3192 = vpack.c.b16 %v3024, %v3020
    %v3193 = vpack.c.b16 %v3025, %v3021
    %v3194 = vpack.c.b16 %v3026, %v3022
    %v3195 = vpack.c.b16 %v3031, %v3027
    %v3196 = vpack.c.b16 %v3032, %v3028
    %v3197 = vpack.c.b16 %v3033, %v3029
    %v3198 = vpack.c.b16 %v3034, %v3030
    %v3199 = vpack.c.b16 %v3039, %v3035
    %v3200 = vpack.c.b16 %v3040, %v3036
    %v3201 = vpack.c.b16 %v3041, %v3037
    %v3202 = vpack.c.b16 %v3042, %v3038
    %v3203 = vpack.c.b16 %v3047, %v3043
    %v3204 = vpack.c.b16 %v3048, %v3044
    %v3205 = vpack.c.b16 %v3049, %v3045
    %v3206 = vpack.c.b16 %v3050, %v3046
    %v3207 = vpack.c.b16 %v3055, %v3051
    %v3208 = vpack.c.b16 %v3056, %v3052
    %v3209 = vpack.c.b16 %v3057, %v3053
    %v3210 = vpack.c.b16 %v3058, %v3054
    %v3211 = vpack.c.b16 %v3063, %v3059
    %v3212 = vpack.c.b16 %v3064, %v3060
    %v3213 = vpack.c.b16 %v3065, %v3061
    %v3214 = vpack.c.b16 %v3066, %v3062
    %v3215 = vpack.c.b16 %v3071, %v3067
    %v3216 = vpack.c.b16 %v3072, %v3068
    %v3217 = vpack.c.b16 %v3073, %v3069
    %v3218 = vpack.c.b16 %v3074, %v3070
    %v3219 = vpack.c.b16 %v3079, %v3075
    %v3220 = vpack.c.b16 %v3080, %v3076
    %v3221 = vpack.c.b16 %v3081, %v3077
    %v3222 = vpack.c.b16 %v3082, %v3078
    %v3223 = vpack.c.b16 %v3087, %v3083
    %v3224 = vpack.c.b16 %v3088, %v3084
    %v3225 = vpack.c.b16 %v3089, %v3085
    %v3226 = vpack.c.b16 %v3090, %v3086
    %v3227 = vpack.c.b16 %v3095, %v3091
    %v3228 = vpack.c.b16 %v3096, %v3092
    %v3229 = vpack.c.b16 %v3097, %v3093
    %v3230 = vpack.c.b16 %v3098, %v3094
    %v3231 = vpack.c.b16 %v3103, %v3099
    %v3232 = vpack.c.b16 %v3104, %v3100
    %v3233 = vpack.c.b16 %v3105, %v3101
    %v3234 = vpack.c.b16 %v3106, %v3102
    %3363 = vmatprep.subr.bf16.mxu0 %v3108
    %3364 = vmatpush1.bf16.msra.mxu0 %v3107
    %3365 = vmatprep.subr.bf16.mxu0 %v3112
    %3366 = vmatpush1.bf16.msra.mxu0 %v3111
    %3367 = vmatprep.subr.bf16.mxu0 %v3116
    %3368 = vmatpush1.bf16.msra.mxu0 %v3115
    %3369 = vmatprep.subr.bf16.mxu0 %v3120
    %3370 = vmatpush1.bf16.msra.mxu0 %v3119
    %3371 = vmatprep.subr.bf16.mxu0 %v3124
    %3372 = vmatpush1.bf16.msra.mxu0 %v3123
    %3373 = vmatprep.subr.bf16.mxu0 %v3128
    %3374 = vmatpush1.bf16.msra.mxu0 %v3127
    %3375 = vmatprep.subr.bf16.mxu0 %v3132
    %3376 = vmatpush1.bf16.msra.mxu0 %v3131
    %3377 = vmatprep.subr.bf16.mxu0 %v3136
    %3378 = vmatpush1.bf16.msra.mxu0 %v3135
    %3379 = vmatprep.subr.bf16.mxu0 %v3140
    %3380 = vmatpush1.bf16.msra.mxu0 %v3139
    %3381 = vmatprep.subr.bf16.mxu0 %v3144
    %3382 = vmatpush1.bf16.msra.mxu0 %v3143
    %3383 = vmatprep.subr.bf16.mxu0 %v3148
    %3384 = vmatpush1.bf16.msra.mxu0 %v3147
    %3385 = vmatprep.subr.bf16.mxu0 %v3152
    %3386 = vmatpush1.bf16.msra.mxu0 %v3151
    %3387 = vmatprep.subr.bf16.mxu0 %v3156
    %3388 = vmatpush1.bf16.msra.mxu0 %v3155
    %3389 = vmatprep.subr.bf16.mxu0 %v3160
    %3390 = vmatpush1.bf16.msra.mxu0 %v3159
    %3391 = vmatprep.subr.bf16.mxu0 %v3164
    %3392 = vmatpush1.bf16.msra.mxu0 %v3163
    %3393 = vmatprep.subr.bf16.mxu0 %v3168
    %3394 = vmatpush1.bf16.msra.mxu0 %v3167
    %3395 = vmatprep.mubr.bf16.mxu0 %v1550
    %3396 = vmatmul.mubr.bf16.gmra.mrb[0].mxu0 %v1549
    %v3397 = vpop.f32.mrb[0].mxu0
    %v3398 = vadd.f32 %v2629, %v3397
    %v3399 = vpop.f32.mrb[0].mxu0
    %v3400 = vadd.f32 %v2631, %v3399
    %v3401 = vpop.f32.mrb[0].mxu0
    %v3402 = vadd.f32 %v2633, %v3401
    %v3403 = vpop.f32.mrb[0].mxu0
    %v3404 = vadd.f32 %v2635, %v3403
    %3405 = vdwg.mxu0
    %3406 = vmatprep.subr.bf16.mxu0 %v3172
    %3407 = vmatpush1.bf16.msra.mxu0 %v3171
    %3408 = vmatprep.subr.bf16.mxu0 %v3176
    %3409 = vmatpush1.bf16.msra.mxu0 %v3175
    %3410 = vmatprep.subr.bf16.mxu0 %v3180
    %3411 = vmatpush1.bf16.msra.mxu0 %v3179
    %3412 = vmatprep.subr.bf16.mxu0 %v3184
    %3413 = vmatpush1.bf16.msra.mxu0 %v3183
    %3414 = vmatprep.subr.bf16.mxu0 %v3188
    %3415 = vmatpush1.bf16.msra.mxu0 %v3187
    %3416 = vmatprep.subr.bf16.mxu0 %v3192
    %3417 = vmatpush1.bf16.msra.mxu0 %v3191
    %3418 = vmatprep.subr.bf16.mxu0 %v3196
    %3419 = vmatpush1.bf16.msra.mxu0 %v3195
    %3420 = vmatprep.subr.bf16.mxu0 %v3200
    %3421 = vmatpush1.bf16.msra.mxu0 %v3199
    %3422 = vmatprep.subr.bf16.mxu0 %v3204
    %3423 = vmatpush1.bf16.msra.mxu0 %v3203
    %3424 = vmatprep.subr.bf16.mxu0 %v3208
    %3425 = vmatpush1.bf16.msra.mxu0 %v3207
    %3426 = vmatprep.subr.bf16.mxu0 %v3212
    %3427 = vmatpush1.bf16.msra.mxu0 %v3211
    %3428 = vmatprep.subr.bf16.mxu0 %v3216
    %3429 = vmatpush1.bf16.msra.mxu0 %v3215
    %3430 = vmatprep.subr.bf16.mxu0 %v3220
    %3431 = vmatpush1.bf16.msra.mxu0 %v3219
    %3432 = vmatprep.subr.bf16.mxu0 %v3224
    %3433 = vmatpush1.bf16.msra.mxu0 %v3223
    %3434 = vmatprep.subr.bf16.mxu0 %v3228
    %3435 = vmatpush1.bf16.msra.mxu0 %v3227
    %3436 = vmatprep.subr.bf16.mxu0 %v3232
    %3437 = vmatpush1.bf16.msra.mxu0 %v3231
    %3438 = vmatprep.mubr.bf16.mxu0 %v1552
    %3439 = vmatmul.mubr.bf16.gmra.mrb[0].mxu0 %v1551
    %v3440 = vpop.f32.mrb[0].mxu0
    %v3441 = vadd.f32 %v3398, %v3440
    %v3442 = vpop.f32.mrb[0].mxu0
    %v3443 = vadd.f32 %v3400, %v3442
    %v3444 = vpop.f32.mrb[0].mxu0
    %v3445 = vadd.f32 %v3402, %v3444
    %v3446 = vpop.f32.mrb[0].mxu0
    %v3447 = vadd.f32 %v3404, %v3446
    %3448 = vdwg.mxu0
    %3449 = vmatprep.subr.bf16.mxu0 %v3110
    %3450 = vmatpush1.bf16.msra.mxu0 %v3109
    %3451 = vmatprep.subr.bf16.mxu0 %v3114
    %3452 = vmatpush1.bf16.msra.mxu0 %v3113
    %3453 = vmatprep.subr.bf16.mxu0 %v3118
    %3454 = vmatpush1.bf16.msra.mxu0 %v3117
    %3455 = vmatprep.subr.bf16.mxu0 %v3122
    %3456 = vmatpush1.bf16.msra.mxu0 %v3121
    %3457 = vmatprep.subr.bf16.mxu0 %v3126
    %3458 = vmatpush1.bf16.msra.mxu0 %v3125
    %3459 = vmatprep.subr.bf16.mxu0 %v3130
    %3460 = vmatpush1.bf16.msra.mxu0 %v3129
    %3461 = vmatprep.subr.bf16.mxu0 %v3134
    %3462 = vmatpush1.bf16.msra.mxu0 %v3133
    %3463 = vmatprep.subr.bf16.mxu0 %v3138
    %3464 = vmatpush1.bf16.msra.mxu0 %v3137
    %3465 = vmatprep.subr.bf16.mxu0 %v3142
    %3466 = vmatpush1.bf16.msra.mxu0 %v3141
    %3467 = vmatprep.subr.bf16.mxu0 %v3146
    %3468 = vmatpush1.bf16.msra.mxu0 %v3145
    %3469 = vmatprep.subr.bf16.mxu0 %v3150
    %3470 = vmatpush1.bf16.msra.mxu0 %v3149
    %3471 = vmatprep.subr.bf16.mxu0 %v3154
    %3472 = vmatpush1.bf16.msra.mxu0 %v3153
    %3473 = vmatprep.subr.bf16.mxu0 %v3158
    %3474 = vmatpush1.bf16.msra.mxu0 %v3157
    %3475 = vmatprep.subr.bf16.mxu0 %v3162
    %3476 = vmatpush1.bf16.msra.mxu0 %v3161
    %3477 = vmatprep.subr.bf16.mxu0 %v3166
    %3478 = vmatpush1.bf16.msra.mxu0 %v3165
    %3479 = vmatprep.subr.bf16.mxu0 %v3170
    %3480 = vmatpush1.bf16.msra.mxu0 %v3169
    %3481 = vmatprep.mubr.bf16.mxu0 %v1550
    %3482 = vmatmul.mubr.bf16.gmra.mrb[0].mxu0 %v1549
    %v3483 = vpop.f32.mrb[0].mxu0
    %v3484 = vadd.f32 %v2715, %v3483
    %v3485 = vpop.f32.mrb[0].mxu0
    %v3486 = vadd.f32 %v2717, %v3485
    %v3487 = vpop.f32.mrb[0].mxu0
    %v3488 = vadd.f32 %v2719, %v3487
    %v3489 = vpop.f32.mrb[0].mxu0
    %v3490 = vadd.f32 %v2721, %v3489
    %3491 = vdwg.mxu0
    %3492 = vmatprep.subr.bf16.mxu0 %v3174
    %3493 = vmatpush1.bf16.msra.mxu0 %v3173
    %3494 = vmatprep.subr.bf16.mxu0 %v3178
    %3495 = vmatpush1.bf16.msra.mxu0 %v3177
    %3496 = vmatprep.subr.bf16.mxu0 %v3182
    %3497 = vmatpush1.bf16.msra.mxu0 %v3181
    %3498 = vmatprep.subr.bf16.mxu0 %v3186
    %3499 = vmatpush1.bf16.msra.mxu0 %v3185
    %3500 = vmatprep.subr.bf16.mxu0 %v3190
    %3501 = vmatpush1.bf16.msra.mxu0 %v3189
    %3502 = vmatprep.subr.bf16.mxu0 %v3194
    %3503 = vmatpush1.bf16.msra.mxu0 %v3193
    %3504 = vmatprep.subr.bf16.mxu0 %v3198
    %3505 = vmatpush1.bf16.msra.mxu0 %v3197
    %3506 = vmatprep.subr.bf16.mxu0 %v3202
    %3507 = vmatpush1.bf16.msra.mxu0 %v3201
    %3508 = vmatprep.subr.bf16.mxu0 %v3206
    %3509 = vmatpush1.bf16.msra.mxu0 %v3205
    %3510 = vmatprep.subr.bf16.mxu0 %v3210
    %3511 = vmatpush1.bf16.msra.mxu0 %v3209
    %3512 = vmatprep.subr.bf16.mxu0 %v3214
    %3513 = vmatpush1.bf16.msra.mxu0 %v3213
    %3514 = vmatprep.subr.bf16.mxu0 %v3218
    %3515 = vmatpush1.bf16.msra.mxu0 %v3217
    %3516 = vmatprep.subr.bf16.mxu0 %v3222
    %3517 = vmatpush1.bf16.msra.mxu0 %v3221
    %3518 = vmatprep.subr.bf16.mxu0 %v3226
    %3519 = vmatpush1.bf16.msra.mxu0 %v3225
    %3520 = vmatprep.subr.bf16.mxu0 %v3230
    %3521 = vmatpush1.bf16.msra.mxu0 %v3229
    %3522 = vmatprep.subr.bf16.mxu0 %v3234
    %3523 = vmatpush1.bf16.msra.mxu0 %v3233
    %3524 = vmatprep.mubr.bf16.mxu0 %v1552
    %3525 = vmatmul.mubr.bf16.gmra.mrb[0].mxu0 %v1551
    %v3526 = vpop.f32.mrb[0].mxu0
    %v3527 = vadd.f32 %v3484, %v3526
    %v3528 = vpop.f32.mrb[0].mxu0
    %v3529 = vadd.f32 %v3486, %v3528
    %v3530 = vpop.f32.mrb[0].mxu0
    %v3531 = vadd.f32 %v3488, %v3530
    %v3532 = vpop.f32.mrb[0].mxu0
    %v3533 = vadd.f32 %v3490, %v3532
    %3534 = vdwg.mxu0
    %s3535 = scalar_lea.vmem [#allocation8], 16
    %v3536 = vld [vmem:[%s3535] sm:$0xf]
    %v3537 = vld [vmem:[%s3535 + $0x4] sm:$0xf]
    %v3540 = vunpack.c.l.b16 %v3536
    %v3541 = vunpack.c.l.b16 %v3537
    %v3542 = vpack.c.b16 %v3541, %v3540
    %v3544 = vsel %vm1459, %v3542, 0
    %3546 = vmatprep.subr.bf16.mxu0 %v1445
    %3547 = vmatpush1.bf16.msra.mxu0 %v1444
    %3548 = vmatprep.subr.bf16.mxu0 %v1449
    %3549 = vmatpush1.bf16.msra.mxu0 %v1448
    %3550 = vmatprep.subr.bf16.mxu0 0
    %3551 = vmatpush1.bf16.msra.mxu0 0
    %3552 = vmatprep.subr.bf16.mxu0 0
    %3553 = vmatpush1.bf16.msra.mxu0 0
    %3554 = vmatprep.subr.bf16.mxu0 0
    %3555 = vmatpush1.bf16.msra.mxu0 0
    %3556 = vmatprep.subr.bf16.mxu0 0
    %3557 = vmatpush1.bf16.msra.mxu0 0
    %3558 = vmatprep.subr.bf16.mxu0 0
    %3559 = vmatpush1.bf16.msra.mxu0 0
    %3560 = vmatprep.subr.bf16.mxu0 0
    %3561 = vmatpush1.bf16.msra.mxu0 0
    %3562 = vmatprep.subr.bf16.mxu0 0
    %3563 = vmatpush1.bf16.msra.mxu0 0
    %3564 = vmatprep.subr.bf16.mxu0 0
    %3565 = vmatpush1.bf16.msra.mxu0 0
    %3566 = vmatprep.subr.bf16.mxu0 0
    %3567 = vmatpush1.bf16.msra.mxu0 0
    %3568 = vmatprep.subr.bf16.mxu0 0
    %3569 = vmatpush1.bf16.msra.mxu0 0
    %3570 = vmatprep.subr.bf16.mxu0 0
    %3571 = vmatpush1.bf16.msra.mxu0 0
    %3572 = vmatprep.subr.bf16.mxu0 0
    %3573 = vmatpush1.bf16.msra.mxu0 0
    %3574 = vmatprep.subr.bf16.mxu0 0
    %3575 = vmatpush1.bf16.msra.mxu0 0
    %3576 = vmatprep.subr.bf16.mxu0 0
    %3577 = vmatpush1.bf16.msra.mxu0 0
    %3578 = vmatprep.mubr.bf16.mxu0 0
    %3579 = vmatmul.mubr.bf16.gmra.mrb[0].mxu0 %v3544
    %v3580 = vpop.f32.mrb[0].mxu0
    %v3581 = vadd.f32 0.0, %v3580
    %v3582 = vpop.f32.mrb[0].mxu0
    %v3583 = vadd.f32 0.0, %v3582
    %v3584 = vpop.f32.mrb[0].mxu0
    %v3585 = vadd.f32 0.0, %v3584
    %v3586 = vpop.f32.mrb[0].mxu0
    %v3587 = vadd.f32 0.0, %v3586
    %3588 = vdwg.mxu0
    %3589 = vmatprep.subr.bf16.mxu0 %v1447
    %3590 = vmatpush1.bf16.msra.mxu0 %v1446
    %3591 = vmatprep.subr.bf16.mxu0 %v1451
    %3592 = vmatpush1.bf16.msra.mxu0 %v1450
    %3593 = vmatprep.subr.bf16.mxu0 0
    %3594 = vmatpush1.bf16.msra.mxu0 0
    %3595 = vmatprep.subr.bf16.mxu0 0
    %3596 = vmatpush1.bf16.msra.mxu0 0
    %3597 = vmatprep.subr.bf16.mxu0 0
    %3598 = vmatpush1.bf16.msra.mxu0 0
    %3599 = vmatprep.subr.bf16.mxu0 0
    %3600 = vmatpush1.bf16.msra.mxu0 0
    %3601 = vmatprep.subr.bf16.mxu0 0
    %3602 = vmatpush1.bf16.msra.mxu0 0
    %3603 = vmatprep.subr.bf16.mxu0 0
    %3604 = vmatpush1.bf16.msra.mxu0 0
    %3605 = vmatprep.subr.bf16.mxu0 0
    %3606 = vmatpush1.bf16.msra.mxu0 0
    %3607 = vmatprep.subr.bf16.mxu0 0
    %3608 = vmatpush1.bf16.msra.mxu0 0
    %3609 = vmatprep.subr.bf16.mxu0 0
    %3610 = vmatpush1.bf16.msra.mxu0 0
    %3611 = vmatprep.subr.bf16.mxu0 0
    %3612 = vmatpush1.bf16.msra.mxu0 0
    %3613 = vmatprep.subr.bf16.mxu0 0
    %3614 = vmatpush1.bf16.msra.mxu0 0
    %3615 = vmatprep.subr.bf16.mxu0 0
    %3616 = vmatpush1.bf16.msra.mxu0 0
    %3617 = vmatprep.subr.bf16.mxu0 0
    %3618 = vmatpush1.bf16.msra.mxu0 0
    %3619 = vmatprep.subr.bf16.mxu0 0
    %3620 = vmatpush1.bf16.msra.mxu0 0
    %3621 = vmatprep.mubr.bf16.mxu0 0
    %3622 = vmatmul.mubr.bf16.gmra.mrb[0].mxu0 %v3544
    %v3623 = vpop.f32.mrb[0].mxu0
    %v3624 = vadd.f32 0.0, %v3623
    %v3625 = vpop.f32.mrb[0].mxu0
    %v3626 = vadd.f32 0.0, %v3625
    %v3627 = vpop.f32.mrb[0].mxu0
    %v3628 = vadd.f32 0.0, %v3627
    %v3629 = vpop.f32.mrb[0].mxu0
    %v3630 = vadd.f32 0.0, %v3629
    %3631 = vdwg.mxu0
    %v3632 = vpack.c.bf16 %v3585, %v3581
    %v3633 = vpack.c.bf16 %v3587, %v3583
    %v3634 = vpack.c.bf16 %v3628, %v3624
    %v3635 = vpack.c.bf16 %v3630, %v3626
    %s3636 = scalar_lea.vmem [#allocation10], 2048
    %v3637 = vld [vmem:[%s3636] sm:$0xff]
    %v3638 = vld [vmem:[%s3636 + $0x8] sm:$0xff]
    %v3639 = vld [vmem:[%s3636 + $0x10] sm:$0xff]
    %v3640 = vld [vmem:[%s3636 + $0x18] sm:$0xff]
    %v3641 = vld [vmem:[%s3636 + $0x20] sm:$0xff]
    %v3642 = vld [vmem:[%s3636 + $0x28] sm:$0xff]
    %v3643 = vld [vmem:[%s3636 + $0x30] sm:$0xff]
    %v3644 = vld [vmem:[%s3636 + $0x38] sm:$0xff]
    %v3645 = vld [vmem:[%s3636 + $0x40] sm:$0xff]
    %v3646 = vld [vmem:[%s3636 + $0x48] sm:$0xff]
    %v3647 = vld [vmem:[%s3636 + $0x50] sm:$0xff]
    %v3648 = vld [vmem:[%s3636 + $0x58] sm:$0xff]
    %v3649 = vld [vmem:[%s3636 + $0x60] sm:$0xff]
    %v3650 = vld [vmem:[%s3636 + $0x68] sm:$0xff]
    %v3651 = vld [vmem:[%s3636 + $0x70] sm:$0xff]
    %v3652 = vld [vmem:[%s3636 + $0x78] sm:$0xff]
    %v3653 = vld [vmem:[%s3636 + $0x80] sm:$0xff]
    %v3654 = vld [vmem:[%s3636 + $0x88] sm:$0xff]
    %v3655 = vld [vmem:[%s3636 + $0x90] sm:$0xff]
    %v3656 = vld [vmem:[%s3636 + $0x98] sm:$0xff]
    %v3657 = vld [vmem:[%s3636 + $0xa0] sm:$0xff]
    %v3658 = vld [vmem:[%s3636 + $0xa8] sm:$0xff]
    %v3659 = vld [vmem:[%s3636 + $0xb0] sm:$0xff]
    %v3660 = vld [vmem:[%s3636 + $0xb8] sm:$0xff]
    %v3661 = vld [vmem:[%s3636 + $0xc0] sm:$0xff]
    %v3662 = vld [vmem:[%s3636 + $0xc8] sm:$0xff]
    %v3663 = vld [vmem:[%s3636 + $0xd0] sm:$0xff]
    %v3664 = vld [vmem:[%s3636 + $0xd8] sm:$0xff]
    %v3665 = vld [vmem:[%s3636 + $0xe0] sm:$0xff]
    %v3666 = vld [vmem:[%s3636 + $0xe8] sm:$0xff]
    %v3667 = vld [vmem:[%s3636 + $0xf0] sm:$0xff]
    %v3668 = vld [vmem:[%s3636 + $0xf8] sm:$0xff]
    %v3669 = vld [vmem:[%s3636 + $0x100] sm:$0xff]
    %v3670 = vld [vmem:[%s3636 + $0x108] sm:$0xff]
    %v3671 = vld [vmem:[%s3636 + $0x110] sm:$0xff]
    %v3672 = vld [vmem:[%s3636 + $0x118] sm:$0xff]
    %v3673 = vld [vmem:[%s3636 + $0x120] sm:$0xff]
    %v3674 = vld [vmem:[%s3636 + $0x128] sm:$0xff]
    %v3675 = vld [vmem:[%s3636 + $0x130] sm:$0xff]
    %v3676 = vld [vmem:[%s3636 + $0x138] sm:$0xff]
    %v3677 = vld [vmem:[%s3636 + $0x140] sm:$0xff]
    %v3678 = vld [vmem:[%s3636 + $0x148] sm:$0xff]
    %v3679 = vld [vmem:[%s3636 + $0x150] sm:$0xff]
    %v3680 = vld [vmem:[%s3636 + $0x158] sm:$0xff]
    %v3681 = vld [vmem:[%s3636 + $0x160] sm:$0xff]
    %v3682 = vld [vmem:[%s3636 + $0x168] sm:$0xff]
    %v3683 = vld [vmem:[%s3636 + $0x170] sm:$0xff]
    %v3684 = vld [vmem:[%s3636 + $0x178] sm:$0xff]
    %v3685 = vld [vmem:[%s3636 + $0x180] sm:$0xff]
    %v3686 = vld [vmem:[%s3636 + $0x188] sm:$0xff]
    %v3687 = vld [vmem:[%s3636 + $0x190] sm:$0xff]
    %v3688 = vld [vmem:[%s3636 + $0x198] sm:$0xff]
    %v3689 = vld [vmem:[%s3636 + $0x1a0] sm:$0xff]
    %v3690 = vld [vmem:[%s3636 + $0x1a8] sm:$0xff]
    %v3691 = vld [vmem:[%s3636 + $0x1b0] sm:$0xff]
    %v3692 = vld [vmem:[%s3636 + $0x1b8] sm:$0xff]
    %v3693 = vld [vmem:[%s3636 + $0x1c0] sm:$0xff]
    %v3694 = vld [vmem:[%s3636 + $0x1c8] sm:$0xff]
    %v3695 = vld [vmem:[%s3636 + $0x1d0] sm:$0xff]
    %v3696 = vld [vmem:[%s3636 + $0x1d8] sm:$0xff]
    %v3697 = vld [vmem:[%s3636 + $0x1e0] sm:$0xff]
    %v3698 = vld [vmem:[%s3636 + $0x1e8] sm:$0xff]
    %v3699 = vld [vmem:[%s3636 + $0x1f0] sm:$0xff]
    %v3700 = vld [vmem:[%s3636 + $0x1f8] sm:$0xff]
    %v3701 = vld [vmem:[%s3636 + $0x200] sm:$0xff]
    %v3702 = vld [vmem:[%s3636 + $0x208] sm:$0xff]
    %v3703 = vld [vmem:[%s3636 + $0x210] sm:$0xff]
    %v3704 = vld [vmem:[%s3636 + $0x218] sm:$0xff]
    %v3705 = vld [vmem:[%s3636 + $0x220] sm:$0xff]
    %v3706 = vld [vmem:[%s3636 + $0x228] sm:$0xff]
    %v3707 = vld [vmem:[%s3636 + $0x230] sm:$0xff]
    %v3708 = vld [vmem:[%s3636 + $0x238] sm:$0xff]
    %v3709 = vld [vmem:[%s3636 + $0x240] sm:$0xff]
    %v3710 = vld [vmem:[%s3636 + $0x248] sm:$0xff]
    %v3711 = vld [vmem:[%s3636 + $0x250] sm:$0xff]
    %v3712 = vld [vmem:[%s3636 + $0x258] sm:$0xff]
    %v3713 = vld [vmem:[%s3636 + $0x260] sm:$0xff]
    %v3714 = vld [vmem:[%s3636 + $0x268] sm:$0xff]
    %v3715 = vld [vmem:[%s3636 + $0x270] sm:$0xff]
    %v3716 = vld [vmem:[%s3636 + $0x278] sm:$0xff]
    %v3717 = vld [vmem:[%s3636 + $0x280] sm:$0xff]
    %v3718 = vld [vmem:[%s3636 + $0x288] sm:$0xff]
    %v3719 = vld [vmem:[%s3636 + $0x290] sm:$0xff]
    %v3720 = vld [vmem:[%s3636 + $0x298] sm:$0xff]
    %v3721 = vld [vmem:[%s3636 + $0x2a0] sm:$0xff]
    %v3722 = vld [vmem:[%s3636 + $0x2a8] sm:$0xff]
    %v3723 = vld [vmem:[%s3636 + $0x2b0] sm:$0xff]
    %v3724 = vld [vmem:[%s3636 + $0x2b8] sm:$0xff]
    %v3725 = vld [vmem:[%s3636 + $0x2c0] sm:$0xff]
    %v3726 = vld [vmem:[%s3636 + $0x2c8] sm:$0xff]
    %v3727 = vld [vmem:[%s3636 + $0x2d0] sm:$0xff]
    %v3728 = vld [vmem:[%s3636 + $0x2d8] sm:$0xff]
    %v3729 = vld [vmem:[%s3636 + $0x2e0] sm:$0xff]
    %v3730 = vld [vmem:[%s3636 + $0x2e8] sm:$0xff]
    %v3731 = vld [vmem:[%s3636 + $0x2f0] sm:$0xff]
    %v3732 = vld [vmem:[%s3636 + $0x2f8] sm:$0xff]
    %v3733 = vld [vmem:[%s3636 + $0x300] sm:$0xff]
    %v3734 = vld [vmem:[%s3636 + $0x308] sm:$0xff]
    %v3735 = vld [vmem:[%s3636 + $0x310] sm:$0xff]
    %v3736 = vld [vmem:[%s3636 + $0x318] sm:$0xff]
    %v3737 = vld [vmem:[%s3636 + $0x320] sm:$0xff]
    %v3738 = vld [vmem:[%s3636 + $0x328] sm:$0xff]
    %v3739 = vld [vmem:[%s3636 + $0x330] sm:$0xff]
    %v3740 = vld [vmem:[%s3636 + $0x338] sm:$0xff]
    %v3741 = vld [vmem:[%s3636 + $0x340] sm:$0xff]
    %v3742 = vld [vmem:[%s3636 + $0x348] sm:$0xff]
    %v3743 = vld [vmem:[%s3636 + $0x350] sm:$0xff]
    %v3744 = vld [vmem:[%s3636 + $0x358] sm:$0xff]
    %v3745 = vld [vmem:[%s3636 + $0x360] sm:$0xff]
    %v3746 = vld [vmem:[%s3636 + $0x368] sm:$0xff]
    %v3747 = vld [vmem:[%s3636 + $0x370] sm:$0xff]
    %v3748 = vld [vmem:[%s3636 + $0x378] sm:$0xff]
    %v3749 = vld [vmem:[%s3636 + $0x380] sm:$0xff]
    %v3750 = vld [vmem:[%s3636 + $0x388] sm:$0xff]
    %v3751 = vld [vmem:[%s3636 + $0x390] sm:$0xff]
    %v3752 = vld [vmem:[%s3636 + $0x398] sm:$0xff]
    %v3753 = vld [vmem:[%s3636 + $0x3a0] sm:$0xff]
    %v3754 = vld [vmem:[%s3636 + $0x3a8] sm:$0xff]
    %v3755 = vld [vmem:[%s3636 + $0x3b0] sm:$0xff]
    %v3756 = vld [vmem:[%s3636 + $0x3b8] sm:$0xff]
    %v3757 = vld [vmem:[%s3636 + $0x3c0] sm:$0xff]
    %v3758 = vld [vmem:[%s3636 + $0x3c8] sm:$0xff]
    %v3759 = vld [vmem:[%s3636 + $0x3d0] sm:$0xff]
    %v3760 = vld [vmem:[%s3636 + $0x3d8] sm:$0xff]
    %v3761 = vld [vmem:[%s3636 + $0x3e0] sm:$0xff]
    %v3762 = vld [vmem:[%s3636 + $0x3e8] sm:$0xff]
    %v3763 = vld [vmem:[%s3636 + $0x3f0] sm:$0xff]
    %v3764 = vld [vmem:[%s3636 + $0x3f8] sm:$0xff]
    %v3893 = vunpack.c.l.b16 %v3637
    %v3894 = vunpack.c.h.b16 %v3637
    %v3895 = vunpack.c.l.b16 %v3638
    %v3896 = vunpack.c.h.b16 %v3638
    %v3897 = vunpack.c.l.b16 %v3639
    %v3898 = vunpack.c.h.b16 %v3639
    %v3899 = vunpack.c.l.b16 %v3640
    %v3900 = vunpack.c.h.b16 %v3640
    %v3901 = vunpack.c.l.b16 %v3641
    %v3902 = vunpack.c.h.b16 %v3641
    %v3903 = vunpack.c.l.b16 %v3642
    %v3904 = vunpack.c.h.b16 %v3642
    %v3905 = vunpack.c.l.b16 %v3643
    %v3906 = vunpack.c.h.b16 %v3643
    %v3907 = vunpack.c.l.b16 %v3644
    %v3908 = vunpack.c.h.b16 %v3644
    %v3909 = vunpack.c.l.b16 %v3645
    %v3910 = vunpack.c.h.b16 %v3645
    %v3911 = vunpack.c.l.b16 %v3646
    %v3912 = vunpack.c.h.b16 %v3646
    %v3913 = vunpack.c.l.b16 %v3647
    %v3914 = vunpack.c.h.b16 %v3647
    %v3915 = vunpack.c.l.b16 %v3648
    %v3916 = vunpack.c.h.b16 %v3648
    %v3917 = vunpack.c.l.b16 %v3649
    %v3918 = vunpack.c.h.b16 %v3649
    %v3919 = vunpack.c.l.b16 %v3650
    %v3920 = vunpack.c.h.b16 %v3650
    %v3921 = vunpack.c.l.b16 %v3651
    %v3922 = vunpack.c.h.b16 %v3651
    %v3923 = vunpack.c.l.b16 %v3652
    %v3924 = vunpack.c.h.b16 %v3652
    %v3925 = vunpack.c.l.b16 %v3653
    %v3926 = vunpack.c.h.b16 %v3653
    %v3927 = vunpack.c.l.b16 %v3654
    %v3928 = vunpack.c.h.b16 %v3654
    %v3929 = vunpack.c.l.b16 %v3655
    %v3930 = vunpack.c.h.b16 %v3655
    %v3931 = vunpack.c.l.b16 %v3656
    %v3932 = vunpack.c.h.b16 %v3656
    %v3933 = vunpack.c.l.b16 %v3657
    %v3934 = vunpack.c.h.b16 %v3657
    %v3935 = vunpack.c.l.b16 %v3658
    %v3936 = vunpack.c.h.b16 %v3658
    %v3937 = vunpack.c.l.b16 %v3659
    %v3938 = vunpack.c.h.b16 %v3659
    %v3939 = vunpack.c.l.b16 %v3660
    %v3940 = vunpack.c.h.b16 %v3660
    %v3941 = vunpack.c.l.b16 %v3661
    %v3942 = vunpack.c.h.b16 %v3661
    %v3943 = vunpack.c.l.b16 %v3662
    %v3944 = vunpack.c.h.b16 %v3662
    %v3945 = vunpack.c.l.b16 %v3663
    %v3946 = vunpack.c.h.b16 %v3663
    %v3947 = vunpack.c.l.b16 %v3664
    %v3948 = vunpack.c.h.b16 %v3664
    %v3949 = vunpack.c.l.b16 %v3665
    %v3950 = vunpack.c.h.b16 %v3665
    %v3951 = vunpack.c.l.b16 %v3666
    %v3952 = vunpack.c.h.b16 %v3666
    %v3953 = vunpack.c.l.b16 %v3667
    %v3954 = vunpack.c.h.b16 %v3667
    %v3955 = vunpack.c.l.b16 %v3668
    %v3956 = vunpack.c.h.b16 %v3668
    %v3957 = vunpack.c.l.b16 %v3669
    %v3958 = vunpack.c.h.b16 %v3669
    %v3959 = vunpack.c.l.b16 %v3670
    %v3960 = vunpack.c.h.b16 %v3670
    %v3961 = vunpack.c.l.b16 %v3671
    %v3962 = vunpack.c.h.b16 %v3671
    %v3963 = vunpack.c.l.b16 %v3672
    %v3964 = vunpack.c.h.b16 %v3672
    %v3965 = vunpack.c.l.b16 %v3673
    %v3966 = vunpack.c.h.b16 %v3673
    %v3967 = vunpack.c.l.b16 %v3674
    %v3968 = vunpack.c.h.b16 %v3674
    %v3969 = vunpack.c.l.b16 %v3675
    %v3970 = vunpack.c.h.b16 %v3675
    %v3971 = vunpack.c.l.b16 %v3676
    %v3972 = vunpack.c.h.b16 %v3676
    %v3973 = vunpack.c.l.b16 %v3677
    %v3974 = vunpack.c.h.b16 %v3677
    %v3975 = vunpack.c.l.b16 %v3678
    %v3976 = vunpack.c.h.b16 %v3678
    %v3977 = vunpack.c.l.b16 %v3679
    %v3978 = vunpack.c.h.b16 %v3679
    %v3979 = vunpack.c.l.b16 %v3680
    %v3980 = vunpack.c.h.b16 %v3680
    %v3981 = vunpack.c.l.b16 %v3681
    %v3982 = vunpack.c.h.b16 %v3681
    %v3983 = vunpack.c.l.b16 %v3682
    %v3984 = vunpack.c.h.b16 %v3682
    %v3985 = vunpack.c.l.b16 %v3683
    %v3986 = vunpack.c.h.b16 %v3683
    %v3987 = vunpack.c.l.b16 %v3684
    %v3988 = vunpack.c.h.b16 %v3684
    %v3989 = vunpack.c.l.b16 %v3685
    %v3990 = vunpack.c.h.b16 %v3685
    %v3991 = vunpack.c.l.b16 %v3686
    %v3992 = vunpack.c.h.b16 %v3686
    %v3993 = vunpack.c.l.b16 %v3687
    %v3994 = vunpack.c.h.b16 %v3687
    %v3995 = vunpack.c.l.b16 %v3688
    %v3996 = vunpack.c.h.b16 %v3688
    %v3997 = vunpack.c.l.b16 %v3689
    %v3998 = vunpack.c.h.b16 %v3689
    %v3999 = vunpack.c.l.b16 %v3690
    %v4000 = vunpack.c.h.b16 %v3690
    %v4001 = vunpack.c.l.b16 %v3691
    %v4002 = vunpack.c.h.b16 %v3691
    %v4003 = vunpack.c.l.b16 %v3692
    %v4004 = vunpack.c.h.b16 %v3692
    %v4005 = vunpack.c.l.b16 %v3693
    %v4006 = vunpack.c.h.b16 %v3693
    %v4007 = vunpack.c.l.b16 %v3694
    %v4008 = vunpack.c.h.b16 %v3694
    %v4009 = vunpack.c.l.b16 %v3695
    %v4010 = vunpack.c.h.b16 %v3695
    %v4011 = vunpack.c.l.b16 %v3696
    %v4012 = vunpack.c.h.b16 %v3696
    %v4013 = vunpack.c.l.b16 %v3697
    %v4014 = vunpack.c.h.b16 %v3697
    %v4015 = vunpack.c.l.b16 %v3698
    %v4016 = vunpack.c.h.b16 %v3698
    %v4017 = vunpack.c.l.b16 %v3699
    %v4018 = vunpack.c.h.b16 %v3699
    %v4019 = vunpack.c.l.b16 %v3700
    %v4020 = vunpack.c.h.b16 %v3700
    %v4021 = vunpack.c.l.b16 %v3701
    %v4022 = vunpack.c.h.b16 %v3701
    %v4023 = vunpack.c.l.b16 %v3702
    %v4024 = vunpack.c.h.b16 %v3702
    %v4025 = vunpack.c.l.b16 %v3703
    %v4026 = vunpack.c.h.b16 %v3703
    %v4027 = vunpack.c.l.b16 %v3704
    %v4028 = vunpack.c.h.b16 %v3704
    %v4029 = vunpack.c.l.b16 %v3705
    %v4030 = vunpack.c.h.b16 %v3705
    %v4031 = vunpack.c.l.b16 %v3706
    %v4032 = vunpack.c.h.b16 %v3706
    %v4033 = vunpack.c.l.b16 %v3707
    %v4034 = vunpack.c.h.b16 %v3707
    %v4035 = vunpack.c.l.b16 %v3708
    %v4036 = vunpack.c.h.b16 %v3708
    %v4037 = vunpack.c.l.b16 %v3709
    %v4038 = vunpack.c.h.b16 %v3709
    %v4039 = vunpack.c.l.b16 %v3710
    %v4040 = vunpack.c.h.b16 %v3710
    %v4041 = vunpack.c.l.b16 %v3711
    %v4042 = vunpack.c.h.b16 %v3711
    %v4043 = vunpack.c.l.b16 %v3712
    %v4044 = vunpack.c.h.b16 %v3712
    %v4045 = vunpack.c.l.b16 %v3713
    %v4046 = vunpack.c.h.b16 %v3713
    %v4047 = vunpack.c.l.b16 %v3714
    %v4048 = vunpack.c.h.b16 %v3714
    %v4049 = vunpack.c.l.b16 %v3715
    %v4050 = vunpack.c.h.b16 %v3715
    %v4051 = vunpack.c.l.b16 %v3716
    %v4052 = vunpack.c.h.b16 %v3716
    %v4053 = vunpack.c.l.b16 %v3717
    %v4054 = vunpack.c.h.b16 %v3717
    %v4055 = vunpack.c.l.b16 %v3718
    %v4056 = vunpack.c.h.b16 %v3718
    %v4057 = vunpack.c.l.b16 %v3719
    %v4058 = vunpack.c.h.b16 %v3719
    %v4059 = vunpack.c.l.b16 %v3720
    %v4060 = vunpack.c.h.b16 %v3720
    %v4061 = vunpack.c.l.b16 %v3721
    %v4062 = vunpack.c.h.b16 %v3721
    %v4063 = vunpack.c.l.b16 %v3722
    %v4064 = vunpack.c.h.b16 %v3722
    %v4065 = vunpack.c.l.b16 %v3723
    %v4066 = vunpack.c.h.b16 %v3723
    %v4067 = vunpack.c.l.b16 %v3724
    %v4068 = vunpack.c.h.b16 %v3724
    %v4069 = vunpack.c.l.b16 %v3725
    %v4070 = vunpack.c.h.b16 %v3725
    %v4071 = vunpack.c.l.b16 %v3726
    %v4072 = vunpack.c.h.b16 %v3726
    %v4073 = vunpack.c.l.b16 %v3727
    %v4074 = vunpack.c.h.b16 %v3727
    %v4075 = vunpack.c.l.b16 %v3728
    %v4076 = vunpack.c.h.b16 %v3728
    %v4077 = vunpack.c.l.b16 %v3729
    %v4078 = vunpack.c.h.b16 %v3729
    %v4079 = vunpack.c.l.b16 %v3730
    %v4080 = vunpack.c.h.b16 %v3730
    %v4081 = vunpack.c.l.b16 %v3731
    %v4082 = vunpack.c.h.b16 %v3731
    %v4083 = vunpack.c.l.b16 %v3732
    %v4084 = vunpack.c.h.b16 %v3732
    %v4085 = vunpack.c.l.b16 %v3733
    %v4086 = vunpack.c.h.b16 %v3733
    %v4087 = vunpack.c.l.b16 %v3734
    %v4088 = vunpack.c.h.b16 %v3734
    %v4089 = vunpack.c.l.b16 %v3735
    %v4090 = vunpack.c.h.b16 %v3735
    %v4091 = vunpack.c.l.b16 %v3736
    %v4092 = vunpack.c.h.b16 %v3736
    %v4093 = vunpack.c.l.b16 %v3737
    %v4094 = vunpack.c.h.b16 %v3737
    %v4095 = vunpack.c.l.b16 %v3738
    %v4096 = vunpack.c.h.b16 %v3738
    %v4097 = vunpack.c.l.b16 %v3739
    %v4098 = vunpack.c.h.b16 %v3739
    %v4099 = vunpack.c.l.b16 %v3740
    %v4100 = vunpack.c.h.b16 %v3740
    %v4101 = vunpack.c.l.b16 %v3741
    %v4102 = vunpack.c.h.b16 %v3741
    %v4103 = vunpack.c.l.b16 %v3742
    %v4104 = vunpack.c.h.b16 %v3742
    %v4105 = vunpack.c.l.b16 %v3743
    %v4106 = vunpack.c.h.b16 %v3743
    %v4107 = vunpack.c.l.b16 %v3744
    %v4108 = vunpack.c.h.b16 %v3744
    %v4109 = vunpack.c.l.b16 %v3745
    %v4110 = vunpack.c.h.b16 %v3745
    %v4111 = vunpack.c.l.b16 %v3746
    %v4112 = vunpack.c.h.b16 %v3746
    %v4113 = vunpack.c.l.b16 %v3747
    %v4114 = vunpack.c.h.b16 %v3747
    %v4115 = vunpack.c.l.b16 %v3748
    %v4116 = vunpack.c.h.b16 %v3748
    %v4117 = vunpack.c.l.b16 %v3749
    %v4118 = vunpack.c.h.b16 %v3749
    %v4119 = vunpack.c.l.b16 %v3750
    %v4120 = vunpack.c.h.b16 %v3750
    %v4121 = vunpack.c.l.b16 %v3751
    %v4122 = vunpack.c.h.b16 %v3751
    %v4123 = vunpack.c.l.b16 %v3752
    %v4124 = vunpack.c.h.b16 %v3752
    %v4125 = vunpack.c.l.b16 %v3753
    %v4126 = vunpack.c.h.b16 %v3753
    %v4127 = vunpack.c.l.b16 %v3754
    %v4128 = vunpack.c.h.b16 %v3754
    %v4129 = vunpack.c.l.b16 %v3755
    %v4130 = vunpack.c.h.b16 %v3755
    %v4131 = vunpack.c.l.b16 %v3756
    %v4132 = vunpack.c.h.b16 %v3756
    %v4133 = vunpack.c.l.b16 %v3757
    %v4134 = vunpack.c.h.b16 %v3757
    %v4135 = vunpack.c.l.b16 %v3758
    %v4136 = vunpack.c.h.b16 %v3758
    %v4137 = vunpack.c.l.b16 %v3759
    %v4138 = vunpack.c.h.b16 %v3759
    %v4139 = vunpack.c.l.b16 %v3760
    %v4140 = vunpack.c.h.b16 %v3760
    %v4141 = vunpack.c.l.b16 %v3761
    %v4142 = vunpack.c.h.b16 %v3761
    %v4143 = vunpack.c.l.b16 %v3762
    %v4144 = vunpack.c.h.b16 %v3762
    %v4145 = vunpack.c.l.b16 %v3763
    %v4146 = vunpack.c.h.b16 %v3763
    %v4147 = vunpack.c.l.b16 %v3764
    %v4148 = vunpack.c.h.b16 %v3764
    %v4149 = vpack.c.b16 %v3897, %v3893
    %v4150 = vpack.c.b16 %v3898, %v3894
    %v4151 = vpack.c.b16 %v3899, %v3895
    %v4152 = vpack.c.b16 %v3900, %v3896
    %v4153 = vpack.c.b16 %v3905, %v3901
    %v4154 = vpack.c.b16 %v3906, %v3902
    %v4155 = vpack.c.b16 %v3907, %v3903
    %v4156 = vpack.c.b16 %v3908, %v3904
    %v4157 = vpack.c.b16 %v3913, %v3909
    %v4158 = vpack.c.b16 %v3914, %v3910
    %v4159 = vpack.c.b16 %v3915, %v3911
    %v4160 = vpack.c.b16 %v3916, %v3912
    %v4161 = vpack.c.b16 %v3921, %v3917
    %v4162 = vpack.c.b16 %v3922, %v3918
    %v4163 = vpack.c.b16 %v3923, %v3919
    %v4164 = vpack.c.b16 %v3924, %v3920
    %v4165 = vpack.c.b16 %v3929, %v3925
    %v4166 = vpack.c.b16 %v3930, %v3926
    %v4167 = vpack.c.b16 %v3931, %v3927
    %v4168 = vpack.c.b16 %v3932, %v3928
    %v4169 = vpack.c.b16 %v3937, %v3933
    %v4170 = vpack.c.b16 %v3938, %v3934
    %v4171 = vpack.c.b16 %v3939, %v3935
    %v4172 = vpack.c.b16 %v3940, %v3936
    %v4173 = vpack.c.b16 %v3945, %v3941
    %v4174 = vpack.c.b16 %v3946, %v3942
    %v4175 = vpack.c.b16 %v3947, %v3943
    %v4176 = vpack.c.b16 %v3948, %v3944
    %v4177 = vpack.c.b16 %v3953, %v3949
    %v4178 = vpack.c.b16 %v3954, %v3950
    %v4179 = vpack.c.b16 %v3955, %v3951
    %v4180 = vpack.c.b16 %v3956, %v3952
    %v4181 = vpack.c.b16 %v3961, %v3957
    %v4182 = vpack.c.b16 %v3962, %v3958
    %v4183 = vpack.c.b16 %v3963, %v3959
    %v4184 = vpack.c.b16 %v3964, %v3960
    %v4185 = vpack.c.b16 %v3969, %v3965
    %v4186 = vpack.c.b16 %v3970, %v3966
    %v4187 = vpack.c.b16 %v3971, %v3967
    %v4188 = vpack.c.b16 %v3972, %v3968
    %v4189 = vpack.c.b16 %v3977, %v3973
    %v4190 = vpack.c.b16 %v3978, %v3974
    %v4191 = vpack.c.b16 %v3979, %v3975
    %v4192 = vpack.c.b16 %v3980, %v3976
    %v4193 = vpack.c.b16 %v3985, %v3981
    %v4194 = vpack.c.b16 %v3986, %v3982
    %v4195 = vpack.c.b16 %v3987, %v3983
    %v4196 = vpack.c.b16 %v3988, %v3984
    %v4197 = vpack.c.b16 %v3993, %v3989
    %v4198 = vpack.c.b16 %v3994, %v3990
    %v4199 = vpack.c.b16 %v3995, %v3991
    %v4200 = vpack.c.b16 %v3996, %v3992
    %v4201 = vpack.c.b16 %v4001, %v3997
    %v4202 = vpack.c.b16 %v4002, %v3998
    %v4203 = vpack.c.b16 %v4003, %v3999
    %v4204 = vpack.c.b16 %v4004, %v4000
    %v4205 = vpack.c.b16 %v4009, %v4005
    %v4206 = vpack.c.b16 %v4010, %v4006
    %v4207 = vpack.c.b16 %v4011, %v4007
    %v4208 = vpack.c.b16 %v4012, %v4008
    %v4209 = vpack.c.b16 %v4017, %v4013
    %v4210 = vpack.c.b16 %v4018, %v4014
    %v4211 = vpack.c.b16 %v4019, %v4015
    %v4212 = vpack.c.b16 %v4020, %v4016
    %v4213 = vpack.c.b16 %v4025, %v4021
    %v4214 = vpack.c.b16 %v4026, %v4022
    %v4215 = vpack.c.b16 %v4027, %v4023
    %v4216 = vpack.c.b16 %v4028, %v4024
    %v4217 = vpack.c.b16 %v4033, %v4029
    %v4218 = vpack.c.b16 %v4034, %v4030
    %v4219 = vpack.c.b16 %v4035, %v4031
    %v4220 = vpack.c.b16 %v4036, %v4032
    %v4221 = vpack.c.b16 %v4041, %v4037
    %v4222 = vpack.c.b16 %v4042, %v4038
    %v4223 = vpack.c.b16 %v4043, %v4039
    %v4224 = vpack.c.b16 %v4044, %v4040
    %v4225 = vpack.c.b16 %v4049, %v4045
    %v4226 = vpack.c.b16 %v4050, %v4046
    %v4227 = vpack.c.b16 %v4051, %v4047
    %v4228 = vpack.c.b16 %v4052, %v4048
    %v4229 = vpack.c.b16 %v4057, %v4053
    %v4230 = vpack.c.b16 %v4058, %v4054
    %v4231 = vpack.c.b16 %v4059, %v4055
    %v4232 = vpack.c.b16 %v4060, %v4056
    %v4233 = vpack.c.b16 %v4065, %v4061
    %v4234 = vpack.c.b16 %v4066, %v4062
    %v4235 = vpack.c.b16 %v4067, %v4063
    %v4236 = vpack.c.b16 %v4068, %v4064
    %v4237 = vpack.c.b16 %v4073, %v4069
    %v4238 = vpack.c.b16 %v4074, %v4070
    %v4239 = vpack.c.b16 %v4075, %v4071
    %v4240 = vpack.c.b16 %v4076, %v4072
    %v4241 = vpack.c.b16 %v4081, %v4077
    %v4242 = vpack.c.b16 %v4082, %v4078
    %v4243 = vpack.c.b16 %v4083, %v4079
    %v4244 = vpack.c.b16 %v4084, %v4080
    %v4245 = vpack.c.b16 %v4089, %v4085
    %v4246 = vpack.c.b16 %v4090, %v4086
    %v4247 = vpack.c.b16 %v4091, %v4087
    %v4248 = vpack.c.b16 %v4092, %v4088
    %v4249 = vpack.c.b16 %v4097, %v4093
    %v4250 = vpack.c.b16 %v4098, %v4094
    %v4251 = vpack.c.b16 %v4099, %v4095
    %v4252 = vpack.c.b16 %v4100, %v4096
    %v4253 = vpack.c.b16 %v4105, %v4101
    %v4254 = vpack.c.b16 %v4106, %v4102
    %v4255 = vpack.c.b16 %v4107, %v4103
    %v4256 = vpack.c.b16 %v4108, %v4104
    %v4257 = vpack.c.b16 %v4113, %v4109
    %v4258 = vpack.c.b16 %v4114, %v4110
    %v4259 = vpack.c.b16 %v4115, %v4111
    %v4260 = vpack.c.b16 %v4116, %v4112
    %v4261 = vpack.c.b16 %v4121, %v4117
    %v4262 = vpack.c.b16 %v4122, %v4118
    %v4263 = vpack.c.b16 %v4123, %v4119
    %v4264 = vpack.c.b16 %v4124, %v4120
    %v4265 = vpack.c.b16 %v4129, %v4125
    %v4266 = vpack.c.b16 %v4130, %v4126
    %v4267 = vpack.c.b16 %v4131, %v4127
    %v4268 = vpack.c.b16 %v4132, %v4128
    %v4269 = vpack.c.b16 %v4137, %v4133
    %v4270 = vpack.c.b16 %v4138, %v4134
    %v4271 = vpack.c.b16 %v4139, %v4135
    %v4272 = vpack.c.b16 %v4140, %v4136
    %v4273 = vpack.c.b16 %v4145, %v4141
    %v4274 = vpack.c.b16 %v4146, %v4142
    %v4275 = vpack.c.b16 %v4147, %v4143
    %v4276 = vpack.c.b16 %v4148, %v4144
    %4405 = vmatprep.subr.bf16.mxu0 %v4150
    %4406 = vmatpush1.bf16.msra.mxu0 %v4149
    %4407 = vmatprep.subr.bf16.mxu0 %v4154
    %4408 = vmatpush1.bf16.msra.mxu0 %v4153
    %4409 = vmatprep.subr.bf16.mxu0 %v4158
    %4410 = vmatpush1.bf16.msra.mxu0 %v4157
    %4411 = vmatprep.subr.bf16.mxu0 %v4162
    %4412 = vmatpush1.bf16.msra.mxu0 %v4161
    %4413 = vmatprep.subr.bf16.mxu0 %v4166
    %4414 = vmatpush1.bf16.msra.mxu0 %v4165
    %4415 = vmatprep.subr.bf16.mxu0 %v4170
    %4416 = vmatpush1.bf16.msra.mxu0 %v4169
    %4417 = vmatprep.subr.bf16.mxu0 %v4174
    %4418 = vmatpush1.bf16.msra.mxu0 %v4173
    %4419 = vmatprep.subr.bf16.mxu0 %v4178
    %4420 = vmatpush1.bf16.msra.mxu0 %v4177
    %4421 = vmatprep.subr.bf16.mxu0 %v4182
    %4422 = vmatpush1.bf16.msra.mxu0 %v4181
    %4423 = vmatprep.subr.bf16.mxu0 %v4186
    %4424 = vmatpush1.bf16.msra.mxu0 %v4185
    %4425 = vmatprep.subr.bf16.mxu0 %v4190
    %4426 = vmatpush1.bf16.msra.mxu0 %v4189
    %4427 = vmatprep.subr.bf16.mxu0 %v4194
    %4428 = vmatpush1.bf16.msra.mxu0 %v4193
    %4429 = vmatprep.subr.bf16.mxu0 %v4198
    %4430 = vmatpush1.bf16.msra.mxu0 %v4197
    %4431 = vmatprep.subr.bf16.mxu0 %v4202
    %4432 = vmatpush1.bf16.msra.mxu0 %v4201
    %4433 = vmatprep.subr.bf16.mxu0 %v4206
    %4434 = vmatpush1.bf16.msra.mxu0 %v4205
    %4435 = vmatprep.subr.bf16.mxu0 %v4210
    %4436 = vmatpush1.bf16.msra.mxu0 %v4209
    %4437 = vmatprep.mubr.bf16.mxu0 %v3633
    %4438 = vmatmul.mubr.bf16.gmra.mrb[0].mxu0 %v3632
    %v4439 = vpop.f32.mrb[0].mxu0
    %v4440 = vadd.f32 0.0, %v4439
    %v4441 = vpop.f32.mrb[0].mxu0
    %v4442 = vadd.f32 0.0, %v4441
    %v4443 = vpop.f32.mrb[0].mxu0
    %v4444 = vadd.f32 0.0, %v4443
    %v4445 = vpop.f32.mrb[0].mxu0
    %v4446 = vadd.f32 0.0, %v4445
    %4447 = vdwg.mxu0
    %4448 = vmatprep.subr.bf16.mxu0 %v4214
    %4449 = vmatpush1.bf16.msra.mxu0 %v4213
    %4450 = vmatprep.subr.bf16.mxu0 %v4218
    %4451 = vmatpush1.bf16.msra.mxu0 %v4217
    %4452 = vmatprep.subr.bf16.mxu0 %v4222
    %4453 = vmatpush1.bf16.msra.mxu0 %v4221
    %4454 = vmatprep.subr.bf16.mxu0 %v4226
    %4455 = vmatpush1.bf16.msra.mxu0 %v4225
    %4456 = vmatprep.subr.bf16.mxu0 %v4230
    %4457 = vmatpush1.bf16.msra.mxu0 %v4229
    %4458 = vmatprep.subr.bf16.mxu0 %v4234
    %4459 = vmatpush1.bf16.msra.mxu0 %v4233
    %4460 = vmatprep.subr.bf16.mxu0 %v4238
    %4461 = vmatpush1.bf16.msra.mxu0 %v4237
    %4462 = vmatprep.subr.bf16.mxu0 %v4242
    %4463 = vmatpush1.bf16.msra.mxu0 %v4241
    %4464 = vmatprep.subr.bf16.mxu0 %v4246
    %4465 = vmatpush1.bf16.msra.mxu0 %v4245
    %4466 = vmatprep.subr.bf16.mxu0 %v4250
    %4467 = vmatpush1.bf16.msra.mxu0 %v4249
    %4468 = vmatprep.subr.bf16.mxu0 %v4254
    %4469 = vmatpush1.bf16.msra.mxu0 %v4253
    %4470 = vmatprep.subr.bf16.mxu0 %v4258
    %4471 = vmatpush1.bf16.msra.mxu0 %v4257
    %4472 = vmatprep.subr.bf16.mxu0 %v4262
    %4473 = vmatpush1.bf16.msra.mxu0 %v4261
    %4474 = vmatprep.subr.bf16.mxu0 %v4266
    %4475 = vmatpush1.bf16.msra.mxu0 %v4265
    %4476 = vmatprep.subr.bf16.mxu0 %v4270
    %4477 = vmatpush1.bf16.msra.mxu0 %v4269
    %4478 = vmatprep.subr.bf16.mxu0 %v4274
    %4479 = vmatpush1.bf16.msra.mxu0 %v4273
    %4480 = vmatprep.mubr.bf16.mxu0 %v3635
    %4481 = vmatmul.mubr.bf16.gmra.mrb[0].mxu0 %v3634
    %v4482 = vpop.f32.mrb[0].mxu0
    %v4483 = vadd.f32 %v4440, %v4482
    %v4484 = vpop.f32.mrb[0].mxu0
    %v4485 = vadd.f32 %v4442, %v4484
    %v4486 = vpop.f32.mrb[0].mxu0
    %v4487 = vadd.f32 %v4444, %v4486
    %v4488 = vpop.f32.mrb[0].mxu0
    %v4489 = vadd.f32 %v4446, %v4488
    %4490 = vdwg.mxu0
    %4491 = vmatprep.subr.bf16.mxu0 %v4152
    %4492 = vmatpush1.bf16.msra.mxu0 %v4151
    %4493 = vmatprep.subr.bf16.mxu0 %v4156
    %4494 = vmatpush1.bf16.msra.mxu0 %v4155
    %4495 = vmatprep.subr.bf16.mxu0 %v4160
    %4496 = vmatpush1.bf16.msra.mxu0 %v4159
    %4497 = vmatprep.subr.bf16.mxu0 %v4164
    %4498 = vmatpush1.bf16.msra.mxu0 %v4163
    %4499 = vmatprep.subr.bf16.mxu0 %v4168
    %4500 = vmatpush1.bf16.msra.mxu0 %v4167
    %4501 = vmatprep.subr.bf16.mxu0 %v4172
    %4502 = vmatpush1.bf16.msra.mxu0 %v4171
    %4503 = vmatprep.subr.bf16.mxu0 %v4176
    %4504 = vmatpush1.bf16.msra.mxu0 %v4175
    %4505 = vmatprep.subr.bf16.mxu0 %v4180
    %4506 = vmatpush1.bf16.msra.mxu0 %v4179
    %4507 = vmatprep.subr.bf16.mxu0 %v4184
    %4508 = vmatpush1.bf16.msra.mxu0 %v4183
    %4509 = vmatprep.subr.bf16.mxu0 %v4188
    %4510 = vmatpush1.bf16.msra.mxu0 %v4187
    %4511 = vmatprep.subr.bf16.mxu0 %v4192
    %4512 = vmatpush1.bf16.msra.mxu0 %v4191
    %4513 = vmatprep.subr.bf16.mxu0 %v4196
    %4514 = vmatpush1.bf16.msra.mxu0 %v4195
    %4515 = vmatprep.subr.bf16.mxu0 %v4200
    %4516 = vmatpush1.bf16.msra.mxu0 %v4199
    %4517 = vmatprep.subr.bf16.mxu0 %v4204
    %4518 = vmatpush1.bf16.msra.mxu0 %v4203
    %4519 = vmatprep.subr.bf16.mxu0 %v4208
    %4520 = vmatpush1.bf16.msra.mxu0 %v4207
    %4521 = vmatprep.subr.bf16.mxu0 %v4212
    %4522 = vmatpush1.bf16.msra.mxu0 %v4211
    %4523 = vmatprep.mubr.bf16.mxu0 %v3633
    %4524 = vmatmul.mubr.bf16.gmra.mrb[0].mxu0 %v3632
    %v4525 = vpop.f32.mrb[0].mxu0
    %v4526 = vadd.f32 0.0, %v4525
    %v4527 = vpop.f32.mrb[0].mxu0
    %v4528 = vadd.f32 0.0, %v4527
    %v4529 = vpop.f32.mrb[0].mxu0
    %v4530 = vadd.f32 0.0, %v4529
    %v4531 = vpop.f32.mrb[0].mxu0
    %v4532 = vadd.f32 0.0, %v4531
    %4533 = vdwg.mxu0
    %4534 = vmatprep.subr.bf16.mxu0 %v4216
    %4535 = vmatpush1.bf16.msra.mxu0 %v4215
    %4536 = vmatprep.subr.bf16.mxu0 %v4220
    %4537 = vmatpush1.bf16.msra.mxu0 %v4219
    %4538 = vmatprep.subr.bf16.mxu0 %v4224
    %4539 = vmatpush1.bf16.msra.mxu0 %v4223
    %4540 = vmatprep.subr.bf16.mxu0 %v4228
    %4541 = vmatpush1.bf16.msra.mxu0 %v4227
    %4542 = vmatprep.subr.bf16.mxu0 %v4232
    %4543 = vmatpush1.bf16.msra.mxu0 %v4231
    %4544 = vmatprep.subr.bf16.mxu0 %v4236
    %4545 = vmatpush1.bf16.msra.mxu0 %v4235
    %4546 = vmatprep.subr.bf16.mxu0 %v4240
    %4547 = vmatpush1.bf16.msra.mxu0 %v4239
    %4548 = vmatprep.subr.bf16.mxu0 %v4244
    %4549 = vmatpush1.bf16.msra.mxu0 %v4243
    %4550 = vmatprep.subr.bf16.mxu0 %v4248
    %4551 = vmatpush1.bf16.msra.mxu0 %v4247
    %4552 = vmatprep.subr.bf16.mxu0 %v4252
    %4553 = vmatpush1.bf16.msra.mxu0 %v4251
    %4554 = vmatprep.subr.bf16.mxu0 %v4256
    %4555 = vmatpush1.bf16.msra.mxu0 %v4255
    %4556 = vmatprep.subr.bf16.mxu0 %v4260
    %4557 = vmatpush1.bf16.msra.mxu0 %v4259
    %4558 = vmatprep.subr.bf16.mxu0 %v4264
    %4559 = vmatpush1.bf16.msra.mxu0 %v4263
    %4560 = vmatprep.subr.bf16.mxu0 %v4268
    %4561 = vmatpush1.bf16.msra.mxu0 %v4267
    %4562 = vmatprep.subr.bf16.mxu0 %v4272
    %4563 = vmatpush1.bf16.msra.mxu0 %v4271
    %4564 = vmatprep.subr.bf16.mxu0 %v4276
    %4565 = vmatpush1.bf16.msra.mxu0 %v4275
    %4566 = vmatprep.mubr.bf16.mxu0 %v3635
    %4567 = vmatmul.mubr.bf16.gmra.mrb[0].mxu0 %v3634
    %v4568 = vpop.f32.mrb[0].mxu0
    %v4569 = vadd.f32 %v4526, %v4568
    %v4570 = vpop.f32.mrb[0].mxu0
    %v4571 = vadd.f32 %v4528, %v4570
    %v4572 = vpop.f32.mrb[0].mxu0
    %v4573 = vadd.f32 %v4530, %v4572
    %v4574 = vpop.f32.mrb[0].mxu0
    %v4575 = vadd.f32 %v4532, %v4574
    %4576 = vdwg.mxu0
    %v4577 = vadd.f32 %v3441, %v4483
    %v4578 = vadd.f32 %v3443, %v4485
    %v4579 = vadd.f32 %v3527, %v4569
    %v4580 = vadd.f32 %v3529, %v4571
    %v4581 = vadd.f32 %v3445, %v4487
    %v4582 = vadd.f32 %v3447, %v4489
    %v4583 = vadd.f32 %v3531, %v4573
    %v4584 = vadd.f32 %v3533, %v4575
    %s4585 = scalar_lea.vmem [#allocation8], 24
    %v4586 = vld [vmem:[%s4585] sm:$0xf]
    %v4587 = vld [vmem:[%s4585 + $0x4] sm:$0xf]
    %v4590 = vunpack.c.l.b16 %v4586
    %v4591 = vunpack.c.l.b16 %v4587
    %v4592 = vpack.c.b16 %v4591, %v4590
    %v4594 = vsel %vm1459, %v4592, 0
    %4596 = vmatprep.subr.bf16.mxu0 %v1445
    %4597 = vmatpush1.bf16.msra.mxu0 %v1444
    %4598 = vmatprep.subr.bf16.mxu0 %v1449
    %4599 = vmatpush1.bf16.msra.mxu0 %v1448
    %4600 = vmatprep.subr.bf16.mxu0 0
    %4601 = vmatpush1.bf16.msra.mxu0 0
    %4602 = vmatprep.subr.bf16.mxu0 0
    %4603 = vmatpush1.bf16.msra.mxu0 0
    %4604 = vmatprep.subr.bf16.mxu0 0
    %4605 = vmatpush1.bf16.msra.mxu0 0
    %4606 = vmatprep.subr.bf16.mxu0 0
    %4607 = vmatpush1.bf16.msra.mxu0 0
    %4608 = vmatprep.subr.bf16.mxu0 0
    %4609 = vmatpush1.bf16.msra.mxu0 0
    %4610 = vmatprep.subr.bf16.mxu0 0
    %4611 = vmatpush1.bf16.msra.mxu0 0
    %4612 = vmatprep.subr.bf16.mxu0 0
    %4613 = vmatpush1.bf16.msra.mxu0 0
    %4614 = vmatprep.subr.bf16.mxu0 0
    %4615 = vmatpush1.bf16.msra.mxu0 0
    %4616 = vmatprep.subr.bf16.mxu0 0
    %4617 = vmatpush1.bf16.msra.mxu0 0
    %4618 = vmatprep.subr.bf16.mxu0 0
    %4619 = vmatpush1.bf16.msra.mxu0 0
    %4620 = vmatprep.subr.bf16.mxu0 0
    %4621 = vmatpush1.bf16.msra.mxu0 0
    %4622 = vmatprep.subr.bf16.mxu0 0
    %4623 = vmatpush1.bf16.msra.mxu0 0
    %4624 = vmatprep.subr.bf16.mxu0 0
    %4625 = vmatpush1.bf16.msra.mxu0 0
    %4626 = vmatprep.subr.bf16.mxu0 0
    %4627 = vmatpush1.bf16.msra.mxu0 0
    %4628 = vmatprep.mubr.bf16.mxu0 0
    %4629 = vmatmul.mubr.bf16.gmra.mrb[0].mxu0 %v4594
    %v4630 = vpop.f32.mrb[0].mxu0
    %v4631 = vadd.f32 0.0, %v4630
    %v4632 = vpop.f32.mrb[0].mxu0
    %v4633 = vadd.f32 0.0, %v4632
    %v4634 = vpop.f32.mrb[0].mxu0
    %v4635 = vadd.f32 0.0, %v4634
    %v4636 = vpop.f32.mrb[0].mxu0
    %v4637 = vadd.f32 0.0, %v4636
    %4638 = vdwg.mxu0
    %4639 = vmatprep.subr.bf16.mxu0 %v1447
    %4640 = vmatpush1.bf16.msra.mxu0 %v1446
    %4641 = vmatprep.subr.bf16.mxu0 %v1451
    %4642 = vmatpush1.bf16.msra.mxu0 %v1450
    %4643 = vmatprep.subr.bf16.mxu0 0
    %4644 = vmatpush1.bf16.msra.mxu0 0
    %4645 = vmatprep.subr.bf16.mxu0 0
    %4646 = vmatpush1.bf16.msra.mxu0 0
    %4647 = vmatprep.subr.bf16.mxu0 0
    %4648 = vmatpush1.bf16.msra.mxu0 0
    %4649 = vmatprep.subr.bf16.mxu0 0
    %4650 = vmatpush1.bf16.msra.mxu0 0
    %4651 = vmatprep.subr.bf16.mxu0 0
    %4652 = vmatpush1.bf16.msra.mxu0 0
    %4653 = vmatprep.subr.bf16.mxu0 0
    %4654 = vmatpush1.bf16.msra.mxu0 0
    %4655 = vmatprep.subr.bf16.mxu0 0
    %4656 = vmatpush1.bf16.msra.mxu0 0
    %4657 = vmatprep.subr.bf16.mxu0 0
    %4658 = vmatpush1.bf16.msra.mxu0 0
    %4659 = vmatprep.subr.bf16.mxu0 0
    %4660 = vmatpush1.bf16.msra.mxu0 0
    %4661 = vmatprep.subr.bf16.mxu0 0
    %4662 = vmatpush1.bf16.msra.mxu0 0
    %4663 = vmatprep.subr.bf16.mxu0 0
    %4664 = vmatpush1.bf16.msra.mxu0 0
    %4665 = vmatprep.subr.bf16.mxu0 0
    %4666 = vmatpush1.bf16.msra.mxu0 0
    %4667 = vmatprep.subr.bf16.mxu0 0
    %4668 = vmatpush1.bf16.msra.mxu0 0
    %4669 = vmatprep.subr.bf16.mxu0 0
    %4670 = vmatpush1.bf16.msra.mxu0 0
    %4671 = vmatprep.mubr.bf16.mxu0 0
    %4672 = vmatmul.mubr.bf16.gmra.mrb[0].mxu0 %v4594
    %v4673 = vpop.f32.mrb[0].mxu0
    %v4674 = vadd.f32 0.0, %v4673
    %v4675 = vpop.f32.mrb[0].mxu0
    %v4676 = vadd.f32 0.0, %v4675
    %v4677 = vpop.f32.mrb[0].mxu0
    %v4678 = vadd.f32 0.0, %v4677
    %v4679 = vpop.f32.mrb[0].mxu0
    %v4680 = vadd.f32 0.0, %v4679
    %4681 = vdwg.mxu0
    %v4682 = vpack.c.bf16 %v4635, %v4631
    %v4683 = vpack.c.bf16 %v4637, %v4633
    %v4684 = vpack.c.bf16 %v4678, %v4674
    %v4685 = vpack.c.bf16 %v4680, %v4676
    %s4686 = scalar_lea.vmem [#allocation10], 3072
    %v4687 = vld [vmem:[%s4686] sm:$0xff]
    %v4688 = vld [vmem:[%s4686 + $0x8] sm:$0xff]
    %v4689 = vld [vmem:[%s4686 + $0x10] sm:$0xff]
    %v4690 = vld [vmem:[%s4686 + $0x18] sm:$0xff]
    %v4691 = vld [vmem:[%s4686 + $0x20] sm:$0xff]
    %v4692 = vld [vmem:[%s4686 + $0x28] sm:$0xff]
    %v4693 = vld [vmem:[%s4686 + $0x30] sm:$0xff]
    %v4694 = vld [vmem:[%s4686 + $0x38] sm:$0xff]
    %v4695 = vld [vmem:[%s4686 + $0x40] sm:$0xff]
    %v4696 = vld [vmem:[%s4686 + $0x48] sm:$0xff]
    %v4697 = vld [vmem:[%s4686 + $0x50] sm:$0xff]
    %v4698 = vld [vmem:[%s4686 + $0x58] sm:$0xff]
    %v4699 = vld [vmem:[%s4686 + $0x60] sm:$0xff]
    %v4700 = vld [vmem:[%s4686 + $0x68] sm:$0xff]
    %v4701 = vld [vmem:[%s4686 + $0x70] sm:$0xff]
    %v4702 = vld [vmem:[%s4686 + $0x78] sm:$0xff]
    %v4703 = vld [vmem:[%s4686 + $0x80] sm:$0xff]
    %v4704 = vld [vmem:[%s4686 + $0x88] sm:$0xff]
    %v4705 = vld [vmem:[%s4686 + $0x90] sm:$0xff]
    %v4706 = vld [vmem:[%s4686 + $0x98] sm:$0xff]
    %v4707 = vld [vmem:[%s4686 + $0xa0] sm:$0xff]
    %v4708 = vld [vmem:[%s4686 + $0xa8] sm:$0xff]
    %v4709 = vld [vmem:[%s4686 + $0xb0] sm:$0xff]
    %v4710 = vld [vmem:[%s4686 + $0xb8] sm:$0xff]
    %v4711 = vld [vmem:[%s4686 + $0xc0] sm:$0xff]
    %v4712 = vld [vmem:[%s4686 + $0xc8] sm:$0xff]
    %v4713 = vld [vmem:[%s4686 + $0xd0] sm:$0xff]
    %v4714 = vld [vmem:[%s4686 + $0xd8] sm:$0xff]
    %v4715 = vld [vmem:[%s4686 + $0xe0] sm:$0xff]
    %v4716 = vld [vmem:[%s4686 + $0xe8] sm:$0xff]
    %v4717 = vld [vmem:[%s4686 + $0xf0] sm:$0xff]
    %v4718 = vld [vmem:[%s4686 + $0xf8] sm:$0xff]
    %v4719 = vld [vmem:[%s4686 + $0x100] sm:$0xff]
    %v4720 = vld [vmem:[%s4686 + $0x108] sm:$0xff]
    %v4721 = vld [vmem:[%s4686 + $0x110] sm:$0xff]
    %v4722 = vld [vmem:[%s4686 + $0x118] sm:$0xff]
    %v4723 = vld [vmem:[%s4686 + $0x120] sm:$0xff]
    %v4724 = vld [vmem:[%s4686 + $0x128] sm:$0xff]
    %v4725 = vld [vmem:[%s4686 + $0x130] sm:$0xff]
    %v4726 = vld [vmem:[%s4686 + $0x138] sm:$0xff]
    %v4727 = vld [vmem:[%s4686 + $0x140] sm:$0xff]
    %v4728 = vld [vmem:[%s4686 + $0x148] sm:$0xff]
    %v4729 = vld [vmem:[%s4686 + $0x150] sm:$0xff]
    %v4730 = vld [vmem:[%s4686 + $0x158] sm:$0xff]
    %v4731 = vld [vmem:[%s4686 + $0x160] sm:$0xff]
    %v4732 = vld [vmem:[%s4686 + $0x168] sm:$0xff]
    %v4733 = vld [vmem:[%s4686 + $0x170] sm:$0xff]
    %v4734 = vld [vmem:[%s4686 + $0x178] sm:$0xff]
    %v4735 = vld [vmem:[%s4686 + $0x180] sm:$0xff]
    %v4736 = vld [vmem:[%s4686 + $0x188] sm:$0xff]
    %v4737 = vld [vmem:[%s4686 + $0x190] sm:$0xff]
    %v4738 = vld [vmem:[%s4686 + $0x198] sm:$0xff]
    %v4739 = vld [vmem:[%s4686 + $0x1a0] sm:$0xff]
    %v4740 = vld [vmem:[%s4686 + $0x1a8] sm:$0xff]
    %v4741 = vld [vmem:[%s4686 + $0x1b0] sm:$0xff]
    %v4742 = vld [vmem:[%s4686 + $0x1b8] sm:$0xff]
    %v4743 = vld [vmem:[%s4686 + $0x1c0] sm:$0xff]
    %v4744 = vld [vmem:[%s4686 + $0x1c8] sm:$0xff]
    %v4745 = vld [vmem:[%s4686 + $0x1d0] sm:$0xff]
    %v4746 = vld [vmem:[%s4686 + $0x1d8] sm:$0xff]
    %v4747 = vld [vmem:[%s4686 + $0x1e0] sm:$0xff]
    %v4748 = vld [vmem:[%s4686 + $0x1e8] sm:$0xff]
    %v4749 = vld [vmem:[%s4686 + $0x1f0] sm:$0xff]
    %v4750 = vld [vmem:[%s4686 + $0x1f8] sm:$0xff]
    %v4751 = vld [vmem:[%s4686 + $0x200] sm:$0xff]
    %v4752 = vld [vmem:[%s4686 + $0x208] sm:$0xff]
    %v4753 = vld [vmem:[%s4686 + $0x210] sm:$0xff]
    %v4754 = vld [vmem:[%s4686 + $0x218] sm:$0xff]
    %v4755 = vld [vmem:[%s4686 + $0x220] sm:$0xff]
    %v4756 = vld [vmem:[%s4686 + $0x228] sm:$0xff]
    %v4757 = vld [vmem:[%s4686 + $0x230] sm:$0xff]
    %v4758 = vld [vmem:[%s4686 + $0x238] sm:$0xff]
    %v4759 = vld [vmem:[%s4686 + $0x240] sm:$0xff]
    %v4760 = vld [vmem:[%s4686 + $0x248] sm:$0xff]
    %v4761 = vld [vmem:[%s4686 + $0x250] sm:$0xff]
    %v4762 = vld [vmem:[%s4686 + $0x258] sm:$0xff]
    %v4763 = vld [vmem:[%s4686 + $0x260] sm:$0xff]
    %v4764 = vld [vmem:[%s4686 + $0x268] sm:$0xff]
    %v4765 = vld [vmem:[%s4686 + $0x270] sm:$0xff]
    %v4766 = vld [vmem:[%s4686 + $0x278] sm:$0xff]
    %v4767 = vld [vmem:[%s4686 + $0x280] sm:$0xff]
    %v4768 = vld [vmem:[%s4686 + $0x288] sm:$0xff]
    %v4769 = vld [vmem:[%s4686 + $0x290] sm:$0xff]
    %v4770 = vld [vmem:[%s4686 + $0x298] sm:$0xff]
    %v4771 = vld [vmem:[%s4686 + $0x2a0] sm:$0xff]
    %v4772 = vld [vmem:[%s4686 + $0x2a8] sm:$0xff]
    %v4773 = vld [vmem:[%s4686 + $0x2b0] sm:$0xff]
    %v4774 = vld [vmem:[%s4686 + $0x2b8] sm:$0xff]
    %v4775 = vld [vmem:[%s4686 + $0x2c0] sm:$0xff]
    %v4776 = vld [vmem:[%s4686 + $0x2c8] sm:$0xff]
    %v4777 = vld [vmem:[%s4686 + $0x2d0] sm:$0xff]
    %v4778 = vld [vmem:[%s4686 + $0x2d8] sm:$0xff]
    %v4779 = vld [vmem:[%s4686 + $0x2e0] sm:$0xff]
    %v4780 = vld [vmem:[%s4686 + $0x2e8] sm:$0xff]
    %v4781 = vld [vmem:[%s4686 + $0x2f0] sm:$0xff]
    %v4782 = vld [vmem:[%s4686 + $0x2f8] sm:$0xff]
    %v4783 = vld [vmem:[%s4686 + $0x300] sm:$0xff]
    %v4784 = vld [vmem:[%s4686 + $0x308] sm:$0xff]
    %v4785 = vld [vmem:[%s4686 + $0x310] sm:$0xff]
    %v4786 = vld [vmem:[%s4686 + $0x318] sm:$0xff]
    %v4787 = vld [vmem:[%s4686 + $0x320] sm:$0xff]
    %v4788 = vld [vmem:[%s4686 + $0x328] sm:$0xff]
    %v4789 = vld [vmem:[%s4686 + $0x330] sm:$0xff]
    %v4790 = vld [vmem:[%s4686 + $0x338] sm:$0xff]
    %v4791 = vld [vmem:[%s4686 + $0x340] sm:$0xff]
    %v4792 = vld [vmem:[%s4686 + $0x348] sm:$0xff]
    %v4793 = vld [vmem:[%s4686 + $0x350] sm:$0xff]
    %v4794 = vld [vmem:[%s4686 + $0x358] sm:$0xff]
    %v4795 = vld [vmem:[%s4686 + $0x360] sm:$0xff]
    %v4796 = vld [vmem:[%s4686 + $0x368] sm:$0xff]
    %v4797 = vld [vmem:[%s4686 + $0x370] sm:$0xff]
    %v4798 = vld [vmem:[%s4686 + $0x378] sm:$0xff]
    %v4799 = vld [vmem:[%s4686 + $0x380] sm:$0xff]
    %v4800 = vld [vmem:[%s4686 + $0x388] sm:$0xff]
    %v4801 = vld [vmem:[%s4686 + $0x390] sm:$0xff]
    %v4802 = vld [vmem:[%s4686 + $0x398] sm:$0xff]
    %v4803 = vld [vmem:[%s4686 + $0x3a0] sm:$0xff]
    %v4804 = vld [vmem:[%s4686 + $0x3a8] sm:$0xff]
    %v4805 = vld [vmem:[%s4686 + $0x3b0] sm:$0xff]
    %v4806 = vld [vmem:[%s4686 + $0x3b8] sm:$0xff]
    %v4807 = vld [vmem:[%s4686 + $0x3c0] sm:$0xff]
    %v4808 = vld [vmem:[%s4686 + $0x3c8] sm:$0xff]
    %v4809 = vld [vmem:[%s4686 + $0x3d0] sm:$0xff]
    %v4810 = vld [vmem:[%s4686 + $0x3d8] sm:$0xff]
    %v4811 = vld [vmem:[%s4686 + $0x3e0] sm:$0xff]
    %v4812 = vld [vmem:[%s4686 + $0x3e8] sm:$0xff]
    %v4813 = vld [vmem:[%s4686 + $0x3f0] sm:$0xff]
    %v4814 = vld [vmem:[%s4686 + $0x3f8] sm:$0xff]
    %v4943 = vunpack.c.l.b16 %v4687
    %v4944 = vunpack.c.h.b16 %v4687
    %v4945 = vunpack.c.l.b16 %v4688
    %v4946 = vunpack.c.h.b16 %v4688
    %v4947 = vunpack.c.l.b16 %v4689
    %v4948 = vunpack.c.h.b16 %v4689
    %v4949 = vunpack.c.l.b16 %v4690
    %v4950 = vunpack.c.h.b16 %v4690
    %v4951 = vunpack.c.l.b16 %v4691
    %v4952 = vunpack.c.h.b16 %v4691
    %v4953 = vunpack.c.l.b16 %v4692
    %v4954 = vunpack.c.h.b16 %v4692
    %v4955 = vunpack.c.l.b16 %v4693
    %v4956 = vunpack.c.h.b16 %v4693
    %v4957 = vunpack.c.l.b16 %v4694
    %v4958 = vunpack.c.h.b16 %v4694
    %v4959 = vunpack.c.l.b16 %v4695
    %v4960 = vunpack.c.h.b16 %v4695
    %v4961 = vunpack.c.l.b16 %v4696
    %v4962 = vunpack.c.h.b16 %v4696
    %v4963 = vunpack.c.l.b16 %v4697
    %v4964 = vunpack.c.h.b16 %v4697
    %v4965 = vunpack.c.l.b16 %v4698
    %v4966 = vunpack.c.h.b16 %v4698
    %v4967 = vunpack.c.l.b16 %v4699
    %v4968 = vunpack.c.h.b16 %v4699
    %v4969 = vunpack.c.l.b16 %v4700
    %v4970 = vunpack.c.h.b16 %v4700
    %v4971 = vunpack.c.l.b16 %v4701
    %v4972 = vunpack.c.h.b16 %v4701
    %v4973 = vunpack.c.l.b16 %v4702
    %v4974 = vunpack.c.h.b16 %v4702
    %v4975 = vunpack.c.l.b16 %v4703
    %v4976 = vunpack.c.h.b16 %v4703
    %v4977 = vunpack.c.l.b16 %v4704
    %v4978 = vunpack.c.h.b16 %v4704
    %v4979 = vunpack.c.l.b16 %v4705
    %v4980 = vunpack.c.h.b16 %v4705
    %v4981 = vunpack.c.l.b16 %v4706
    %v4982 = vunpack.c.h.b16 %v4706
    %v4983 = vunpack.c.l.b16 %v4707
    %v4984 = vunpack.c.h.b16 %v4707
    %v4985 = vunpack.c.l.b16 %v4708
    %v4986 = vunpack.c.h.b16 %v4708
    %v4987 = vunpack.c.l.b16 %v4709
    %v4988 = vunpack.c.h.b16 %v4709
    %v4989 = vunpack.c.l.b16 %v4710
    %v4990 = vunpack.c.h.b16 %v4710
    %v4991 = vunpack.c.l.b16 %v4711
    %v4992 = vunpack.c.h.b16 %v4711
    %v4993 = vunpack.c.l.b16 %v4712
    %v4994 = vunpack.c.h.b16 %v4712
    %v4995 = vunpack.c.l.b16 %v4713
    %v4996 = vunpack.c.h.b16 %v4713
    %v4997 = vunpack.c.l.b16 %v4714
    %v4998 = vunpack.c.h.b16 %v4714
    %v4999 = vunpack.c.l.b16 %v4715
    %v5000 = vunpack.c.h.b16 %v4715
    %v5001 = vunpack.c.l.b16 %v4716
    %v5002 = vunpack.c.h.b16 %v4716
    %v5003 = vunpack.c.l.b16 %v4717
    %v5004 = vunpack.c.h.b16 %v4717
    %v5005 = vunpack.c.l.b16 %v4718
    %v5006 = vunpack.c.h.b16 %v4718
    %v5007 = vunpack.c.l.b16 %v4719
    %v5008 = vunpack.c.h.b16 %v4719
    %v5009 = vunpack.c.l.b16 %v4720
    %v5010 = vunpack.c.h.b16 %v4720
    %v5011 = vunpack.c.l.b16 %v4721
    %v5012 = vunpack.c.h.b16 %v4721
    %v5013 = vunpack.c.l.b16 %v4722
    %v5014 = vunpack.c.h.b16 %v4722
    %v5015 = vunpack.c.l.b16 %v4723
    %v5016 = vunpack.c.h.b16 %v4723
    %v5017 = vunpack.c.l.b16 %v4724
    %v5018 = vunpack.c.h.b16 %v4724
    %v5019 = vunpack.c.l.b16 %v4725
    %v5020 = vunpack.c.h.b16 %v4725
    %v5021 = vunpack.c.l.b16 %v4726
    %v5022 = vunpack.c.h.b16 %v4726
    %v5023 = vunpack.c.l.b16 %v4727
    %v5024 = vunpack.c.h.b16 %v4727
    %v5025 = vunpack.c.l.b16 %v4728
    %v5026 = vunpack.c.h.b16 %v4728
    %v5027 = vunpack.c.l.b16 %v4729
    %v5028 = vunpack.c.h.b16 %v4729
    %v5029 = vunpack.c.l.b16 %v4730
    %v5030 = vunpack.c.h.b16 %v4730
    %v5031 = vunpack.c.l.b16 %v4731
    %v5032 = vunpack.c.h.b16 %v4731
    %v5033 = vunpack.c.l.b16 %v4732
    %v5034 = vunpack.c.h.b16 %v4732
    %v5035 = vunpack.c.l.b16 %v4733
    %v5036 = vunpack.c.h.b16 %v4733
    %v5037 = vunpack.c.l.b16 %v4734
    %v5038 = vunpack.c.h.b16 %v4734
    %v5039 = vunpack.c.l.b16 %v4735
    %v5040 = vunpack.c.h.b16 %v4735
    %v5041 = vunpack.c.l.b16 %v4736
    %v5042 = vunpack.c.h.b16 %v4736
    %v5043 = vunpack.c.l.b16 %v4737
    %v5044 = vunpack.c.h.b16 %v4737
    %v5045 = vunpack.c.l.b16 %v4738
    %v5046 = vunpack.c.h.b16 %v4738
    %v5047 = vunpack.c.l.b16 %v4739
    %v5048 = vunpack.c.h.b16 %v4739
    %v5049 = vunpack.c.l.b16 %v4740
    %v5050 = vunpack.c.h.b16 %v4740
    %v5051 = vunpack.c.l.b16 %v4741
    %v5052 = vunpack.c.h.b16 %v4741
    %v5053 = vunpack.c.l.b16 %v4742
    %v5054 = vunpack.c.h.b16 %v4742
    %v5055 = vunpack.c.l.b16 %v4743
    %v5056 = vunpack.c.h.b16 %v4743
    %v5057 = vunpack.c.l.b16 %v4744
    %v5058 = vunpack.c.h.b16 %v4744
    %v5059 = vunpack.c.l.b16 %v4745
    %v5060 = vunpack.c.h.b16 %v4745
    %v5061 = vunpack.c.l.b16 %v4746
    %v5062 = vunpack.c.h.b16 %v4746
    %v5063 = vunpack.c.l.b16 %v4747
    %v5064 = vunpack.c.h.b16 %v4747
    %v5065 = vunpack.c.l.b16 %v4748
    %v5066 = vunpack.c.h.b16 %v4748
    %v5067 = vunpack.c.l.b16 %v4749
    %v5068 = vunpack.c.h.b16 %v4749
    %v5069 = vunpack.c.l.b16 %v4750
    %v5070 = vunpack.c.h.b16 %v4750
    %v5071 = vunpack.c.l.b16 %v4751
    %v5072 = vunpack.c.h.b16 %v4751
    %v5073 = vunpack.c.l.b16 %v4752
    %v5074 = vunpack.c.h.b16 %v4752
    %v5075 = vunpack.c.l.b16 %v4753
    %v5076 = vunpack.c.h.b16 %v4753
    %v5077 = vunpack.c.l.b16 %v4754
    %v5078 = vunpack.c.h.b16 %v4754
    %v5079 = vunpack.c.l.b16 %v4755
    %v5080 = vunpack.c.h.b16 %v4755
    %v5081 = vunpack.c.l.b16 %v4756
    %v5082 = vunpack.c.h.b16 %v4756
    %v5083 = vunpack.c.l.b16 %v4757
    %v5084 = vunpack.c.h.b16 %v4757
    %v5085 = vunpack.c.l.b16 %v4758
    %v5086 = vunpack.c.h.b16 %v4758
    %v5087 = vunpack.c.l.b16 %v4759
    %v5088 = vunpack.c.h.b16 %v4759
    %v5089 = vunpack.c.l.b16 %v4760
    %v5090 = vunpack.c.h.b16 %v4760
    %v5091 = vunpack.c.l.b16 %v4761
    %v5092 = vunpack.c.h.b16 %v4761
    %v5093 = vunpack.c.l.b16 %v4762
    %v5094 = vunpack.c.h.b16 %v4762
    %v5095 = vunpack.c.l.b16 %v4763
    %v5096 = vunpack.c.h.b16 %v4763
    %v5097 = vunpack.c.l.b16 %v4764
    %v5098 = vunpack.c.h.b16 %v4764
    %v5099 = vunpack.c.l.b16 %v4765
    %v5100 = vunpack.c.h.b16 %v4765
    %v5101 = vunpack.c.l.b16 %v4766
    %v5102 = vunpack.c.h.b16 %v4766
    %v5103 = vunpack.c.l.b16 %v4767
    %v5104 = vunpack.c.h.b16 %v4767
    %v5105 = vunpack.c.l.b16 %v4768
    %v5106 = vunpack.c.h.b16 %v4768
    %v5107 = vunpack.c.l.b16 %v4769
    %v5108 = vunpack.c.h.b16 %v4769
    %v5109 = vunpack.c.l.b16 %v4770
    %v5110 = vunpack.c.h.b16 %v4770
    %v5111 = vunpack.c.l.b16 %v4771
    %v5112 = vunpack.c.h.b16 %v4771
    %v5113 = vunpack.c.l.b16 %v4772
    %v5114 = vunpack.c.h.b16 %v4772
    %v5115 = vunpack.c.l.b16 %v4773
    %v5116 = vunpack.c.h.b16 %v4773
    %v5117 = vunpack.c.l.b16 %v4774
    %v5118 = vunpack.c.h.b16 %v4774
    %v5119 = vunpack.c.l.b16 %v4775
    %v5120 = vunpack.c.h.b16 %v4775
    %v5121 = vunpack.c.l.b16 %v4776
    %v5122 = vunpack.c.h.b16 %v4776
    %v5123 = vunpack.c.l.b16 %v4777
    %v5124 = vunpack.c.h.b16 %v4777
    %v5125 = vunpack.c.l.b16 %v4778
    %v5126 = vunpack.c.h.b16 %v4778
    %v5127 = vunpack.c.l.b16 %v4779
    %v5128 = vunpack.c.h.b16 %v4779
    %v5129 = vunpack.c.l.b16 %v4780
    %v5130 = vunpack.c.h.b16 %v4780
    %v5131 = vunpack.c.l.b16 %v4781
    %v5132 = vunpack.c.h.b16 %v4781
    %v5133 = vunpack.c.l.b16 %v4782
    %v5134 = vunpack.c.h.b16 %v4782
    %v5135 = vunpack.c.l.b16 %v4783
    %v5136 = vunpack.c.h.b16 %v4783
    %v5137 = vunpack.c.l.b16 %v4784
    %v5138 = vunpack.c.h.b16 %v4784
    %v5139 = vunpack.c.l.b16 %v4785
    %v5140 = vunpack.c.h.b16 %v4785
    %v5141 = vunpack.c.l.b16 %v4786
    %v5142 = vunpack.c.h.b16 %v4786
    %v5143 = vunpack.c.l.b16 %v4787
    %v5144 = vunpack.c.h.b16 %v4787
    %v5145 = vunpack.c.l.b16 %v4788
    %v5146 = vunpack.c.h.b16 %v4788
    %v5147 = vunpack.c.l.b16 %v4789
    %v5148 = vunpack.c.h.b16 %v4789
    %v5149 = vunpack.c.l.b16 %v4790
    %v5150 = vunpack.c.h.b16 %v4790
    %v5151 = vunpack.c.l.b16 %v4791
    %v5152 = vunpack.c.h.b16 %v4791
    %v5153 = vunpack.c.l.b16 %v4792
    %v5154 = vunpack.c.h.b16 %v4792
    %v5155 = vunpack.c.l.b16 %v4793
    %v5156 = vunpack.c.h.b16 %v4793
    %v5157 = vunpack.c.l.b16 %v4794
    %v5158 = vunpack.c.h.b16 %v4794
    %v5159 = vunpack.c.l.b16 %v4795
    %v5160 = vunpack.c.h.b16 %v4795
    %v5161 = vunpack.c.l.b16 %v4796
    %v5162 = vunpack.c.h.b16 %v4796
    %v5163 = vunpack.c.l.b16 %v4797
    %v5164 = vunpack.c.h.b16 %v4797
    %v5165 = vunpack.c.l.b16 %v4798
    %v5166 = vunpack.c.h.b16 %v4798
    %v5167 = vunpack.c.l.b16 %v4799
    %v5168 = vunpack.c.h.b16 %v4799
    %v5169 = vunpack.c.l.b16 %v4800
    %v5170 = vunpack.c.h.b16 %v4800
    %v5171 = vunpack.c.l.b16 %v4801
    %v5172 = vunpack.c.h.b16 %v4801
    %v5173 = vunpack.c.l.b16 %v4802
    %v5174 = vunpack.c.h.b16 %v4802
    %v5175 = vunpack.c.l.b16 %v4803
    %v5176 = vunpack.c.h.b16 %v4803
    %v5177 = vunpack.c.l.b16 %v4804
    %v5178 = vunpack.c.h.b16 %v4804
    %v5179 = vunpack.c.l.b16 %v4805
    %v5180 = vunpack.c.h.b16 %v4805
    %v5181 = vunpack.c.l.b16 %v4806
    %v5182 = vunpack.c.h.b16 %v4806
    %v5183 = vunpack.c.l.b16 %v4807
    %v5184 = vunpack.c.h.b16 %v4807
    %v5185 = vunpack.c.l.b16 %v4808
    %v5186 = vunpack.c.h.b16 %v4808
    %v5187 = vunpack.c.l.b16 %v4809
    %v5188 = vunpack.c.h.b16 %v4809
    %v5189 = vunpack.c.l.b16 %v4810
    %v5190 = vunpack.c.h.b16 %v4810
    %v5191 = vunpack.c.l.b16 %v4811
    %v5192 = vunpack.c.h.b16 %v4811
    %v5193 = vunpack.c.l.b16 %v4812
    %v5194 = vunpack.c.h.b16 %v4812
    %v5195 = vunpack.c.l.b16 %v4813
    %v5196 = vunpack.c.h.b16 %v4813
    %v5197 = vunpack.c.l.b16 %v4814
    %v5198 = vunpack.c.h.b16 %v4814
    %v5199 = vpack.c.b16 %v4947, %v4943
    %v5200 = vpack.c.b16 %v4948, %v4944
    %v5201 = vpack.c.b16 %v4949, %v4945
    %v5202 = vpack.c.b16 %v4950, %v4946
    %v5203 = vpack.c.b16 %v4955, %v4951
    %v5204 = vpack.c.b16 %v4956, %v4952
    %v5205 = vpack.c.b16 %v4957, %v4953
    %v5206 = vpack.c.b16 %v4958, %v4954
    %v5207 = vpack.c.b16 %v4963, %v4959
    %v5208 = vpack.c.b16 %v4964, %v4960
    %v5209 = vpack.c.b16 %v4965, %v4961
    %v5210 = vpack.c.b16 %v4966, %v4962
    %v5211 = vpack.c.b16 %v4971, %v4967
    %v5212 = vpack.c.b16 %v4972, %v4968
    %v5213 = vpack.c.b16 %v4973, %v4969
    %v5214 = vpack.c.b16 %v4974, %v4970
    %v5215 = vpack.c.b16 %v4979, %v4975
    %v5216 = vpack.c.b16 %v4980, %v4976
    %v5217 = vpack.c.b16 %v4981, %v4977
    %v5218 = vpack.c.b16 %v4982, %v4978
    %v5219 = vpack.c.b16 %v4987, %v4983
    %v5220 = vpack.c.b16 %v4988, %v4984
    %v5221 = vpack.c.b16 %v4989, %v4985
    %v5222 = vpack.c.b16 %v4990, %v4986
    %v5223 = vpack.c.b16 %v4995, %v4991
    %v5224 = vpack.c.b16 %v4996, %v4992
    %v5225 = vpack.c.b16 %v4997, %v4993
    %v5226 = vpack.c.b16 %v4998, %v4994
    %v5227 = vpack.c.b16 %v5003, %v4999
    %v5228 = vpack.c.b16 %v5004, %v5000
    %v5229 = vpack.c.b16 %v5005, %v5001
    %v5230 = vpack.c.b16 %v5006, %v5002
    %v5231 = vpack.c.b16 %v5011, %v5007
    %v5232 = vpack.c.b16 %v5012, %v5008
    %v5233 = vpack.c.b16 %v5013, %v5009
    %v5234 = vpack.c.b16 %v5014, %v5010
    %v5235 = vpack.c.b16 %v5019, %v5015
    %v5236 = vpack.c.b16 %v5020, %v5016
    %v5237 = vpack.c.b16 %v5021, %v5017
    %v5238 = vpack.c.b16 %v5022, %v5018
    %v5239 = vpack.c.b16 %v5027, %v5023
    %v5240 = vpack.c.b16 %v5028, %v5024
    %v5241 = vpack.c.b16 %v5029, %v5025
    %v5242 = vpack.c.b16 %v5030, %v5026
    %v5243 = vpack.c.b16 %v5035, %v5031
    %v5244 = vpack.c.b16 %v5036, %v5032
    %v5245 = vpack.c.b16 %v5037, %v5033
    %v5246 = vpack.c.b16 %v5038, %v5034
    %v5247 = vpack.c.b16 %v5043, %v5039
    %v5248 = vpack.c.b16 %v5044, %v5040
    %v5249 = vpack.c.b16 %v5045, %v5041
    %v5250 = vpack.c.b16 %v5046, %v5042
    %v5251 = vpack.c.b16 %v5051, %v5047
    %v5252 = vpack.c.b16 %v5052, %v5048
    %v5253 = vpack.c.b16 %v5053, %v5049
    %v5254 = vpack.c.b16 %v5054, %v5050
    %v5255 = vpack.c.b16 %v5059, %v5055
    %v5256 = vpack.c.b16 %v5060, %v5056
    %v5257 = vpack.c.b16 %v5061, %v5057
    %v5258 = vpack.c.b16 %v5062, %v5058
    %v5259 = vpack.c.b16 %v5067, %v5063
    %v5260 = vpack.c.b16 %v5068, %v5064
    %v5261 = vpack.c.b16 %v5069, %v5065
    %v5262 = vpack.c.b16 %v5070, %v5066
    %v5263 = vpack.c.b16 %v5075, %v5071
    %v5264 = vpack.c.b16 %v5076, %v5072
    %v5265 = vpack.c.b16 %v5077, %v5073
    %v5266 = vpack.c.b16 %v5078, %v5074
    %v5267 = vpack.c.b16 %v5083, %v5079
    %v5268 = vpack.c.b16 %v5084, %v5080
    %v5269 = vpack.c.b16 %v5085, %v5081
    %v5270 = vpack.c.b16 %v5086, %v5082
    %v5271 = vpack.c.b16 %v5091, %v5087
    %v5272 = vpack.c.b16 %v5092, %v5088
    %v5273 = vpack.c.b16 %v5093, %v5089
    %v5274 = vpack.c.b16 %v5094, %v5090
    %v5275 = vpack.c.b16 %v5099, %v5095
    %v5276 = vpack.c.b16 %v5100, %v5096
    %v5277 = vpack.c.b16 %v5101, %v5097
    %v5278 = vpack.c.b16 %v5102, %v5098
    %v5279 = vpack.c.b16 %v5107, %v5103
    %v5280 = vpack.c.b16 %v5108, %v5104
    %v5281 = vpack.c.b16 %v5109, %v5105
    %v5282 = vpack.c.b16 %v5110, %v5106
    %v5283 = vpack.c.b16 %v5115, %v5111
    %v5284 = vpack.c.b16 %v5116, %v5112
    %v5285 = vpack.c.b16 %v5117, %v5113
    %v5286 = vpack.c.b16 %v5118, %v5114
    %v5287 = vpack.c.b16 %v5123, %v5119
    %v5288 = vpack.c.b16 %v5124, %v5120
    %v5289 = vpack.c.b16 %v5125, %v5121
    %v5290 = vpack.c.b16 %v5126, %v5122
    %v5291 = vpack.c.b16 %v5131, %v5127
    %v5292 = vpack.c.b16 %v5132, %v5128
    %v5293 = vpack.c.b16 %v5133, %v5129
    %v5294 = vpack.c.b16 %v5134, %v5130
    %v5295 = vpack.c.b16 %v5139, %v5135
    %v5296 = vpack.c.b16 %v5140, %v5136
    %v5297 = vpack.c.b16 %v5141, %v5137
    %v5298 = vpack.c.b16 %v5142, %v5138
    %v5299 = vpack.c.b16 %v5147, %v5143
    %v5300 = vpack.c.b16 %v5148, %v5144
    %v5301 = vpack.c.b16 %v5149, %v5145
    %v5302 = vpack.c.b16 %v5150, %v5146
    %v5303 = vpack.c.b16 %v5155, %v5151
    %v5304 = vpack.c.b16 %v5156, %v5152
    %v5305 = vpack.c.b16 %v5157, %v5153
    %v5306 = vpack.c.b16 %v5158, %v5154
    %v5307 = vpack.c.b16 %v5163, %v5159
    %v5308 = vpack.c.b16 %v5164, %v5160
    %v5309 = vpack.c.b16 %v5165, %v5161
    %v5310 = vpack.c.b16 %v5166, %v5162
    %v5311 = vpack.c.b16 %v5171, %v5167
    %v5312 = vpack.c.b16 %v5172, %v5168
    %v5313 = vpack.c.b16 %v5173, %v5169
    %v5314 = vpack.c.b16 %v5174, %v5170
    %v5315 = vpack.c.b16 %v5179, %v5175
    %v5316 = vpack.c.b16 %v5180, %v5176
    %v5317 = vpack.c.b16 %v5181, %v5177
    %v5318 = vpack.c.b16 %v5182, %v5178
    %v5319 = vpack.c.b16 %v5187, %v5183
    %v5320 = vpack.c.b16 %v5188, %v5184
    %v5321 = vpack.c.b16 %v5189, %v5185
    %v5322 = vpack.c.b16 %v5190, %v5186
    %v5323 = vpack.c.b16 %v5195, %v5191
    %v5324 = vpack.c.b16 %v5196, %v5192
    %v5325 = vpack.c.b16 %v5197, %v5193
    %v5326 = vpack.c.b16 %v5198, %v5194
    %5455 = vmatprep.subr.bf16.mxu0 %v5200
    %5456 = vmatpush1.bf16.msra.mxu0 %v5199
    %5457 = vmatprep.subr.bf16.mxu0 %v5204
    %5458 = vmatpush1.bf16.msra.mxu0 %v5203
    %5459 = vmatprep.subr.bf16.mxu0 %v5208
    %5460 = vmatpush1.bf16.msra.mxu0 %v5207
    %5461 = vmatprep.subr.bf16.mxu0 %v5212
    %5462 = vmatpush1.bf16.msra.mxu0 %v5211
    %5463 = vmatprep.subr.bf16.mxu0 %v5216
    %5464 = vmatpush1.bf16.msra.mxu0 %v5215
    %5465 = vmatprep.subr.bf16.mxu0 %v5220
    %5466 = vmatpush1.bf16.msra.mxu0 %v5219
    %5467 = vmatprep.subr.bf16.mxu0 %v5224
    %5468 = vmatpush1.bf16.msra.mxu0 %v5223
    %5469 = vmatprep.subr.bf16.mxu0 %v5228
    %5470 = vmatpush1.bf16.msra.mxu0 %v5227
    %5471 = vmatprep.subr.bf16.mxu0 %v5232
    %5472 = vmatpush1.bf16.msra.mxu0 %v5231
    %5473 = vmatprep.subr.bf16.mxu0 %v5236
    %5474 = vmatpush1.bf16.msra.mxu0 %v5235
    %5475 = vmatprep.subr.bf16.mxu0 %v5240
    %5476 = vmatpush1.bf16.msra.mxu0 %v5239
    %5477 = vmatprep.subr.bf16.mxu0 %v5244
    %5478 = vmatpush1.bf16.msra.mxu0 %v5243
    %5479 = vmatprep.subr.bf16.mxu0 %v5248
    %5480 = vmatpush1.bf16.msra.mxu0 %v5247
    %5481 = vmatprep.subr.bf16.mxu0 %v5252
    %5482 = vmatpush1.bf16.msra.mxu0 %v5251
    %5483 = vmatprep.subr.bf16.mxu0 %v5256
    %5484 = vmatpush1.bf16.msra.mxu0 %v5255
    %5485 = vmatprep.subr.bf16.mxu0 %v5260
    %5486 = vmatpush1.bf16.msra.mxu0 %v5259
    %5487 = vmatprep.mubr.bf16.mxu0 %v4683
    %5488 = vmatmul.mubr.bf16.gmra.mrb[0].mxu0 %v4682
    %v5489 = vpop.f32.mrb[0].mxu0
    %v5490 = vadd.f32 0.0, %v5489
    %v5491 = vpop.f32.mrb[0].mxu0
    %v5492 = vadd.f32 0.0, %v5491
    %v5493 = vpop.f32.mrb[0].mxu0
    %v5494 = vadd.f32 0.0, %v5493
    %v5495 = vpop.f32.mrb[0].mxu0
    %v5496 = vadd.f32 0.0, %v5495
    %5497 = vdwg.mxu0
    %5498 = vmatprep.subr.bf16.mxu0 %v5264
    %5499 = vmatpush1.bf16.msra.mxu0 %v5263
    %5500 = vmatprep.subr.bf16.mxu0 %v5268
    %5501 = vmatpush1.bf16.msra.mxu0 %v5267
    %5502 = vmatprep.subr.bf16.mxu0 %v5272
    %5503 = vmatpush1.bf16.msra.mxu0 %v5271
    %5504 = vmatprep.subr.bf16.mxu0 %v5276
    %5505 = vmatpush1.bf16.msra.mxu0 %v5275
    %5506 = vmatprep.subr.bf16.mxu0 %v5280
    %5507 = vmatpush1.bf16.msra.mxu0 %v5279
    %5508 = vmatprep.subr.bf16.mxu0 %v5284
    %5509 = vmatpush1.bf16.msra.mxu0 %v5283
    %5510 = vmatprep.subr.bf16.mxu0 %v5288
    %5511 = vmatpush1.bf16.msra.mxu0 %v5287
    %5512 = vmatprep.subr.bf16.mxu0 %v5292
    %5513 = vmatpush1.bf16.msra.mxu0 %v5291
    %5514 = vmatprep.subr.bf16.mxu0 %v5296
    %5515 = vmatpush1.bf16.msra.mxu0 %v5295
    %5516 = vmatprep.subr.bf16.mxu0 %v5300
    %5517 = vmatpush1.bf16.msra.mxu0 %v5299
    %5518 = vmatprep.subr.bf16.mxu0 %v5304
    %5519 = vmatpush1.bf16.msra.mxu0 %v5303
    %5520 = vmatprep.subr.bf16.mxu0 %v5308
    %5521 = vmatpush1.bf16.msra.mxu0 %v5307
    %5522 = vmatprep.subr.bf16.mxu0 %v5312
    %5523 = vmatpush1.bf16.msra.mxu0 %v5311
    %5524 = vmatprep.subr.bf16.mxu0 %v5316
    %5525 = vmatpush1.bf16.msra.mxu0 %v5315
    %5526 = vmatprep.subr.bf16.mxu0 %v5320
    %5527 = vmatpush1.bf16.msra.mxu0 %v5319
    %5528 = vmatprep.subr.bf16.mxu0 %v5324
    %5529 = vmatpush1.bf16.msra.mxu0 %v5323
    %5530 = vmatprep.mubr.bf16.mxu0 %v4685
    %5531 = vmatmul.mubr.bf16.gmra.mrb[0].mxu0 %v4684
    %v5532 = vpop.f32.mrb[0].mxu0
    %v5533 = vadd.f32 %v5490, %v5532
    %v5534 = vpop.f32.mrb[0].mxu0
    %v5535 = vadd.f32 %v5492, %v5534
    %v5536 = vpop.f32.mrb[0].mxu0
    %v5537 = vadd.f32 %v5494, %v5536
    %v5538 = vpop.f32.mrb[0].mxu0
    %v5539 = vadd.f32 %v5496, %v5538
    %5540 = vdwg.mxu0
    %5541 = vmatprep.subr.bf16.mxu0 %v5202
    %5542 = vmatpush1.bf16.msra.mxu0 %v5201
    %5543 = vmatprep.subr.bf16.mxu0 %v5206
    %5544 = vmatpush1.bf16.msra.mxu0 %v5205
    %5545 = vmatprep.subr.bf16.mxu0 %v5210
    %5546 = vmatpush1.bf16.msra.mxu0 %v5209
    %5547 = vmatprep.subr.bf16.mxu0 %v5214
    %5548 = vmatpush1.bf16.msra.mxu0 %v5213
    %5549 = vmatprep.subr.bf16.mxu0 %v5218
    %5550 = vmatpush1.bf16.msra.mxu0 %v5217
    %5551 = vmatprep.subr.bf16.mxu0 %v5222
    %5552 = vmatpush1.bf16.msra.mxu0 %v5221
    %5553 = vmatprep.subr.bf16.mxu0 %v5226
    %5554 = vmatpush1.bf16.msra.mxu0 %v5225
    %5555 = vmatprep.subr.bf16.mxu0 %v5230
    %5556 = vmatpush1.bf16.msra.mxu0 %v5229
    %5557 = vmatprep.subr.bf16.mxu0 %v5234
    %5558 = vmatpush1.bf16.msra.mxu0 %v5233
    %5559 = vmatprep.subr.bf16.mxu0 %v5238
    %5560 = vmatpush1.bf16.msra.mxu0 %v5237
    %5561 = vmatprep.subr.bf16.mxu0 %v5242
    %5562 = vmatpush1.bf16.msra.mxu0 %v5241
    %5563 = vmatprep.subr.bf16.mxu0 %v5246
    %5564 = vmatpush1.bf16.msra.mxu0 %v5245
    %5565 = vmatprep.subr.bf16.mxu0 %v5250
    %5566 = vmatpush1.bf16.msra.mxu0 %v5249
    %5567 = vmatprep.subr.bf16.mxu0 %v5254
    %5568 = vmatpush1.bf16.msra.mxu0 %v5253
    %5569 = vmatprep.subr.bf16.mxu0 %v5258
    %5570 = vmatpush1.bf16.msra.mxu0 %v5257
    %5571 = vmatprep.subr.bf16.mxu0 %v5262
    %5572 = vmatpush1.bf16.msra.mxu0 %v5261
    %5573 = vmatprep.mubr.bf16.mxu0 %v4683
    %5574 = vmatmul.mubr.bf16.gmra.mrb[0].mxu0 %v4682
    %v5575 = vpop.f32.mrb[0].mxu0
    %v5576 = vadd.f32 0.0, %v5575
    %v5577 = vpop.f32.mrb[0].mxu0
    %v5578 = vadd.f32 0.0, %v5577
    %v5579 = vpop.f32.mrb[0].mxu0
    %v5580 = vadd.f32 0.0, %v5579
    %v5581 = vpop.f32.mrb[0].mxu0
    %v5582 = vadd.f32 0.0, %v5581
    %5583 = vdwg.mxu0
    %5584 = vmatprep.subr.bf16.mxu0 %v5266
    %5585 = vmatpush1.bf16.msra.mxu0 %v5265
    %5586 = vmatprep.subr.bf16.mxu0 %v5270
    %5587 = vmatpush1.bf16.msra.mxu0 %v5269
    %5588 = vmatprep.subr.bf16.mxu0 %v5274
    %5589 = vmatpush1.bf16.msra.mxu0 %v5273
    %5590 = vmatprep.subr.bf16.mxu0 %v5278
    %5591 = vmatpush1.bf16.msra.mxu0 %v5277
    %5592 = vmatprep.subr.bf16.mxu0 %v5282
    %5593 = vmatpush1.bf16.msra.mxu0 %v5281
    %5594 = vmatprep.subr.bf16.mxu0 %v5286
    %5595 = vmatpush1.bf16.msra.mxu0 %v5285
    %5596 = vmatprep.subr.bf16.mxu0 %v5290
    %5597 = vmatpush1.bf16.msra.mxu0 %v5289
    %5598 = vmatprep.subr.bf16.mxu0 %v5294
    %5599 = vmatpush1.bf16.msra.mxu0 %v5293
    %5600 = vmatprep.subr.bf16.mxu0 %v5298
    %5601 = vmatpush1.bf16.msra.mxu0 %v5297
    %5602 = vmatprep.subr.bf16.mxu0 %v5302
    %5603 = vmatpush1.bf16.msra.mxu0 %v5301
    %5604 = vmatprep.subr.bf16.mxu0 %v5306
    %5605 = vmatpush1.bf16.msra.mxu0 %v5305
    %5606 = vmatprep.subr.bf16.mxu0 %v5310
    %5607 = vmatpush1.bf16.msra.mxu0 %v5309
    %5608 = vmatprep.subr.bf16.mxu0 %v5314
    %5609 = vmatpush1.bf16.msra.mxu0 %v5313
    %5610 = vmatprep.subr.bf16.mxu0 %v5318
    %5611 = vmatpush1.bf16.msra.mxu0 %v5317
    %5612 = vmatprep.subr.bf16.mxu0 %v5322
    %5613 = vmatpush1.bf16.msra.mxu0 %v5321
    %5614 = vmatprep.subr.bf16.mxu0 %v5326
    %5615 = vmatpush1.bf16.msra.mxu0 %v5325
    %5616 = vmatprep.mubr.bf16.mxu0 %v4685
    %5617 = vmatmul.mubr.bf16.gmra.mrb[0].mxu0 %v4684
    %v5618 = vpop.f32.mrb[0].mxu0
    %v5619 = vadd.f32 %v5576, %v5618
    %v5620 = vpop.f32.mrb[0].mxu0
    %v5621 = vadd.f32 %v5578, %v5620
    %v5622 = vpop.f32.mrb[0].mxu0
    %v5623 = vadd.f32 %v5580, %v5622
    %v5624 = vpop.f32.mrb[0].mxu0
    %v5625 = vadd.f32 %v5582, %v5624
    %5626 = vdwg.mxu0
    %v5627 = vadd.f32 %v4577, %v5533
    %v5628 = vadd.f32 %v4578, %v5535
    %v5629 = vadd.f32 %v4579, %v5619
    %v5630 = vadd.f32 %v4580, %v5621
    %v5631 = vadd.f32 %v4581, %v5537
    %v5632 = vadd.f32 %v4582, %v5539
    %v5633 = vadd.f32 %v4583, %v5623
    %v5634 = vadd.f32 %v4584, %v5625
    %v5636 = vlaneseq
    %v5637 = vshrl.u32 %v5636, 7
    %v5638 = vsub.s32 0, %v5637
    %v5639 = vrot.slane %v1443, %v5638
    %v5640 = vlaneseq
    %v5641 = vshrl.u32 %v5640, 7
    %v5642 = vsub.s32 1, %v5641
    %v5643 = vrot.slane %v1443, %v5642
    %v5644 = vlaneseq
    %v5645 = vshrl.u32 %v5644, 7
    %v5646 = vsub.s32 2, %v5645
    %v5647 = vrot.slane %v1443, %v5646
    %v5648 = vlaneseq
    %v5649 = vshrl.u32 %v5648, 7
    %v5650 = vsub.s32 3, %v5649
    %v5651 = vrot.slane %v1443, %v5650
    %v5656 = vadd.f32 %v5627, %v5639
    %v5657 = vadd.f32 %v5628, %v5643
    %v5658 = vadd.f32 %v5629, %v5647
    %v5659 = vadd.f32 %v5630, %v5651
    %v5660 = vadd.f32 %v5631, %v5639
    %v5661 = vadd.f32 %v5632, %v5643
    %v5662 = vadd.f32 %v5633, %v5647
    %v5663 = vadd.f32 %v5634, %v5651
    %v5664 = vmax.f32 %v5656, %v5660
    %v5665 = vmax.f32 %v5657, %v5661
    %v5666 = vmax.f32 %v5658, %v5662
    %v5667 = vmax.f32 %v5659, %v5663
    %v5668 = vmax.f32 %v5664, %v5666
    %v5669 = vmax.f32 %v5665, %v5667
    %v5670 = vrot.slane %v5668, 4
    %v5671 = vadd.f32 %v5668, %v5670
    %v5672 = vrot.slane %v5671, 2
    %v5673 = vadd.f32 %v5671, %v5672
    %v5674 = vrot.slane %v5673, 1
    %v5675 = vadd.f32 %v5673, %v5674
    %v5676 = vrot.slane %v5669, 4
    %v5677 = vadd.f32 %v5669, %v5676
    %v5678 = vrot.slane %v5677, 2
    %v5679 = vadd.f32 %v5677, %v5678
    %v5680 = vrot.slane %v5679, 1
    %v5681 = vadd.f32 %v5679, %v5680
    %v5682 = vld [vmem:[%s7] sm:$0xff]
    %v5683 = vld [vmem:[%s7 + $0x8] sm:$0xff]
    %v5684 = vld [vmem:[%s7 + $0x10] sm:$0xff]
    %v5685 = vld [vmem:[%s7 + $0x18] sm:$0xff]
    %v5686 = vld [vmem:[%s7 + $0x20] sm:$0xff]
    %v5687 = vld [vmem:[%s7 + $0x28] sm:$0xff]
    %v5688 = vld [vmem:[%s7 + $0x30] sm:$0xff]
    %v5689 = vld [vmem:[%s7 + $0x38] sm:$0xff]
    %v5690 = vld [vmem:[%s7 + $0x40] sm:$0xff]
    %v5691 = vld [vmem:[%s7 + $0x48] sm:$0xff]
    %v5692 = vld [vmem:[%s7 + $0x50] sm:$0xff]
    %v5693 = vld [vmem:[%s7 + $0x58] sm:$0xff]
    %v5694 = vld [vmem:[%s7 + $0x60] sm:$0xff]
    %v5695 = vld [vmem:[%s7 + $0x68] sm:$0xff]
    %v5696 = vld [vmem:[%s7 + $0x70] sm:$0xff]
    %v5697 = vld [vmem:[%s7 + $0x78] sm:$0xff]
    %v5698 = vld [vmem:[%s7 + $0x80] sm:$0xff]
    %v5699 = vld [vmem:[%s7 + $0x88] sm:$0xff]
    %v5700 = vld [vmem:[%s7 + $0x90] sm:$0xff]
    %v5701 = vld [vmem:[%s7 + $0x98] sm:$0xff]
    %v5702 = vld [vmem:[%s7 + $0xa0] sm:$0xff]
    %v5703 = vld [vmem:[%s7 + $0xa8] sm:$0xff]
    %v5704 = vld [vmem:[%s7 + $0xb0] sm:$0xff]
    %v5705 = vld [vmem:[%s7 + $0xb8] sm:$0xff]
    %v5706 = vld [vmem:[%s7 + $0xc0] sm:$0xff]
    %v5707 = vld [vmem:[%s7 + $0xc8] sm:$0xff]
    %v5708 = vld [vmem:[%s7 + $0xd0] sm:$0xff]
    %v5709 = vld [vmem:[%s7 + $0xd8] sm:$0xff]
    %v5710 = vld [vmem:[%s7 + $0xe0] sm:$0xff]
    %v5711 = vld [vmem:[%s7 + $0xe8] sm:$0xff]
    %v5712 = vld [vmem:[%s7 + $0xf0] sm:$0xff]
    %v5713 = vld [vmem:[%s7 + $0xf8] sm:$0xff]
    %5714 = vmatprep.subr.mxu0 0.0
    %5715 = vmatpush1.msra.mxu0 %v5682
    %5716 = vmatprep.subr.mxu0 0.0
    %5717 = vmatpush1.msra.mxu0 %v5683
    %5718 = vmatprep.subr.mxu0 0.0
    %5719 = vmatpush1.msra.mxu0 %v5684
    %5720 = vmatprep.subr.mxu0 0.0
    %5721 = vmatpush1.msra.mxu0 %v5685
    %5722 = vmatprep.subr.mxu0 0.0
    %5723 = vmatpush1.msra.mxu0 %v5686
    %5724 = vmatprep.subr.mxu0 0.0
    %5725 = vmatpush1.msra.mxu0 %v5687
    %5726 = vmatprep.subr.mxu0 0.0
    %5727 = vmatpush1.msra.mxu0 %v5688
    %5728 = vmatprep.subr.mxu0 0.0
    %5729 = vmatpush1.msra.mxu0 %v5689
    %5730 = vmatprep.subr.mxu0 0.0
    %5731 = vmatpush1.msra.mxu0 %v5690
    %5732 = vmatprep.subr.mxu0 0.0
    %5733 = vmatpush1.msra.mxu0 %v5691
    %5734 = vmatprep.subr.mxu0 0.0
    %5735 = vmatpush1.msra.mxu0 %v5692
    %5736 = vmatprep.subr.mxu0 0.0
    %5737 = vmatpush1.msra.mxu0 %v5693
    %5738 = vmatprep.subr.mxu0 0.0
    %5739 = vmatpush1.msra.mxu0 %v5694
    %5740 = vmatprep.subr.mxu0 0.0
    %5741 = vmatpush1.msra.mxu0 %v5695
    %5742 = vmatprep.subr.mxu0 0.0
    %5743 = vmatpush1.msra.mxu0 %v5696
    %5744 = vmatprep.subr.mxu0 0.0
    %5745 = vmatpush1.msra.mxu0 %v5697
    %5746 = vmatprep.subr.mxu0 0.0
    %5747 = vmatpush1.msra.mxu0 %v5698
    %5748 = vmatprep.subr.mxu0 0.0
    %5749 = vmatpush1.msra.mxu0 %v5699
    %5750 = vmatprep.subr.mxu0 0.0
    %5751 = vmatpush1.msra.mxu0 %v5700
    %5752 = vmatprep.subr.mxu0 0.0
    %5753 = vmatpush1.msra.mxu0 %v5701
    %5754 = vmatprep.subr.mxu0 0.0
    %5755 = vmatpush1.msra.mxu0 %v5702
    %5756 = vmatprep.subr.mxu0 0.0
    %5757 = vmatpush1.msra.mxu0 %v5703
    %5758 = vmatprep.subr.mxu0 0.0
    %5759 = vmatpush1.msra.mxu0 %v5704
    %5760 = vmatprep.subr.mxu0 0.0
    %5761 = vmatpush1.msra.mxu0 %v5705
    %5762 = vmatprep.subr.mxu0 0.0
    %5763 = vmatpush1.msra.mxu0 %v5706
    %5764 = vmatprep.subr.mxu0 0.0
    %5765 = vmatpush1.msra.mxu0 %v5707
    %5766 = vmatprep.subr.mxu0 0.0
    %5767 = vmatpush1.msra.mxu0 %v5708
    %5768 = vmatprep.subr.mxu0 0.0
    %5769 = vmatpush1.msra.mxu0 %v5709
    %5770 = vmatprep.subr.mxu0 0.0
    %5771 = vmatpush1.msra.mxu0 %v5710
    %5772 = vmatprep.subr.mxu0 0.0
    %5773 = vmatpush1.msra.mxu0 %v5711
    %5774 = vmatprep.subr.mxu0 0.0
    %5775 = vmatpush1.msra.mxu0 %v5712
    %5776 = vmatprep.subr.mxu0 0.0
    %5777 = vmatpush1.msra.mxu0 %v5713
    %5778 = vmatprep.mubr.f32.mxu0 %v5681
    %5779 = vmatmul.mubr.f32.gmra.mrb[0].mxu0 %v5675
    %v5780 = vpop.f32.mrb[0].mxu0
    %v5781 = vadd.f32 0.0, %v5780
    %v5782 = vpop.f32.mrb[0].mxu0
    %5783 = vdwg.mxu0
    %v5784 = vmul.f32 %v5781, 0.03125
    %v5785 = vld [vmem:[#allocation13] sm:$0xff]
    %v5786 = vld [vmem:[#allocation13 + $0x8] sm:$0xff]
    %v5787 = vld [vmem:[#allocation13 + $0x10] sm:$0xff]
    %v5788 = vld [vmem:[#allocation13 + $0x18] sm:$0xff]
    %v5789 = vld [vmem:[#allocation13 + $0x20] sm:$0xff]
    %v5790 = vld [vmem:[#allocation13 + $0x28] sm:$0xff]
    %v5791 = vld [vmem:[#allocation13 + $0x30] sm:$0xff]
    %v5792 = vld [vmem:[#allocation13 + $0x38] sm:$0xff]
    %v5793 = vld [vmem:[#allocation13 + $0x40] sm:$0xff]
    %v5794 = vld [vmem:[#allocation13 + $0x48] sm:$0xff]
    %v5795 = vld [vmem:[#allocation13 + $0x50] sm:$0xff]
    %v5796 = vld [vmem:[#allocation13 + $0x58] sm:$0xff]
    %v5797 = vld [vmem:[#allocation13 + $0x60] sm:$0xff]
    %v5798 = vld [vmem:[#allocation13 + $0x68] sm:$0xff]
    %v5799 = vld [vmem:[#allocation13 + $0x70] sm:$0xff]
    %v5800 = vld [vmem:[#allocation13 + $0x78] sm:$0xff]
    %v5802 = vsel %vm265, %v5784, 0
    %5804 = vmatprep.subr.mxu0 %v5786
    %5805 = vmatpush1.msra.mxu0 %v5785
    %5806 = vmatprep.subr.mxu0 %v5788
    %5807 = vmatpush1.msra.mxu0 %v5787
    %5808 = vmatprep.subr.mxu0 %v5790
    %5809 = vmatpush1.msra.mxu0 %v5789
    %5810 = vmatprep.subr.mxu0 %v5792
    %5811 = vmatpush1.msra.mxu0 %v5791
    %5812 = vmatprep.subr.mxu0 %v5794
    %5813 = vmatpush1.msra.mxu0 %v5793
    %5814 = vmatprep.subr.mxu0 %v5796
    %5815 = vmatpush1.msra.mxu0 %v5795
    %5816 = vmatprep.subr.mxu0 %v5798
    %5817 = vmatpush1.msra.mxu0 %v5797
    %5818 = vmatprep.subr.mxu0 %v5800
    %5819 = vmatpush1.msra.mxu0 %v5799
    %5820 = vmatprep.subr.mxu0 0.0
    %5821 = vmatpush1.msra.mxu0 0.0
    %5822 = vmatprep.subr.mxu0 0.0
    %5823 = vmatpush1.msra.mxu0 0.0
    %5824 = vmatprep.subr.mxu0 0.0
    %5825 = vmatpush1.msra.mxu0 0.0
    %5826 = vmatprep.subr.mxu0 0.0
    %5827 = vmatpush1.msra.mxu0 0.0
    %5828 = vmatprep.subr.mxu0 0.0
    %5829 = vmatpush1.msra.mxu0 0.0
    %5830 = vmatprep.subr.mxu0 0.0
    %5831 = vmatpush1.msra.mxu0 0.0
    %5832 = vmatprep.subr.mxu0 0.0
    %5833 = vmatpush1.msra.mxu0 0.0
    %5834 = vmatprep.subr.mxu0 0.0
    %5835 = vmatpush1.msra.mxu0 0.0
    %5836 = vmatprep.subr.mxu0 0.0
    %5837 = vmatpush1.msra.mxu0 0.0
    %5838 = vmatprep.subr.mxu0 0.0
    %5839 = vmatpush1.msra.mxu0 0.0
    %5840 = vmatprep.subr.mxu0 0.0
    %5841 = vmatpush1.msra.mxu0 0.0
    %5842 = vmatprep.subr.mxu0 0.0
    %5843 = vmatpush1.msra.mxu0 0.0
    %5844 = vmatprep.subr.mxu0 0.0
    %5845 = vmatpush1.msra.mxu0 0.0
    %5846 = vmatprep.subr.mxu0 0.0
    %5847 = vmatpush1.msra.mxu0 0.0
    %5848 = vmatprep.subr.mxu0 0.0
    %5849 = vmatpush1.msra.mxu0 0.0
    %5850 = vmatprep.subr.mxu0 0.0
    %5851 = vmatpush1.msra.mxu0 0.0
    %5852 = vmatprep.subr.mxu0 0.0
    %5853 = vmatpush1.msra.mxu0 0.0
    %5854 = vmatprep.subr.mxu0 0.0
    %5855 = vmatpush1.msra.mxu0 0.0
    %5856 = vmatprep.subr.mxu0 0.0
    %5857 = vmatpush1.msra.mxu0 0.0
    %5858 = vmatprep.subr.mxu0 0.0
    %5859 = vmatpush1.msra.mxu0 0.0
    %5860 = vmatprep.subr.mxu0 0.0
    %5861 = vmatpush1.msra.mxu0 0.0
    %5862 = vmatprep.subr.mxu0 0.0
    %5863 = vmatpush1.msra.mxu0 0.0
    %5864 = vmatprep.subr.mxu0 0.0
    %5865 = vmatpush1.msra.mxu0 0.0
    %5866 = vmatprep.subr.mxu0 0.0
    %5867 = vmatpush1.msra.mxu0 0.0
    %5868 = vmatprep.mubr.f32.mxu0 0.0
    %5869 = vmatmul.mubr.f32.gmra.mrb[0].mxu0 %v5802
    %v5870 = vpop.f32.mrb[0].mxu0
    %v5871 = vadd.f32 0.0, %v5870
    %v5872 = vpop.f32.mrb[0].mxu0
    %v5873 = vadd.f32 0.0, %v5872
    %5874 = vdwg.mxu0
    %v5875 = vlaneseq
    %v5876 = vshrl.u32 %v5875, 7
    %v5877 = vsub.s32 0, %v5876
    %v5878 = vrot.slane %v5871, %v5877
    %v5879 = vlaneseq
    %v5880 = vshrl.u32 %v5879, 7
    %v5881 = vsub.s32 0, %v5880
    %v5882 = vrot.slane %v5873, %v5881
    %v5883 = vsub.f32 %v5668, %v5878
    %v5884 = vsub.f32 %v5669, %v5882
    %v5885 = vmul.f32 %v5883, %v5883
    %v5886 = vmul.f32 %v5884, %v5884
    %v5887 = vrot.slane %v5885, 4
    %v5888 = vadd.f32 %v5885, %v5887
    %v5889 = vrot.slane %v5888, 2
    %v5890 = vadd.f32 %v5888, %v5889
    %v5891 = vrot.slane %v5890, 1
    %v5892 = vadd.f32 %v5890, %v5891
    %v5893 = vrot.slane %v5886, 4
    %v5894 = vadd.f32 %v5886, %v5893
    %v5895 = vrot.slane %v5894, 2
    %v5896 = vadd.f32 %v5894, %v5895
    %v5897 = vrot.slane %v5896, 1
    %v5898 = vadd.f32 %v5896, %v5897
    %5899 = vmatprep.subr.mxu0 0.0
    %5900 = vmatpush1.msra.mxu0 %v5682
    %5901 = vmatprep.subr.mxu0 0.0
    %5902 = vmatpush1.msra.mxu0 %v5683
    %5903 = vmatprep.subr.mxu0 0.0
    %5904 = vmatpush1.msra.mxu0 %v5684
    %5905 = vmatprep.subr.mxu0 0.0
    %5906 = vmatpush1.msra.mxu0 %v5685
    %5907 = vmatprep.subr.mxu0 0.0
    %5908 = vmatpush1.msra.mxu0 %v5686
    %5909 = vmatprep.subr.mxu0 0.0
    %5910 = vmatpush1.msra.mxu0 %v5687
    %5911 = vmatprep.subr.mxu0 0.0
    %5912 = vmatpush1.msra.mxu0 %v5688
    %5913 = vmatprep.subr.mxu0 0.0
    %5914 = vmatpush1.msra.mxu0 %v5689
    %5915 = vmatprep.subr.mxu0 0.0
    %5916 = vmatpush1.msra.mxu0 %v5690
    %5917 = vmatprep.subr.mxu0 0.0
    %5918 = vmatpush1.msra.mxu0 %v5691
    %5919 = vmatprep.subr.mxu0 0.0
    %5920 = vmatpush1.msra.mxu0 %v5692
    %5921 = vmatprep.subr.mxu0 0.0
    %5922 = vmatpush1.msra.mxu0 %v5693
    %5923 = vmatprep.subr.mxu0 0.0
    %5924 = vmatpush1.msra.mxu0 %v5694
    %5925 = vmatprep.subr.mxu0 0.0
    %5926 = vmatpush1.msra.mxu0 %v5695
    %5927 = vmatprep.subr.mxu0 0.0
    %5928 = vmatpush1.msra.mxu0 %v5696
    %5929 = vmatprep.subr.mxu0 0.0
    %5930 = vmatpush1.msra.mxu0 %v5697
    %5931 = vmatprep.subr.mxu0 0.0
    %5932 = vmatpush1.msra.mxu0 %v5698
    %5933 = vmatprep.subr.mxu0 0.0
    %5934 = vmatpush1.msra.mxu0 %v5699
    %5935 = vmatprep.subr.mxu0 0.0
    %5936 = vmatpush1.msra.mxu0 %v5700
    %5937 = vmatprep.subr.mxu0 0.0
    %5938 = vmatpush1.msra.mxu0 %v5701
    %5939 = vmatprep.subr.mxu0 0.0
    %5940 = vmatpush1.msra.mxu0 %v5702
    %5941 = vmatprep.subr.mxu0 0.0
    %5942 = vmatpush1.msra.mxu0 %v5703
    %5943 = vmatprep.subr.mxu0 0.0
    %5944 = vmatpush1.msra.mxu0 %v5704
    %5945 = vmatprep.subr.mxu0 0.0
    %5946 = vmatpush1.msra.mxu0 %v5705
    %5947 = vmatprep.subr.mxu0 0.0
    %5948 = vmatpush1.msra.mxu0 %v5706
    %5949 = vmatprep.subr.mxu0 0.0
    %5950 = vmatpush1.msra.mxu0 %v5707
    %5951 = vmatprep.subr.mxu0 0.0
    %5952 = vmatpush1.msra.mxu0 %v5708
    %5953 = vmatprep.subr.mxu0 0.0
    %5954 = vmatpush1.msra.mxu0 %v5709
    %5955 = vmatprep.subr.mxu0 0.0
    %5956 = vmatpush1.msra.mxu0 %v5710
    %5957 = vmatprep.subr.mxu0 0.0
    %5958 = vmatpush1.msra.mxu0 %v5711
    %5959 = vmatprep.subr.mxu0 0.0
    %5960 = vmatpush1.msra.mxu0 %v5712
    %5961 = vmatprep.subr.mxu0 0.0
    %5962 = vmatpush1.msra.mxu0 %v5713
    %5963 = vmatprep.mubr.f32.mxu0 %v5898
    %5964 = vmatmul.mubr.f32.gmra.mrb[0].mxu0 %v5892
    %v5965 = vpop.f32.mrb[0].mxu0
    %v5966 = vadd.f32 0.0, %v5965
    %v5967 = vpop.f32.mrb[0].mxu0
    %5968 = vdwg.mxu0
    %v5969 = vmul.f32 %v5966, 0.03125
    %v5970 = vld [vmem:[#allocation14] sm:$0x1]
    %v5971 = vadd.f32 %v5969, 1e-05
    %v5972 = vrsqrt.pop %v5971
    %v5973 = vmul.f32 %v5970, %v5972
    %v5974 = vld [vmem:[#allocation16] sm:$0x1]
    %v5975 = vmul.f32 %v5784, %v5973
    %v5976 = vsub.f32 %v5974, %v5975
    %v5978 = vsel %vm265, %v5973, 0
    %5980 = vmatprep.subr.mxu0 %v5786
    %5981 = vmatpush1.msra.mxu0 %v5785
    %5982 = vmatprep.subr.mxu0 %v5788
    %5983 = vmatpush1.msra.mxu0 %v5787
    %5984 = vmatprep.subr.mxu0 %v5790
    %5985 = vmatpush1.msra.mxu0 %v5789
    %5986 = vmatprep.subr.mxu0 %v5792
    %5987 = vmatpush1.msra.mxu0 %v5791
    %5988 = vmatprep.subr.mxu0 %v5794
    %5989 = vmatpush1.msra.mxu0 %v5793
    %5990 = vmatprep.subr.mxu0 %v5796
    %5991 = vmatpush1.msra.mxu0 %v5795
    %5992 = vmatprep.subr.mxu0 %v5798
    %5993 = vmatpush1.msra.mxu0 %v5797
    %5994 = vmatprep.subr.mxu0 %v5800
    %5995 = vmatpush1.msra.mxu0 %v5799
    %5996 = vmatprep.subr.mxu0 0.0
    %5997 = vmatpush1.msra.mxu0 0.0
    %5998 = vmatprep.subr.mxu0 0.0
    %5999 = vmatpush1.msra.mxu0 0.0
    %6000 = vmatprep.subr.mxu0 0.0
    %6001 = vmatpush1.msra.mxu0 0.0
    %6002 = vmatprep.subr.mxu0 0.0
    %6003 = vmatpush1.msra.mxu0 0.0
    %6004 = vmatprep.subr.mxu0 0.0
    %6005 = vmatpush1.msra.mxu0 0.0
    %6006 = vmatprep.subr.mxu0 0.0
    %6007 = vmatpush1.msra.mxu0 0.0
    %6008 = vmatprep.subr.mxu0 0.0
    %6009 = vmatpush1.msra.mxu0 0.0
    %6010 = vmatprep.subr.mxu0 0.0
    %6011 = vmatpush1.msra.mxu0 0.0
    %6012 = vmatprep.subr.mxu0 0.0
    %6013 = vmatpush1.msra.mxu0 0.0
    %6014 = vmatprep.subr.mxu0 0.0
    %6015 = vmatpush1.msra.mxu0 0.0
    %6016 = vmatprep.subr.mxu0 0.0
    %6017 = vmatpush1.msra.mxu0 0.0
    %6018 = vmatprep.subr.mxu0 0.0
    %6019 = vmatpush1.msra.mxu0 0.0
    %6020 = vmatprep.subr.mxu0 0.0
    %6021 = vmatpush1.msra.mxu0 0.0
    %6022 = vmatprep.subr.mxu0 0.0
    %6023 = vmatpush1.msra.mxu0 0.0
    %6024 = vmatprep.subr.mxu0 0.0
    %6025 = vmatpush1.msra.mxu0 0.0
    %6026 = vmatprep.subr.mxu0 0.0
    %6027 = vmatpush1.msra.mxu0 0.0
    %6028 = vmatprep.subr.mxu0 0.0
    %6029 = vmatpush1.msra.mxu0 0.0
    %6030 = vmatprep.subr.mxu0 0.0
    %6031 = vmatpush1.msra.mxu0 0.0
    %6032 = vmatprep.subr.mxu0 0.0
    %6033 = vmatpush1.msra.mxu0 0.0
    %6034 = vmatprep.subr.mxu0 0.0
    %6035 = vmatpush1.msra.mxu0 0.0
    %6036 = vmatprep.subr.mxu0 0.0
    %6037 = vmatpush1.msra.mxu0 0.0
    %6038 = vmatprep.subr.mxu0 0.0
    %6039 = vmatpush1.msra.mxu0 0.0
    %6040 = vmatprep.subr.mxu0 0.0
    %6041 = vmatpush1.msra.mxu0 0.0
    %6042 = vmatprep.subr.mxu0 0.0
    %6043 = vmatpush1.msra.mxu0 0.0
    %6044 = vmatprep.mubr.f32.mxu0 0.0
    %6045 = vmatmul.mubr.f32.gmra.mrb[0].mxu0 %v5978
    %v6046 = vpop.f32.mrb[0].mxu0
    %v6047 = vadd.f32 0.0, %v6046
    %v6048 = vpop.f32.mrb[0].mxu0
    %v6049 = vadd.f32 0.0, %v6048
    %6050 = vdwg.mxu0
    %v6051 = vlaneseq
    %v6052 = vshrl.u32 %v6051, 7
    %v6053 = vsub.s32 0, %v6052
    %v6054 = vrot.slane %v6047, %v6053
    %v6055 = vlaneseq
    %v6056 = vshrl.u32 %v6055, 7
    %v6057 = vsub.s32 0, %v6056
    %v6058 = vrot.slane %v6049, %v6057
    %v6059 = vmul.f32 %v5668, %v6054
    %v6060 = vmul.f32 %v5669, %v6058
    %v6062 = vsel %vm265, %v5976, 0
    %6064 = vmatprep.subr.mxu0 %v5786
    %6065 = vmatpush1.msra.mxu0 %v5785
    %6066 = vmatprep.subr.mxu0 %v5788
    %6067 = vmatpush1.msra.mxu0 %v5787
    %6068 = vmatprep.subr.mxu0 %v5790
    %6069 = vmatpush1.msra.mxu0 %v5789
    %6070 = vmatprep.subr.mxu0 %v5792
    %6071 = vmatpush1.msra.mxu0 %v5791
    %6072 = vmatprep.subr.mxu0 %v5794
    %6073 = vmatpush1.msra.mxu0 %v5793
    %6074 = vmatprep.subr.mxu0 %v5796
    %6075 = vmatpush1.msra.mxu0 %v5795
    %6076 = vmatprep.subr.mxu0 %v5798
    %6077 = vmatpush1.msra.mxu0 %v5797
    %6078 = vmatprep.subr.mxu0 %v5800
    %6079 = vmatpush1.msra.mxu0 %v5799
    %6080 = vmatprep.subr.mxu0 0.0
    %6081 = vmatpush1.msra.mxu0 0.0
    %6082 = vmatprep.subr.mxu0 0.0
    %6083 = vmatpush1.msra.mxu0 0.0
    %6084 = vmatprep.subr.mxu0 0.0
    %6085 = vmatpush1.msra.mxu0 0.0
    %6086 = vmatprep.subr.mxu0 0.0
    %6087 = vmatpush1.msra.mxu0 0.0
    %6088 = vmatprep.subr.mxu0 0.0
    %6089 = vmatpush1.msra.mxu0 0.0
    %6090 = vmatprep.subr.mxu0 0.0
    %6091 = vmatpush1.msra.mxu0 0.0
    %6092 = vmatprep.subr.mxu0 0.0
    %6093 = vmatpush1.msra.mxu0 0.0
    %6094 = vmatprep.subr.mxu0 0.0
    %6095 = vmatpush1.msra.mxu0 0.0
    %6096 = vmatprep.subr.mxu0 0.0
    %6097 = vmatpush1.msra.mxu0 0.0
    %6098 = vmatprep.subr.mxu0 0.0
    %6099 = vmatpush1.msra.mxu0 0.0
    %6100 = vmatprep.subr.mxu0 0.0
    %6101 = vmatpush1.msra.mxu0 0.0
    %6102 = vmatprep.subr.mxu0 0.0
    %6103 = vmatpush1.msra.mxu0 0.0
    %6104 = vmatprep.subr.mxu0 0.0
    %6105 = vmatpush1.msra.mxu0 0.0
    %6106 = vmatprep.subr.mxu0 0.0
    %6107 = vmatpush1.msra.mxu0 0.0
    %6108 = vmatprep.subr.mxu0 0.0
    %6109 = vmatpush1.msra.mxu0 0.0
    %6110 = vmatprep.subr.mxu0 0.0
    %6111 = vmatpush1.msra.mxu0 0.0
    %6112 = vmatprep.subr.mxu0 0.0
    %6113 = vmatpush1.msra.mxu0 0.0
    %6114 = vmatprep.subr.mxu0 0.0
    %6115 = vmatpush1.msra.mxu0 0.0
    %6116 = vmatprep.subr.mxu0 0.0
    %6117 = vmatpush1.msra.mxu0 0.0
    %6118 = vmatprep.subr.mxu0 0.0
    %6119 = vmatpush1.msra.mxu0 0.0
    %6120 = vmatprep.subr.mxu0 0.0
    %6121 = vmatpush1.msra.mxu0 0.0
    %6122 = vmatprep.subr.mxu0 0.0
    %6123 = vmatpush1.msra.mxu0 0.0
    %6124 = vmatprep.subr.mxu0 0.0
    %6125 = vmatpush1.msra.mxu0 0.0
    %6126 = vmatprep.subr.mxu0 0.0
    %6127 = vmatpush1.msra.mxu0 0.0
    %6128 = vmatprep.mubr.f32.mxu0 0.0
    %6129 = vmatmul.mubr.f32.gmra.mrb[0].mxu0 %v6062
    %v6130 = vpop.f32.mrb[0].mxu0
    %v6131 = vadd.f32 0.0, %v6130
    %v6132 = vpop.f32.mrb[0].mxu0
    %v6133 = vadd.f32 0.0, %v6132
    %6134 = vdwg.mxu0
    %v6135 = vlaneseq
    %v6136 = vshrl.u32 %v6135, 7
    %v6137 = vsub.s32 0, %v6136
    %v6138 = vrot.slane %v6131, %v6137
    %v6139 = vlaneseq
    %v6140 = vshrl.u32 %v6139, 7
    %v6141 = vsub.s32 0, %v6140
    %v6142 = vrot.slane %v6133, %v6141
    %v6143 = vadd.f32 %v6059, %v6138
    %v6144 = vadd.f32 %v6060, %v6142
    %vm6145 = vcmp.ge.f32.partialorder %v6143, 0.0
    %vm6146 = vcmp.ge.f32.partialorder %v6144, 0.0
    %v6147 = vmul.f32 %v6143, 0.2
    %v6148 = vmul.f32 %v6144, 0.2
    %v6149 = vsel %vm6145, %v6143, %v6147
    %v6150 = vsel %vm6146, %v6144, %v6148
    %v6151 = vpack.c.bf16 %v6149, %v6149
    %v6152 = vpack.c.bf16 %v6150, %v6150
    %v6153 = vld [vmem:[#allocation20] sm:$0x3]
    %v6154 = vld [vmem:[#allocation17] sm:$0x1]
    %vm6155 = vcmask 64512
    %v6157 = vsel %vm6155, %v6154, 0
    %vm6159 = vcmask 1043456
    %v6161 = vsel %vm6159, %v6151, 0
    %v6164 = vsel %vm6159, %v6152, 0
    %6166 = vmatprep.subr.bf16.mxu0 %v6164
    %6167 = vmatpush1.bf16.msra.mxu0 %v6161
    %6168 = vmatprep.subr.bf16.mxu0 0
    %6169 = vmatpush1.bf16.msra.mxu0 0
    %6170 = vmatprep.subr.bf16.mxu0 0
    %6171 = vmatpush1.bf16.msra.mxu0 0
    %6172 = vmatprep.subr.bf16.mxu0 0
    %6173 = vmatpush1.bf16.msra.mxu0 0
    %6174 = vmatprep.subr.bf16.mxu0 0
    %6175 = vmatpush1.bf16.msra.mxu0 0
    %6176 = vmatprep.subr.bf16.mxu0 0
    %6177 = vmatpush1.bf16.msra.mxu0 0
    %6178 = vmatprep.subr.bf16.mxu0 0
    %6179 = vmatpush1.bf16.msra.mxu0 0
    %6180 = vmatprep.subr.bf16.mxu0 0
    %6181 = vmatpush1.bf16.msra.mxu0 0
    %6182 = vmatprep.subr.bf16.mxu0 0
    %6183 = vmatpush1.bf16.msra.mxu0 0
    %6184 = vmatprep.subr.bf16.mxu0 0
    %6185 = vmatpush1.bf16.msra.mxu0 0
    %6186 = vmatprep.subr.bf16.mxu0 0
    %6187 = vmatpush1.bf16.msra.mxu0 0
    %6188 = vmatprep.subr.bf16.mxu0 0
    %6189 = vmatpush1.bf16.msra.mxu0 0
    %6190 = vmatprep.subr.bf16.mxu0 0
    %6191 = vmatpush1.bf16.msra.mxu0 0
    %6192 = vmatprep.subr.bf16.mxu0 0
    %6193 = vmatpush1.bf16.msra.mxu0 0
    %6194 = vmatprep.subr.bf16.mxu0 0
    %6195 = vmatpush1.bf16.msra.mxu0 0
    %6196 = vmatprep.subr.bf16.mxu0 0
    %6197 = vmatpush1.bf16.msra.mxu0 0
    %6198 = vmatprep.mubr.bf16.mxu0 0
    %6199 = vmatmul.mubr.bf16.gmra.mrb[0].mxu0 %v6157
    %v6200 = vpop.f32.mrb[0].mxu0
    %v6201 = vadd.f32 0.0, %v6200
    %v6202 = vpop.f32.mrb[0].mxu0
    %v6203 = vadd.f32 0.0, %v6202
    %v6204 = vpop.f32.mrb[0].mxu0
    %v6205 = vpop.f32.mrb[0].mxu0
    %6206 = vdwg.mxu0
    %v6207 = vpack.c.bf16 %v6201, %v6201
    %v6208 = vpack.c.bf16 %v6203, %v6203
    %v6209 = vld [vmem:[#allocation19] sm:$0xff]
    %v6210 = vld [vmem:[#allocation19 + $0x8] sm:$0xff]
    %v6211 = vld [vmem:[#allocation19 + $0x10] sm:$0xff]
    %v6212 = vld [vmem:[#allocation19 + $0x18] sm:$0xff]
    %v6213 = vld [vmem:[#allocation19 + $0x20] sm:$0xff]
    %v6214 = vld [vmem:[#allocation19 + $0x28] sm:$0xff]
    %v6215 = vld [vmem:[#allocation19 + $0x30] sm:$0xff]
    %v6216 = vld [vmem:[#allocation19 + $0x38] sm:$0xff]
    %v6217 = vld [vmem:[#allocation19 + $0x40] sm:$0xff]
    %v6218 = vld [vmem:[#allocation19 + $0x48] sm:$0xff]
    %v6219 = vld [vmem:[#allocation19 + $0x50] sm:$0xff]
    %v6220 = vld [vmem:[#allocation19 + $0x58] sm:$0xff]
    %v6221 = vld [vmem:[#allocation19 + $0x60] sm:$0xff]
    %v6222 = vld [vmem:[#allocation19 + $0x68] sm:$0xff]
    %v6223 = vld [vmem:[#allocation19 + $0x70] sm:$0xff]
    %v6224 = vld [vmem:[#allocation19 + $0x78] sm:$0xff]
    %v6225 = vld [vmem:[#allocation19 + $0x80] sm:$0xff]
    %v6226 = vld [vmem:[#allocation19 + $0x88] sm:$0xff]
    %v6227 = vld [vmem:[#allocation19 + $0x90] sm:$0xff]
    %v6228 = vld [vmem:[#allocation19 + $0x98] sm:$0xff]
    %v6229 = vld [vmem:[#allocation19 + $0xa0] sm:$0xff]
    %v6230 = vld [vmem:[#allocation19 + $0xa8] sm:$0xff]
    %v6231 = vld [vmem:[#allocation19 + $0xb0] sm:$0xff]
    %v6232 = vld [vmem:[#allocation19 + $0xb8] sm:$0xff]
    %v6233 = vld [vmem:[#allocation19 + $0xc0] sm:$0xff]
    %v6234 = vld [vmem:[#allocation19 + $0xc8] sm:$0xff]
    %v6235 = vld [vmem:[#allocation19 + $0xd0] sm:$0xff]
    %v6236 = vld [vmem:[#allocation19 + $0xd8] sm:$0xff]
    %v6237 = vld [vmem:[#allocation19 + $0xe0] sm:$0xff]
    %v6238 = vld [vmem:[#allocation19 + $0xe8] sm:$0xff]
    %v6239 = vld [vmem:[#allocation19 + $0xf0] sm:$0xff]
    %v6240 = vld [vmem:[#allocation19 + $0xf8] sm:$0xff]
    %s6241 = scalar_lea.vmem [#allocation17], 1
    %v6242 = vld [vmem:[%s6241] sm:$0x1]
    %v6244 = vsel %vm6155, %v6242, 0
    %6246 = vmatprep.subr.bf16.mxu0 %v6164
    %6247 = vmatpush1.bf16.msra.mxu0 %v6161
    %6248 = vmatprep.subr.bf16.mxu0 0
    %6249 = vmatpush1.bf16.msra.mxu0 0
    %6250 = vmatprep.subr.bf16.mxu0 0
    %6251 = vmatpush1.bf16.msra.mxu0 0
    %6252 = vmatprep.subr.bf16.mxu0 0
    %6253 = vmatpush1.bf16.msra.mxu0 0
    %6254 = vmatprep.subr.bf16.mxu0 0
    %6255 = vmatpush1.bf16.msra.mxu0 0
    %6256 = vmatprep.subr.bf16.mxu0 0
    %6257 = vmatpush1.bf16.msra.mxu0 0
    %6258 = vmatprep.subr.bf16.mxu0 0
    %6259 = vmatpush1.bf16.msra.mxu0 0
    %6260 = vmatprep.subr.bf16.mxu0 0
    %6261 = vmatpush1.bf16.msra.mxu0 0
    %6262 = vmatprep.subr.bf16.mxu0 0
    %6263 = vmatpush1.bf16.msra.mxu0 0
    %6264 = vmatprep.subr.bf16.mxu0 0
    %6265 = vmatpush1.bf16.msra.mxu0 0
    %6266 = vmatprep.subr.bf16.mxu0 0
    %6267 = vmatpush1.bf16.msra.mxu0 0
    %6268 = vmatprep.subr.bf16.mxu0 0
    %6269 = vmatpush1.bf16.msra.mxu0 0
    %6270 = vmatprep.subr.bf16.mxu0 0
    %6271 = vmatpush1.bf16.msra.mxu0 0
    %6272 = vmatprep.subr.bf16.mxu0 0
    %6273 = vmatpush1.bf16.msra.mxu0 0
    %6274 = vmatprep.subr.bf16.mxu0 0
    %6275 = vmatpush1.bf16.msra.mxu0 0
    %6276 = vmatprep.subr.bf16.mxu0 0
    %6277 = vmatpush1.bf16.msra.mxu0 0
    %6278 = vmatprep.mubr.bf16.mxu0 0
    %6279 = vmatmul.mubr.bf16.gmra.mrb[0].mxu0 %v6244
    %v6280 = vpop.f32.mrb[0].mxu0
    %v6281 = vadd.f32 0.0, %v6280
    %v6282 = vpop.f32.mrb[0].mxu0
    %v6283 = vadd.f32 0.0, %v6282
    %v6284 = vpop.f32.mrb[0].mxu0
    %v6285 = vpop.f32.mrb[0].mxu0
    %6286 = vdwg.mxu0
    %v6287 = vpack.c.bf16 %v6281, %v6281
    %v6288 = vpack.c.bf16 %v6283, %v6283
    %s6289 = scalar_lea.vmem [#allocation19], 256
    %v6290 = vld [vmem:[%s6289] sm:$0xff]
    %v6291 = vld [vmem:[%s6289 + $0x8] sm:$0xff]
    %v6292 = vld [vmem:[%s6289 + $0x10] sm:$0xff]
    %v6293 = vld [vmem:[%s6289 + $0x18] sm:$0xff]
    %v6294 = vld [vmem:[%s6289 + $0x20] sm:$0xff]
    %v6295 = vld [vmem:[%s6289 + $0x28] sm:$0xff]
    %v6296 = vld [vmem:[%s6289 + $0x30] sm:$0xff]
    %v6297 = vld [vmem:[%s6289 + $0x38] sm:$0xff]
    %v6298 = vld [vmem:[%s6289 + $0x40] sm:$0xff]
    %v6299 = vld [vmem:[%s6289 + $0x48] sm:$0xff]
    %v6300 = vld [vmem:[%s6289 + $0x50] sm:$0xff]
    %v6301 = vld [vmem:[%s6289 + $0x58] sm:$0xff]
    %v6302 = vld [vmem:[%s6289 + $0x60] sm:$0xff]
    %v6303 = vld [vmem:[%s6289 + $0x68] sm:$0xff]
    %v6304 = vld [vmem:[%s6289 + $0x70] sm:$0xff]
    %v6305 = vld [vmem:[%s6289 + $0x78] sm:$0xff]
    %v6306 = vld [vmem:[%s6289 + $0x80] sm:$0xff]
    %v6307 = vld [vmem:[%s6289 + $0x88] sm:$0xff]
    %v6308 = vld [vmem:[%s6289 + $0x90] sm:$0xff]
    %v6309 = vld [vmem:[%s6289 + $0x98] sm:$0xff]
    %v6310 = vld [vmem:[%s6289 + $0xa0] sm:$0xff]
    %v6311 = vld [vmem:[%s6289 + $0xa8] sm:$0xff]
    %v6312 = vld [vmem:[%s6289 + $0xb0] sm:$0xff]
    %v6313 = vld [vmem:[%s6289 + $0xb8] sm:$0xff]
    %v6314 = vld [vmem:[%s6289 + $0xc0] sm:$0xff]
    %v6315 = vld [vmem:[%s6289 + $0xc8] sm:$0xff]
    %v6316 = vld [vmem:[%s6289 + $0xd0] sm:$0xff]
    %v6317 = vld [vmem:[%s6289 + $0xd8] sm:$0xff]
    %v6318 = vld [vmem:[%s6289 + $0xe0] sm:$0xff]
    %v6319 = vld [vmem:[%s6289 + $0xe8] sm:$0xff]
    %v6320 = vld [vmem:[%s6289 + $0xf0] sm:$0xff]
    %v6321 = vld [vmem:[%s6289 + $0xf8] sm:$0xff]
    %v6354 = vunpack.c.l.b16 %v6290
    %v6355 = vunpack.c.h.b16 %v6290
    %v6356 = vunpack.c.l.b16 %v6291
    %v6357 = vunpack.c.h.b16 %v6291
    %v6358 = vunpack.c.l.b16 %v6292
    %v6359 = vunpack.c.h.b16 %v6292
    %v6360 = vunpack.c.l.b16 %v6293
    %v6361 = vunpack.c.h.b16 %v6293
    %v6362 = vunpack.c.l.b16 %v6294
    %v6363 = vunpack.c.h.b16 %v6294
    %v6364 = vunpack.c.l.b16 %v6295
    %v6365 = vunpack.c.h.b16 %v6295
    %v6366 = vunpack.c.l.b16 %v6296
    %v6367 = vunpack.c.h.b16 %v6296
    %v6368 = vunpack.c.l.b16 %v6297
    %v6369 = vunpack.c.h.b16 %v6297
    %v6370 = vunpack.c.l.b16 %v6298
    %v6371 = vunpack.c.h.b16 %v6298
    %v6372 = vunpack.c.l.b16 %v6299
    %v6373 = vunpack.c.h.b16 %v6299
    %v6374 = vunpack.c.l.b16 %v6300
    %v6375 = vunpack.c.h.b16 %v6300
    %v6376 = vunpack.c.l.b16 %v6301
    %v6377 = vunpack.c.h.b16 %v6301
    %v6378 = vunpack.c.l.b16 %v6302
    %v6379 = vunpack.c.h.b16 %v6302
    %v6380 = vunpack.c.l.b16 %v6303
    %v6381 = vunpack.c.h.b16 %v6303
    %v6382 = vunpack.c.l.b16 %v6304
    %v6383 = vunpack.c.h.b16 %v6304
    %v6384 = vunpack.c.l.b16 %v6305
    %v6385 = vunpack.c.h.b16 %v6305
    %v6386 = vunpack.c.l.b16 %v6306
    %v6387 = vunpack.c.h.b16 %v6306
    %v6388 = vunpack.c.l.b16 %v6307
    %v6389 = vunpack.c.h.b16 %v6307
    %v6390 = vunpack.c.l.b16 %v6308
    %v6391 = vunpack.c.h.b16 %v6308
    %v6392 = vunpack.c.l.b16 %v6309
    %v6393 = vunpack.c.h.b16 %v6309
    %v6394 = vunpack.c.l.b16 %v6310
    %v6395 = vunpack.c.h.b16 %v6310
    %v6396 = vunpack.c.l.b16 %v6311
    %v6397 = vunpack.c.h.b16 %v6311
    %v6398 = vunpack.c.l.b16 %v6312
    %v6399 = vunpack.c.h.b16 %v6312
    %v6400 = vunpack.c.l.b16 %v6313
    %v6401 = vunpack.c.h.b16 %v6313
    %v6402 = vunpack.c.l.b16 %v6314
    %v6403 = vunpack.c.h.b16 %v6314
    %v6404 = vunpack.c.l.b16 %v6315
    %v6405 = vunpack.c.h.b16 %v6315
    %v6406 = vunpack.c.l.b16 %v6316
    %v6407 = vunpack.c.h.b16 %v6316
    %v6408 = vunpack.c.l.b16 %v6317
    %v6409 = vunpack.c.h.b16 %v6317
    %v6410 = vunpack.c.l.b16 %v6318
    %v6411 = vunpack.c.h.b16 %v6318
    %v6412 = vunpack.c.l.b16 %v6319
    %v6413 = vunpack.c.h.b16 %v6319
    %v6414 = vunpack.c.l.b16 %v6320
    %v6415 = vunpack.c.h.b16 %v6320
    %v6416 = vunpack.c.l.b16 %v6321
    %v6417 = vunpack.c.h.b16 %v6321
    %v6418 = vpack.c.b16 %v6356, %v6354
    %v6419 = vpack.c.b16 %v6357, %v6355
    %v6420 = vpack.c.b16 %v6360, %v6358
    %v6421 = vpack.c.b16 %v6361, %v6359
    %v6422 = vpack.c.b16 %v6364, %v6362
    %v6423 = vpack.c.b16 %v6365, %v6363
    %v6424 = vpack.c.b16 %v6368, %v6366
    %v6425 = vpack.c.b16 %v6369, %v6367
    %v6426 = vpack.c.b16 %v6372, %v6370
    %v6427 = vpack.c.b16 %v6373, %v6371
    %v6428 = vpack.c.b16 %v6376, %v6374
    %v6429 = vpack.c.b16 %v6377, %v6375
    %v6430 = vpack.c.b16 %v6380, %v6378
    %v6431 = vpack.c.b16 %v6381, %v6379
    %v6432 = vpack.c.b16 %v6384, %v6382
    %v6433 = vpack.c.b16 %v6385, %v6383
    %v6434 = vpack.c.b16 %v6388, %v6386
    %v6435 = vpack.c.b16 %v6389, %v6387
    %v6436 = vpack.c.b16 %v6392, %v6390
    %v6437 = vpack.c.b16 %v6393, %v6391
    %v6438 = vpack.c.b16 %v6396, %v6394
    %v6439 = vpack.c.b16 %v6397, %v6395
    %v6440 = vpack.c.b16 %v6400, %v6398
    %v6441 = vpack.c.b16 %v6401, %v6399
    %v6442 = vpack.c.b16 %v6404, %v6402
    %v6443 = vpack.c.b16 %v6405, %v6403
    %v6444 = vpack.c.b16 %v6408, %v6406
    %v6445 = vpack.c.b16 %v6409, %v6407
    %v6446 = vpack.c.b16 %v6412, %v6410
    %v6447 = vpack.c.b16 %v6413, %v6411
    %v6448 = vpack.c.b16 %v6416, %v6414
    %v6449 = vpack.c.b16 %v6417, %v6415
    %6482 = vmatprep.subr.bf16.mxu0 %v6419
    %6483 = vmatpush1.bf16.msra.mxu0 %v6418
    %6484 = vmatprep.subr.bf16.mxu0 %v6421
    %6485 = vmatpush1.bf16.msra.mxu0 %v6420
    %6486 = vmatprep.subr.bf16.mxu0 %v6423
    %6487 = vmatpush1.bf16.msra.mxu0 %v6422
    %6488 = vmatprep.subr.bf16.mxu0 %v6425
    %6489 = vmatpush1.bf16.msra.mxu0 %v6424
    %6490 = vmatprep.subr.bf16.mxu0 %v6427
    %6491 = vmatpush1.bf16.msra.mxu0 %v6426
    %6492 = vmatprep.subr.bf16.mxu0 %v6429
    %6493 = vmatpush1.bf16.msra.mxu0 %v6428
    %6494 = vmatprep.subr.bf16.mxu0 %v6431
    %6495 = vmatpush1.bf16.msra.mxu0 %v6430
    %6496 = vmatprep.subr.bf16.mxu0 %v6433
    %6497 = vmatpush1.bf16.msra.mxu0 %v6432
    %6498 = vmatprep.subr.bf16.mxu0 %v6435
    %6499 = vmatpush1.bf16.msra.mxu0 %v6434
    %6500 = vmatprep.subr.bf16.mxu0 %v6437
    %6501 = vmatpush1.bf16.msra.mxu0 %v6436
    %6502 = vmatprep.subr.bf16.mxu0 %v6439
    %6503 = vmatpush1.bf16.msra.mxu0 %v6438
    %6504 = vmatprep.subr.bf16.mxu0 %v6441
    %6505 = vmatpush1.bf16.msra.mxu0 %v6440
    %6506 = vmatprep.subr.bf16.mxu0 %v6443
    %6507 = vmatpush1.bf16.msra.mxu0 %v6442
    %6508 = vmatprep.subr.bf16.mxu0 %v6445
    %6509 = vmatpush1.bf16.msra.mxu0 %v6444
    %6510 = vmatprep.subr.bf16.mxu0 %v6447
    %6511 = vmatpush1.bf16.msra.mxu0 %v6446
    %6512 = vmatprep.subr.bf16.mxu0 %v6449
    %6513 = vmatpush1.bf16.msra.mxu0 %v6448
    %6514 = vmatprep.mubr.bf16.mxu0 %v6288
    %6515 = vmatmul.mubr.bf16.gmra.mrb[0].mxu0 %v6287
    %v6516 = vpop.f32.mrb[0].mxu0
    %v6517 = vadd.f32 0.0, %v6516
    %v6518 = vpop.f32.mrb[0].mxu0
    %v6519 = vadd.f32 0.0, %v6518
    %v6520 = vpop.f32.mrb[0].mxu0
    %v6521 = vpop.f32.mrb[0].mxu0
    %6522 = vdwg.mxu0
    %v6555 = vunpack.c.l.b16 %v6209
    %v6556 = vunpack.c.h.b16 %v6209
    %v6557 = vunpack.c.l.b16 %v6210
    %v6558 = vunpack.c.h.b16 %v6210
    %v6559 = vunpack.c.l.b16 %v6211
    %v6560 = vunpack.c.h.b16 %v6211
    %v6561 = vunpack.c.l.b16 %v6212
    %v6562 = vunpack.c.h.b16 %v6212
    %v6563 = vunpack.c.l.b16 %v6213
    %v6564 = vunpack.c.h.b16 %v6213
    %v6565 = vunpack.c.l.b16 %v6214
    %v6566 = vunpack.c.h.b16 %v6214
    %v6567 = vunpack.c.l.b16 %v6215
    %v6568 = vunpack.c.h.b16 %v6215
    %v6569 = vunpack.c.l.b16 %v6216
    %v6570 = vunpack.c.h.b16 %v6216
    %v6571 = vunpack.c.l.b16 %v6217
    %v6572 = vunpack.c.h.b16 %v6217
    %v6573 = vunpack.c.l.b16 %v6218
    %v6574 = vunpack.c.h.b16 %v6218
    %v6575 = vunpack.c.l.b16 %v6219
    %v6576 = vunpack.c.h.b16 %v6219
    %v6577 = vunpack.c.l.b16 %v6220
    %v6578 = vunpack.c.h.b16 %v6220
    %v6579 = vunpack.c.l.b16 %v6221
    %v6580 = vunpack.c.h.b16 %v6221
    %v6581 = vunpack.c.l.b16 %v6222
    %v6582 = vunpack.c.h.b16 %v6222
    %v6583 = vunpack.c.l.b16 %v6223
    %v6584 = vunpack.c.h.b16 %v6223
    %v6585 = vunpack.c.l.b16 %v6224
    %v6586 = vunpack.c.h.b16 %v6224
    %v6587 = vunpack.c.l.b16 %v6225
    %v6588 = vunpack.c.h.b16 %v6225
    %v6589 = vunpack.c.l.b16 %v6226
    %v6590 = vunpack.c.h.b16 %v6226
    %v6591 = vunpack.c.l.b16 %v6227
    %v6592 = vunpack.c.h.b16 %v6227
    %v6593 = vunpack.c.l.b16 %v6228
    %v6594 = vunpack.c.h.b16 %v6228
    %v6595 = vunpack.c.l.b16 %v6229
    %v6596 = vunpack.c.h.b16 %v6229
    %v6597 = vunpack.c.l.b16 %v6230
    %v6598 = vunpack.c.h.b16 %v6230
    %v6599 = vunpack.c.l.b16 %v6231
    %v6600 = vunpack.c.h.b16 %v6231
    %v6601 = vunpack.c.l.b16 %v6232
    %v6602 = vunpack.c.h.b16 %v6232
    %v6603 = vunpack.c.l.b16 %v6233
    %v6604 = vunpack.c.h.b16 %v6233
    %v6605 = vunpack.c.l.b16 %v6234
    %v6606 = vunpack.c.h.b16 %v6234
    %v6607 = vunpack.c.l.b16 %v6235
    %v6608 = vunpack.c.h.b16 %v6235
    %v6609 = vunpack.c.l.b16 %v6236
    %v6610 = vunpack.c.h.b16 %v6236
    %v6611 = vunpack.c.l.b16 %v6237
    %v6612 = vunpack.c.h.b16 %v6237
    %v6613 = vunpack.c.l.b16 %v6238
    %v6614 = vunpack.c.h.b16 %v6238
    %v6615 = vunpack.c.l.b16 %v6239
    %v6616 = vunpack.c.h.b16 %v6239
    %v6617 = vunpack.c.l.b16 %v6240
    %v6618 = vunpack.c.h.b16 %v6240
    %v6619 = vpack.c.b16 %v6557, %v6555
    %v6620 = vpack.c.b16 %v6558, %v6556
    %v6621 = vpack.c.b16 %v6561, %v6559
    %v6622 = vpack.c.b16 %v6562, %v6560
    %v6623 = vpack.c.b16 %v6565, %v6563
    %v6624 = vpack.c.b16 %v6566, %v6564
    %v6625 = vpack.c.b16 %v6569, %v6567
    %v6626 = vpack.c.b16 %v6570, %v6568
    %v6627 = vpack.c.b16 %v6573, %v6571
    %v6628 = vpack.c.b16 %v6574, %v6572
    %v6629 = vpack.c.b16 %v6577, %v6575
    %v6630 = vpack.c.b16 %v6578, %v6576
    %v6631 = vpack.c.b16 %v6581, %v6579
    %v6632 = vpack.c.b16 %v6582, %v6580
    %v6633 = vpack.c.b16 %v6585, %v6583
    %v6634 = vpack.c.b16 %v6586, %v6584
    %v6635 = vpack.c.b16 %v6589, %v6587
    %v6636 = vpack.c.b16 %v6590, %v6588
    %v6637 = vpack.c.b16 %v6593, %v6591
    %v6638 = vpack.c.b16 %v6594, %v6592
    %v6639 = vpack.c.b16 %v6597, %v6595
    %v6640 = vpack.c.b16 %v6598, %v6596
    %v6641 = vpack.c.b16 %v6601, %v6599
    %v6642 = vpack.c.b16 %v6602, %v6600
    %v6643 = vpack.c.b16 %v6605, %v6603
    %v6644 = vpack.c.b16 %v6606, %v6604
    %v6645 = vpack.c.b16 %v6609, %v6607
    %v6646 = vpack.c.b16 %v6610, %v6608
    %v6647 = vpack.c.b16 %v6613, %v6611
    %v6648 = vpack.c.b16 %v6614, %v6612
    %v6649 = vpack.c.b16 %v6617, %v6615
    %v6650 = vpack.c.b16 %v6618, %v6616
    %6683 = vmatprep.subr.bf16.mxu0 %v6620
    %6684 = vmatpush1.bf16.msra.mxu0 %v6619
    %6685 = vmatprep.subr.bf16.mxu0 %v6622
    %6686 = vmatpush1.bf16.msra.mxu0 %v6621
    %6687 = vmatprep.subr.bf16.mxu0 %v6624
    %6688 = vmatpush1.bf16.msra.mxu0 %v6623
    %6689 = vmatprep.subr.bf16.mxu0 %v6626
    %6690 = vmatpush1.bf16.msra.mxu0 %v6625
    %6691 = vmatprep.subr.bf16.mxu0 %v6628
    %6692 = vmatpush1.bf16.msra.mxu0 %v6627
    %6693 = vmatprep.subr.bf16.mxu0 %v6630
    %6694 = vmatpush1.bf16.msra.mxu0 %v6629
    %6695 = vmatprep.subr.bf16.mxu0 %v6632
    %6696 = vmatpush1.bf16.msra.mxu0 %v6631
    %6697 = vmatprep.subr.bf16.mxu0 %v6634
    %6698 = vmatpush1.bf16.msra.mxu0 %v6633
    %6699 = vmatprep.subr.bf16.mxu0 %v6636
    %6700 = vmatpush1.bf16.msra.mxu0 %v6635
    %6701 = vmatprep.subr.bf16.mxu0 %v6638
    %6702 = vmatpush1.bf16.msra.mxu0 %v6637
    %6703 = vmatprep.subr.bf16.mxu0 %v6640
    %6704 = vmatpush1.bf16.msra.mxu0 %v6639
    %6705 = vmatprep.subr.bf16.mxu0 %v6642
    %6706 = vmatpush1.bf16.msra.mxu0 %v6641
    %6707 = vmatprep.subr.bf16.mxu0 %v6644
    %6708 = vmatpush1.bf16.msra.mxu0 %v6643
    %6709 = vmatprep.subr.bf16.mxu0 %v6646
    %6710 = vmatpush1.bf16.msra.mxu0 %v6645
    %6711 = vmatprep.subr.bf16.mxu0 %v6648
    %6712 = vmatpush1.bf16.msra.mxu0 %v6647
    %6713 = vmatprep.subr.bf16.mxu0 %v6650
    %6714 = vmatpush1.bf16.msra.mxu0 %v6649
    %6715 = vmatprep.mubr.bf16.mxu0 %v6208
    %6716 = vmatmul.mubr.bf16.gmra.mrb[0].mxu0 %v6207
    %v6717 = vpop.f32.mrb[0].mxu0
    %v6718 = vadd.f32 %v6517, %v6717
    %v6719 = vpop.f32.mrb[0].mxu0
    %v6720 = vadd.f32 %v6519, %v6719
    %v6721 = vpop.f32.mrb[0].mxu0
    %v6722 = vpop.f32.mrb[0].mxu0
    %6723 = vdwg.mxu0
    %s6724 = scalar_lea.vmem [#allocation17], 2
    %v6725 = vld [vmem:[%s6724] sm:$0x1]
    %v6727 = vsel %vm6155, %v6725, 0
    %6729 = vmatprep.subr.bf16.mxu0 %v6164
    %6730 = vmatpush1.bf16.msra.mxu0 %v6161
    %6731 = vmatprep.subr.bf16.mxu0 0
    %6732 = vmatpush1.bf16.msra.mxu0 0
    %6733 = vmatprep.subr.bf16.mxu0 0
    %6734 = vmatpush1.bf16.msra.mxu0 0
    %6735 = vmatprep.subr.bf16.mxu0 0
    %6736 = vmatpush1.bf16.msra.mxu0 0
    %6737 = vmatprep.subr.bf16.mxu0 0
    %6738 = vmatpush1.bf16.msra.mxu0 0
    %6739 = vmatprep.subr.bf16.mxu0 0
    %6740 = vmatpush1.bf16.msra.mxu0 0
    %6741 = vmatprep.subr.bf16.mxu0 0
    %6742 = vmatpush1.bf16.msra.mxu0 0
    %6743 = vmatprep.subr.bf16.mxu0 0
    %6744 = vmatpush1.bf16.msra.mxu0 0
    %6745 = vmatprep.subr.bf16.mxu0 0
    %6746 = vmatpush1.bf16.msra.mxu0 0
    %6747 = vmatprep.subr.bf16.mxu0 0
    %6748 = vmatpush1.bf16.msra.mxu0 0
    %6749 = vmatprep.subr.bf16.mxu0 0
    %6750 = vmatpush1.bf16.msra.mxu0 0
    %6751 = vmatprep.subr.bf16.mxu0 0
    %6752 = vmatpush1.bf16.msra.mxu0 0
    %6753 = vmatprep.subr.bf16.mxu0 0
    %6754 = vmatpush1.bf16.msra.mxu0 0
    %6755 = vmatprep.subr.bf16.mxu0 0
    %6756 = vmatpush1.bf16.msra.mxu0 0
    %6757 = vmatprep.subr.bf16.mxu0 0
    %6758 = vmatpush1.bf16.msra.mxu0 0
    %6759 = vmatprep.subr.bf16.mxu0 0
    %6760 = vmatpush1.bf16.msra.mxu0 0
    %6761 = vmatprep.mubr.bf16.mxu0 0
    %6762 = vmatmul.mubr.bf16.gmra.mrb[0].mxu0 %v6727
    %v6763 = vpop.f32.mrb[0].mxu0
    %v6764 = vadd.f32 0.0, %v6763
    %v6765 = vpop.f32.mrb[0].mxu0
    %v6766 = vadd.f32 0.0, %v6765
    %v6767 = vpop.f32.mrb[0].mxu0
    %v6768 = vpop.f32.mrb[0].mxu0
    %6769 = vdwg.mxu0
    %v6770 = vpack.c.bf16 %v6764, %v6764
    %v6771 = vpack.c.bf16 %v6766, %v6766
    %s6772 = scalar_lea.vmem [#allocation19], 512
    %v6773 = vld [vmem:[%s6772] sm:$0xff]
    %v6774 = vld [vmem:[%s6772 + $0x8] sm:$0xff]
    %v6775 = vld [vmem:[%s6772 + $0x10] sm:$0xff]
    %v6776 = vld [vmem:[%s6772 + $0x18] sm:$0xff]
    %v6777 = vld [vmem:[%s6772 + $0x20] sm:$0xff]
    %v6778 = vld [vmem:[%s6772 + $0x28] sm:$0xff]
    %v6779 = vld [vmem:[%s6772 + $0x30] sm:$0xff]
    %v6780 = vld [vmem:[%s6772 + $0x38] sm:$0xff]
    %v6781 = vld [vmem:[%s6772 + $0x40] sm:$0xff]
    %v6782 = vld [vmem:[%s6772 + $0x48] sm:$0xff]
    %v6783 = vld [vmem:[%s6772 + $0x50] sm:$0xff]
    %v6784 = vld [vmem:[%s6772 + $0x58] sm:$0xff]
    %v6785 = vld [vmem:[%s6772 + $0x60] sm:$0xff]
    %v6786 = vld [vmem:[%s6772 + $0x68] sm:$0xff]
    %v6787 = vld [vmem:[%s6772 + $0x70] sm:$0xff]
    %v6788 = vld [vmem:[%s6772 + $0x78] sm:$0xff]
    %v6789 = vld [vmem:[%s6772 + $0x80] sm:$0xff]
    %v6790 = vld [vmem:[%s6772 + $0x88] sm:$0xff]
    %v6791 = vld [vmem:[%s6772 + $0x90] sm:$0xff]
    %v6792 = vld [vmem:[%s6772 + $0x98] sm:$0xff]
    %v6793 = vld [vmem:[%s6772 + $0xa0] sm:$0xff]
    %v6794 = vld [vmem:[%s6772 + $0xa8] sm:$0xff]
    %v6795 = vld [vmem:[%s6772 + $0xb0] sm:$0xff]
    %v6796 = vld [vmem:[%s6772 + $0xb8] sm:$0xff]
    %v6797 = vld [vmem:[%s6772 + $0xc0] sm:$0xff]
    %v6798 = vld [vmem:[%s6772 + $0xc8] sm:$0xff]
    %v6799 = vld [vmem:[%s6772 + $0xd0] sm:$0xff]
    %v6800 = vld [vmem:[%s6772 + $0xd8] sm:$0xff]
    %v6801 = vld [vmem:[%s6772 + $0xe0] sm:$0xff]
    %v6802 = vld [vmem:[%s6772 + $0xe8] sm:$0xff]
    %v6803 = vld [vmem:[%s6772 + $0xf0] sm:$0xff]
    %v6804 = vld [vmem:[%s6772 + $0xf8] sm:$0xff]
    %v6837 = vunpack.c.l.b16 %v6773
    %v6838 = vunpack.c.h.b16 %v6773
    %v6839 = vunpack.c.l.b16 %v6774
    %v6840 = vunpack.c.h.b16 %v6774
    %v6841 = vunpack.c.l.b16 %v6775
    %v6842 = vunpack.c.h.b16 %v6775
    %v6843 = vunpack.c.l.b16 %v6776
    %v6844 = vunpack.c.h.b16 %v6776
    %v6845 = vunpack.c.l.b16 %v6777
    %v6846 = vunpack.c.h.b16 %v6777
    %v6847 = vunpack.c.l.b16 %v6778
    %v6848 = vunpack.c.h.b16 %v6778
    %v6849 = vunpack.c.l.b16 %v6779
    %v6850 = vunpack.c.h.b16 %v6779
    %v6851 = vunpack.c.l.b16 %v6780
    %v6852 = vunpack.c.h.b16 %v6780
    %v6853 = vunpack.c.l.b16 %v6781
    %v6854 = vunpack.c.h.b16 %v6781
    %v6855 = vunpack.c.l.b16 %v6782
    %v6856 = vunpack.c.h.b16 %v6782
    %v6857 = vunpack.c.l.b16 %v6783
    %v6858 = vunpack.c.h.b16 %v6783
    %v6859 = vunpack.c.l.b16 %v6784
    %v6860 = vunpack.c.h.b16 %v6784
    %v6861 = vunpack.c.l.b16 %v6785
    %v6862 = vunpack.c.h.b16 %v6785
    %v6863 = vunpack.c.l.b16 %v6786
    %v6864 = vunpack.c.h.b16 %v6786
    %v6865 = vunpack.c.l.b16 %v6787
    %v6866 = vunpack.c.h.b16 %v6787
    %v6867 = vunpack.c.l.b16 %v6788
    %v6868 = vunpack.c.h.b16 %v6788
    %v6869 = vunpack.c.l.b16 %v6789
    %v6870 = vunpack.c.h.b16 %v6789
    %v6871 = vunpack.c.l.b16 %v6790
    %v6872 = vunpack.c.h.b16 %v6790
    %v6873 = vunpack.c.l.b16 %v6791
    %v6874 = vunpack.c.h.b16 %v6791
    %v6875 = vunpack.c.l.b16 %v6792
    %v6876 = vunpack.c.h.b16 %v6792
    %v6877 = vunpack.c.l.b16 %v6793
    %v6878 = vunpack.c.h.b16 %v6793
    %v6879 = vunpack.c.l.b16 %v6794
    %v6880 = vunpack.c.h.b16 %v6794
    %v6881 = vunpack.c.l.b16 %v6795
    %v6882 = vunpack.c.h.b16 %v6795
    %v6883 = vunpack.c.l.b16 %v6796
    %v6884 = vunpack.c.h.b16 %v6796
    %v6885 = vunpack.c.l.b16 %v6797
    %v6886 = vunpack.c.h.b16 %v6797
    %v6887 = vunpack.c.l.b16 %v6798
    %v6888 = vunpack.c.h.b16 %v6798
    %v6889 = vunpack.c.l.b16 %v6799
    %v6890 = vunpack.c.h.b16 %v6799
    %v6891 = vunpack.c.l.b16 %v6800
    %v6892 = vunpack.c.h.b16 %v6800
    %v6893 = vunpack.c.l.b16 %v6801
    %v6894 = vunpack.c.h.b16 %v6801
    %v6895 = vunpack.c.l.b16 %v6802
    %v6896 = vunpack.c.h.b16 %v6802
    %v6897 = vunpack.c.l.b16 %v6803
    %v6898 = vunpack.c.h.b16 %v6803
    %v6899 = vunpack.c.l.b16 %v6804
    %v6900 = vunpack.c.h.b16 %v6804
    %v6901 = vpack.c.b16 %v6839, %v6837
    %v6902 = vpack.c.b16 %v6840, %v6838
    %v6903 = vpack.c.b16 %v6843, %v6841
    %v6904 = vpack.c.b16 %v6844, %v6842
    %v6905 = vpack.c.b16 %v6847, %v6845
    %v6906 = vpack.c.b16 %v6848, %v6846
    %v6907 = vpack.c.b16 %v6851, %v6849
    %v6908 = vpack.c.b16 %v6852, %v6850
    %v6909 = vpack.c.b16 %v6855, %v6853
    %v6910 = vpack.c.b16 %v6856, %v6854
    %v6911 = vpack.c.b16 %v6859, %v6857
    %v6912 = vpack.c.b16 %v6860, %v6858
    %v6913 = vpack.c.b16 %v6863, %v6861
    %v6914 = vpack.c.b16 %v6864, %v6862
    %v6915 = vpack.c.b16 %v6867, %v6865
    %v6916 = vpack.c.b16 %v6868, %v6866
    %v6917 = vpack.c.b16 %v6871, %v6869
    %v6918 = vpack.c.b16 %v6872, %v6870
    %v6919 = vpack.c.b16 %v6875, %v6873
    %v6920 = vpack.c.b16 %v6876, %v6874
    %v6921 = vpack.c.b16 %v6879, %v6877
    %v6922 = vpack.c.b16 %v6880, %v6878
    %v6923 = vpack.c.b16 %v6883, %v6881
    %v6924 = vpack.c.b16 %v6884, %v6882
    %v6925 = vpack.c.b16 %v6887, %v6885
    %v6926 = vpack.c.b16 %v6888, %v6886
    %v6927 = vpack.c.b16 %v6891, %v6889
    %v6928 = vpack.c.b16 %v6892, %v6890
    %v6929 = vpack.c.b16 %v6895, %v6893
    %v6930 = vpack.c.b16 %v6896, %v6894
    %v6931 = vpack.c.b16 %v6899, %v6897
    %v6932 = vpack.c.b16 %v6900, %v6898
    %6965 = vmatprep.subr.bf16.mxu0 %v6902
    %6966 = vmatpush1.bf16.msra.mxu0 %v6901
    %6967 = vmatprep.subr.bf16.mxu0 %v6904
    %6968 = vmatpush1.bf16.msra.mxu0 %v6903
    %6969 = vmatprep.subr.bf16.mxu0 %v6906
    %6970 = vmatpush1.bf16.msra.mxu0 %v6905
    %6971 = vmatprep.subr.bf16.mxu0 %v6908
    %6972 = vmatpush1.bf16.msra.mxu0 %v6907
    %6973 = vmatprep.subr.bf16.mxu0 %v6910
    %6974 = vmatpush1.bf16.msra.mxu0 %v6909
    %6975 = vmatprep.subr.bf16.mxu0 %v6912
    %6976 = vmatpush1.bf16.msra.mxu0 %v6911
    %6977 = vmatprep.subr.bf16.mxu0 %v6914
    %6978 = vmatpush1.bf16.msra.mxu0 %v6913
    %6979 = vmatprep.subr.bf16.mxu0 %v6916
    %6980 = vmatpush1.bf16.msra.mxu0 %v6915
    %6981 = vmatprep.subr.bf16.mxu0 %v6918
    %6982 = vmatpush1.bf16.msra.mxu0 %v6917
    %6983 = vmatprep.subr.bf16.mxu0 %v6920
    %6984 = vmatpush1.bf16.msra.mxu0 %v6919
    %6985 = vmatprep.subr.bf16.mxu0 %v6922
    %6986 = vmatpush1.bf16.msra.mxu0 %v6921
    %6987 = vmatprep.subr.bf16.mxu0 %v6924
    %6988 = vmatpush1.bf16.msra.mxu0 %v6923
    %6989 = vmatprep.subr.bf16.mxu0 %v6926
    %6990 = vmatpush1.bf16.msra.mxu0 %v6925
    %6991 = vmatprep.subr.bf16.mxu0 %v6928
    %6992 = vmatpush1.bf16.msra.mxu0 %v6927
    %6993 = vmatprep.subr.bf16.mxu0 %v6930
    %6994 = vmatpush1.bf16.msra.mxu0 %v6929
    %6995 = vmatprep.subr.bf16.mxu0 %v6932
    %6996 = vmatpush1.bf16.msra.mxu0 %v6931
    %6997 = vmatprep.mubr.bf16.mxu0 %v6771
    %6998 = vmatmul.mubr.bf16.gmra.mrb[0].mxu0 %v6770
    %v6999 = vpop.f32.mrb[0].mxu0
    %v7000 = vadd.f32 0.0, %v6999
    %v7001 = vpop.f32.mrb[0].mxu0
    %v7002 = vadd.f32 0.0, %v7001
    %v7003 = vpop.f32.mrb[0].mxu0
    %v7004 = vpop.f32.mrb[0].mxu0
    %7005 = vdwg.mxu0
    %v7006 = vadd.f32 %v6718, %v7000
    %v7007 = vadd.f32 %v6720, %v7002
    %s7008 = scalar_lea.vmem [#allocation17], 3
    %v7009 = vld [vmem:[%s7008] sm:$0x1]
    %v7011 = vsel %vm6155, %v7009, 0
    %7013 = vmatprep.subr.bf16.mxu0 %v6164
    %7014 = vmatpush1.bf16.msra.mxu0 %v6161
    %7015 = vmatprep.subr.bf16.mxu0 0
    %7016 = vmatpush1.bf16.msra.mxu0 0
    %7017 = vmatprep.subr.bf16.mxu0 0
    %7018 = vmatpush1.bf16.msra.mxu0 0
    %7019 = vmatprep.subr.bf16.mxu0 0
    %7020 = vmatpush1.bf16.msra.mxu0 0
    %7021 = vmatprep.subr.bf16.mxu0 0
    %7022 = vmatpush1.bf16.msra.mxu0 0
    %7023 = vmatprep.subr.bf16.mxu0 0
    %7024 = vmatpush1.bf16.msra.mxu0 0
    %7025 = vmatprep.subr.bf16.mxu0 0
    %7026 = vmatpush1.bf16.msra.mxu0 0
    %7027 = vmatprep.subr.bf16.mxu0 0
    %7028 = vmatpush1.bf16.msra.mxu0 0
    %7029 = vmatprep.subr.bf16.mxu0 0
    %7030 = vmatpush1.bf16.msra.mxu0 0
    %7031 = vmatprep.subr.bf16.mxu0 0
    %7032 = vmatpush1.bf16.msra.mxu0 0
    %7033 = vmatprep.subr.bf16.mxu0 0
    %7034 = vmatpush1.bf16.msra.mxu0 0
    %7035 = vmatprep.subr.bf16.mxu0 0
    %7036 = vmatpush1.bf16.msra.mxu0 0
    %7037 = vmatprep.subr.bf16.mxu0 0
    %7038 = vmatpush1.bf16.msra.mxu0 0
    %7039 = vmatprep.subr.bf16.mxu0 0
    %7040 = vmatpush1.bf16.msra.mxu0 0
    %7041 = vmatprep.subr.bf16.mxu0 0
    %7042 = vmatpush1.bf16.msra.mxu0 0
    %7043 = vmatprep.subr.bf16.mxu0 0
    %7044 = vmatpush1.bf16.msra.mxu0 0
    %7045 = vmatprep.mubr.bf16.mxu0 0
    %7046 = vmatmul.mubr.bf16.gmra.mrb[0].mxu0 %v7011
    %v7047 = vpop.f32.mrb[0].mxu0
    %v7048 = vadd.f32 0.0, %v7047
    %v7049 = vpop.f32.mrb[0].mxu0
    %v7050 = vadd.f32 0.0, %v7049
    %v7051 = vpop.f32.mrb[0].mxu0
    %v7052 = vpop.f32.mrb[0].mxu0
    %7053 = vdwg.mxu0
    %v7054 = vpack.c.bf16 %v7048, %v7048
    %v7055 = vpack.c.bf16 %v7050, %v7050
    %s7056 = scalar_lea.vmem [#allocation19], 768
    %v7057 = vld [vmem:[%s7056] sm:$0xff]
    %v7058 = vld [vmem:[%s7056 + $0x8] sm:$0xff]
    %v7059 = vld [vmem:[%s7056 + $0x10] sm:$0xff]
    %v7060 = vld [vmem:[%s7056 + $0x18] sm:$0xff]
    %v7061 = vld [vmem:[%s7056 + $0x20] sm:$0xff]
    %v7062 = vld [vmem:[%s7056 + $0x28] sm:$0xff]
    %v7063 = vld [vmem:[%s7056 + $0x30] sm:$0xff]
    %v7064 = vld [vmem:[%s7056 + $0x38] sm:$0xff]
    %v7065 = vld [vmem:[%s7056 + $0x40] sm:$0xff]
    %v7066 = vld [vmem:[%s7056 + $0x48] sm:$0xff]
    %v7067 = vld [vmem:[%s7056 + $0x50] sm:$0xff]
    %v7068 = vld [vmem:[%s7056 + $0x58] sm:$0xff]
    %v7069 = vld [vmem:[%s7056 + $0x60] sm:$0xff]
    %v7070 = vld [vmem:[%s7056 + $0x68] sm:$0xff]
    %v7071 = vld [vmem:[%s7056 + $0x70] sm:$0xff]
    %v7072 = vld [vmem:[%s7056 + $0x78] sm:$0xff]
    %v7073 = vld [vmem:[%s7056 + $0x80] sm:$0xff]
    %v7074 = vld [vmem:[%s7056 + $0x88] sm:$0xff]
    %v7075 = vld [vmem:[%s7056 + $0x90] sm:$0xff]
    %v7076 = vld [vmem:[%s7056 + $0x98] sm:$0xff]
    %v7077 = vld [vmem:[%s7056 + $0xa0] sm:$0xff]
    %v7078 = vld [vmem:[%s7056 + $0xa8] sm:$0xff]
    %v7079 = vld [vmem:[%s7056 + $0xb0] sm:$0xff]
    %v7080 = vld [vmem:[%s7056 + $0xb8] sm:$0xff]
    %v7081 = vld [vmem:[%s7056 + $0xc0] sm:$0xff]
    %v7082 = vld [vmem:[%s7056 + $0xc8] sm:$0xff]
    %v7083 = vld [vmem:[%s7056 + $0xd0] sm:$0xff]
    %v7084 = vld [vmem:[%s7056 + $0xd8] sm:$0xff]
    %v7085 = vld [vmem:[%s7056 + $0xe0] sm:$0xff]
    %v7086 = vld [vmem:[%s7056 + $0xe8] sm:$0xff]
    %v7087 = vld [vmem:[%s7056 + $0xf0] sm:$0xff]
    %v7088 = vld [vmem:[%s7056 + $0xf8] sm:$0xff]
    %v7121 = vunpack.c.l.b16 %v7057
    %v7122 = vunpack.c.h.b16 %v7057
    %v7123 = vunpack.c.l.b16 %v7058
    %v7124 = vunpack.c.h.b16 %v7058
    %v7125 = vunpack.c.l.b16 %v7059
    %v7126 = vunpack.c.h.b16 %v7059
    %v7127 = vunpack.c.l.b16 %v7060
    %v7128 = vunpack.c.h.b16 %v7060
    %v7129 = vunpack.c.l.b16 %v7061
    %v7130 = vunpack.c.h.b16 %v7061
    %v7131 = vunpack.c.l.b16 %v7062
    %v7132 = vunpack.c.h.b16 %v7062
    %v7133 = vunpack.c.l.b16 %v7063
    %v7134 = vunpack.c.h.b16 %v7063
    %v7135 = vunpack.c.l.b16 %v7064
    %v7136 = vunpack.c.h.b16 %v7064
    %v7137 = vunpack.c.l.b16 %v7065
    %v7138 = vunpack.c.h.b16 %v7065
    %v7139 = vunpack.c.l.b16 %v7066
    %v7140 = vunpack.c.h.b16 %v7066
    %v7141 = vunpack.c.l.b16 %v7067
    %v7142 = vunpack.c.h.b16 %v7067
    %v7143 = vunpack.c.l.b16 %v7068
    %v7144 = vunpack.c.h.b16 %v7068
    %v7145 = vunpack.c.l.b16 %v7069
    %v7146 = vunpack.c.h.b16 %v7069
    %v7147 = vunpack.c.l.b16 %v7070
    %v7148 = vunpack.c.h.b16 %v7070
    %v7149 = vunpack.c.l.b16 %v7071
    %v7150 = vunpack.c.h.b16 %v7071
    %v7151 = vunpack.c.l.b16 %v7072
    %v7152 = vunpack.c.h.b16 %v7072
    %v7153 = vunpack.c.l.b16 %v7073
    %v7154 = vunpack.c.h.b16 %v7073
    %v7155 = vunpack.c.l.b16 %v7074
    %v7156 = vunpack.c.h.b16 %v7074
    %v7157 = vunpack.c.l.b16 %v7075
    %v7158 = vunpack.c.h.b16 %v7075
    %v7159 = vunpack.c.l.b16 %v7076
    %v7160 = vunpack.c.h.b16 %v7076
    %v7161 = vunpack.c.l.b16 %v7077
    %v7162 = vunpack.c.h.b16 %v7077
    %v7163 = vunpack.c.l.b16 %v7078
    %v7164 = vunpack.c.h.b16 %v7078
    %v7165 = vunpack.c.l.b16 %v7079
    %v7166 = vunpack.c.h.b16 %v7079
    %v7167 = vunpack.c.l.b16 %v7080
    %v7168 = vunpack.c.h.b16 %v7080
    %v7169 = vunpack.c.l.b16 %v7081
    %v7170 = vunpack.c.h.b16 %v7081
    %v7171 = vunpack.c.l.b16 %v7082
    %v7172 = vunpack.c.h.b16 %v7082
    %v7173 = vunpack.c.l.b16 %v7083
    %v7174 = vunpack.c.h.b16 %v7083
    %v7175 = vunpack.c.l.b16 %v7084
    %v7176 = vunpack.c.h.b16 %v7084
    %v7177 = vunpack.c.l.b16 %v7085
    %v7178 = vunpack.c.h.b16 %v7085
    %v7179 = vunpack.c.l.b16 %v7086
    %v7180 = vunpack.c.h.b16 %v7086
    %v7181 = vunpack.c.l.b16 %v7087
    %v7182 = vunpack.c.h.b16 %v7087
    %v7183 = vunpack.c.l.b16 %v7088
    %v7184 = vunpack.c.h.b16 %v7088
    %v7185 = vpack.c.b16 %v7123, %v7121
    %v7186 = vpack.c.b16 %v7124, %v7122
    %v7187 = vpack.c.b16 %v7127, %v7125
    %v7188 = vpack.c.b16 %v7128, %v7126
    %v7189 = vpack.c.b16 %v7131, %v7129
    %v7190 = vpack.c.b16 %v7132, %v7130
    %v7191 = vpack.c.b16 %v7135, %v7133
    %v7192 = vpack.c.b16 %v7136, %v7134
    %v7193 = vpack.c.b16 %v7139, %v7137
    %v7194 = vpack.c.b16 %v7140, %v7138
    %v7195 = vpack.c.b16 %v7143, %v7141
    %v7196 = vpack.c.b16 %v7144, %v7142
    %v7197 = vpack.c.b16 %v7147, %v7145
    %v7198 = vpack.c.b16 %v7148, %v7146
    %v7199 = vpack.c.b16 %v7151, %v7149
    %v7200 = vpack.c.b16 %v7152, %v7150
    %v7201 = vpack.c.b16 %v7155, %v7153
    %v7202 = vpack.c.b16 %v7156, %v7154
    %v7203 = vpack.c.b16 %v7159, %v7157
    %v7204 = vpack.c.b16 %v7160, %v7158
    %v7205 = vpack.c.b16 %v7163, %v7161
    %v7206 = vpack.c.b16 %v7164, %v7162
    %v7207 = vpack.c.b16 %v7167, %v7165
    %v7208 = vpack.c.b16 %v7168, %v7166
    %v7209 = vpack.c.b16 %v7171, %v7169
    %v7210 = vpack.c.b16 %v7172, %v7170
    %v7211 = vpack.c.b16 %v7175, %v7173
    %v7212 = vpack.c.b16 %v7176, %v7174
    %v7213 = vpack.c.b16 %v7179, %v7177
    %v7214 = vpack.c.b16 %v7180, %v7178
    %v7215 = vpack.c.b16 %v7183, %v7181
    %v7216 = vpack.c.b16 %v7184, %v7182
    %7249 = vmatprep.subr.bf16.mxu0 %v7186
    %7250 = vmatpush1.bf16.msra.mxu0 %v7185
    %7251 = vmatprep.subr.bf16.mxu0 %v7188
    %7252 = vmatpush1.bf16.msra.mxu0 %v7187
    %7253 = vmatprep.subr.bf16.mxu0 %v7190
    %7254 = vmatpush1.bf16.msra.mxu0 %v7189
    %7255 = vmatprep.subr.bf16.mxu0 %v7192
    %7256 = vmatpush1.bf16.msra.mxu0 %v7191
    %7257 = vmatprep.subr.bf16.mxu0 %v7194
    %7258 = vmatpush1.bf16.msra.mxu0 %v7193
    %7259 = vmatprep.subr.bf16.mxu0 %v7196
    %7260 = vmatpush1.bf16.msra.mxu0 %v7195
    %7261 = vmatprep.subr.bf16.mxu0 %v7198
    %7262 = vmatpush1.bf16.msra.mxu0 %v7197
    %7263 = vmatprep.subr.bf16.mxu0 %v7200
    %7264 = vmatpush1.bf16.msra.mxu0 %v7199
    %7265 = vmatprep.subr.bf16.mxu0 %v7202
    %7266 = vmatpush1.bf16.msra.mxu0 %v7201
    %7267 = vmatprep.subr.bf16.mxu0 %v7204
    %7268 = vmatpush1.bf16.msra.mxu0 %v7203
    %7269 = vmatprep.subr.bf16.mxu0 %v7206
    %7270 = vmatpush1.bf16.msra.mxu0 %v7205
    %7271 = vmatprep.subr.bf16.mxu0 %v7208
    %7272 = vmatpush1.bf16.msra.mxu0 %v7207
    %7273 = vmatprep.subr.bf16.mxu0 %v7210
    %7274 = vmatpush1.bf16.msra.mxu0 %v7209
    %7275 = vmatprep.subr.bf16.mxu0 %v7212
    %7276 = vmatpush1.bf16.msra.mxu0 %v7211
    %7277 = vmatprep.subr.bf16.mxu0 %v7214
    %7278 = vmatpush1.bf16.msra.mxu0 %v7213
    %7279 = vmatprep.subr.bf16.mxu0 %v7216
    %7280 = vmatpush1.bf16.msra.mxu0 %v7215
    %7281 = vmatprep.mubr.bf16.mxu0 %v7055
    %7282 = vmatmul.mubr.bf16.gmra.mrb[0].mxu0 %v7054
    %v7283 = vpop.f32.mrb[0].mxu0
    %v7284 = vadd.f32 0.0, %v7283
    %v7285 = vpop.f32.mrb[0].mxu0
    %v7286 = vadd.f32 0.0, %v7285
    %v7287 = vpop.f32.mrb[0].mxu0
    %v7288 = vpop.f32.mrb[0].mxu0
    %7289 = vdwg.mxu0
    %v7290 = vadd.f32 %v7006, %v7284
    %v7291 = vadd.f32 %v7007, %v7286
    %v7293 = vlaneseq
    %v7294 = vshrl.u32 %v7293, 7
    %v7295 = vsub.s32 0, %v7294
    %v7296 = vrot.slane %v6153, %v7295
    %v7297 = vlaneseq
    %v7298 = vshrl.u32 %v7297, 7
    %v7299 = vsub.s32 1, %v7298
    %v7300 = vrot.slane %v6153, %v7299
    %v7303 = vadd.f32 %v7290, %v7296
    %v7304 = vadd.f32 %v7291, %v7300
    %s7305 = scalar_lea.vmem [#allocation17], 4
    %v7306 = vld [vmem:[%s7305] sm:$0x1]
    %v7308 = vsel %vm6155, %v7306, 0
    %7310 = vmatprep.subr.bf16.mxu0 %v6164
    %7311 = vmatpush1.bf16.msra.mxu0 %v6161
    %7312 = vmatprep.subr.bf16.mxu0 0
    %7313 = vmatpush1.bf16.msra.mxu0 0
    %7314 = vmatprep.subr.bf16.mxu0 0
    %7315 = vmatpush1.bf16.msra.mxu0 0
    %7316 = vmatprep.subr.bf16.mxu0 0
    %7317 = vmatpush1.bf16.msra.mxu0 0
    %7318 = vmatprep.subr.bf16.mxu0 0
    %7319 = vmatpush1.bf16.msra.mxu0 0
    %7320 = vmatprep.subr.bf16.mxu0 0
    %7321 = vmatpush1.bf16.msra.mxu0 0
    %7322 = vmatprep.subr.bf16.mxu0 0
    %7323 = vmatpush1.bf16.msra.mxu0 0
    %7324 = vmatprep.subr.bf16.mxu0 0
    %7325 = vmatpush1.bf16.msra.mxu0 0
    %7326 = vmatprep.subr.bf16.mxu0 0
    %7327 = vmatpush1.bf16.msra.mxu0 0
    %7328 = vmatprep.subr.bf16.mxu0 0
    %7329 = vmatpush1.bf16.msra.mxu0 0
    %7330 = vmatprep.subr.bf16.mxu0 0
    %7331 = vmatpush1.bf16.msra.mxu0 0
    %7332 = vmatprep.subr.bf16.mxu0 0
    %7333 = vmatpush1.bf16.msra.mxu0 0
    %7334 = vmatprep.subr.bf16.mxu0 0
    %7335 = vmatpush1.bf16.msra.mxu0 0
    %7336 = vmatprep.subr.bf16.mxu0 0
    %7337 = vmatpush1.bf16.msra.mxu0 0
    %7338 = vmatprep.subr.bf16.mxu0 0
    %7339 = vmatpush1.bf16.msra.mxu0 0
    %7340 = vmatprep.subr.bf16.mxu0 0
    %7341 = vmatpush1.bf16.msra.mxu0 0
    %7342 = vmatprep.mubr.bf16.mxu0 0
    %7343 = vmatmul.mubr.bf16.gmra.mrb[0].mxu0 %v7308
    %v7344 = vpop.f32.mrb[0].mxu0
    %v7345 = vadd.f32 0.0, %v7344
    %v7346 = vpop.f32.mrb[0].mxu0
    %v7347 = vadd.f32 0.0, %v7346
    %v7348 = vpop.f32.mrb[0].mxu0
    %v7349 = vpop.f32.mrb[0].mxu0
    %7350 = vdwg.mxu0
    %v7351 = vpack.c.bf16 %v7345, %v7345
    %v7352 = vpack.c.bf16 %v7347, %v7347
    %s7353 = scalar_lea.vmem [#allocation17], 5
    %v7354 = vld [vmem:[%s7353] sm:$0x1]
    %v7356 = vsel %vm6155, %v7354, 0
    %7358 = vmatprep.subr.bf16.mxu0 %v6164
    %7359 = vmatpush1.bf16.msra.mxu0 %v6161
    %7360 = vmatprep.subr.bf16.mxu0 0
    %7361 = vmatpush1.bf16.msra.mxu0 0
    %7362 = vmatprep.subr.bf16.mxu0 0
    %7363 = vmatpush1.bf16.msra.mxu0 0
    %7364 = vmatprep.subr.bf16.mxu0 0
    %7365 = vmatpush1.bf16.msra.mxu0 0
    %7366 = vmatprep.subr.bf16.mxu0 0
    %7367 = vmatpush1.bf16.msra.mxu0 0
    %7368 = vmatprep.subr.bf16.mxu0 0
    %7369 = vmatpush1.bf16.msra.mxu0 0
    %7370 = vmatprep.subr.bf16.mxu0 0
    %7371 = vmatpush1.bf16.msra.mxu0 0
    %7372 = vmatprep.subr.bf16.mxu0 0
    %7373 = vmatpush1.bf16.msra.mxu0 0
    %7374 = vmatprep.subr.bf16.mxu0 0
    %7375 = vmatpush1.bf16.msra.mxu0 0
    %7376 = vmatprep.subr.bf16.mxu0 0
    %7377 = vmatpush1.bf16.msra.mxu0 0
    %7378 = vmatprep.subr.bf16.mxu0 0
    %7379 = vmatpush1.bf16.msra.mxu0 0
    %7380 = vmatprep.subr.bf16.mxu0 0
    %7381 = vmatpush1.bf16.msra.mxu0 0
    %7382 = vmatprep.subr.bf16.mxu0 0
    %7383 = vmatpush1.bf16.msra.mxu0 0
    %7384 = vmatprep.subr.bf16.mxu0 0
    %7385 = vmatpush1.bf16.msra.mxu0 0
    %7386 = vmatprep.subr.bf16.mxu0 0
    %7387 = vmatpush1.bf16.msra.mxu0 0
    %7388 = vmatprep.subr.bf16.mxu0 0
    %7389 = vmatpush1.bf16.msra.mxu0 0
    %7390 = vmatprep.mubr.bf16.mxu0 0
    %7391 = vmatmul.mubr.bf16.gmra.mrb[0].mxu0 %v7356
    %v7392 = vpop.f32.mrb[0].mxu0
    %v7393 = vadd.f32 0.0, %v7392
    %v7394 = vpop.f32.mrb[0].mxu0
    %v7395 = vadd.f32 0.0, %v7394
    %v7396 = vpop.f32.mrb[0].mxu0
    %v7397 = vpop.f32.mrb[0].mxu0
    %7398 = vdwg.mxu0
    %v7399 = vpack.c.bf16 %v7393, %v7393
    %v7400 = vpack.c.bf16 %v7395, %v7395
    %7401 = vmatprep.subr.bf16.mxu0 %v6419
    %7402 = vmatpush1.bf16.msra.mxu0 %v6418
    %7403 = vmatprep.subr.bf16.mxu0 %v6421
    %7404 = vmatpush1.bf16.msra.mxu0 %v6420
    %7405 = vmatprep.subr.bf16.mxu0 %v6423
    %7406 = vmatpush1.bf16.msra.mxu0 %v6422
    %7407 = vmatprep.subr.bf16.mxu0 %v6425
    %7408 = vmatpush1.bf16.msra.mxu0 %v6424
    %7409 = vmatprep.subr.bf16.mxu0 %v6427
    %7410 = vmatpush1.bf16.msra.mxu0 %v6426
    %7411 = vmatprep.subr.bf16.mxu0 %v6429
    %7412 = vmatpush1.bf16.msra.mxu0 %v6428
    %7413 = vmatprep.subr.bf16.mxu0 %v6431
    %7414 = vmatpush1.bf16.msra.mxu0 %v6430
    %7415 = vmatprep.subr.bf16.mxu0 %v6433
    %7416 = vmatpush1.bf16.msra.mxu0 %v6432
    %7417 = vmatprep.subr.bf16.mxu0 %v6435
    %7418 = vmatpush1.bf16.msra.mxu0 %v6434
    %7419 = vmatprep.subr.bf16.mxu0 %v6437
    %7420 = vmatpush1.bf16.msra.mxu0 %v6436
    %7421 = vmatprep.subr.bf16.mxu0 %v6439
    %7422 = vmatpush1.bf16.msra.mxu0 %v6438
    %7423 = vmatprep.subr.bf16.mxu0 %v6441
    %7424 = vmatpush1.bf16.msra.mxu0 %v6440
    %7425 = vmatprep.subr.bf16.mxu0 %v6443
    %7426 = vmatpush1.bf16.msra.mxu0 %v6442
    %7427 = vmatprep.subr.bf16.mxu0 %v6445
    %7428 = vmatpush1.bf16.msra.mxu0 %v6444
    %7429 = vmatprep.subr.bf16.mxu0 %v6447
    %7430 = vmatpush1.bf16.msra.mxu0 %v6446
    %7431 = vmatprep.subr.bf16.mxu0 %v6449
    %7432 = vmatpush1.bf16.msra.mxu0 %v6448
    %7433 = vmatprep.mubr.bf16.mxu0 %v7400
    %7434 = vmatmul.mubr.bf16.gmra.mrb[0].mxu0 %v7399
    %v7435 = vpop.f32.mrb[0].mxu0
    %v7436 = vadd.f32 0.0, %v7435
    %v7437 = vpop.f32.mrb[0].mxu0
    %v7438 = vadd.f32 0.0, %v7437
    %v7439 = vpop.f32.mrb[0].mxu0
    %v7440 = vpop.f32.mrb[0].mxu0
    %7441 = vdwg.mxu0
    %7442 = vmatprep.subr.bf16.mxu0 %v6620
    %7443 = vmatpush1.bf16.msra.mxu0 %v6619
    %7444 = vmatprep.subr.bf16.mxu0 %v6622
    %7445 = vmatpush1.bf16.msra.mxu0 %v6621
    %7446 = vmatprep.subr.bf16.mxu0 %v6624
    %7447 = vmatpush1.bf16.msra.mxu0 %v6623
    %7448 = vmatprep.subr.bf16.mxu0 %v6626
    %7449 = vmatpush1.bf16.msra.mxu0 %v6625
    %7450 = vmatprep.subr.bf16.mxu0 %v6628
    %7451 = vmatpush1.bf16.msra.mxu0 %v6627
    %7452 = vmatprep.subr.bf16.mxu0 %v6630
    %7453 = vmatpush1.bf16.msra.mxu0 %v6629
    %7454 = vmatprep.subr.bf16.mxu0 %v6632
    %7455 = vmatpush1.bf16.msra.mxu0 %v6631
    %7456 = vmatprep.subr.bf16.mxu0 %v6634
    %7457 = vmatpush1.bf16.msra.mxu0 %v6633
    %7458 = vmatprep.subr.bf16.mxu0 %v6636
    %7459 = vmatpush1.bf16.msra.mxu0 %v6635
    %7460 = vmatprep.subr.bf16.mxu0 %v6638
    %7461 = vmatpush1.bf16.msra.mxu0 %v6637
    %7462 = vmatprep.subr.bf16.mxu0 %v6640
    %7463 = vmatpush1.bf16.msra.mxu0 %v6639
    %7464 = vmatprep.subr.bf16.mxu0 %v6642
    %7465 = vmatpush1.bf16.msra.mxu0 %v6641
    %7466 = vmatprep.subr.bf16.mxu0 %v6644
    %7467 = vmatpush1.bf16.msra.mxu0 %v6643
    %7468 = vmatprep.subr.bf16.mxu0 %v6646
    %7469 = vmatpush1.bf16.msra.mxu0 %v6645
    %7470 = vmatprep.subr.bf16.mxu0 %v6648
    %7471 = vmatpush1.bf16.msra.mxu0 %v6647
    %7472 = vmatprep.subr.bf16.mxu0 %v6650
    %7473 = vmatpush1.bf16.msra.mxu0 %v6649
    %7474 = vmatprep.mubr.bf16.mxu0 %v7352
    %7475 = vmatmul.mubr.bf16.gmra.mrb[0].mxu0 %v7351
    %v7476 = vpop.f32.mrb[0].mxu0
    %v7477 = vadd.f32 %v7436, %v7476
    %v7478 = vpop.f32.mrb[0].mxu0
    %v7479 = vadd.f32 %v7438, %v7478
    %v7480 = vpop.f32.mrb[0].mxu0
    %v7481 = vpop.f32.mrb[0].mxu0
    %7482 = vdwg.mxu0
    %s7483 = scalar_lea.vmem [#allocation17], 6
    %v7484 = vld [vmem:[%s7483] sm:$0x1]
    %v7486 = vsel %vm6155, %v7484, 0
    %7488 = vmatprep.subr.bf16.mxu0 %v6164
    %7489 = vmatpush1.bf16.msra.mxu0 %v6161
    %7490 = vmatprep.subr.bf16.mxu0 0
    %7491 = vmatpush1.bf16.msra.mxu0 0
    %7492 = vmatprep.subr.bf16.mxu0 0
    %7493 = vmatpush1.bf16.msra.mxu0 0
    %7494 = vmatprep.subr.bf16.mxu0 0
    %7495 = vmatpush1.bf16.msra.mxu0 0
    %7496 = vmatprep.subr.bf16.mxu0 0
    %7497 = vmatpush1.bf16.msra.mxu0 0
    %7498 = vmatprep.subr.bf16.mxu0 0
    %7499 = vmatpush1.bf16.msra.mxu0 0
    %7500 = vmatprep.subr.bf16.mxu0 0
    %7501 = vmatpush1.bf16.msra.mxu0 0
    %7502 = vmatprep.subr.bf16.mxu0 0
    %7503 = vmatpush1.bf16.msra.mxu0 0
    %7504 = vmatprep.subr.bf16.mxu0 0
    %7505 = vmatpush1.bf16.msra.mxu0 0
    %7506 = vmatprep.subr.bf16.mxu0 0
    %7507 = vmatpush1.bf16.msra.mxu0 0
    %7508 = vmatprep.subr.bf16.mxu0 0
    %7509 = vmatpush1.bf16.msra.mxu0 0
    %7510 = vmatprep.subr.bf16.mxu0 0
    %7511 = vmatpush1.bf16.msra.mxu0 0
    %7512 = vmatprep.subr.bf16.mxu0 0
    %7513 = vmatpush1.bf16.msra.mxu0 0
    %7514 = vmatprep.subr.bf16.mxu0 0
    %7515 = vmatpush1.bf16.msra.mxu0 0
    %7516 = vmatprep.subr.bf16.mxu0 0
    %7517 = vmatpush1.bf16.msra.mxu0 0
    %7518 = vmatprep.subr.bf16.mxu0 0
    %7519 = vmatpush1.bf16.msra.mxu0 0
    %7520 = vmatprep.mubr.bf16.mxu0 0
    %7521 = vmatmul.mubr.bf16.gmra.mrb[0].mxu0 %v7486
    %v7522 = vpop.f32.mrb[0].mxu0
    %v7523 = vadd.f32 0.0, %v7522
    %v7524 = vpop.f32.mrb[0].mxu0
    %v7525 = vadd.f32 0.0, %v7524
    %v7526 = vpop.f32.mrb[0].mxu0
    %v7527 = vpop.f32.mrb[0].mxu0
    %7528 = vdwg.mxu0
    %v7529 = vpack.c.bf16 %v7523, %v7523
    %v7530 = vpack.c.bf16 %v7525, %v7525
    %7531 = vmatprep.subr.bf16.mxu0 %v6902
    %7532 = vmatpush1.bf16.msra.mxu0 %v6901
    %7533 = vmatprep.subr.bf16.mxu0 %v6904
    %7534 = vmatpush1.bf16.msra.mxu0 %v6903
    %7535 = vmatprep.subr.bf16.mxu0 %v6906
    %7536 = vmatpush1.bf16.msra.mxu0 %v6905
    %7537 = vmatprep.subr.bf16.mxu0 %v6908
    %7538 = vmatpush1.bf16.msra.mxu0 %v6907
    %7539 = vmatprep.subr.bf16.mxu0 %v6910
    %7540 = vmatpush1.bf16.msra.mxu0 %v6909
    %7541 = vmatprep.subr.bf16.mxu0 %v6912
    %7542 = vmatpush1.bf16.msra.mxu0 %v6911
    %7543 = vmatprep.subr.bf16.mxu0 %v6914
    %7544 = vmatpush1.bf16.msra.mxu0 %v6913
    %7545 = vmatprep.subr.bf16.mxu0 %v6916
    %7546 = vmatpush1.bf16.msra.mxu0 %v6915
    %7547 = vmatprep.subr.bf16.mxu0 %v6918
    %7548 = vmatpush1.bf16.msra.mxu0 %v6917
    %7549 = vmatprep.subr.bf16.mxu0 %v6920
    %7550 = vmatpush1.bf16.msra.mxu0 %v6919
    %7551 = vmatprep.subr.bf16.mxu0 %v6922
    %7552 = vmatpush1.bf16.msra.mxu0 %v6921
    %7553 = vmatprep.subr.bf16.mxu0 %v6924
    %7554 = vmatpush1.bf16.msra.mxu0 %v6923
    %7555 = vmatprep.subr.bf16.mxu0 %v6926
    %7556 = vmatpush1.bf16.msra.mxu0 %v6925
    %7557 = vmatprep.subr.bf16.mxu0 %v6928
    %7558 = vmatpush1.bf16.msra.mxu0 %v6927
    %7559 = vmatprep.subr.bf16.mxu0 %v6930
    %7560 = vmatpush1.bf16.msra.mxu0 %v6929
    %7561 = vmatprep.subr.bf16.mxu0 %v6932
    %7562 = vmatpush1.bf16.msra.mxu0 %v6931
    %7563 = vmatprep.mubr.bf16.mxu0 %v7530
    %7564 = vmatmul.mubr.bf16.gmra.mrb[0].mxu0 %v7529
    %v7565 = vpop.f32.mrb[0].mxu0
    %v7566 = vadd.f32 0.0, %v7565
    %v7567 = vpop.f32.mrb[0].mxu0
    %v7568 = vadd.f32 0.0, %v7567
    %v7569 = vpop.f32.mrb[0].mxu0
    %v7570 = vpop.f32.mrb[0].mxu0
    %7571 = vdwg.mxu0
    %v7572 = vadd.f32 %v7477, %v7566
    %v7573 = vadd.f32 %v7479, %v7568
    %s7574 = scalar_lea.vmem [#allocation17], 7
    %v7575 = vld [vmem:[%s7574] sm:$0x1]
    %v7577 = vsel %vm6155, %v7575, 0
    %7579 = vmatprep.subr.bf16.mxu0 %v6164
    %7580 = vmatpush1.bf16.msra.mxu0 %v6161
    %7581 = vmatprep.subr.bf16.mxu0 0
    %7582 = vmatpush1.bf16.msra.mxu0 0
    %7583 = vmatprep.subr.bf16.mxu0 0
    %7584 = vmatpush1.bf16.msra.mxu0 0
    %7585 = vmatprep.subr.bf16.mxu0 0
    %7586 = vmatpush1.bf16.msra.mxu0 0
    %7587 = vmatprep.subr.bf16.mxu0 0
    %7588 = vmatpush1.bf16.msra.mxu0 0
    %7589 = vmatprep.subr.bf16.mxu0 0
    %7590 = vmatpush1.bf16.msra.mxu0 0
    %7591 = vmatprep.subr.bf16.mxu0 0
    %7592 = vmatpush1.bf16.msra.mxu0 0
    %7593 = vmatprep.subr.bf16.mxu0 0
    %7594 = vmatpush1.bf16.msra.mxu0 0
    %7595 = vmatprep.subr.bf16.mxu0 0
    %7596 = vmatpush1.bf16.msra.mxu0 0
    %7597 = vmatprep.subr.bf16.mxu0 0
    %7598 = vmatpush1.bf16.msra.mxu0 0
    %7599 = vmatprep.subr.bf16.mxu0 0
    %7600 = vmatpush1.bf16.msra.mxu0 0
    %7601 = vmatprep.subr.bf16.mxu0 0
    %7602 = vmatpush1.bf16.msra.mxu0 0
    %7603 = vmatprep.subr.bf16.mxu0 0
    %7604 = vmatpush1.bf16.msra.mxu0 0
    %7605 = vmatprep.subr.bf16.mxu0 0
    %7606 = vmatpush1.bf16.msra.mxu0 0
    %7607 = vmatprep.subr.bf16.mxu0 0
    %7608 = vmatpush1.bf16.msra.mxu0 0
    %7609 = vmatprep.subr.bf16.mxu0 0
    %7610 = vmatpush1.bf16.msra.mxu0 0
    %7611 = vmatprep.mubr.bf16.mxu0 0
    %7612 = vmatmul.mubr.bf16.gmra.mrb[0].mxu0 %v7577
    %v7613 = vpop.f32.mrb[0].mxu0
    %v7614 = vadd.f32 0.0, %v7613
    %v7615 = vpop.f32.mrb[0].mxu0
    %v7616 = vadd.f32 0.0, %v7615
    %v7617 = vpop.f32.mrb[0].mxu0
    %v7618 = vpop.f32.mrb[0].mxu0
    %7619 = vdwg.mxu0
    %v7620 = vpack.c.bf16 %v7614, %v7614
    %v7621 = vpack.c.bf16 %v7616, %v7616
    %7622 = vmatprep.subr.bf16.mxu0 %v7186
    %7623 = vmatpush1.bf16.msra.mxu0 %v7185
    %7624 = vmatprep.subr.bf16.mxu0 %v7188
    %7625 = vmatpush1.bf16.msra.mxu0 %v7187
    %7626 = vmatprep.subr.bf16.mxu0 %v7190
    %7627 = vmatpush1.bf16.msra.mxu0 %v7189
    %7628 = vmatprep.subr.bf16.mxu0 %v7192
    %7629 = vmatpush1.bf16.msra.mxu0 %v7191
    %7630 = vmatprep.subr.bf16.mxu0 %v7194
    %7631 = vmatpush1.bf16.msra.mxu0 %v7193
    %7632 = vmatprep.subr.bf16.mxu0 %v7196
    %7633 = vmatpush1.bf16.msra.mxu0 %v7195
    %7634 = vmatprep.subr.bf16.mxu0 %v7198
    %7635 = vmatpush1.bf16.msra.mxu0 %v7197
    %7636 = vmatprep.subr.bf16.mxu0 %v7200
    %7637 = vmatpush1.bf16.msra.mxu0 %v7199
    %7638 = vmatprep.subr.bf16.mxu0 %v7202
    %7639 = vmatpush1.bf16.msra.mxu0 %v7201
    %7640 = vmatprep.subr.bf16.mxu0 %v7204
    %7641 = vmatpush1.bf16.msra.mxu0 %v7203
    %7642 = vmatprep.subr.bf16.mxu0 %v7206
    %7643 = vmatpush1.bf16.msra.mxu0 %v7205
    %7644 = vmatprep.subr.bf16.mxu0 %v7208
    %7645 = vmatpush1.bf16.msra.mxu0 %v7207
    %7646 = vmatprep.subr.bf16.mxu0 %v7210
    %7647 = vmatpush1.bf16.msra.mxu0 %v7209
    %7648 = vmatprep.subr.bf16.mxu0 %v7212
    %7649 = vmatpush1.bf16.msra.mxu0 %v7211
    %7650 = vmatprep.subr.bf16.mxu0 %v7214
    %7651 = vmatpush1.bf16.msra.mxu0 %v7213
    %7652 = vmatprep.subr.bf16.mxu0 %v7216
    %7653 = vmatpush1.bf16.msra.mxu0 %v7215
    %7654 = vmatprep.mubr.bf16.mxu0 %v7621
    %7655 = vmatmul.mubr.bf16.gmra.mrb[0].mxu0 %v7620
    %v7656 = vpop.f32.mrb[0].mxu0
    %v7657 = vadd.f32 0.0, %v7656
    %v7658 = vpop.f32.mrb[0].mxu0
    %v7659 = vadd.f32 0.0, %v7658
    %v7660 = vpop.f32.mrb[0].mxu0
    %v7661 = vpop.f32.mrb[0].mxu0
    %7662 = vdwg.mxu0
    %v7663 = vadd.f32 %v7572, %v7657
    %v7664 = vadd.f32 %v7573, %v7659
    %v7665 = vadd.f32 %v7663, %v7296
    %v7666 = vadd.f32 %v7664, %v7300
    %v7667 = vmax.f32 %v7303, %v7665
    %v7668 = vmax.f32 %v7304, %v7666
    %v7669 = vmax.f32 %v7667, %v7668
    %vm7670 = vcmask 1041408
    %v7671 = vsel %vm7670, %v7669, 0.0
    %v7672 = vrot.slane %v7671, 4
    %v7673 = vadd.f32 %v7671, %v7672
    %v7674 = vrot.slane %v7673, 2
    %v7675 = vadd.f32 %v7673, %v7674
    %v7676 = vrot.slane %v7675, 1
    %v7677 = vadd.f32 %v7675, %v7676
    %v7678 = vrcp.pop 2.0
    %v7679 = vmul.f32 %v7677, %v7678
    %v7680 = vsub.f32 %v7669, %v7679
    %v7681 = vmul.f32 %v7680, %v7680
    %v7682 = vsel %vm7670, %v7681, 0.0
    %v7683 = vrot.slane %v7682, 4
    %v7684 = vadd.f32 %v7682, %v7683
    %v7685 = vrot.slane %v7684, 2
    %v7686 = vadd.f32 %v7684, %v7685
    %v7687 = vrot.slane %v7686, 1
    %v7688 = vadd.f32 %v7686, %v7687
    %v7689 = vmul.f32 %v7688, %v7678
    %v7690 = vld [vmem:[#allocation22] sm:$0x1]
    %v7691 = vadd.f32 %v7689, 1e-05
    %v7692 = vrsqrt.pop %v7691
    %v7693 = vmul.f32 %v7690, %v7692
    %v7695 = vlaneseq
    %v7696 = vshrl.u32 %v7695, 7
    %v7697 = vsub.s32 0, %v7696
    %v7698 = vrot.slane %v7693, %v7697
    %v7700 = vmul.f32 %v7680, %v7698
    %v7701 = vld [vmem:[#allocation23] sm:$0x1]
    %v7703 = vlaneseq
    %v7704 = vshrl.u32 %v7703, 7
    %v7705 = vsub.s32 0, %v7704
    %v7706 = vrot.slane %v7701, %v7705
    %v7708 = vadd.f32 %v7700, %v7706
    %vm7709 = vcmp.ge.f32.partialorder %v7708, 0.0
    %v7710 = vmul.f32 %v7708, 0.2
    %v7711 = vsel %vm7709, %v7708, %v7710
    %v7712 = vld [vmem:[%s16] sm:$0xff]
    %v7713 = vld [vmem:[%s16 + $0x8] sm:$0xff]
    %v7714 = vld [vmem:[%s16 + $0x10] sm:$0xff]
    %v7715 = vld [vmem:[%s16 + $0x18] sm:$0xff]
    %v7716 = vld [vmem:[%s16 + $0x20] sm:$0xff]
    %v7717 = vld [vmem:[%s16 + $0x28] sm:$0xff]
    %v7718 = vld [vmem:[%s16 + $0x30] sm:$0xff]
    %v7719 = vld [vmem:[%s16 + $0x38] sm:$0xff]
    %v7720 = vld [vmem:[%s16 + $0x40] sm:$0xff]
    %v7721 = vld [vmem:[%s16 + $0x48] sm:$0xff]
    %v7722 = vld [vmem:[%s16 + $0x50] sm:$0xff]
    %v7723 = vld [vmem:[%s16 + $0x58] sm:$0xff]
    %v7724 = vld [vmem:[%s16 + $0x60] sm:$0xff]
    %v7725 = vld [vmem:[%s16 + $0x68] sm:$0xff]
    %v7726 = vld [vmem:[%s16 + $0x70] sm:$0xff]
    %v7727 = vld [vmem:[%s16 + $0x78] sm:$0xff]
    %v7728 = vld [vmem:[#allocation2] sm:$0x1]
    %v7730 = vlaneseq
    %v7731 = vshrl.u32 %v7730, 7
    %v7732 = vsub.s32 0, %v7731
    %v7733 = vrot.slane %v7728, %v7732
    %7735 = vmatprep.subr.mxu0 0.0
    %7736 = vmatpush1.msra.mxu0 %v7712
    %7737 = vmatprep.subr.mxu0 0.0
    %7738 = vmatpush1.msra.mxu0 %v7713
    %7739 = vmatprep.subr.mxu0 0.0
    %7740 = vmatpush1.msra.mxu0 %v7714
    %7741 = vmatprep.subr.mxu0 0.0
    %7742 = vmatpush1.msra.mxu0 %v7715
    %7743 = vmatprep.subr.mxu0 0.0
    %7744 = vmatpush1.msra.mxu0 %v7716
    %7745 = vmatprep.subr.mxu0 0.0
    %7746 = vmatpush1.msra.mxu0 %v7717
    %7747 = vmatprep.subr.mxu0 0.0
    %7748 = vmatpush1.msra.mxu0 %v7718
    %7749 = vmatprep.subr.mxu0 0.0
    %7750 = vmatpush1.msra.mxu0 %v7719
    %7751 = vmatprep.subr.mxu0 0.0
    %7752 = vmatpush1.msra.mxu0 %v7720
    %7753 = vmatprep.subr.mxu0 0.0
    %7754 = vmatpush1.msra.mxu0 %v7721
    %7755 = vmatprep.subr.mxu0 0.0
    %7756 = vmatpush1.msra.mxu0 %v7722
    %7757 = vmatprep.subr.mxu0 0.0
    %7758 = vmatpush1.msra.mxu0 %v7723
    %7759 = vmatprep.subr.mxu0 0.0
    %7760 = vmatpush1.msra.mxu0 %v7724
    %7761 = vmatprep.subr.mxu0 0.0
    %7762 = vmatpush1.msra.mxu0 %v7725
    %7763 = vmatprep.subr.mxu0 0.0
    %7764 = vmatpush1.msra.mxu0 %v7726
    %7765 = vmatprep.subr.mxu0 0.0
    %7766 = vmatpush1.msra.mxu0 %v7727
    %7767 = vmatprep.subr.mxu0 0.0
    %7768 = vmatpush1.msra.mxu0 0.0
    %7769 = vmatprep.subr.mxu0 0.0
    %7770 = vmatpush1.msra.mxu0 0.0
    %7771 = vmatprep.subr.mxu0 0.0
    %7772 = vmatpush1.msra.mxu0 0.0
    %7773 = vmatprep.subr.mxu0 0.0
    %7774 = vmatpush1.msra.mxu0 0.0
    %7775 = vmatprep.subr.mxu0 0.0
    %7776 = vmatpush1.msra.mxu0 0.0
    %7777 = vmatprep.subr.mxu0 0.0
    %7778 = vmatpush1.msra.mxu0 0.0
    %7779 = vmatprep.subr.mxu0 0.0
    %7780 = vmatpush1.msra.mxu0 0.0
    %7781 = vmatprep.subr.mxu0 0.0
    %7782 = vmatpush1.msra.mxu0 0.0
    %7783 = vmatprep.subr.mxu0 0.0
    %7784 = vmatpush1.msra.mxu0 0.0
    %7785 = vmatprep.subr.mxu0 0.0
    %7786 = vmatpush1.msra.mxu0 0.0
    %7787 = vmatprep.subr.mxu0 0.0
    %7788 = vmatpush1.msra.mxu0 0.0
    %7789 = vmatprep.subr.mxu0 0.0
    %7790 = vmatpush1.msra.mxu0 0.0
    %7791 = vmatprep.subr.mxu0 0.0
    %7792 = vmatpush1.msra.mxu0 0.0
    %7793 = vmatprep.subr.mxu0 0.0
    %7794 = vmatpush1.msra.mxu0 0.0
    %7795 = vmatprep.subr.mxu0 0.0
    %7796 = vmatpush1.msra.mxu0 0.0
    %7797 = vmatprep.subr.mxu0 0.0
    %7798 = vmatpush1.msra.mxu0 0.0
    %7799 = vmatprep.mubr.f32.mxu0 0.0
    %7800 = vmatmul.mubr.f32.gmra.mrb[0].mxu0 %v7711
    %v7801 = vpop.f32.mrb[0].mxu0
    %v7802 = vadd.f32 %v7733, %v7801
    %v7803 = vpop.f32.mrb[0].mxu0
    %7804 = vdwg.mxu0
    %vm7805 = vcmask 1024
    %7806 = vst.msk [vmem:[%s18] sm:$0x3] %vm7805, %v7802
    // Predicated region
    $region130: #{vanilla_discriminator.1} parent=1 // pred_check
      _
    $region131: #{vanilla_discriminator.1} parent=1 // pred_check_branch
      %7808 = sbr.rel (0) target = $region133
    $region132: #{vanilla_discriminator.1} parent=1 // pred_region
      _
    $region133: #{vanilla_discriminator.1} parent=1 // pred_fallthru
      _
    // Predicated region
    $region134: #{vanilla_discriminator.1} parent=1 // pred_check
      _
    $region135: #{vanilla_discriminator.1} parent=1 // pred_check_branch
      %7810 = sbr.rel (0) target = $region137
    $region136: #{vanilla_discriminator.1} parent=1 // pred_region
      _
    $region137: #{vanilla_discriminator.1} parent=1 // pred_fallthru
      _
    %7811 = vsyncpa [#allocation4], 1
    %7812 = vsyncpa [#allocation6], 1
    %7813 = vsyncpa [#allocation9], 1
    %7814 = vsyncpa [#allocation12], 1
    %7815 = vsyncpa [#allocation15], 1
    %7816 = vsyncpa [#allocation18], 1
    %7817 = vsyncpa [#allocation21], 1
    %7818 = vsyncpa [#allocation24], 1

</llo_original>
